<compile_context>
chip_gen: v5e
topology: v5e:2x2
jax: 0.10.0
libtpu: 0.0.40
codegen_flags: <defaults>
</compile_context>

<pallas_src>
import functools

import jax
import jax.numpy as jnp
import numpy as np
from jax.experimental import pallas as pl
from jax.experimental.pallas import tpu as pltpu

_STRIDES = (1, 2, 2, 1, 2, 1, 2, 1)   # conv1..conv8 strides of ResEncoder
_GUARD = 8                            # zero guard rows after each flat buffer


def _out_hw(h, w, s):
    return ((h - 1) // 2 + 1, (w - 1) // 2 + 1) if s == 2 else (h, w)


def _q(h, w):                         # flattened size of a pad-1 zero-padded map
    return (h + 2) * (w + 2)


def _layer_dims(H, W):
    """Static (Hin, Win, stride) for every conv layer, in forward order."""
    dims, h, w = [], H, W
    for s in _STRIDES:
        dims.append((h, w, s))
        h, w = _out_hw(h, w, s)
    return dims


def _scatter_matrix(h_in, w_in):
    """(Q_next, M) 0/1 matrix: stride-2 subsample + scatter into the next
    layer's zero-padded flattened buffer (computed once, host-side)."""
    wp = w_in + 2
    m = h_in * wp
    ho, wo = _out_hw(h_in, w_in, 2)
    t = np.zeros((_q(ho, wo), m), np.float32)
    for oy in range(ho):
        for ox in range(wo):
            t[(oy + 1) * (wo + 2) + (ox + 1), 2 * oy * wp + 2 * ox] = 1.0
    return t


def _col_masks(dims):
    """(n_stride1, M_max, 1) masks zeroing the pad-column garbage rows that the
    flattened stride-1 conv produces (2 garbage rows per image row)."""
    s1 = [(h, w) for (h, w, s) in dims if s == 1]
    m_max = max(h * (w + 2) for h, w in s1)
    out = np.zeros((len(s1), m_max, 1), np.float32)
    for k, (h, w) in enumerate(s1):
        wp = w + 2
        for m in range(h * wp):
            out[k, m, 0] = 1.0 if (m % wp) < w else 0.0
    return out


# ---------------------------------------------------------------------------
# Fused Pallas kernel: 8 x (3x3 conv + PReLU), one image per grid step.
# ---------------------------------------------------------------------------
def _build_kernel(dims, nf):
    def kernel(x_ref, w_ref, ba_ref, mask_ref, ta_ref, tb_ref, tc_ref, td_ref,
               o1_ref, o2_ref, o3_ref, o4_ref, mid_ref, slab_ref):

        def conv_prelu(l, src, dst, s1_idx=None, t_ref=None):
            h_in, w_in, s = dims[l]
            wp = w_in + 2
            m = h_in * wp                  # rows of the "flat conv" output
            q0 = wp + 1                    # flat index of output (0,0)'s center

            # In-VMEM im2col: 9 shifted slices of the flat padded input laid
            # side-by-side on the lane dim -> one GEMM with K = 9*nf.
            for tap in range(9):
                dy, dx = tap // 3, tap % 3
                off = q0 + (dy - 1) * wp + (dx - 1)
                slab_ref[0, 0:m, tap * nf:(tap + 1) * nf] = src[0, off:off + m, :]

            a = slab_ref[0, 0:m, :].astype(jnp.bfloat16)
            y = jnp.dot(a, w_ref[l], preferred_element_type=jnp.float32)  # (m, nf)
            y = y + ba_ref[l, 0:1, :]                              # conv bias
            y = jnp.where(y >= 0.0, y, ba_ref[l, 1:2, :] * y)      # PReLU

            # Emit the next layer's zero-padded flattened input (also the HBM
            # feature output for conv2/4/6/8).
            dst[...] = jnp.zeros(dst.shape, dst.dtype)
            if s == 1:
                colmask = mask_ref[s1_idx, 0:m, :]     # zero pad-column garbage
                dst[0, q0:q0 + m, :] = y * colmask
            else:
                t = t_ref[...]                          # (Q_next, m) 0/1 scatter
                dst[0, 0:t.shape[0], :] = jnp.dot(
                    t, y, preferred_element_type=jnp.float32)

        conv_prelu(0, x_ref,   mid_ref, s1_idx=0)           # conv1 (s=1)
        conv_prelu(1, mid_ref, o1_ref, t_ref=ta_ref)        # conv2 (s=2) -> feat1
        conv_prelu(2, o1_ref,  mid_ref, t_ref=tb_ref)       # conv3 (s=2)
        conv_prelu(3, mid_ref, o2_ref, s1_idx=1)            # conv4 (s=1) -> feat2
        conv_prelu(4, o2_ref,  mid_ref, t_ref=tc_ref)       # conv5 (s=2)
        conv_prelu(5, mid_ref, o3_ref, s1_idx=2)            # conv6 (s=1) -> feat3
        conv_prelu(6, o3_ref,  mid_ref, t_ref=td_ref)       # conv7 (s=2)
        conv_prelu(7, mid_ref, o4_ref, s1_idx=3)            # conv8 (s=1) -> feat4

    return kernel


# ---------------------------------------------------------------------------
# ResEncoder parameters + forward
# ---------------------------------------------------------------------------
def init_res_encoder_params(key, nf):
    # (cin, cout, stride) for every conv in the module, in forward order.
    defs = [
        (3, nf, 1), (nf, nf, 2),   # projection (n_res_block = 0)
        (nf, nf, 2), (nf, nf, 1),  # fea_L2_conv
        (nf, nf, 2), (nf, nf, 1),  # fea_L3_conv
        (nf, nf, 2), (nf, nf, 1),  # fea_L4_conv
    ]
    params = []
    for cin, cout, s in defs:
        key, kw, kb = jax.random.split(key, 3)
        w = jax.random.normal(kw, (3, 3, cin, cout), jnp.float32) * 0.05
        b = jax.random.normal(kb, (cout,), jnp.float32) * 0.05
        a = jnp.full((cout,), 0.25, jnp.float32)  # PyTorch PReLU default init
        params.append((w, b, a, s))
    return params


def res_encoder_forward(x_nchw, params):
    """Returns (feat1, feat2, feat3, feat4) in NCHW, matching the PyTorch module."""
    N, C, H, W = x_nchw.shape
    nf = params[0][1].shape[0]
    assert C == 3 and nf >= C
    assert tuple(p[3] for p in params) == _STRIDES

    dims = _layer_dims(H, W)
    feat_hw = [dims[2][:2], dims[4][:2], dims[6][:2], dims[7][:2]]
    q_in = _q(H, W)
    m_max = H * (W + 2)
    out_rows = [_q(h, w) + _GUARD for (h, w) in feat_hw]

    # --- parameters: fold 9 taps into K, merge bias + PReLU slope, bf16 ------
    w_list, ba_list = [], []
    for (w, b, a, _s) in params:
        cin = w.shape[2]
        if cin < nf:                       # first conv: zero-pad Cin (3 -> nf)
            w = jnp.pad(w, ((0, 0), (0, 0), (0, nf - cin), (0, 0)))
        w_list.append(w.reshape(9 * nf, nf))
        ba_list.append(jnp.stack([b, a], axis=0))
    w_stack = jnp.stack(w_list, axis=0).astype(jnp.bfloat16)      # (8, 9nf, nf)
    ba_stack = jnp.stack(ba_list, axis=0)                         # (8, 2, nf)

    # --- static 0/1 scatter matrices (stride 2) and pad-column masks ---------
    t_mats = [jnp.asarray(_scatter_matrix(h, w)) for (h, w, s) in dims if s == 2]
    masks = jnp.asarray(_col_masks(dims))

    # --- input: NCHW -> zero-padded, channel-padded, flattened slab ----------
    xh = jnp.transpose(x_nchw, (0, 2, 3, 1))                      # NCHW -> NHWC
    xh = jnp.pad(xh, ((0, 0), (1, 1), (1, 1), (0, nf - C)))       # (N, H+2, W+2, nf)
    xflat = jnp.pad(xh.reshape(N, q_in, nf), ((0, 0), (0, _GUARD), (0, 0)))

    bcast = lambda arr: pl.BlockSpec(arr.shape, lambda n: (0,) * arr.ndim)
    outs = pl.pallas_call(
        _build_kernel(dims, nf),
        out_shape=tuple(jax.ShapeDtypeStruct((N, r, nf), jnp.float32)
                        for r in out_rows),
        grid=(N,),
        in_specs=[pl.BlockSpec((1, q_in + _GUARD, nf), lambda n: (n, 0, 0)),
                  bcast(w_stack), bcast(ba_stack), bcast(masks)]
                 + [bcast(t) for t in t_mats],
        out_specs=tuple(pl.BlockSpec((1, r, nf), lambda n: (n, 0, 0))
                        for r in out_rows),
        scratch_shapes=[
            pltpu.VMEM((1, q_in + _GUARD, nf), jnp.float32),  # ping-pong activation buf
            pltpu.VMEM((1, m_max, 9 * nf), jnp.float32),      # K-folded im2col slab
        ],
        compiler_params=pltpu.CompilerParams(
            dimension_semantics=("parallel",)),               # batch across TCs (v7x)
    )(xflat, w_stack, ba_stack, masks, *t_mats)

    feats = []
    for o, (h, w) in zip(outs, feat_hw):
        f = o[:, :_q(h, w), :].reshape(N, h + 2, w + 2, nf)[:, 1:1 + h, 1:1 + w, :]
        feats.append(jnp.transpose(f, (0, 3, 1, 2)))              # NHWC -> NCHW
    return tuple(feats)


# ---------------------------------------------------------------------------
# Pure-JAX reference (lax.conv) for a correctness check.
# ---------------------------------------------------------------------------
def _ref_conv_prelu(x, w, b, alpha, stride):
    y = jax.lax.conv_general_dilated(
        x, w, window_strides=(stride, stride), padding=((1, 1), (1, 1)),
        dimension_numbers=("NHWC", "HWIO", "NHWC"))
    y = y + b.reshape(1, 1, 1, -1)
    return jnp.where(y >= 0.0, y, alpha.reshape(1, 1, 1, -1) * y)


def _ref_forward(x_nchw, params):
    h = jnp.transpose(x_nchw, (0, 2, 3, 1))
    feats = []
    for i, (w, b, a, s) in enumerate(params):
        h = _ref_conv_prelu(h, w, b, a, s)
        if i in (1, 3, 5, 7):
            feats.append(jnp.transpose(h, (0, 3, 1, 2)))
    return tuple(feats)


if __name__ == "__main__":
    nf = 16
    N, C, H, W = 2, 3, 16, 16

    key = jax.random.PRNGKey(0)
    key, kx = jax.random.split(key)
    x = jax.random.normal(kx, (N, C, H, W), jnp.float32)

    params = init_res_encoder_params(key, nf)

    feats = jax.jit(functools.partial(res_encoder_forward, params=params))(x)
    feats = jax.block_until_ready(feats)

    # Shape check vs PyTorch semantics: 16 -> 8 -> 4 -> 2 -> 1, channels = nf.
    expected = [(N, nf, 8, 8), (N, nf, 4, 4), (N, nf, 2, 2), (N, nf, 1, 1)]
    for f, es in zip(feats, expected):
        assert f.shape == es, (f.shape, es)

    # Numerical check against the lax.conv reference (bf16 GEMMs, f32 accum).
    refs = jax.block_until_ready(_ref_forward(x, params))
    for f, r in zip(feats, refs):
        np.testing.assert_allclose(np.asarray(f), np.asarray(r),
                                   rtol=5e-2, atol=2e-2)

    print("KERNEL_OK")
</pallas_src>

<mosaic_0001>
module attributes {stable_mosaic.version = 11 : i64} {
  func.func @kernel(%arg0: i32, %arg1: memref<1x332x16xf32, #tpu.memory_space<vmem>>, %arg2: memref<8x144x16xbf16, #tpu.memory_space<vmem>>, %arg3: memref<8x2x16xf32, #tpu.memory_space<vmem>>, %arg4: memref<4x288x1xf32, #tpu.memory_space<vmem>>, %arg5: memref<100x288xf32, #tpu.memory_space<vmem>>, %arg6: memref<36x80xf32, #tpu.memory_space<vmem>>, %arg7: memref<16x24xf32, #tpu.memory_space<vmem>>, %arg8: memref<9x8xf32, #tpu.memory_space<vmem>>, %arg9: memref<1x108x16xf32, #tpu.memory_space<vmem>>, %arg10: memref<1x44x16xf32, #tpu.memory_space<vmem>>, %arg11: memref<1x24x16xf32, #tpu.memory_space<vmem>>, %arg12: memref<1x17x16xf32, #tpu.memory_space<vmem>>, %arg13: memref<1x332x16xf32, #tpu.memory_space<vmem>>, %arg14: memref<1x288x144xf32, #tpu.memory_space<vmem>>) attributes {dimension_semantics = [#tpu.dimension_semantics<parallel>], iteration_bounds = array<i64: 2>, scalar_prefetch = 0 : i64, scratch_operands = 2 : i64, tpu.core_type = #tpu.core_type<tc>, window_params = [{transform_indices = @transform_0, window_bounds = array<i64: 1, 332, 16>}, {pipeline_mode = #tpu.pipeline_mode<synchronous>, transform_indices = @transform_1, window_bounds = array<i64: 8, 144, 16>}, {pipeline_mode = #tpu.pipeline_mode<synchronous>, transform_indices = @transform_2, window_bounds = array<i64: 8, 2, 16>}, {pipeline_mode = #tpu.pipeline_mode<synchronous>, transform_indices = @transform_3, window_bounds = array<i64: 4, 288, 1>}, {pipeline_mode = #tpu.pipeline_mode<synchronous>, transform_indices = @transform_4, window_bounds = array<i64: 100, 288>}, {pipeline_mode = #tpu.pipeline_mode<synchronous>, transform_indices = @transform_5, window_bounds = array<i64: 36, 80>}, {pipeline_mode = #tpu.pipeline_mode<synchronous>, transform_indices = @transform_6, window_bounds = array<i64: 16, 24>}, {pipeline_mode = #tpu.pipeline_mode<synchronous>, transform_indices = @transform_7, window_bounds = array<i64: 9, 8>}, {transform_indices = @transform_8, window_bounds = array<i64: 1, 108, 16>}, {transform_indices = @transform_9, window_bounds = array<i64: 1, 44, 16>}, {transform_indices = @transform_10, window_bounds = array<i64: 1, 24, 16>}, {transform_indices = @transform_11, window_bounds = array<i64: 1, 17, 16>}]} {
    %c0 = arith.constant 0 : index
    %c0_0 = arith.constant 0 : index
    %c0_1 = arith.constant 0 : index
    %0 = vector.load %arg1[%c0, %c0_0, %c0_1] : memref<1x332x16xf32, #tpu.memory_space<vmem>>, vector<1x288x16xf32>
    %1 = vector.shape_cast %0 : vector<1x288x16xf32> to vector<288x16xf32>
    %c0_2 = arith.constant 0 : index
    %c0_3 = arith.constant 0 : index
    %c0_4 = arith.constant 0 : index
    %2 = vector.load %arg14[%c0_2, %c0_3, %c0_4] : memref<1x288x144xf32, #tpu.memory_space<vmem>>, vector<1x288x16xf32>
    %3 = vector.shape_cast %2 : vector<1x288x16xf32> to vector<288x16xf32>
    %4 = vector.shape_cast %1 : vector<288x16xf32> to vector<1x288x16xf32>
    tpu.vector_store %arg14[%c0_2, %c0_3, %c0_4], %4 {strides = array<i32>} : memref<1x288x144xf32, #tpu.memory_space<vmem>>, vector<1x288x16xf32>,
    %c0_5 = arith.constant 0 : index
    %c1 = arith.constant 1 : index
    %c0_6 = arith.constant 0 : index
    %5 = vector.load %arg1[%c0_5, %c1, %c0_6] : memref<1x332x16xf32, #tpu.memory_space<vmem>>, vector<1x288x16xf32>
    %6 = vector.shape_cast %5 : vector<1x288x16xf32> to vector<288x16xf32>
    %c0_7 = arith.constant 0 : index
    %c0_8 = arith.constant 0 : index
    %c16 = arith.constant 16 : index
    %7 = vector.load %arg14[%c0_7, %c0_8, %c16] : memref<1x288x144xf32, #tpu.memory_space<vmem>>, vector<1x288x16xf32>
    %8 = vector.shape_cast %7 : vector<1x288x16xf32> to vector<288x16xf32>
    %9 = vector.shape_cast %6 : vector<288x16xf32> to vector<1x288x16xf32>
    tpu.vector_store %arg14[%c0_7, %c0_8, %c16], %9 {strides = array<i32>} : memref<1x288x144xf32, #tpu.memory_space<vmem>>, vector<1x288x16xf32>,
    %c0_9 = arith.constant 0 : index
    %c2 = arith.constant 2 : index
    %c0_10 = arith.constant 0 : index
    %10 = vector.load %arg1[%c0_9, %c2, %c0_10] : memref<1x332x16xf32, #tpu.memory_space<vmem>>, vector<1x288x16xf32>
    %11 = vector.shape_cast %10 : vector<1x288x16xf32> to vector<288x16xf32>
    %c0_11 = arith.constant 0 : index
    %c0_12 = arith.constant 0 : index
    %c32 = arith.constant 32 : index
    %12 = vector.load %arg14[%c0_11, %c0_12, %c32] : memref<1x288x144xf32, #tpu.memory_space<vmem>>, vector<1x288x16xf32>
    %13 = vector.shape_cast %12 : vector<1x288x16xf32> to vector<288x16xf32>
    %14 = vector.shape_cast %11 : vector<288x16xf32> to vector<1x288x16xf32>
    tpu.vector_store %arg14[%c0_11, %c0_12, %c32], %14 {strides = array<i32>} : memref<1x288x144xf32, #tpu.memory_space<vmem>>, vector<1x288x16xf32>,
    %c0_13 = arith.constant 0 : index
    %c18 = arith.constant 18 : index
    %c0_14 = arith.constant 0 : index
    %15 = vector.load %arg1[%c0_13, %c18, %c0_14] : memref<1x332x16xf32, #tpu.memory_space<vmem>>, vector<1x288x16xf32>
    %16 = vector.shape_cast %15 : vector<1x288x16xf32> to vector<288x16xf32>
    %c0_15 = arith.constant 0 : index
    %c0_16 = arith.constant 0 : index
    %c48 = arith.constant 48 : index
    %17 = vector.load %arg14[%c0_15, %c0_16, %c48] : memref<1x288x144xf32, #tpu.memory_space<vmem>>, vector<1x288x16xf32>
    %18 = vector.shape_cast %17 : vector<1x288x16xf32> to vector<288x16xf32>
    %19 = vector.shape_cast %16 : vector<288x16xf32> to vector<1x288x16xf32>
    tpu.vector_store %arg14[%c0_15, %c0_16, %c48], %19 {strides = array<i32>} : memref<1x288x144xf32, #tpu.memory_space<vmem>>, vector<1x288x16xf32>,
    %c0_17 = arith.constant 0 : index
    %c19 = arith.constant 19 : index
    %c0_18 = arith.constant 0 : index
    %20 = vector.load %arg1[%c0_17, %c19, %c0_18] : memref<1x332x16xf32, #tpu.memory_space<vmem>>, vector<1x288x16xf32>
    %21 = vector.shape_cast %20 : vector<1x288x16xf32> to vector<288x16xf32>
    %c0_19 = arith.constant 0 : index
    %c0_20 = arith.constant 0 : index
    %c64 = arith.constant 64 : index
    %22 = vector.load %arg14[%c0_19, %c0_20, %c64] : memref<1x288x144xf32, #tpu.memory_space<vmem>>, vector<1x288x16xf32>
    %23 = vector.shape_cast %22 : vector<1x288x16xf32> to vector<288x16xf32>
    %24 = vector.shape_cast %21 : vector<288x16xf32> to vector<1x288x16xf32>
    tpu.vector_store %arg14[%c0_19, %c0_20, %c64], %24 {strides = array<i32>} : memref<1x288x144xf32, #tpu.memory_space<vmem>>, vector<1x288x16xf32>,
    %c0_21 = arith.constant 0 : index
    %c20 = arith.constant 20 : index
    %c0_22 = arith.constant 0 : index
    %25 = vector.load %arg1[%c0_21, %c20, %c0_22] : memref<1x332x16xf32, #tpu.memory_space<vmem>>, vector<1x288x16xf32>
    %26 = vector.shape_cast %25 : vector<1x288x16xf32> to vector<288x16xf32>
    %c0_23 = arith.constant 0 : index
    %c0_24 = arith.constant 0 : index
    %c80 = arith.constant 80 : index
    %27 = vector.load %arg14[%c0_23, %c0_24, %c80] : memref<1x288x144xf32, #tpu.memory_space<vmem>>, vector<1x288x16xf32>
    %28 = vector.shape_cast %27 : vector<1x288x16xf32> to vector<288x16xf32>
    %29 = vector.shape_cast %26 : vector<288x16xf32> to vector<1x288x16xf32>
    tpu.vector_store %arg14[%c0_23, %c0_24, %c80], %29 {strides = array<i32>} : memref<1x288x144xf32, #tpu.memory_space<vmem>>, vector<1x288x16xf32>,
    %c0_25 = arith.constant 0 : index
    %c36 = arith.constant 36 : index
    %c0_26 = arith.constant 0 : index
    %30 = vector.load %arg1[%c0_25, %c36, %c0_26] : memref<1x332x16xf32, #tpu.memory_space<vmem>>, vector<1x288x16xf32>
    %31 = vector.shape_cast %30 : vector<1x288x16xf32> to vector<288x16xf32>
    %c0_27 = arith.constant 0 : index
    %c0_28 = arith.constant 0 : index
    %c96 = arith.constant 96 : index
    %32 = vector.load %arg14[%c0_27, %c0_28, %c96] : memref<1x288x144xf32, #tpu.memory_space<vmem>>, vector<1x288x16xf32>
    %33 = vector.shape_cast %32 : vector<1x288x16xf32> to vector<288x16xf32>
    %34 = vector.shape_cast %31 : vector<288x16xf32> to vector<1x288x16xf32>
    tpu.vector_store %arg14[%c0_27, %c0_28, %c96], %34 {strides = array<i32>} : memref<1x288x144xf32, #tpu.memory_space<vmem>>, vector<1x288x16xf32>,
    %c0_29 = arith.constant 0 : index
    %c37 = arith.constant 37 : index
    %c0_30 = arith.constant 0 : index
    %35 = vector.load %arg1[%c0_29, %c37, %c0_30] : memref<1x332x16xf32, #tpu.memory_space<vmem>>, vector<1x288x16xf32>
    %36 = vector.shape_cast %35 : vector<1x288x16xf32> to vector<288x16xf32>
    %c0_31 = arith.constant 0 : index
    %c0_32 = arith.constant 0 : index
    %c112 = arith.constant 112 : index
    %37 = vector.load %arg14[%c0_31, %c0_32, %c112] : memref<1x288x144xf32, #tpu.memory_space<vmem>>, vector<1x288x16xf32>
    %38 = vector.shape_cast %37 : vector<1x288x16xf32> to vector<288x16xf32>
    %39 = vector.shape_cast %36 : vector<288x16xf32> to vector<1x288x16xf32>
    tpu.vector_store %arg14[%c0_31, %c0_32, %c112], %39 {strides = array<i32>} : memref<1x288x144xf32, #tpu.memory_space<vmem>>, vector<1x288x16xf32>,
    %c0_33 = arith.constant 0 : index
    %c38 = arith.constant 38 : index
    %c0_34 = arith.constant 0 : index
    %40 = vector.load %arg1[%c0_33, %c38, %c0_34] : memref<1x332x16xf32, #tpu.memory_space<vmem>>, vector<1x288x16xf32>
    %41 = vector.shape_cast %40 : vector<1x288x16xf32> to vector<288x16xf32>
    %c0_35 = arith.constant 0 : index
    %c0_36 = arith.constant 0 : index
    %c128 = arith.constant 128 : index
    %42 = vector.load %arg14[%c0_35, %c0_36, %c128] : memref<1x288x144xf32, #tpu.memory_space<vmem>>, vector<1x288x16xf32>
    %43 = vector.shape_cast %42 : vector<1x288x16xf32> to vector<288x16xf32>
    %44 = vector.shape_cast %41 : vector<288x16xf32> to vector<1x288x16xf32>
    tpu.vector_store %arg14[%c0_35, %c0_36, %c128], %44 {strides = array<i32>} : memref<1x288x144xf32, #tpu.memory_space<vmem>>, vector<1x288x16xf32>,
    %c0_37 = arith.constant 0 : index
    %c0_38 = arith.constant 0 : index
    %c0_39 = arith.constant 0 : index
    %45 = vector.load %arg14[%c0_37, %c0_38, %c0_39] : memref<1x288x144xf32, #tpu.memory_space<vmem>>, vector<1x288x144xf32>
    %46 = vector.shape_cast %45 : vector<1x288x144xf32> to vector<288x144xf32>
    %47 = arith.truncf %46 : vector<288x144xf32> to vector<288x144xbf16>
    %c0_40 = arith.constant 0 : index
    %c0_41 = arith.constant 0 : index
    %c0_42 = arith.constant 0 : index
    %48 = vector.load %arg2[%c0_40, %c0_41, %c0_42] : memref<8x144x16xbf16, #tpu.memory_space<vmem>>, vector<1x144x16xbf16>
    %49 = vector.shape_cast %48 : vector<1x144x16xbf16> to vector<144x16xbf16>
    %cst = arith.constant dense<0.000000e+00> : vector<288x16xf32>
    %50 = tpu.matmul %47, %49, %cst {dimension_numbers = #tpu.dot_dimension_numbers<[1], [0], [0], [1], [0, 0, 1, 1], [], []>} : vector<288x144xbf16>, vector<144x16xbf16>, vector<288x16xf32> -> vector<288x16xf32>
    %c0_43 = arith.constant 0 : index
    %c0_44 = arith.constant 0 : index
    %c0_45 = arith.constant 0 : index
    %51 = vector.load %arg3[%c0_43, %c0_44, %c0_45] : memref<8x2x16xf32, #tpu.memory_space<vmem>>, vector<1x1x16xf32>
    %52 = vector.shape_cast %51 : vector<1x1x16xf32> to vector<1x16xf32>
    %53 = vector.broadcast %52 : vector<1x16xf32> to vector<288x16xf32>
    %54 = arith.addf %50, %53 : vector<288x16xf32>
    %cst_46 = arith.constant 0.000000e+00 : f32
    %55 = vector.broadcast %cst_46 : f32 to vector<288x16xf32>
    %56 = arith.cmpf oge, %54, %55 : vector<288x16xf32>
    %c0_47 = arith.constant 0 : index
    %c1_48 = arith.constant 1 : index
    %c0_49 = arith.constant 0 : index
    %57 = vector.load %arg3[%c0_47, %c1_48, %c0_49] : memref<8x2x16xf32, #tpu.memory_space<vmem>>, vector<1x1x16xf32>
    %58 = vector.shape_cast %57 : vector<1x1x16xf32> to vector<1x16xf32>
    %59 = vector.broadcast %58 : vector<1x16xf32> to vector<288x16xf32>
    %60 = arith.mulf %59, %54 : vector<288x16xf32>
    %61 = arith.select %56, %54, %60 : vector<288x16xi1>, vector<288x16xf32>
    %cst_50 = arith.constant 0.000000e+00 : f32
    %62 = vector.broadcast %cst_50 : f32 to vector<1x332x16xf32>
    %c0_51 = arith.constant 0 : index
    %c0_52 = arith.constant 0 : index
    %c0_53 = arith.constant 0 : index
    %63 = vector.load %arg13[%c0_51, %c0_52, %c0_53] : memref<1x332x16xf32, #tpu.memory_space<vmem>>, vector<1x332x16xf32>
    tpu.vector_store %arg13[%c0_51, %c0_52, %c0_53], %62 {strides = array<i32>} : memref<1x332x16xf32, #tpu.memory_space<vmem>>, vector<1x332x16xf32>,
    %c0_54 = arith.constant 0 : index
    %c0_55 = arith.constant 0 : index
    %c0_56 = arith.constant 0 : index
    %64 = vector.load %arg4[%c0_54, %c0_55, %c0_56] : memref<4x288x1xf32, #tpu.memory_space<vmem>>, vector<1x288x1xf32>
    %65 = vector.shape_cast %64 : vector<1x288x1xf32> to vector<288x1xf32>
    %66 = vector.broadcast %65 : vector<288x1xf32> to vector<288x16xf32>
    %67 = arith.mulf %61, %66 : vector<288x16xf32>
    %c0_57 = arith.constant 0 : index
    %c19_58 = arith.constant 19 : index
    %c0_59 = arith.constant 0 : index
    %68 = vector.load %arg13[%c0_57, %c19_58, %c0_59] : memref<1x332x16xf32, #tpu.memory_space<vmem>>, vector<1x288x16xf32>
    %69 = vector.shape_cast %68 : vector<1x288x16xf32> to vector<288x16xf32>
    %70 = vector.shape_cast %67 : vector<288x16xf32> to vector<1x288x16xf32>
    tpu.vector_store %arg13[%c0_57, %c19_58, %c0_59], %70 {strides = array<i32>} : memref<1x332x16xf32, #tpu.memory_space<vmem>>, vector<1x288x16xf32>,
    %c0_60 = arith.constant 0 : index
    %c0_61 = arith.constant 0 : index
    %c0_62 = arith.constant 0 : index
    %71 = vector.load %arg13[%c0_60, %c0_61, %c0_62] : memref<1x332x16xf32, #tpu.memory_space<vmem>>, vector<1x288x16xf32>
    %72 = vector.shape_cast %71 : vector<1x288x16xf32> to vector<288x16xf32>
    %c0_63 = arith.constant 0 : index
    %c0_64 = arith.constant 0 : index
    %c0_65 = arith.constant 0 : index
    %73 = vector.load %arg14[%c0_63, %c0_64, %c0_65] : memref<1x288x144xf32, #tpu.memory_space<vmem>>, vector<1x288x16xf32>
    %74 = vector.shape_cast %73 : vector<1x288x16xf32> to vector<288x16xf32>
    %75 = vector.shape_cast %72 : vector<288x16xf32> to vector<1x288x16xf32>
    tpu.vector_store %arg14[%c0_63, %c0_64, %c0_65], %75 {strides = array<i32>} : memref<1x288x144xf32, #tpu.memory_space<vmem>>, vector<1x288x16xf32>,
    %c0_66 = arith.constant 0 : index
    %c1_67 = arith.constant 1 : index
    %c0_68 = arith.constant 0 : index
    %76 = vector.load %arg13[%c0_66, %c1_67, %c0_68] : memref<1x332x16xf32, #tpu.memory_space<vmem>>, vector<1x288x16xf32>
    %77 = vector.shape_cast %76 : vector<1x288x16xf32> to vector<288x16xf32>
    %c0_69 = arith.constant 0 : index
    %c0_70 = arith.constant 0 : index
    %c16_71 = arith.constant 16 : index
    %78 = vector.load %arg14[%c0_69, %c0_70, %c16_71] : memref<1x288x144xf32, #tpu.memory_space<vmem>>, vector<1x288x16xf32>
    %79 = vector.shape_cast %78 : vector<1x288x16xf32> to vector<288x16xf32>
    %80 = vector.shape_cast %77 : vector<288x16xf32> to vector<1x288x16xf32>
    tpu.vector_store %arg14[%c0_69, %c0_70, %c16_71], %80 {strides = array<i32>} : memref<1x288x144xf32, #tpu.memory_space<vmem>>, vector<1x288x16xf32>,
    %c0_72 = arith.constant 0 : index
    %c2_73 = arith.constant 2 : index
    %c0_74 = arith.constant 0 : index
    %81 = vector.load %arg13[%c0_72, %c2_73, %c0_74] : memref<1x332x16xf32, #tpu.memory_space<vmem>>, vector<1x288x16xf32>
    %82 = vector.shape_cast %81 : vector<1x288x16xf32> to vector<288x16xf32>
    %c0_75 = arith.constant 0 : index
    %c0_76 = arith.constant 0 : index
    %c32_77 = arith.constant 32 : index
    %83 = vector.load %arg14[%c0_75, %c0_76, %c32_77] : memref<1x288x144xf32, #tpu.memory_space<vmem>>, vector<1x288x16xf32>
    %84 = vector.shape_cast %83 : vector<1x288x16xf32> to vector<288x16xf32>
    %85 = vector.shape_cast %82 : vector<288x16xf32> to vector<1x288x16xf32>
    tpu.vector_store %arg14[%c0_75, %c0_76, %c32_77], %85 {strides = array<i32>} : memref<1x288x144xf32, #tpu.memory_space<vmem>>, vector<1x288x16xf32>,
    %c0_78 = arith.constant 0 : index
    %c18_79 = arith.constant 18 : index
    %c0_80 = arith.constant 0 : index
    %86 = vector.load %arg13[%c0_78, %c18_79, %c0_80] : memref<1x332x16xf32, #tpu.memory_space<vmem>>, vector<1x288x16xf32>
    %87 = vector.shape_cast %86 : vector<1x288x16xf32> to vector<288x16xf32>
    %c0_81 = arith.constant 0 : index
    %c0_82 = arith.constant 0 : index
    %c48_83 = arith.constant 48 : index
    %88 = vector.load %arg14[%c0_81, %c0_82, %c48_83] : memref<1x288x144xf32, #tpu.memory_space<vmem>>, vector<1x288x16xf32>
    %89 = vector.shape_cast %88 : vector<1x288x16xf32> to vector<288x16xf32>
    %90 = vector.shape_cast %87 : vector<288x16xf32> to vector<1x288x16xf32>
    tpu.vector_store %arg14[%c0_81, %c0_82, %c48_83], %90 {strides = array<i32>} : memref<1x288x144xf32, #tpu.memory_space<vmem>>, vector<1x288x16xf32>,
    %c0_84 = arith.constant 0 : index
    %c19_85 = arith.constant 19 : index
    %c0_86 = arith.constant 0 : index
    %91 = vector.load %arg13[%c0_84, %c19_85, %c0_86] : memref<1x332x16xf32, #tpu.memory_space<vmem>>, vector<1x288x16xf32>
    %92 = vector.shape_cast %91 : vector<1x288x16xf32> to vector<288x16xf32>
    %c0_87 = arith.constant 0 : index
    %c0_88 = arith.constant 0 : index
    %c64_89 = arith.constant 64 : index
    %93 = vector.load %arg14[%c0_87, %c0_88, %c64_89] : memref<1x288x144xf32, #tpu.memory_space<vmem>>, vector<1x288x16xf32>
    %94 = vector.shape_cast %93 : vector<1x288x16xf32> to vector<288x16xf32>
    %95 = vector.shape_cast %92 : vector<288x16xf32> to vector<1x288x16xf32>
    tpu.vector_store %arg14[%c0_87, %c0_88, %c64_89], %95 {strides = array<i32>} : memref<1x288x144xf32, #tpu.memory_space<vmem>>, vector<1x288x16xf32>,
    %c0_90 = arith.constant 0 : index
    %c20_91 = arith.constant 20 : index
    %c0_92 = arith.constant 0 : index
    %96 = vector.load %arg13[%c0_90, %c20_91, %c0_92] : memref<1x332x16xf32, #tpu.memory_space<vmem>>, vector<1x288x16xf32>
    %97 = vector.shape_cast %96 : vector<1x288x16xf32> to vector<288x16xf32>
    %c0_93 = arith.constant 0 : index
    %c0_94 = arith.constant 0 : index
    %c80_95 = arith.constant 80 : index
    %98 = vector.load %arg14[%c0_93, %c0_94, %c80_95] : memref<1x288x144xf32, #tpu.memory_space<vmem>>, vector<1x288x16xf32>
    %99 = vector.shape_cast %98 : vector<1x288x16xf32> to vector<288x16xf32>
    %100 = vector.shape_cast %97 : vector<288x16xf32> to vector<1x288x16xf32>
    tpu.vector_store %arg14[%c0_93, %c0_94, %c80_95], %100 {strides = array<i32>} : memref<1x288x144xf32, #tpu.memory_space<vmem>>, vector<1x288x16xf32>,
    %c0_96 = arith.constant 0 : index
    %c36_97 = arith.constant 36 : index
    %c0_98 = arith.constant 0 : index
    %101 = vector.load %arg13[%c0_96, %c36_97, %c0_98] : memref<1x332x16xf32, #tpu.memory_space<vmem>>, vector<1x288x16xf32>
    %102 = vector.shape_cast %101 : vector<1x288x16xf32> to vector<288x16xf32>
    %c0_99 = arith.constant 0 : index
    %c0_100 = arith.constant 0 : index
    %c96_101 = arith.constant 96 : index
    %103 = vector.load %arg14[%c0_99, %c0_100, %c96_101] : memref<1x288x144xf32, #tpu.memory_space<vmem>>, vector<1x288x16xf32>
    %104 = vector.shape_cast %103 : vector<1x288x16xf32> to vector<288x16xf32>
    %105 = vector.shape_cast %102 : vector<288x16xf32> to vector<1x288x16xf32>
    tpu.vector_store %arg14[%c0_99, %c0_100, %c96_101], %105 {strides = array<i32>} : memref<1x288x144xf32, #tpu.memory_space<vmem>>, vector<1x288x16xf32>,
    %c0_102 = arith.constant 0 : index
    %c37_103 = arith.constant 37 : index
    %c0_104 = arith.constant 0 : index
    %106 = vector.load %arg13[%c0_102, %c37_103, %c0_104] : memref<1x332x16xf32, #tpu.memory_space<vmem>>, vector<1x288x16xf32>
    %107 = vector.shape_cast %106 : vector<1x288x16xf32> to vector<288x16xf32>
    %c0_105 = arith.constant 0 : index
    %c0_106 = arith.constant 0 : index
    %c112_107 = arith.constant 112 : index
    %108 = vector.load %arg14[%c0_105, %c0_106, %c112_107] : memref<1x288x144xf32, #tpu.memory_space<vmem>>, vector<1x288x16xf32>
    %109 = vector.shape_cast %108 : vector<1x288x16xf32> to vector<288x16xf32>
    %110 = vector.shape_cast %107 : vector<288x16xf32> to vector<1x288x16xf32>
    tpu.vector_store %arg14[%c0_105, %c0_106, %c112_107], %110 {strides = array<i32>} : memref<1x288x144xf32, #tpu.memory_space<vmem>>, vector<1x288x16xf32>,
    %c0_108 = arith.constant 0 : index
    %c38_109 = arith.constant 38 : index
    %c0_110 = arith.constant 0 : index
    %111 = vector.load %arg13[%c0_108, %c38_109, %c0_110] : memref<1x332x16xf32, #tpu.memory_space<vmem>>, vector<1x288x16xf32>
    %112 = vector.shape_cast %111 : vector<1x288x16xf32> to vector<288x16xf32>
    %c0_111 = arith.constant 0 : index
    %c0_112 = arith.constant 0 : index
    %c128_113 = arith.constant 128 : index
    %113 = vector.load %arg14[%c0_111, %c0_112, %c128_113] : memref<1x288x144xf32, #tpu.memory_space<vmem>>, vector<1x288x16xf32>
    %114 = vector.shape_cast %113 : vector<1x288x16xf32> to vector<288x16xf32>
    %115 = vector.shape_cast %112 : vector<288x16xf32> to vector<1x288x16xf32>
    tpu.vector_store %arg14[%c0_111, %c0_112, %c128_113], %115 {strides = array<i32>} : memref<1x288x144xf32, #tpu.memory_space<vmem>>, vector<1x288x16xf32>,
    %c0_114 = arith.constant 0 : index
    %c0_115 = arith.constant 0 : index
    %c0_116 = arith.constant 0 : index
    %116 = vector.load %arg14[%c0_114, %c0_115, %c0_116] : memref<1x288x144xf32, #tpu.memory_space<vmem>>, vector<1x288x144xf32>
    %117 = vector.shape_cast %116 : vector<1x288x144xf32> to vector<288x144xf32>
    %118 = arith.truncf %117 : vector<288x144xf32> to vector<288x144xbf16>
    %c1_117 = arith.constant 1 : index
    %c0_118 = arith.constant 0 : index
    %c0_119 = arith.constant 0 : index
    %119 = vector.load %arg2[%c1_117, %c0_118, %c0_119] : memref<8x144x16xbf16, #tpu.memory_space<vmem>>, vector<1x144x16xbf16>
    %120 = vector.shape_cast %119 : vector<1x144x16xbf16> to vector<144x16xbf16>
    %cst_120 = arith.constant dense<0.000000e+00> : vector<288x16xf32>
    %121 = tpu.matmul %118, %120, %cst_120 {dimension_numbers = #tpu.dot_dimension_numbers<[1], [0], [0], [1], [0, 0, 1, 1], [], []>} : vector<288x144xbf16>, vector<144x16xbf16>, vector<288x16xf32> -> vector<288x16xf32>
    %c1_121 = arith.constant 1 : index
    %c0_122 = arith.constant 0 : index
    %c0_123 = arith.constant 0 : index
    %122 = vector.load %arg3[%c1_121, %c0_122, %c0_123] : memref<8x2x16xf32, #tpu.memory_space<vmem>>, vector<1x1x16xf32>
    %123 = vector.shape_cast %122 : vector<1x1x16xf32> to vector<1x16xf32>
    %124 = vector.broadcast %123 : vector<1x16xf32> to vector<288x16xf32>
    %125 = arith.addf %121, %124 : vector<288x16xf32>
    %cst_124 = arith.constant 0.000000e+00 : f32
    %126 = vector.broadcast %cst_124 : f32 to vector<288x16xf32>
    %127 = arith.cmpf oge, %125, %126 : vector<288x16xf32>
    %c1_125 = arith.constant 1 : index
    %c1_126 = arith.constant 1 : index
    %c0_127 = arith.constant 0 : index
    %128 = vector.load %arg3[%c1_125, %c1_126, %c0_127] : memref<8x2x16xf32, #tpu.memory_space<vmem>>, vector<1x1x16xf32>
    %129 = vector.shape_cast %128 : vector<1x1x16xf32> to vector<1x16xf32>
    %130 = vector.broadcast %129 : vector<1x16xf32> to vector<288x16xf32>
    %131 = arith.mulf %130, %125 : vector<288x16xf32>
    %132 = arith.select %127, %125, %131 : vector<288x16xi1>, vector<288x16xf32>
    %cst_128 = arith.constant 0.000000e+00 : f32
    %133 = vector.broadcast %cst_128 : f32 to vector<1x108x16xf32>
    %c0_129 = arith.constant 0 : index
    %c0_130 = arith.constant 0 : index
    %c0_131 = arith.constant 0 : index
    %134 = vector.load %arg9[%c0_129, %c0_130, %c0_131] : memref<1x108x16xf32, #tpu.memory_space<vmem>>, vector<1x108x16xf32>
    tpu.vector_store %arg9[%c0_129, %c0_130, %c0_131], %133 {strides = array<i32>} : memref<1x108x16xf32, #tpu.memory_space<vmem>>, vector<1x108x16xf32>,
    %c0_132 = arith.constant 0 : index
    %c0_133 = arith.constant 0 : index
    %135 = vector.load %arg5[%c0_132, %c0_133] : memref<100x288xf32, #tpu.memory_space<vmem>>, vector<100x288xf32>
    %cst_134 = arith.constant dense<0.000000e+00> : vector<100x16xf32>
    %136 = tpu.matmul %135, %132, %cst_134 {dimension_numbers = #tpu.dot_dimension_numbers<[1], [0], [0], [1], [0, 0, 1, 1], [], []>} : vector<100x288xf32>, vector<288x16xf32>, vector<100x16xf32> -> vector<100x16xf32>
    %c0_135 = arith.constant 0 : index
    %c0_136 = arith.constant 0 : index
    %c0_137 = arith.constant 0 : index
    %137 = vector.load %arg9[%c0_135, %c0_136, %c0_137] : memref<1x108x16xf32, #tpu.memory_space<vmem>>, vector<1x100x16xf32>
    %138 = vector.shape_cast %137 : vector<1x100x16xf32> to vector<100x16xf32>
    %139 = vector.shape_cast %136 : vector<100x16xf32> to vector<1x100x16xf32>
    tpu.vector_store %arg9[%c0_135, %c0_136, %c0_137], %139 {strides = array<i32>} : memref<1x108x16xf32, #tpu.memory_space<vmem>>, vector<1x100x16xf32>,
    %c0_138 = arith.constant 0 : index
    %c0_139 = arith.constant 0 : index
    %c0_140 = arith.constant 0 : index
    %140 = vector.load %arg9[%c0_138, %c0_139, %c0_140] : memref<1x108x16xf32, #tpu.memory_space<vmem>>, vector<1x80x16xf32>
    %141 = vector.shape_cast %140 : vector<1x80x16xf32> to vector<80x16xf32>
    %c0_141 = arith.constant 0 : index
    %c0_142 = arith.constant 0 : index
    %c0_143 = arith.constant 0 : index
    %142 = vector.load %arg14[%c0_141, %c0_142, %c0_143] : memref<1x288x144xf32, #tpu.memory_space<vmem>>, vector<1x80x16xf32>
    %143 = vector.shape_cast %142 : vector<1x80x16xf32> to vector<80x16xf32>
    %144 = vector.shape_cast %141 : vector<80x16xf32> to vector<1x80x16xf32>
    tpu.vector_store %arg14[%c0_141, %c0_142, %c0_143], %144 {strides = array<i32>} : memref<1x288x144xf32, #tpu.memory_space<vmem>>, vector<1x80x16xf32>,
    %c0_144 = arith.constant 0 : index
    %c1_145 = arith.constant 1 : index
    %c0_146 = arith.constant 0 : index
    %145 = vector.load %arg9[%c0_144, %c1_145, %c0_146] : memref<1x108x16xf32, #tpu.memory_space<vmem>>, vector<1x80x16xf32>
    %146 = vector.shape_cast %145 : vector<1x80x16xf32> to vector<80x16xf32>
    %c0_147 = arith.constant 0 : index
    %c0_148 = arith.constant 0 : index
    %c16_149 = arith.constant 16 : index
    %147 = vector.load %arg14[%c0_147, %c0_148, %c16_149] : memref<1x288x144xf32, #tpu.memory_space<vmem>>, vector<1x80x16xf32>
    %148 = vector.shape_cast %147 : vector<1x80x16xf32> to vector<80x16xf32>
    %149 = vector.shape_cast %146 : vector<80x16xf32> to vector<1x80x16xf32>
    tpu.vector_store %arg14[%c0_147, %c0_148, %c16_149], %149 {strides = array<i32>} : memref<1x288x144xf32, #tpu.memory_space<vmem>>, vector<1x80x16xf32>,
    %c0_150 = arith.constant 0 : index
    %c2_151 = arith.constant 2 : index
    %c0_152 = arith.constant 0 : index
    %150 = vector.load %arg9[%c0_150, %c2_151, %c0_152] : memref<1x108x16xf32, #tpu.memory_space<vmem>>, vector<1x80x16xf32>
    %151 = vector.shape_cast %150 : vector<1x80x16xf32> to vector<80x16xf32>
    %c0_153 = arith.constant 0 : index
    %c0_154 = arith.constant 0 : index
    %c32_155 = arith.constant 32 : index
    %152 = vector.load %arg14[%c0_153, %c0_154, %c32_155] : memref<1x288x144xf32, #tpu.memory_space<vmem>>, vector<1x80x16xf32>
    %153 = vector.shape_cast %152 : vector<1x80x16xf32> to vector<80x16xf32>
    %154 = vector.shape_cast %151 : vector<80x16xf32> to vector<1x80x16xf32>
    tpu.vector_store %arg14[%c0_153, %c0_154, %c32_155], %154 {strides = array<i32>} : memref<1x288x144xf32, #tpu.memory_space<vmem>>, vector<1x80x16xf32>,
    %c0_156 = arith.constant 0 : index
    %c10 = arith.constant 10 : index
    %c0_157 = arith.constant 0 : index
    %155 = vector.load %arg9[%c0_156, %c10, %c0_157] : memref<1x108x16xf32, #tpu.memory_space<vmem>>, vector<1x80x16xf32>
    %156 = vector.shape_cast %155 : vector<1x80x16xf32> to vector<80x16xf32>
    %c0_158 = arith.constant 0 : index
    %c0_159 = arith.constant 0 : index
    %c48_160 = arith.constant 48 : index
    %157 = vector.load %arg14[%c0_158, %c0_159, %c48_160] : memref<1x288x144xf32, #tpu.memory_space<vmem>>, vector<1x80x16xf32>
    %158 = vector.shape_cast %157 : vector<1x80x16xf32> to vector<80x16xf32>
    %159 = vector.shape_cast %156 : vector<80x16xf32> to vector<1x80x16xf32>
    tpu.vector_store %arg14[%c0_158, %c0_159, %c48_160], %159 {strides = array<i32>} : memref<1x288x144xf32, #tpu.memory_space<vmem>>, vector<1x80x16xf32>,
    %c0_161 = arith.constant 0 : index
    %c11 = arith.constant 11 : index
    %c0_162 = arith.constant 0 : index
    %160 = vector.load %arg9[%c0_161, %c11, %c0_162] : memref<1x108x16xf32, #tpu.memory_space<vmem>>, vector<1x80x16xf32>
    %161 = vector.shape_cast %160 : vector<1x80x16xf32> to vector<80x16xf32>
    %c0_163 = arith.constant 0 : index
    %c0_164 = arith.constant 0 : index
    %c64_165 = arith.constant 64 : index
    %162 = vector.load %arg14[%c0_163, %c0_164, %c64_165] : memref<1x288x144xf32, #tpu.memory_space<vmem>>, vector<1x80x16xf32>
    %163 = vector.shape_cast %162 : vector<1x80x16xf32> to vector<80x16xf32>
    %164 = vector.shape_cast %161 : vector<80x16xf32> to vector<1x80x16xf32>
    tpu.vector_store %arg14[%c0_163, %c0_164, %c64_165], %164 {strides = array<i32>} : memref<1x288x144xf32, #tpu.memory_space<vmem>>, vector<1x80x16xf32>,
    %c0_166 = arith.constant 0 : index
    %c12 = arith.constant 12 : index
    %c0_167 = arith.constant 0 : index
    %165 = vector.load %arg9[%c0_166, %c12, %c0_167] : memref<1x108x16xf32, #tpu.memory_space<vmem>>, vector<1x80x16xf32>
    %166 = vector.shape_cast %165 : vector<1x80x16xf32> to vector<80x16xf32>
    %c0_168 = arith.constant 0 : index
    %c0_169 = arith.constant 0 : index
    %c80_170 = arith.constant 80 : index
    %167 = vector.load %arg14[%c0_168, %c0_169, %c80_170] : memref<1x288x144xf32, #tpu.memory_space<vmem>>, vector<1x80x16xf32>
    %168 = vector.shape_cast %167 : vector<1x80x16xf32> to vector<80x16xf32>
    %169 = vector.shape_cast %166 : vector<80x16xf32> to vector<1x80x16xf32>
    tpu.vector_store %arg14[%c0_168, %c0_169, %c80_170], %169 {strides = array<i32>} : memref<1x288x144xf32, #tpu.memory_space<vmem>>, vector<1x80x16xf32>,
    %c0_171 = arith.constant 0 : index
    %c20_172 = arith.constant 20 : index
    %c0_173 = arith.constant 0 : index
    %170 = vector.load %arg9[%c0_171, %c20_172, %c0_173] : memref<1x108x16xf32, #tpu.memory_space<vmem>>, vector<1x80x16xf32>
    %171 = vector.shape_cast %170 : vector<1x80x16xf32> to vector<80x16xf32>
    %c0_174 = arith.constant 0 : index
    %c0_175 = arith.constant 0 : index
    %c96_176 = arith.constant 96 : index
    %172 = vector.load %arg14[%c0_174, %c0_175, %c96_176] : memref<1x288x144xf32, #tpu.memory_space<vmem>>, vector<1x80x16xf32>
    %173 = vector.shape_cast %172 : vector<1x80x16xf32> to vector<80x16xf32>
    %174 = vector.shape_cast %171 : vector<80x16xf32> to vector<1x80x16xf32>
    tpu.vector_store %arg14[%c0_174, %c0_175, %c96_176], %174 {strides = array<i32>} : memref<1x288x144xf32, #tpu.memory_space<vmem>>, vector<1x80x16xf32>,
    %c0_177 = arith.constant 0 : index
    %c21 = arith.constant 21 : index
    %c0_178 = arith.constant 0 : index
    %175 = vector.load %arg9[%c0_177, %c21, %c0_178] : memref<1x108x16xf32, #tpu.memory_space<vmem>>, vector<1x80x16xf32>
    %176 = vector.shape_cast %175 : vector<1x80x16xf32> to vector<80x16xf32>
    %c0_179 = arith.constant 0 : index
    %c0_180 = arith.constant 0 : index
    %c112_181 = arith.constant 112 : index
    %177 = vector.load %arg14[%c0_179, %c0_180, %c112_181] : memref<1x288x144xf32, #tpu.memory_space<vmem>>, vector<1x80x16xf32>
    %178 = vector.shape_cast %177 : vector<1x80x16xf32> to vector<80x16xf32>
    %179 = vector.shape_cast %176 : vector<80x16xf32> to vector<1x80x16xf32>
    tpu.vector_store %arg14[%c0_179, %c0_180, %c112_181], %179 {strides = array<i32>} : memref<1x288x144xf32, #tpu.memory_space<vmem>>, vector<1x80x16xf32>,
    %c0_182 = arith.constant 0 : index
    %c22 = arith.constant 22 : index
    %c0_183 = arith.constant 0 : index
    %180 = vector.load %arg9[%c0_182, %c22, %c0_183] : memref<1x108x16xf32, #tpu.memory_space<vmem>>, vector<1x80x16xf32>
    %181 = vector.shape_cast %180 : vector<1x80x16xf32> to vector<80x16xf32>
    %c0_184 = arith.constant 0 : index
    %c0_185 = arith.constant 0 : index
    %c128_186 = arith.constant 128 : index
    %182 = vector.load %arg14[%c0_184, %c0_185, %c128_186] : memref<1x288x144xf32, #tpu.memory_space<vmem>>, vector<1x80x16xf32>
    %183 = vector.shape_cast %182 : vector<1x80x16xf32> to vector<80x16xf32>
    %184 = vector.shape_cast %181 : vector<80x16xf32> to vector<1x80x16xf32>
    tpu.vector_store %arg14[%c0_184, %c0_185, %c128_186], %184 {strides = array<i32>} : memref<1x288x144xf32, #tpu.memory_space<vmem>>, vector<1x80x16xf32>,
    %c0_187 = arith.constant 0 : index
    %c0_188 = arith.constant 0 : index
    %c0_189 = arith.constant 0 : index
    %185 = vector.load %arg14[%c0_187, %c0_188, %c0_189] : memref<1x288x144xf32, #tpu.memory_space<vmem>>, vector<1x80x144xf32>
    %186 = vector.shape_cast %185 : vector<1x80x144xf32> to vector<80x144xf32>
    %187 = arith.truncf %186 : vector<80x144xf32> to vector<80x144xbf16>
    %c2_190 = arith.constant 2 : index
    %c0_191 = arith.constant 0 : index
    %c0_192 = arith.constant 0 : index
    %188 = vector.load %arg2[%c2_190, %c0_191, %c0_192] : memref<8x144x16xbf16, #tpu.memory_space<vmem>>, vector<1x144x16xbf16>
    %189 = vector.shape_cast %188 : vector<1x144x16xbf16> to vector<144x16xbf16>
    %cst_193 = arith.constant dense<0.000000e+00> : vector<80x16xf32>
    %190 = tpu.matmul %187, %189, %cst_193 {dimension_numbers = #tpu.dot_dimension_numbers<[1], [0], [0], [1], [0, 0, 1, 1], [], []>} : vector<80x144xbf16>, vector<144x16xbf16>, vector<80x16xf32> -> vector<80x16xf32>
    %c2_194 = arith.constant 2 : index
    %c0_195 = arith.constant 0 : index
    %c0_196 = arith.constant 0 : index
    %191 = vector.load %arg3[%c2_194, %c0_195, %c0_196] : memref<8x2x16xf32, #tpu.memory_space<vmem>>, vector<1x1x16xf32>
    %192 = vector.shape_cast %191 : vector<1x1x16xf32> to vector<1x16xf32>
    %193 = vector.broadcast %192 : vector<1x16xf32> to vector<80x16xf32>
    %194 = arith.addf %190, %193 : vector<80x16xf32>
    %cst_197 = arith.constant 0.000000e+00 : f32
    %195 = vector.broadcast %cst_197 : f32 to vector<80x16xf32>
    %196 = arith.cmpf oge, %194, %195 : vector<80x16xf32>
    %c2_198 = arith.constant 2 : index
    %c1_199 = arith.constant 1 : index
    %c0_200 = arith.constant 0 : index
    %197 = vector.load %arg3[%c2_198, %c1_199, %c0_200] : memref<8x2x16xf32, #tpu.memory_space<vmem>>, vector<1x1x16xf32>
    %198 = vector.shape_cast %197 : vector<1x1x16xf32> to vector<1x16xf32>
    %199 = vector.broadcast %198 : vector<1x16xf32> to vector<80x16xf32>
    %200 = arith.mulf %199, %194 : vector<80x16xf32>
    %201 = arith.select %196, %194, %200 : vector<80x16xi1>, vector<80x16xf32>
    %cst_201 = arith.constant 0.000000e+00 : f32
    %202 = vector.broadcast %cst_201 : f32 to vector<1x332x16xf32>
    %c0_202 = arith.constant 0 : index
    %c0_203 = arith.constant 0 : index
    %c0_204 = arith.constant 0 : index
    %203 = vector.load %arg13[%c0_202, %c0_203, %c0_204] : memref<1x332x16xf32, #tpu.memory_space<vmem>>, vector<1x332x16xf32>
    tpu.vector_store %arg13[%c0_202, %c0_203, %c0_204], %202 {strides = array<i32>} : memref<1x332x16xf32, #tpu.memory_space<vmem>>, vector<1x332x16xf32>,
    %c0_205 = arith.constant 0 : index
    %c0_206 = arith.constant 0 : index
    %204 = vector.load %arg6[%c0_205, %c0_206] : memref<36x80xf32, #tpu.memory_space<vmem>>, vector<36x80xf32>
    %cst_207 = arith.constant dense<0.000000e+00> : vector<36x16xf32>
    %205 = tpu.matmul %204, %201, %cst_207 {dimension_numbers = #tpu.dot_dimension_numbers<[1], [0], [0], [1], [0, 0, 1, 1], [], []>} : vector<36x80xf32>, vector<80x16xf32>, vector<36x16xf32> -> vector<36x16xf32>
    %c0_208 = arith.constant 0 : index
    %c0_209 = arith.constant 0 : index
    %c0_210 = arith.constant 0 : index
    %206 = vector.load %arg13[%c0_208, %c0_209, %c0_210] : memref<1x332x16xf32, #tpu.memory_space<vmem>>, vector<1x36x16xf32>
    %207 = vector.shape_cast %206 : vector<1x36x16xf32> to vector<36x16xf32>
    %208 = vector.shape_cast %205 : vector<36x16xf32> to vector<1x36x16xf32>
    tpu.vector_store %arg13[%c0_208, %c0_209, %c0_210], %208 {strides = array<i32>} : memref<1x332x16xf32, #tpu.memory_space<vmem>>, vector<1x36x16xf32>,
    %c0_211 = arith.constant 0 : index
    %c0_212 = arith.constant 0 : index
    %c0_213 = arith.constant 0 : index
    %209 = vector.load %arg13[%c0_211, %c0_212, %c0_213] : memref<1x332x16xf32, #tpu.memory_space<vmem>>, vector<1x24x16xf32>
    %210 = vector.shape_cast %209 : vector<1x24x16xf32> to vector<24x16xf32>
    %c0_214 = arith.constant 0 : index
    %c0_215 = arith.constant 0 : index
    %c0_216 = arith.constant 0 : index
    %211 = vector.load %arg14[%c0_214, %c0_215, %c0_216] : memref<1x288x144xf32, #tpu.memory_space<vmem>>, vector<1x24x16xf32>
    %212 = vector.shape_cast %211 : vector<1x24x16xf32> to vector<24x16xf32>
    %213 = vector.shape_cast %210 : vector<24x16xf32> to vector<1x24x16xf32>
    tpu.vector_store %arg14[%c0_214, %c0_215, %c0_216], %213 {strides = array<i32>} : memref<1x288x144xf32, #tpu.memory_space<vmem>>, vector<1x24x16xf32>,
    %c0_217 = arith.constant 0 : index
    %c1_218 = arith.constant 1 : index
    %c0_219 = arith.constant 0 : index
    %214 = vector.load %arg13[%c0_217, %c1_218, %c0_219] : memref<1x332x16xf32, #tpu.memory_space<vmem>>, vector<1x24x16xf32>
    %215 = vector.shape_cast %214 : vector<1x24x16xf32> to vector<24x16xf32>
    %c0_220 = arith.constant 0 : index
    %c0_221 = arith.constant 0 : index
    %c16_222 = arith.constant 16 : index
    %216 = vector.load %arg14[%c0_220, %c0_221, %c16_222] : memref<1x288x144xf32, #tpu.memory_space<vmem>>, vector<1x24x16xf32>
    %217 = vector.shape_cast %216 : vector<1x24x16xf32> to vector<24x16xf32>
    %218 = vector.shape_cast %215 : vector<24x16xf32> to vector<1x24x16xf32>
    tpu.vector_store %arg14[%c0_220, %c0_221, %c16_222], %218 {strides = array<i32>} : memref<1x288x144xf32, #tpu.memory_space<vmem>>, vector<1x24x16xf32>,
    %c0_223 = arith.constant 0 : index
    %c2_224 = arith.constant 2 : index
    %c0_225 = arith.constant 0 : index
    %219 = vector.load %arg13[%c0_223, %c2_224, %c0_225] : memref<1x332x16xf32, #tpu.memory_space<vmem>>, vector<1x24x16xf32>
    %220 = vector.shape_cast %219 : vector<1x24x16xf32> to vector<24x16xf32>
    %c0_226 = arith.constant 0 : index
    %c0_227 = arith.constant 0 : index
    %c32_228 = arith.constant 32 : index
    %221 = vector.load %arg14[%c0_226, %c0_227, %c32_228] : memref<1x288x144xf32, #tpu.memory_space<vmem>>, vector<1x24x16xf32>
    %222 = vector.shape_cast %221 : vector<1x24x16xf32> to vector<24x16xf32>
    %223 = vector.shape_cast %220 : vector<24x16xf32> to vector<1x24x16xf32>
    tpu.vector_store %arg14[%c0_226, %c0_227, %c32_228], %223 {strides = array<i32>} : memref<1x288x144xf32, #tpu.memory_space<vmem>>, vector<1x24x16xf32>,
    %c0_229 = arith.constant 0 : index
    %c6 = arith.constant 6 : index
    %c0_230 = arith.constant 0 : index
    %224 = vector.load %arg13[%c0_229, %c6, %c0_230] : memref<1x332x16xf32, #tpu.memory_space<vmem>>, vector<1x24x16xf32>
    %225 = vector.shape_cast %224 : vector<1x24x16xf32> to vector<24x16xf32>
    %c0_231 = arith.constant 0 : index
    %c0_232 = arith.constant 0 : index
    %c48_233 = arith.constant 48 : index
    %226 = vector.load %arg14[%c0_231, %c0_232, %c48_233] : memref<1x288x144xf32, #tpu.memory_space<vmem>>, vector<1x24x16xf32>
    %227 = vector.shape_cast %226 : vector<1x24x16xf32> to vector<24x16xf32>
    %228 = vector.shape_cast %225 : vector<24x16xf32> to vector<1x24x16xf32>
    tpu.vector_store %arg14[%c0_231, %c0_232, %c48_233], %228 {strides = array<i32>} : memref<1x288x144xf32, #tpu.memory_space<vmem>>, vector<1x24x16xf32>,
    %c0_234 = arith.constant 0 : index
    %c7 = arith.constant 7 : index
    %c0_235 = arith.constant 0 : index
    %229 = vector.load %arg13[%c0_234, %c7, %c0_235] : memref<1x332x16xf32, #tpu.memory_space<vmem>>, vector<1x24x16xf32>
    %230 = vector.shape_cast %229 : vector<1x24x16xf32> to vector<24x16xf32>
    %c0_236 = arith.constant 0 : index
    %c0_237 = arith.constant 0 : index
    %c64_238 = arith.constant 64 : index
    %231 = vector.load %arg14[%c0_236, %c0_237, %c64_238] : memref<1x288x144xf32, #tpu.memory_space<vmem>>, vector<1x24x16xf32>
    %232 = vector.shape_cast %231 : vector<1x24x16xf32> to vector<24x16xf32>
    %233 = vector.shape_cast %230 : vector<24x16xf32> to vector<1x24x16xf32>
    tpu.vector_store %arg14[%c0_236, %c0_237, %c64_238], %233 {strides = array<i32>} : memref<1x288x144xf32, #tpu.memory_space<vmem>>, vector<1x24x16xf32>,
    %c0_239 = arith.constant 0 : index
    %c8 = arith.constant 8 : index
    %c0_240 = arith.constant 0 : index
    %234 = vector.load %arg13[%c0_239, %c8, %c0_240] : memref<1x332x16xf32, #tpu.memory_space<vmem>>, vector<1x24x16xf32>
    %235 = vector.shape_cast %234 : vector<1x24x16xf32> to vector<24x16xf32>
    %c0_241 = arith.constant 0 : index
    %c0_242 = arith.constant 0 : index
    %c80_243 = arith.constant 80 : index
    %236 = vector.load %arg14[%c0_241, %c0_242, %c80_243] : memref<1x288x144xf32, #tpu.memory_space<vmem>>, vector<1x24x16xf32>
    %237 = vector.shape_cast %236 : vector<1x24x16xf32> to vector<24x16xf32>
    %238 = vector.shape_cast %235 : vector<24x16xf32> to vector<1x24x16xf32>
    tpu.vector_store %arg14[%c0_241, %c0_242, %c80_243], %238 {strides = array<i32>} : memref<1x288x144xf32, #tpu.memory_space<vmem>>, vector<1x24x16xf32>,
    %c0_244 = arith.constant 0 : index
    %c12_245 = arith.constant 12 : index
    %c0_246 = arith.constant 0 : index
    %239 = vector.load %arg13[%c0_244, %c12_245, %c0_246] : memref<1x332x16xf32, #tpu.memory_space<vmem>>, vector<1x24x16xf32>
    %240 = vector.shape_cast %239 : vector<1x24x16xf32> to vector<24x16xf32>
    %c0_247 = arith.constant 0 : index
    %c0_248 = arith.constant 0 : index
    %c96_249 = arith.constant 96 : index
    %241 = vector.load %arg14[%c0_247, %c0_248, %c96_249] : memref<1x288x144xf32, #tpu.memory_space<vmem>>, vector<1x24x16xf32>
    %242 = vector.shape_cast %241 : vector<1x24x16xf32> to vector<24x16xf32>
    %243 = vector.shape_cast %240 : vector<24x16xf32> to vector<1x24x16xf32>
    tpu.vector_store %arg14[%c0_247, %c0_248, %c96_249], %243 {strides = array<i32>} : memref<1x288x144xf32, #tpu.memory_space<vmem>>, vector<1x24x16xf32>,
    %c0_250 = arith.constant 0 : index
    %c13 = arith.constant 13 : index
    %c0_251 = arith.constant 0 : index
    %244 = vector.load %arg13[%c0_250, %c13, %c0_251] : memref<1x332x16xf32, #tpu.memory_space<vmem>>, vector<1x24x16xf32>
    %245 = vector.shape_cast %244 : vector<1x24x16xf32> to vector<24x16xf32>
    %c0_252 = arith.constant 0 : index
    %c0_253 = arith.constant 0 : index
    %c112_254 = arith.constant 112 : index
    %246 = vector.load %arg14[%c0_252, %c0_253, %c112_254] : memref<1x288x144xf32, #tpu.memory_space<vmem>>, vector<1x24x16xf32>
    %247 = vector.shape_cast %246 : vector<1x24x16xf32> to vector<24x16xf32>
    %248 = vector.shape_cast %245 : vector<24x16xf32> to vector<1x24x16xf32>
    tpu.vector_store %arg14[%c0_252, %c0_253, %c112_254], %248 {strides = array<i32>} : memref<1x288x144xf32, #tpu.memory_space<vmem>>, vector<1x24x16xf32>,
    %c0_255 = arith.constant 0 : index
    %c14 = arith.constant 14 : index
    %c0_256 = arith.constant 0 : index
    %249 = vector.load %arg13[%c0_255, %c14, %c0_256] : memref<1x332x16xf32, #tpu.memory_space<vmem>>, vector<1x24x16xf32>
    %250 = vector.shape_cast %249 : vector<1x24x16xf32> to vector<24x16xf32>
    %c0_257 = arith.constant 0 : index
    %c0_258 = arith.constant 0 : index
    %c128_259 = arith.constant 128 : index
    %251 = vector.load %arg14[%c0_257, %c0_258, %c128_259] : memref<1x288x144xf32, #tpu.memory_space<vmem>>, vector<1x24x16xf32>
    %252 = vector.shape_cast %251 : vector<1x24x16xf32> to vector<24x16xf32>
    %253 = vector.shape_cast %250 : vector<24x16xf32> to vector<1x24x16xf32>
    tpu.vector_store %arg14[%c0_257, %c0_258, %c128_259], %253 {strides = array<i32>} : memref<1x288x144xf32, #tpu.memory_space<vmem>>, vector<1x24x16xf32>,
    %c0_260 = arith.constant 0 : index
    %c0_261 = arith.constant 0 : index
    %c0_262 = arith.constant 0 : index
    %254 = vector.load %arg14[%c0_260, %c0_261, %c0_262] : memref<1x288x144xf32, #tpu.memory_space<vmem>>, vector<1x24x144xf32>
    %255 = vector.shape_cast %254 : vector<1x24x144xf32> to vector<24x144xf32>
    %256 = arith.truncf %255 : vector<24x144xf32> to vector<24x144xbf16>
    %c3 = arith.constant 3 : index
    %c0_263 = arith.constant 0 : index
    %c0_264 = arith.constant 0 : index
    %257 = vector.load %arg2[%c3, %c0_263, %c0_264] : memref<8x144x16xbf16, #tpu.memory_space<vmem>>, vector<1x144x16xbf16>
    %258 = vector.shape_cast %257 : vector<1x144x16xbf16> to vector<144x16xbf16>
    %cst_265 = arith.constant dense<0.000000e+00> : vector<24x16xf32>
    %259 = tpu.matmul %256, %258, %cst_265 {dimension_numbers = #tpu.dot_dimension_numbers<[1], [0], [0], [1], [0, 0, 1, 1], [], []>} : vector<24x144xbf16>, vector<144x16xbf16>, vector<24x16xf32> -> vector<24x16xf32>
    %c3_266 = arith.constant 3 : index
    %c0_267 = arith.constant 0 : index
    %c0_268 = arith.constant 0 : index
    %260 = vector.load %arg3[%c3_266, %c0_267, %c0_268] : memref<8x2x16xf32, #tpu.memory_space<vmem>>, vector<1x1x16xf32>
    %261 = vector.shape_cast %260 : vector<1x1x16xf32> to vector<1x16xf32>
    %262 = vector.broadcast %261 : vector<1x16xf32> to vector<24x16xf32>
    %263 = arith.addf %259, %262 : vector<24x16xf32>
    %cst_269 = arith.constant 0.000000e+00 : f32
    %264 = vector.broadcast %cst_269 : f32 to vector<24x16xf32>
    %265 = arith.cmpf oge, %263, %264 : vector<24x16xf32>
    %c3_270 = arith.constant 3 : index
    %c1_271 = arith.constant 1 : index
    %c0_272 = arith.constant 0 : index
    %266 = vector.load %arg3[%c3_270, %c1_271, %c0_272] : memref<8x2x16xf32, #tpu.memory_space<vmem>>, vector<1x1x16xf32>
    %267 = vector.shape_cast %266 : vector<1x1x16xf32> to vector<1x16xf32>
    %268 = vector.broadcast %267 : vector<1x16xf32> to vector<24x16xf32>
    %269 = arith.mulf %268, %263 : vector<24x16xf32>
    %270 = arith.select %265, %263, %269 : vector<24x16xi1>, vector<24x16xf32>
    %cst_273 = arith.constant 0.000000e+00 : f32
    %271 = vector.broadcast %cst_273 : f32 to vector<1x44x16xf32>
    %c0_274 = arith.constant 0 : index
    %c0_275 = arith.constant 0 : index
    %c0_276 = arith.constant 0 : index
    %272 = vector.load %arg10[%c0_274, %c0_275, %c0_276] : memref<1x44x16xf32, #tpu.memory_space<vmem>>, vector<1x44x16xf32>
    tpu.vector_store %arg10[%c0_274, %c0_275, %c0_276], %271 {strides = array<i32>} : memref<1x44x16xf32, #tpu.memory_space<vmem>>, vector<1x44x16xf32>,
    %c1_277 = arith.constant 1 : index
    %c0_278 = arith.constant 0 : index
    %c0_279 = arith.constant 0 : index
    %273 = vector.load %arg4[%c1_277, %c0_278, %c0_279] : memref<4x288x1xf32, #tpu.memory_space<vmem>>, vector<1x24x1xf32>
    %274 = vector.shape_cast %273 : vector<1x24x1xf32> to vector<24x1xf32>
    %275 = vector.broadcast %274 : vector<24x1xf32> to vector<24x16xf32>
    %276 = arith.mulf %270, %275 : vector<24x16xf32>
    %c0_280 = arith.constant 0 : index
    %c7_281 = arith.constant 7 : index
    %c0_282 = arith.constant 0 : index
    %277 = vector.load %arg10[%c0_280, %c7_281, %c0_282] : memref<1x44x16xf32, #tpu.memory_space<vmem>>, vector<1x24x16xf32>
    %278 = vector.shape_cast %277 : vector<1x24x16xf32> to vector<24x16xf32>
    %279 = vector.shape_cast %276 : vector<24x16xf32> to vector<1x24x16xf32>
    tpu.vector_store %arg10[%c0_280, %c7_281, %c0_282], %279 {strides = array<i32>} : memref<1x44x16xf32, #tpu.memory_space<vmem>>, vector<1x24x16xf32>,
    %c0_283 = arith.constant 0 : index
    %c0_284 = arith.constant 0 : index
    %c0_285 = arith.constant 0 : index
    %280 = vector.load %arg10[%c0_283, %c0_284, %c0_285] : memref<1x44x16xf32, #tpu.memory_space<vmem>>, vector<1x24x16xf32>
    %281 = vector.shape_cast %280 : vector<1x24x16xf32> to vector<24x16xf32>
    %c0_286 = arith.constant 0 : index
    %c0_287 = arith.constant 0 : index
    %c0_288 = arith.constant 0 : index
    %282 = vector.load %arg14[%c0_286, %c0_287, %c0_288] : memref<1x288x144xf32, #tpu.memory_space<vmem>>, vector<1x24x16xf32>
    %283 = vector.shape_cast %282 : vector<1x24x16xf32> to vector<24x16xf32>
    %284 = vector.shape_cast %281 : vector<24x16xf32> to vector<1x24x16xf32>
    tpu.vector_store %arg14[%c0_286, %c0_287, %c0_288], %284 {strides = array<i32>} : memref<1x288x144xf32, #tpu.memory_space<vmem>>, vector<1x24x16xf32>,
    %c0_289 = arith.constant 0 : index
    %c1_290 = arith.constant 1 : index
    %c0_291 = arith.constant 0 : index
    %285 = vector.load %arg10[%c0_289, %c1_290, %c0_291] : memref<1x44x16xf32, #tpu.memory_space<vmem>>, vector<1x24x16xf32>
    %286 = vector.shape_cast %285 : vector<1x24x16xf32> to vector<24x16xf32>
    %c0_292 = arith.constant 0 : index
    %c0_293 = arith.constant 0 : index
    %c16_294 = arith.constant 16 : index
    %287 = vector.load %arg14[%c0_292, %c0_293, %c16_294] : memref<1x288x144xf32, #tpu.memory_space<vmem>>, vector<1x24x16xf32>
    %288 = vector.shape_cast %287 : vector<1x24x16xf32> to vector<24x16xf32>
    %289 = vector.shape_cast %286 : vector<24x16xf32> to vector<1x24x16xf32>
    tpu.vector_store %arg14[%c0_292, %c0_293, %c16_294], %289 {strides = array<i32>} : memref<1x288x144xf32, #tpu.memory_space<vmem>>, vector<1x24x16xf32>,
    %c0_295 = arith.constant 0 : index
    %c2_296 = arith.constant 2 : index
    %c0_297 = arith.constant 0 : index
    %290 = vector.load %arg10[%c0_295, %c2_296, %c0_297] : memref<1x44x16xf32, #tpu.memory_space<vmem>>, vector<1x24x16xf32>
    %291 = vector.shape_cast %290 : vector<1x24x16xf32> to vector<24x16xf32>
    %c0_298 = arith.constant 0 : index
    %c0_299 = arith.constant 0 : index
    %c32_300 = arith.constant 32 : index
    %292 = vector.load %arg14[%c0_298, %c0_299, %c32_300] : memref<1x288x144xf32, #tpu.memory_space<vmem>>, vector<1x24x16xf32>
    %293 = vector.shape_cast %292 : vector<1x24x16xf32> to vector<24x16xf32>
    %294 = vector.shape_cast %291 : vector<24x16xf32> to vector<1x24x16xf32>
    tpu.vector_store %arg14[%c0_298, %c0_299, %c32_300], %294 {strides = array<i32>} : memref<1x288x144xf32, #tpu.memory_space<vmem>>, vector<1x24x16xf32>,
    %c0_301 = arith.constant 0 : index
    %c6_302 = arith.constant 6 : index
    %c0_303 = arith.constant 0 : index
    %295 = vector.load %arg10[%c0_301, %c6_302, %c0_303] : memref<1x44x16xf32, #tpu.memory_space<vmem>>, vector<1x24x16xf32>
    %296 = vector.shape_cast %295 : vector<1x24x16xf32> to vector<24x16xf32>
    %c0_304 = arith.constant 0 : index
    %c0_305 = arith.constant 0 : index
    %c48_306 = arith.constant 48 : index
    %297 = vector.load %arg14[%c0_304, %c0_305, %c48_306] : memref<1x288x144xf32, #tpu.memory_space<vmem>>, vector<1x24x16xf32>
    %298 = vector.shape_cast %297 : vector<1x24x16xf32> to vector<24x16xf32>
    %299 = vector.shape_cast %296 : vector<24x16xf32> to vector<1x24x16xf32>
    tpu.vector_store %arg14[%c0_304, %c0_305, %c48_306], %299 {strides = array<i32>} : memref<1x288x144xf32, #tpu.memory_space<vmem>>, vector<1x24x16xf32>,
    %c0_307 = arith.constant 0 : index
    %c7_308 = arith.constant 7 : index
    %c0_309 = arith.constant 0 : index
    %300 = vector.load %arg10[%c0_307, %c7_308, %c0_309] : memref<1x44x16xf32, #tpu.memory_space<vmem>>, vector<1x24x16xf32>
    %301 = vector.shape_cast %300 : vector<1x24x16xf32> to vector<24x16xf32>
    %c0_310 = arith.constant 0 : index
    %c0_311 = arith.constant 0 : index
    %c64_312 = arith.constant 64 : index
    %302 = vector.load %arg14[%c0_310, %c0_311, %c64_312] : memref<1x288x144xf32, #tpu.memory_space<vmem>>, vector<1x24x16xf32>
    %303 = vector.shape_cast %302 : vector<1x24x16xf32> to vector<24x16xf32>
    %304 = vector.shape_cast %301 : vector<24x16xf32> to vector<1x24x16xf32>
    tpu.vector_store %arg14[%c0_310, %c0_311, %c64_312], %304 {strides = array<i32>} : memref<1x288x144xf32, #tpu.memory_space<vmem>>, vector<1x24x16xf32>,
    %c0_313 = arith.constant 0 : index
    %c8_314 = arith.constant 8 : index
    %c0_315 = arith.constant 0 : index
    %305 = vector.load %arg10[%c0_313, %c8_314, %c0_315] : memref<1x44x16xf32, #tpu.memory_space<vmem>>, vector<1x24x16xf32>
    %306 = vector.shape_cast %305 : vector<1x24x16xf32> to vector<24x16xf32>
    %c0_316 = arith.constant 0 : index
    %c0_317 = arith.constant 0 : index
    %c80_318 = arith.constant 80 : index
    %307 = vector.load %arg14[%c0_316, %c0_317, %c80_318] : memref<1x288x144xf32, #tpu.memory_space<vmem>>, vector<1x24x16xf32>
    %308 = vector.shape_cast %307 : vector<1x24x16xf32> to vector<24x16xf32>
    %309 = vector.shape_cast %306 : vector<24x16xf32> to vector<1x24x16xf32>
    tpu.vector_store %arg14[%c0_316, %c0_317, %c80_318], %309 {strides = array<i32>} : memref<1x288x144xf32, #tpu.memory_space<vmem>>, vector<1x24x16xf32>,
    %c0_319 = arith.constant 0 : index
    %c12_320 = arith.constant 12 : index
    %c0_321 = arith.constant 0 : index
    %310 = vector.load %arg10[%c0_319, %c12_320, %c0_321] : memref<1x44x16xf32, #tpu.memory_space<vmem>>, vector<1x24x16xf32>
    %311 = vector.shape_cast %310 : vector<1x24x16xf32> to vector<24x16xf32>
    %c0_322 = arith.constant 0 : index
    %c0_323 = arith.constant 0 : index
    %c96_324 = arith.constant 96 : index
    %312 = vector.load %arg14[%c0_322, %c0_323, %c96_324] : memref<1x288x144xf32, #tpu.memory_space<vmem>>, vector<1x24x16xf32>
    %313 = vector.shape_cast %312 : vector<1x24x16xf32> to vector<24x16xf32>
    %314 = vector.shape_cast %311 : vector<24x16xf32> to vector<1x24x16xf32>
    tpu.vector_store %arg14[%c0_322, %c0_323, %c96_324], %314 {strides = array<i32>} : memref<1x288x144xf32, #tpu.memory_space<vmem>>, vector<1x24x16xf32>,
    %c0_325 = arith.constant 0 : index
    %c13_326 = arith.constant 13 : index
    %c0_327 = arith.constant 0 : index
    %315 = vector.load %arg10[%c0_325, %c13_326, %c0_327] : memref<1x44x16xf32, #tpu.memory_space<vmem>>, vector<1x24x16xf32>
    %316 = vector.shape_cast %315 : vector<1x24x16xf32> to vector<24x16xf32>
    %c0_328 = arith.constant 0 : index
    %c0_329 = arith.constant 0 : index
    %c112_330 = arith.constant 112 : index
    %317 = vector.load %arg14[%c0_328, %c0_329, %c112_330] : memref<1x288x144xf32, #tpu.memory_space<vmem>>, vector<1x24x16xf32>
    %318 = vector.shape_cast %317 : vector<1x24x16xf32> to vector<24x16xf32>
    %319 = vector.shape_cast %316 : vector<24x16xf32> to vector<1x24x16xf32>
    tpu.vector_store %arg14[%c0_328, %c0_329, %c112_330], %319 {strides = array<i32>} : memref<1x288x144xf32, #tpu.memory_space<vmem>>, vector<1x24x16xf32>,
    %c0_331 = arith.constant 0 : index
    %c14_332 = arith.constant 14 : index
    %c0_333 = arith.constant 0 : index
    %320 = vector.load %arg10[%c0_331, %c14_332, %c0_333] : memref<1x44x16xf32, #tpu.memory_space<vmem>>, vector<1x24x16xf32>
    %321 = vector.shape_cast %320 : vector<1x24x16xf32> to vector<24x16xf32>
    %c0_334 = arith.constant 0 : index
    %c0_335 = arith.constant 0 : index
    %c128_336 = arith.constant 128 : index
    %322 = vector.load %arg14[%c0_334, %c0_335, %c128_336] : memref<1x288x144xf32, #tpu.memory_space<vmem>>, vector<1x24x16xf32>
    %323 = vector.shape_cast %322 : vector<1x24x16xf32> to vector<24x16xf32>
    %324 = vector.shape_cast %321 : vector<24x16xf32> to vector<1x24x16xf32>
    tpu.vector_store %arg14[%c0_334, %c0_335, %c128_336], %324 {strides = array<i32>} : memref<1x288x144xf32, #tpu.memory_space<vmem>>, vector<1x24x16xf32>,
    %c0_337 = arith.constant 0 : index
    %c0_338 = arith.constant 0 : index
    %c0_339 = arith.constant 0 : index
    %325 = vector.load %arg14[%c0_337, %c0_338, %c0_339] : memref<1x288x144xf32, #tpu.memory_space<vmem>>, vector<1x24x144xf32>
    %326 = vector.shape_cast %325 : vector<1x24x144xf32> to vector<24x144xf32>
    %327 = arith.truncf %326 : vector<24x144xf32> to vector<24x144xbf16>
    %c4 = arith.constant 4 : index
    %c0_340 = arith.constant 0 : index
    %c0_341 = arith.constant 0 : index
    %328 = vector.load %arg2[%c4, %c0_340, %c0_341] : memref<8x144x16xbf16, #tpu.memory_space<vmem>>, vector<1x144x16xbf16>
    %329 = vector.shape_cast %328 : vector<1x144x16xbf16> to vector<144x16xbf16>
    %cst_342 = arith.constant dense<0.000000e+00> : vector<24x16xf32>
    %330 = tpu.matmul %327, %329, %cst_342 {dimension_numbers = #tpu.dot_dimension_numbers<[1], [0], [0], [1], [0, 0, 1, 1], [], []>} : vector<24x144xbf16>, vector<144x16xbf16>, vector<24x16xf32> -> vector<24x16xf32>
    %c4_343 = arith.constant 4 : index
    %c0_344 = arith.constant 0 : index
    %c0_345 = arith.constant 0 : index
    %331 = vector.load %arg3[%c4_343, %c0_344, %c0_345] : memref<8x2x16xf32, #tpu.memory_space<vmem>>, vector<1x1x16xf32>
    %332 = vector.shape_cast %331 : vector<1x1x16xf32> to vector<1x16xf32>
    %333 = vector.broadcast %332 : vector<1x16xf32> to vector<24x16xf32>
    %334 = arith.addf %330, %333 : vector<24x16xf32>
    %cst_346 = arith.constant 0.000000e+00 : f32
    %335 = vector.broadcast %cst_346 : f32 to vector<24x16xf32>
    %336 = arith.cmpf oge, %334, %335 : vector<24x16xf32>
    %c4_347 = arith.constant 4 : index
    %c1_348 = arith.constant 1 : index
    %c0_349 = arith.constant 0 : index
    %337 = vector.load %arg3[%c4_347, %c1_348, %c0_349] : memref<8x2x16xf32, #tpu.memory_space<vmem>>, vector<1x1x16xf32>
    %338 = vector.shape_cast %337 : vector<1x1x16xf32> to vector<1x16xf32>
    %339 = vector.broadcast %338 : vector<1x16xf32> to vector<24x16xf32>
    %340 = arith.mulf %339, %334 : vector<24x16xf32>
    %341 = arith.select %336, %334, %340 : vector<24x16xi1>, vector<24x16xf32>
    %cst_350 = arith.constant 0.000000e+00 : f32
    %342 = vector.broadcast %cst_350 : f32 to vector<1x332x16xf32>
    %c0_351 = arith.constant 0 : index
    %c0_352 = arith.constant 0 : index
    %c0_353 = arith.constant 0 : index
    %343 = vector.load %arg13[%c0_351, %c0_352, %c0_353] : memref<1x332x16xf32, #tpu.memory_space<vmem>>, vector<1x332x16xf32>
    tpu.vector_store %arg13[%c0_351, %c0_352, %c0_353], %342 {strides = array<i32>} : memref<1x332x16xf32, #tpu.memory_space<vmem>>, vector<1x332x16xf32>,
    %c0_354 = arith.constant 0 : index
    %c0_355 = arith.constant 0 : index
    %344 = vector.load %arg7[%c0_354, %c0_355] : memref<16x24xf32, #tpu.memory_space<vmem>>, vector<16x24xf32>
    %cst_356 = arith.constant dense<0.000000e+00> : vector<16x16xf32>
    %345 = tpu.matmul %344, %341, %cst_356 {dimension_numbers = #tpu.dot_dimension_numbers<[1], [0], [0], [1], [0, 0, 1, 1], [], []>} : vector<16x24xf32>, vector<24x16xf32>, vector<16x16xf32> -> vector<16x16xf32>
    %c0_357 = arith.constant 0 : index
    %c0_358 = arith.constant 0 : index
    %c0_359 = arith.constant 0 : index
    %346 = vector.load %arg13[%c0_357, %c0_358, %c0_359] : memref<1x332x16xf32, #tpu.memory_space<vmem>>, vector<1x16x16xf32>
    %347 = vector.shape_cast %346 : vector<1x16x16xf32> to vector<16x16xf32>
    %348 = vector.shape_cast %345 : vector<16x16xf32> to vector<1x16x16xf32>
    tpu.vector_store %arg13[%c0_357, %c0_358, %c0_359], %348 {strides = array<i32>} : memref<1x332x16xf32, #tpu.memory_space<vmem>>, vector<1x16x16xf32>,
    %c0_360 = arith.constant 0 : index
    %c0_361 = arith.constant 0 : index
    %c0_362 = arith.constant 0 : index
    %349 = vector.load %arg13[%c0_360, %c0_361, %c0_362] : memref<1x332x16xf32, #tpu.memory_space<vmem>>, vector<1x8x16xf32>
    %350 = vector.shape_cast %349 : vector<1x8x16xf32> to vector<8x16xf32>
    %c0_363 = arith.constant 0 : index
    %c0_364 = arith.constant 0 : index
    %c0_365 = arith.constant 0 : index
    %351 = vector.load %arg14[%c0_363, %c0_364, %c0_365] : memref<1x288x144xf32, #tpu.memory_space<vmem>>, vector<1x8x16xf32>
    %352 = vector.shape_cast %351 : vector<1x8x16xf32> to vector<8x16xf32>
    %353 = vector.shape_cast %350 : vector<8x16xf32> to vector<1x8x16xf32>
    tpu.vector_store %arg14[%c0_363, %c0_364, %c0_365], %353 {strides = array<i32>} : memref<1x288x144xf32, #tpu.memory_space<vmem>>, vector<1x8x16xf32>,
    %c0_366 = arith.constant 0 : index
    %c1_367 = arith.constant 1 : index
    %c0_368 = arith.constant 0 : index
    %354 = vector.load %arg13[%c0_366, %c1_367, %c0_368] : memref<1x332x16xf32, #tpu.memory_space<vmem>>, vector<1x8x16xf32>
    %355 = vector.shape_cast %354 : vector<1x8x16xf32> to vector<8x16xf32>
    %c0_369 = arith.constant 0 : index
    %c0_370 = arith.constant 0 : index
    %c16_371 = arith.constant 16 : index
    %356 = vector.load %arg14[%c0_369, %c0_370, %c16_371] : memref<1x288x144xf32, #tpu.memory_space<vmem>>, vector<1x8x16xf32>
    %357 = vector.shape_cast %356 : vector<1x8x16xf32> to vector<8x16xf32>
    %358 = vector.shape_cast %355 : vector<8x16xf32> to vector<1x8x16xf32>
    tpu.vector_store %arg14[%c0_369, %c0_370, %c16_371], %358 {strides = array<i32>} : memref<1x288x144xf32, #tpu.memory_space<vmem>>, vector<1x8x16xf32>,
    %c0_372 = arith.constant 0 : index
    %c2_373 = arith.constant 2 : index
    %c0_374 = arith.constant 0 : index
    %359 = vector.load %arg13[%c0_372, %c2_373, %c0_374] : memref<1x332x16xf32, #tpu.memory_space<vmem>>, vector<1x8x16xf32>
    %360 = vector.shape_cast %359 : vector<1x8x16xf32> to vector<8x16xf32>
    %c0_375 = arith.constant 0 : index
    %c0_376 = arith.constant 0 : index
    %c32_377 = arith.constant 32 : index
    %361 = vector.load %arg14[%c0_375, %c0_376, %c32_377] : memref<1x288x144xf32, #tpu.memory_space<vmem>>, vector<1x8x16xf32>
    %362 = vector.shape_cast %361 : vector<1x8x16xf32> to vector<8x16xf32>
    %363 = vector.shape_cast %360 : vector<8x16xf32> to vector<1x8x16xf32>
    tpu.vector_store %arg14[%c0_375, %c0_376, %c32_377], %363 {strides = array<i32>} : memref<1x288x144xf32, #tpu.memory_space<vmem>>, vector<1x8x16xf32>,
    %c0_378 = arith.constant 0 : index
    %c4_379 = arith.constant 4 : index
    %c0_380 = arith.constant 0 : index
    %364 = vector.load %arg13[%c0_378, %c4_379, %c0_380] : memref<1x332x16xf32, #tpu.memory_space<vmem>>, vector<1x8x16xf32>
    %365 = vector.shape_cast %364 : vector<1x8x16xf32> to vector<8x16xf32>
    %c0_381 = arith.constant 0 : index
    %c0_382 = arith.constant 0 : index
    %c48_383 = arith.constant 48 : index
    %366 = vector.load %arg14[%c0_381, %c0_382, %c48_383] : memref<1x288x144xf32, #tpu.memory_space<vmem>>, vector<1x8x16xf32>
    %367 = vector.shape_cast %366 : vector<1x8x16xf32> to vector<8x16xf32>
    %368 = vector.shape_cast %365 : vector<8x16xf32> to vector<1x8x16xf32>
    tpu.vector_store %arg14[%c0_381, %c0_382, %c48_383], %368 {strides = array<i32>} : memref<1x288x144xf32, #tpu.memory_space<vmem>>, vector<1x8x16xf32>,
    %c0_384 = arith.constant 0 : index
    %c5 = arith.constant 5 : index
    %c0_385 = arith.constant 0 : index
    %369 = vector.load %arg13[%c0_384, %c5, %c0_385] : memref<1x332x16xf32, #tpu.memory_space<vmem>>, vector<1x8x16xf32>
    %370 = vector.shape_cast %369 : vector<1x8x16xf32> to vector<8x16xf32>
    %c0_386 = arith.constant 0 : index
    %c0_387 = arith.constant 0 : index
    %c64_388 = arith.constant 64 : index
    %371 = vector.load %arg14[%c0_386, %c0_387, %c64_388] : memref<1x288x144xf32, #tpu.memory_space<vmem>>, vector<1x8x16xf32>
    %372 = vector.shape_cast %371 : vector<1x8x16xf32> to vector<8x16xf32>
    %373 = vector.shape_cast %370 : vector<8x16xf32> to vector<1x8x16xf32>
    tpu.vector_store %arg14[%c0_386, %c0_387, %c64_388], %373 {strides = array<i32>} : memref<1x288x144xf32, #tpu.memory_space<vmem>>, vector<1x8x16xf32>,
    %c0_389 = arith.constant 0 : index
    %c6_390 = arith.constant 6 : index
    %c0_391 = arith.constant 0 : index
    %374 = vector.load %arg13[%c0_389, %c6_390, %c0_391] : memref<1x332x16xf32, #tpu.memory_space<vmem>>, vector<1x8x16xf32>
    %375 = vector.shape_cast %374 : vector<1x8x16xf32> to vector<8x16xf32>
    %c0_392 = arith.constant 0 : index
    %c0_393 = arith.constant 0 : index
    %c80_394 = arith.constant 80 : index
    %376 = vector.load %arg14[%c0_392, %c0_393, %c80_394] : memref<1x288x144xf32, #tpu.memory_space<vmem>>, vector<1x8x16xf32>
    %377 = vector.shape_cast %376 : vector<1x8x16xf32> to vector<8x16xf32>
    %378 = vector.shape_cast %375 : vector<8x16xf32> to vector<1x8x16xf32>
    tpu.vector_store %arg14[%c0_392, %c0_393, %c80_394], %378 {strides = array<i32>} : memref<1x288x144xf32, #tpu.memory_space<vmem>>, vector<1x8x16xf32>,
    %c0_395 = arith.constant 0 : index
    %c8_396 = arith.constant 8 : index
    %c0_397 = arith.constant 0 : index
    %379 = vector.load %arg13[%c0_395, %c8_396, %c0_397] : memref<1x332x16xf32, #tpu.memory_space<vmem>>, vector<1x8x16xf32>
    %380 = vector.shape_cast %379 : vector<1x8x16xf32> to vector<8x16xf32>
    %c0_398 = arith.constant 0 : index
    %c0_399 = arith.constant 0 : index
    %c96_400 = arith.constant 96 : index
    %381 = vector.load %arg14[%c0_398, %c0_399, %c96_400] : memref<1x288x144xf32, #tpu.memory_space<vmem>>, vector<1x8x16xf32>
    %382 = vector.shape_cast %381 : vector<1x8x16xf32> to vector<8x16xf32>
    %383 = vector.shape_cast %380 : vector<8x16xf32> to vector<1x8x16xf32>
    tpu.vector_store %arg14[%c0_398, %c0_399, %c96_400], %383 {strides = array<i32>} : memref<1x288x144xf32, #tpu.memory_space<vmem>>, vector<1x8x16xf32>,
    %c0_401 = arith.constant 0 : index
    %c9 = arith.constant 9 : index
    %c0_402 = arith.constant 0 : index
    %384 = vector.load %arg13[%c0_401, %c9, %c0_402] : memref<1x332x16xf32, #tpu.memory_space<vmem>>, vector<1x8x16xf32>
    %385 = vector.shape_cast %384 : vector<1x8x16xf32> to vector<8x16xf32>
    %c0_403 = arith.constant 0 : index
    %c0_404 = arith.constant 0 : index
    %c112_405 = arith.constant 112 : index
    %386 = vector.load %arg14[%c0_403, %c0_404, %c112_405] : memref<1x288x144xf32, #tpu.memory_space<vmem>>, vector<1x8x16xf32>
    %387 = vector.shape_cast %386 : vector<1x8x16xf32> to vector<8x16xf32>
    %388 = vector.shape_cast %385 : vector<8x16xf32> to vector<1x8x16xf32>
    tpu.vector_store %arg14[%c0_403, %c0_404, %c112_405], %388 {strides = array<i32>} : memref<1x288x144xf32, #tpu.memory_space<vmem>>, vector<1x8x16xf32>,
    %c0_406 = arith.constant 0 : index
    %c10_407 = arith.constant 10 : index
    %c0_408 = arith.constant 0 : index
    %389 = vector.load %arg13[%c0_406, %c10_407, %c0_408] : memref<1x332x16xf32, #tpu.memory_space<vmem>>, vector<1x8x16xf32>
    %390 = vector.shape_cast %389 : vector<1x8x16xf32> to vector<8x16xf32>
    %c0_409 = arith.constant 0 : index
    %c0_410 = arith.constant 0 : index
    %c128_411 = arith.constant 128 : index
    %391 = vector.load %arg14[%c0_409, %c0_410, %c128_411] : memref<1x288x144xf32, #tpu.memory_space<vmem>>, vector<1x8x16xf32>
    %392 = vector.shape_cast %391 : vector<1x8x16xf32> to vector<8x16xf32>
    %393 = vector.shape_cast %390 : vector<8x16xf32> to vector<1x8x16xf32>
    tpu.vector_store %arg14[%c0_409, %c0_410, %c128_411], %393 {strides = array<i32>} : memref<1x288x144xf32, #tpu.memory_space<vmem>>, vector<1x8x16xf32>,
    %c0_412 = arith.constant 0 : index
    %c0_413 = arith.constant 0 : index
    %c0_414 = arith.constant 0 : index
    %394 = vector.load %arg14[%c0_412, %c0_413, %c0_414] : memref<1x288x144xf32, #tpu.memory_space<vmem>>, vector<1x8x144xf32>
    %395 = vector.shape_cast %394 : vector<1x8x144xf32> to vector<8x144xf32>
    %396 = arith.truncf %395 : vector<8x144xf32> to vector<8x144xbf16>
    %c5_415 = arith.constant 5 : index
    %c0_416 = arith.constant 0 : index
    %c0_417 = arith.constant 0 : index
    %397 = vector.load %arg2[%c5_415, %c0_416, %c0_417] : memref<8x144x16xbf16, #tpu.memory_space<vmem>>, vector<1x144x16xbf16>
    %398 = vector.shape_cast %397 : vector<1x144x16xbf16> to vector<144x16xbf16>
    %cst_418 = arith.constant dense<0.000000e+00> : vector<8x16xf32>
    %399 = tpu.matmul %396, %398, %cst_418 {dimension_numbers = #tpu.dot_dimension_numbers<[1], [0], [0], [1], [0, 0, 1, 1], [], []>} : vector<8x144xbf16>, vector<144x16xbf16>, vector<8x16xf32> -> vector<8x16xf32>
    %c5_419 = arith.constant 5 : index
    %c0_420 = arith.constant 0 : index
    %c0_421 = arith.constant 0 : index
    %400 = vector.load %arg3[%c5_419, %c0_420, %c0_421] : memref<8x2x16xf32, #tpu.memory_space<vmem>>, vector<1x1x16xf32>
    %401 = vector.shape_cast %400 : vector<1x1x16xf32> to vector<1x16xf32>
    %402 = vector.broadcast %401 : vector<1x16xf32> to vector<8x16xf32>
    %403 = arith.addf %399, %402 : vector<8x16xf32>
    %cst_422 = arith.constant 0.000000e+00 : f32
    %404 = vector.broadcast %cst_422 : f32 to vector<8x16xf32>
    %405 = arith.cmpf oge, %403, %404 : vector<8x16xf32>
    %c5_423 = arith.constant 5 : index
    %c1_424 = arith.constant 1 : index
    %c0_425 = arith.constant 0 : index
    %406 = vector.load %arg3[%c5_423, %c1_424, %c0_425] : memref<8x2x16xf32, #tpu.memory_space<vmem>>, vector<1x1x16xf32>
    %407 = vector.shape_cast %406 : vector<1x1x16xf32> to vector<1x16xf32>
    %408 = vector.broadcast %407 : vector<1x16xf32> to vector<8x16xf32>
    %409 = arith.mulf %408, %403 : vector<8x16xf32>
    %410 = arith.select %405, %403, %409 : vector<8x16xi1>, vector<8x16xf32>
    %cst_426 = arith.constant 0.000000e+00 : f32
    %411 = vector.broadcast %cst_426 : f32 to vector<1x24x16xf32>
    %c0_427 = arith.constant 0 : index
    %c0_428 = arith.constant 0 : index
    %c0_429 = arith.constant 0 : index
    %412 = vector.load %arg11[%c0_427, %c0_428, %c0_429] : memref<1x24x16xf32, #tpu.memory_space<vmem>>, vector<1x24x16xf32>
    tpu.vector_store %arg11[%c0_427, %c0_428, %c0_429], %411 {strides = array<i32>} : memref<1x24x16xf32, #tpu.memory_space<vmem>>, vector<1x24x16xf32>,
    %c2_430 = arith.constant 2 : index
    %c0_431 = arith.constant 0 : index
    %c0_432 = arith.constant 0 : index
    %413 = vector.load %arg4[%c2_430, %c0_431, %c0_432] : memref<4x288x1xf32, #tpu.memory_space<vmem>>, vector<1x8x1xf32>
    %414 = vector.shape_cast %413 : vector<1x8x1xf32> to vector<8x1xf32>
    %415 = vector.broadcast %414 : vector<8x1xf32> to vector<8x16xf32>
    %416 = arith.mulf %410, %415 : vector<8x16xf32>
    %c0_433 = arith.constant 0 : index
    %c5_434 = arith.constant 5 : index
    %c0_435 = arith.constant 0 : index
    %417 = vector.load %arg11[%c0_433, %c5_434, %c0_435] : memref<1x24x16xf32, #tpu.memory_space<vmem>>, vector<1x8x16xf32>
    %418 = vector.shape_cast %417 : vector<1x8x16xf32> to vector<8x16xf32>
    %419 = vector.shape_cast %416 : vector<8x16xf32> to vector<1x8x16xf32>
    tpu.vector_store %arg11[%c0_433, %c5_434, %c0_435], %419 {strides = array<i32>} : memref<1x24x16xf32, #tpu.memory_space<vmem>>, vector<1x8x16xf32>,
    %c0_436 = arith.constant 0 : index
    %c0_437 = arith.constant 0 : index
    %c0_438 = arith.constant 0 : index
    %420 = vector.load %arg11[%c0_436, %c0_437, %c0_438] : memref<1x24x16xf32, #tpu.memory_space<vmem>>, vector<1x8x16xf32>
    %421 = vector.shape_cast %420 : vector<1x8x16xf32> to vector<8x16xf32>
    %c0_439 = arith.constant 0 : index
    %c0_440 = arith.constant 0 : index
    %c0_441 = arith.constant 0 : index
    %422 = vector.load %arg14[%c0_439, %c0_440, %c0_441] : memref<1x288x144xf32, #tpu.memory_space<vmem>>, vector<1x8x16xf32>
    %423 = vector.shape_cast %422 : vector<1x8x16xf32> to vector<8x16xf32>
    %424 = vector.shape_cast %421 : vector<8x16xf32> to vector<1x8x16xf32>
    tpu.vector_store %arg14[%c0_439, %c0_440, %c0_441], %424 {strides = array<i32>} : memref<1x288x144xf32, #tpu.memory_space<vmem>>, vector<1x8x16xf32>,
    %c0_442 = arith.constant 0 : index
    %c1_443 = arith.constant 1 : index
    %c0_444 = arith.constant 0 : index
    %425 = vector.load %arg11[%c0_442, %c1_443, %c0_444] : memref<1x24x16xf32, #tpu.memory_space<vmem>>, vector<1x8x16xf32>
    %426 = vector.shape_cast %425 : vector<1x8x16xf32> to vector<8x16xf32>
    %c0_445 = arith.constant 0 : index
    %c0_446 = arith.constant 0 : index
    %c16_447 = arith.constant 16 : index
    %427 = vector.load %arg14[%c0_445, %c0_446, %c16_447] : memref<1x288x144xf32, #tpu.memory_space<vmem>>, vector<1x8x16xf32>
    %428 = vector.shape_cast %427 : vector<1x8x16xf32> to vector<8x16xf32>
    %429 = vector.shape_cast %426 : vector<8x16xf32> to vector<1x8x16xf32>
    tpu.vector_store %arg14[%c0_445, %c0_446, %c16_447], %429 {strides = array<i32>} : memref<1x288x144xf32, #tpu.memory_space<vmem>>, vector<1x8x16xf32>,
    %c0_448 = arith.constant 0 : index
    %c2_449 = arith.constant 2 : index
    %c0_450 = arith.constant 0 : index
    %430 = vector.load %arg11[%c0_448, %c2_449, %c0_450] : memref<1x24x16xf32, #tpu.memory_space<vmem>>, vector<1x8x16xf32>
    %431 = vector.shape_cast %430 : vector<1x8x16xf32> to vector<8x16xf32>
    %c0_451 = arith.constant 0 : index
    %c0_452 = arith.constant 0 : index
    %c32_453 = arith.constant 32 : index
    %432 = vector.load %arg14[%c0_451, %c0_452, %c32_453] : memref<1x288x144xf32, #tpu.memory_space<vmem>>, vector<1x8x16xf32>
    %433 = vector.shape_cast %432 : vector<1x8x16xf32> to vector<8x16xf32>
    %434 = vector.shape_cast %431 : vector<8x16xf32> to vector<1x8x16xf32>
    tpu.vector_store %arg14[%c0_451, %c0_452, %c32_453], %434 {strides = array<i32>} : memref<1x288x144xf32, #tpu.memory_space<vmem>>, vector<1x8x16xf32>,
    %c0_454 = arith.constant 0 : index
    %c4_455 = arith.constant 4 : index
    %c0_456 = arith.constant 0 : index
    %435 = vector.load %arg11[%c0_454, %c4_455, %c0_456] : memref<1x24x16xf32, #tpu.memory_space<vmem>>, vector<1x8x16xf32>
    %436 = vector.shape_cast %435 : vector<1x8x16xf32> to vector<8x16xf32>
    %c0_457 = arith.constant 0 : index
    %c0_458 = arith.constant 0 : index
    %c48_459 = arith.constant 48 : index
    %437 = vector.load %arg14[%c0_457, %c0_458, %c48_459] : memref<1x288x144xf32, #tpu.memory_space<vmem>>, vector<1x8x16xf32>
    %438 = vector.shape_cast %437 : vector<1x8x16xf32> to vector<8x16xf32>
    %439 = vector.shape_cast %436 : vector<8x16xf32> to vector<1x8x16xf32>
    tpu.vector_store %arg14[%c0_457, %c0_458, %c48_459], %439 {strides = array<i32>} : memref<1x288x144xf32, #tpu.memory_space<vmem>>, vector<1x8x16xf32>,
    %c0_460 = arith.constant 0 : index
    %c5_461 = arith.constant 5 : index
    %c0_462 = arith.constant 0 : index
    %440 = vector.load %arg11[%c0_460, %c5_461, %c0_462] : memref<1x24x16xf32, #tpu.memory_space<vmem>>, vector<1x8x16xf32>
    %441 = vector.shape_cast %440 : vector<1x8x16xf32> to vector<8x16xf32>
    %c0_463 = arith.constant 0 : index
    %c0_464 = arith.constant 0 : index
    %c64_465 = arith.constant 64 : index
    %442 = vector.load %arg14[%c0_463, %c0_464, %c64_465] : memref<1x288x144xf32, #tpu.memory_space<vmem>>, vector<1x8x16xf32>
    %443 = vector.shape_cast %442 : vector<1x8x16xf32> to vector<8x16xf32>
    %444 = vector.shape_cast %441 : vector<8x16xf32> to vector<1x8x16xf32>
    tpu.vector_store %arg14[%c0_463, %c0_464, %c64_465], %444 {strides = array<i32>} : memref<1x288x144xf32, #tpu.memory_space<vmem>>, vector<1x8x16xf32>,
    %c0_466 = arith.constant 0 : index
    %c6_467 = arith.constant 6 : index
    %c0_468 = arith.constant 0 : index
    %445 = vector.load %arg11[%c0_466, %c6_467, %c0_468] : memref<1x24x16xf32, #tpu.memory_space<vmem>>, vector<1x8x16xf32>
    %446 = vector.shape_cast %445 : vector<1x8x16xf32> to vector<8x16xf32>
    %c0_469 = arith.constant 0 : index
    %c0_470 = arith.constant 0 : index
    %c80_471 = arith.constant 80 : index
    %447 = vector.load %arg14[%c0_469, %c0_470, %c80_471] : memref<1x288x144xf32, #tpu.memory_space<vmem>>, vector<1x8x16xf32>
    %448 = vector.shape_cast %447 : vector<1x8x16xf32> to vector<8x16xf32>
    %449 = vector.shape_cast %446 : vector<8x16xf32> to vector<1x8x16xf32>
    tpu.vector_store %arg14[%c0_469, %c0_470, %c80_471], %449 {strides = array<i32>} : memref<1x288x144xf32, #tpu.memory_space<vmem>>, vector<1x8x16xf32>,
    %c0_472 = arith.constant 0 : index
    %c8_473 = arith.constant 8 : index
    %c0_474 = arith.constant 0 : index
    %450 = vector.load %arg11[%c0_472, %c8_473, %c0_474] : memref<1x24x16xf32, #tpu.memory_space<vmem>>, vector<1x8x16xf32>
    %451 = vector.shape_cast %450 : vector<1x8x16xf32> to vector<8x16xf32>
    %c0_475 = arith.constant 0 : index
    %c0_476 = arith.constant 0 : index
    %c96_477 = arith.constant 96 : index
    %452 = vector.load %arg14[%c0_475, %c0_476, %c96_477] : memref<1x288x144xf32, #tpu.memory_space<vmem>>, vector<1x8x16xf32>
    %453 = vector.shape_cast %452 : vector<1x8x16xf32> to vector<8x16xf32>
    %454 = vector.shape_cast %451 : vector<8x16xf32> to vector<1x8x16xf32>
    tpu.vector_store %arg14[%c0_475, %c0_476, %c96_477], %454 {strides = array<i32>} : memref<1x288x144xf32, #tpu.memory_space<vmem>>, vector<1x8x16xf32>,
    %c0_478 = arith.constant 0 : index
    %c9_479 = arith.constant 9 : index
    %c0_480 = arith.constant 0 : index
    %455 = vector.load %arg11[%c0_478, %c9_479, %c0_480] : memref<1x24x16xf32, #tpu.memory_space<vmem>>, vector<1x8x16xf32>
    %456 = vector.shape_cast %455 : vector<1x8x16xf32> to vector<8x16xf32>
    %c0_481 = arith.constant 0 : index
    %c0_482 = arith.constant 0 : index
    %c112_483 = arith.constant 112 : index
    %457 = vector.load %arg14[%c0_481, %c0_482, %c112_483] : memref<1x288x144xf32, #tpu.memory_space<vmem>>, vector<1x8x16xf32>
    %458 = vector.shape_cast %457 : vector<1x8x16xf32> to vector<8x16xf32>
    %459 = vector.shape_cast %456 : vector<8x16xf32> to vector<1x8x16xf32>
    tpu.vector_store %arg14[%c0_481, %c0_482, %c112_483], %459 {strides = array<i32>} : memref<1x288x144xf32, #tpu.memory_space<vmem>>, vector<1x8x16xf32>,
    %c0_484 = arith.constant 0 : index
    %c10_485 = arith.constant 10 : index
    %c0_486 = arith.constant 0 : index
    %460 = vector.load %arg11[%c0_484, %c10_485, %c0_486] : memref<1x24x16xf32, #tpu.memory_space<vmem>>, vector<1x8x16xf32>
    %461 = vector.shape_cast %460 : vector<1x8x16xf32> to vector<8x16xf32>
    %c0_487 = arith.constant 0 : index
    %c0_488 = arith.constant 0 : index
    %c128_489 = arith.constant 128 : index
    %462 = vector.load %arg14[%c0_487, %c0_488, %c128_489] : memref<1x288x144xf32, #tpu.memory_space<vmem>>, vector<1x8x16xf32>
    %463 = vector.shape_cast %462 : vector<1x8x16xf32> to vector<8x16xf32>
    %464 = vector.shape_cast %461 : vector<8x16xf32> to vector<1x8x16xf32>
    tpu.vector_store %arg14[%c0_487, %c0_488, %c128_489], %464 {strides = array<i32>} : memref<1x288x144xf32, #tpu.memory_space<vmem>>, vector<1x8x16xf32>,
    %c0_490 = arith.constant 0 : index
    %c0_491 = arith.constant 0 : index
    %c0_492 = arith.constant 0 : index
    %465 = vector.load %arg14[%c0_490, %c0_491, %c0_492] : memref<1x288x144xf32, #tpu.memory_space<vmem>>, vector<1x8x144xf32>
    %466 = vector.shape_cast %465 : vector<1x8x144xf32> to vector<8x144xf32>
    %467 = arith.truncf %466 : vector<8x144xf32> to vector<8x144xbf16>
    %c6_493 = arith.constant 6 : index
    %c0_494 = arith.constant 0 : index
    %c0_495 = arith.constant 0 : index
    %468 = vector.load %arg2[%c6_493, %c0_494, %c0_495] : memref<8x144x16xbf16, #tpu.memory_space<vmem>>, vector<1x144x16xbf16>
    %469 = vector.shape_cast %468 : vector<1x144x16xbf16> to vector<144x16xbf16>
    %cst_496 = arith.constant dense<0.000000e+00> : vector<8x16xf32>
    %470 = tpu.matmul %467, %469, %cst_496 {dimension_numbers = #tpu.dot_dimension_numbers<[1], [0], [0], [1], [0, 0, 1, 1], [], []>} : vector<8x144xbf16>, vector<144x16xbf16>, vector<8x16xf32> -> vector<8x16xf32>
    %c6_497 = arith.constant 6 : index
    %c0_498 = arith.constant 0 : index
    %c0_499 = arith.constant 0 : index
    %471 = vector.load %arg3[%c6_497, %c0_498, %c0_499] : memref<8x2x16xf32, #tpu.memory_space<vmem>>, vector<1x1x16xf32>
    %472 = vector.shape_cast %471 : vector<1x1x16xf32> to vector<1x16xf32>
    %473 = vector.broadcast %472 : vector<1x16xf32> to vector<8x16xf32>
    %474 = arith.addf %470, %473 : vector<8x16xf32>
    %cst_500 = arith.constant 0.000000e+00 : f32
    %475 = vector.broadcast %cst_500 : f32 to vector<8x16xf32>
    %476 = arith.cmpf oge, %474, %475 : vector<8x16xf32>
    %c6_501 = arith.constant 6 : index
    %c1_502 = arith.constant 1 : index
    %c0_503 = arith.constant 0 : index
    %477 = vector.load %arg3[%c6_501, %c1_502, %c0_503] : memref<8x2x16xf32, #tpu.memory_space<vmem>>, vector<1x1x16xf32>
    %478 = vector.shape_cast %477 : vector<1x1x16xf32> to vector<1x16xf32>
    %479 = vector.broadcast %478 : vector<1x16xf32> to vector<8x16xf32>
    %480 = arith.mulf %479, %474 : vector<8x16xf32>
    %481 = arith.select %476, %474, %480 : vector<8x16xi1>, vector<8x16xf32>
    %cst_504 = arith.constant 0.000000e+00 : f32
    %482 = vector.broadcast %cst_504 : f32 to vector<1x332x16xf32>
    %c0_505 = arith.constant 0 : index
    %c0_506 = arith.constant 0 : index
    %c0_507 = arith.constant 0 : index
    %483 = vector.load %arg13[%c0_505, %c0_506, %c0_507] : memref<1x332x16xf32, #tpu.memory_space<vmem>>, vector<1x332x16xf32>
    tpu.vector_store %arg13[%c0_505, %c0_506, %c0_507], %482 {strides = array<i32>} : memref<1x332x16xf32, #tpu.memory_space<vmem>>, vector<1x332x16xf32>,
    %c0_508 = arith.constant 0 : index
    %c0_509 = arith.constant 0 : index
    %484 = vector.load %arg8[%c0_508, %c0_509] : memref<9x8xf32, #tpu.memory_space<vmem>>, vector<9x8xf32>
    %cst_510 = arith.constant dense<0.000000e+00> : vector<9x16xf32>
    %485 = tpu.matmul %484, %481, %cst_510 {dimension_numbers = #tpu.dot_dimension_numbers<[1], [0], [0], [1], [0, 0, 1, 1], [], []>} : vector<9x8xf32>, vector<8x16xf32>, vector<9x16xf32> -> vector<9x16xf32>
    %c0_511 = arith.constant 0 : index
    %c0_512 = arith.constant 0 : index
    %c0_513 = arith.constant 0 : index
    %486 = vector.load %arg13[%c0_511, %c0_512, %c0_513] : memref<1x332x16xf32, #tpu.memory_space<vmem>>, vector<1x9x16xf32>
    %487 = vector.shape_cast %486 : vector<1x9x16xf32> to vector<9x16xf32>
    %488 = vector.shape_cast %485 : vector<9x16xf32> to vector<1x9x16xf32>
    tpu.vector_store %arg13[%c0_511, %c0_512, %c0_513], %488 {strides = array<i32>} : memref<1x332x16xf32, #tpu.memory_space<vmem>>, vector<1x9x16xf32>,
    %c0_514 = arith.constant 0 : index
    %c0_515 = arith.constant 0 : index
    %c0_516 = arith.constant 0 : index
    %489 = vector.load %arg13[%c0_514, %c0_515, %c0_516] : memref<1x332x16xf32, #tpu.memory_space<vmem>>, vector<1x3x16xf32>
    %490 = vector.shape_cast %489 : vector<1x3x16xf32> to vector<3x16xf32>
    %c0_517 = arith.constant 0 : index
    %c0_518 = arith.constant 0 : index
    %c0_519 = arith.constant 0 : index
    %491 = vector.load %arg14[%c0_517, %c0_518, %c0_519] : memref<1x288x144xf32, #tpu.memory_space<vmem>>, vector<1x3x16xf32>
    %492 = vector.shape_cast %491 : vector<1x3x16xf32> to vector<3x16xf32>
    %493 = vector.shape_cast %490 : vector<3x16xf32> to vector<1x3x16xf32>
    tpu.vector_store %arg14[%c0_517, %c0_518, %c0_519], %493 {strides = array<i32>} : memref<1x288x144xf32, #tpu.memory_space<vmem>>, vector<1x3x16xf32>,
    %c0_520 = arith.constant 0 : index
    %c1_521 = arith.constant 1 : index
    %c0_522 = arith.constant 0 : index
    %494 = vector.load %arg13[%c0_520, %c1_521, %c0_522] : memref<1x332x16xf32, #tpu.memory_space<vmem>>, vector<1x3x16xf32>
    %495 = vector.shape_cast %494 : vector<1x3x16xf32> to vector<3x16xf32>
    %c0_523 = arith.constant 0 : index
    %c0_524 = arith.constant 0 : index
    %c16_525 = arith.constant 16 : index
    %496 = vector.load %arg14[%c0_523, %c0_524, %c16_525] : memref<1x288x144xf32, #tpu.memory_space<vmem>>, vector<1x3x16xf32>
    %497 = vector.shape_cast %496 : vector<1x3x16xf32> to vector<3x16xf32>
    %498 = vector.shape_cast %495 : vector<3x16xf32> to vector<1x3x16xf32>
    tpu.vector_store %arg14[%c0_523, %c0_524, %c16_525], %498 {strides = array<i32>} : memref<1x288x144xf32, #tpu.memory_space<vmem>>, vector<1x3x16xf32>,
    %c0_526 = arith.constant 0 : index
    %c2_527 = arith.constant 2 : index
    %c0_528 = arith.constant 0 : index
    %499 = vector.load %arg13[%c0_526, %c2_527, %c0_528] : memref<1x332x16xf32, #tpu.memory_space<vmem>>, vector<1x3x16xf32>
    %500 = vector.shape_cast %499 : vector<1x3x16xf32> to vector<3x16xf32>
    %c0_529 = arith.constant 0 : index
    %c0_530 = arith.constant 0 : index
    %c32_531 = arith.constant 32 : index
    %501 = vector.load %arg14[%c0_529, %c0_530, %c32_531] : memref<1x288x144xf32, #tpu.memory_space<vmem>>, vector<1x3x16xf32>
    %502 = vector.shape_cast %501 : vector<1x3x16xf32> to vector<3x16xf32>
    %503 = vector.shape_cast %500 : vector<3x16xf32> to vector<1x3x16xf32>
    tpu.vector_store %arg14[%c0_529, %c0_530, %c32_531], %503 {strides = array<i32>} : memref<1x288x144xf32, #tpu.memory_space<vmem>>, vector<1x3x16xf32>,
    %c0_532 = arith.constant 0 : index
    %c3_533 = arith.constant 3 : index
    %c0_534 = arith.constant 0 : index
    %504 = vector.load %arg13[%c0_532, %c3_533, %c0_534] : memref<1x332x16xf32, #tpu.memory_space<vmem>>, vector<1x3x16xf32>
    %505 = vector.shape_cast %504 : vector<1x3x16xf32> to vector<3x16xf32>
    %c0_535 = arith.constant 0 : index
    %c0_536 = arith.constant 0 : index
    %c48_537 = arith.constant 48 : index
    %506 = vector.load %arg14[%c0_535, %c0_536, %c48_537] : memref<1x288x144xf32, #tpu.memory_space<vmem>>, vector<1x3x16xf32>
    %507 = vector.shape_cast %506 : vector<1x3x16xf32> to vector<3x16xf32>
    %508 = vector.shape_cast %505 : vector<3x16xf32> to vector<1x3x16xf32>
    tpu.vector_store %arg14[%c0_535, %c0_536, %c48_537], %508 {strides = array<i32>} : memref<1x288x144xf32, #tpu.memory_space<vmem>>, vector<1x3x16xf32>,
    %c0_538 = arith.constant 0 : index
    %c4_539 = arith.constant 4 : index
    %c0_540 = arith.constant 0 : index
    %509 = vector.load %arg13[%c0_538, %c4_539, %c0_540] : memref<1x332x16xf32, #tpu.memory_space<vmem>>, vector<1x3x16xf32>
    %510 = vector.shape_cast %509 : vector<1x3x16xf32> to vector<3x16xf32>
    %c0_541 = arith.constant 0 : index
    %c0_542 = arith.constant 0 : index
    %c64_543 = arith.constant 64 : index
    %511 = vector.load %arg14[%c0_541, %c0_542, %c64_543] : memref<1x288x144xf32, #tpu.memory_space<vmem>>, vector<1x3x16xf32>
    %512 = vector.shape_cast %511 : vector<1x3x16xf32> to vector<3x16xf32>
    %513 = vector.shape_cast %510 : vector<3x16xf32> to vector<1x3x16xf32>
    tpu.vector_store %arg14[%c0_541, %c0_542, %c64_543], %513 {strides = array<i32>} : memref<1x288x144xf32, #tpu.memory_space<vmem>>, vector<1x3x16xf32>,
    %c0_544 = arith.constant 0 : index
    %c5_545 = arith.constant 5 : index
    %c0_546 = arith.constant 0 : index
    %514 = vector.load %arg13[%c0_544, %c5_545, %c0_546] : memref<1x332x16xf32, #tpu.memory_space<vmem>>, vector<1x3x16xf32>
    %515 = vector.shape_cast %514 : vector<1x3x16xf32> to vector<3x16xf32>
    %c0_547 = arith.constant 0 : index
    %c0_548 = arith.constant 0 : index
    %c80_549 = arith.constant 80 : index
    %516 = vector.load %arg14[%c0_547, %c0_548, %c80_549] : memref<1x288x144xf32, #tpu.memory_space<vmem>>, vector<1x3x16xf32>
    %517 = vector.shape_cast %516 : vector<1x3x16xf32> to vector<3x16xf32>
    %518 = vector.shape_cast %515 : vector<3x16xf32> to vector<1x3x16xf32>
    tpu.vector_store %arg14[%c0_547, %c0_548, %c80_549], %518 {strides = array<i32>} : memref<1x288x144xf32, #tpu.memory_space<vmem>>, vector<1x3x16xf32>,
    %c0_550 = arith.constant 0 : index
    %c6_551 = arith.constant 6 : index
    %c0_552 = arith.constant 0 : index
    %519 = vector.load %arg13[%c0_550, %c6_551, %c0_552] : memref<1x332x16xf32, #tpu.memory_space<vmem>>, vector<1x3x16xf32>
    %520 = vector.shape_cast %519 : vector<1x3x16xf32> to vector<3x16xf32>
    %c0_553 = arith.constant 0 : index
    %c0_554 = arith.constant 0 : index
    %c96_555 = arith.constant 96 : index
    %521 = vector.load %arg14[%c0_553, %c0_554, %c96_555] : memref<1x288x144xf32, #tpu.memory_space<vmem>>, vector<1x3x16xf32>
    %522 = vector.shape_cast %521 : vector<1x3x16xf32> to vector<3x16xf32>
    %523 = vector.shape_cast %520 : vector<3x16xf32> to vector<1x3x16xf32>
    tpu.vector_store %arg14[%c0_553, %c0_554, %c96_555], %523 {strides = array<i32>} : memref<1x288x144xf32, #tpu.memory_space<vmem>>, vector<1x3x16xf32>,
    %c0_556 = arith.constant 0 : index
    %c7_557 = arith.constant 7 : index
    %c0_558 = arith.constant 0 : index
    %524 = vector.load %arg13[%c0_556, %c7_557, %c0_558] : memref<1x332x16xf32, #tpu.memory_space<vmem>>, vector<1x3x16xf32>
    %525 = vector.shape_cast %524 : vector<1x3x16xf32> to vector<3x16xf32>
    %c0_559 = arith.constant 0 : index
    %c0_560 = arith.constant 0 : index
    %c112_561 = arith.constant 112 : index
    %526 = vector.load %arg14[%c0_559, %c0_560, %c112_561] : memref<1x288x144xf32, #tpu.memory_space<vmem>>, vector<1x3x16xf32>
    %527 = vector.shape_cast %526 : vector<1x3x16xf32> to vector<3x16xf32>
    %528 = vector.shape_cast %525 : vector<3x16xf32> to vector<1x3x16xf32>
    tpu.vector_store %arg14[%c0_559, %c0_560, %c112_561], %528 {strides = array<i32>} : memref<1x288x144xf32, #tpu.memory_space<vmem>>, vector<1x3x16xf32>,
    %c0_562 = arith.constant 0 : index
    %c8_563 = arith.constant 8 : index
    %c0_564 = arith.constant 0 : index
    %529 = vector.load %arg13[%c0_562, %c8_563, %c0_564] : memref<1x332x16xf32, #tpu.memory_space<vmem>>, vector<1x3x16xf32>
    %530 = vector.shape_cast %529 : vector<1x3x16xf32> to vector<3x16xf32>
    %c0_565 = arith.constant 0 : index
    %c0_566 = arith.constant 0 : index
    %c128_567 = arith.constant 128 : index
    %531 = vector.load %arg14[%c0_565, %c0_566, %c128_567] : memref<1x288x144xf32, #tpu.memory_space<vmem>>, vector<1x3x16xf32>
    %532 = vector.shape_cast %531 : vector<1x3x16xf32> to vector<3x16xf32>
    %533 = vector.shape_cast %530 : vector<3x16xf32> to vector<1x3x16xf32>
    tpu.vector_store %arg14[%c0_565, %c0_566, %c128_567], %533 {strides = array<i32>} : memref<1x288x144xf32, #tpu.memory_space<vmem>>, vector<1x3x16xf32>,
    %c0_568 = arith.constant 0 : index
    %c0_569 = arith.constant 0 : index
    %c0_570 = arith.constant 0 : index
    %534 = vector.load %arg14[%c0_568, %c0_569, %c0_570] : memref<1x288x144xf32, #tpu.memory_space<vmem>>, vector<1x3x144xf32>
    %535 = vector.shape_cast %534 : vector<1x3x144xf32> to vector<3x144xf32>
    %536 = arith.truncf %535 : vector<3x144xf32> to vector<3x144xbf16>
    %c7_571 = arith.constant 7 : index
    %c0_572 = arith.constant 0 : index
    %c0_573 = arith.constant 0 : index
    %537 = vector.load %arg2[%c7_571, %c0_572, %c0_573] : memref<8x144x16xbf16, #tpu.memory_space<vmem>>, vector<1x144x16xbf16>
    %538 = vector.shape_cast %537 : vector<1x144x16xbf16> to vector<144x16xbf16>
    %cst_574 = arith.constant dense<0.000000e+00> : vector<3x16xf32>
    %539 = tpu.matmul %536, %538, %cst_574 {dimension_numbers = #tpu.dot_dimension_numbers<[1], [0], [0], [1], [0, 0, 1, 1], [], []>} : vector<3x144xbf16>, vector<144x16xbf16>, vector<3x16xf32> -> vector<3x16xf32>
    %c7_575 = arith.constant 7 : index
    %c0_576 = arith.constant 0 : index
    %c0_577 = arith.constant 0 : index
    %540 = vector.load %arg3[%c7_575, %c0_576, %c0_577] : memref<8x2x16xf32, #tpu.memory_space<vmem>>, vector<1x1x16xf32>
    %541 = vector.shape_cast %540 : vector<1x1x16xf32> to vector<1x16xf32>
    %542 = vector.broadcast %541 : vector<1x16xf32> to vector<3x16xf32>
    %543 = arith.addf %539, %542 : vector<3x16xf32>
    %cst_578 = arith.constant 0.000000e+00 : f32
    %544 = vector.broadcast %cst_578 : f32 to vector<3x16xf32>
    %545 = arith.cmpf oge, %543, %544 : vector<3x16xf32>
    %c7_579 = arith.constant 7 : index
    %c1_580 = arith.constant 1 : index
    %c0_581 = arith.constant 0 : index
    %546 = vector.load %arg3[%c7_579, %c1_580, %c0_581] : memref<8x2x16xf32, #tpu.memory_space<vmem>>, vector<1x1x16xf32>
    %547 = vector.shape_cast %546 : vector<1x1x16xf32> to vector<1x16xf32>
    %548 = vector.broadcast %547 : vector<1x16xf32> to vector<3x16xf32>
    %549 = arith.mulf %548, %543 : vector<3x16xf32>
    %550 = arith.select %545, %543, %549 : vector<3x16xi1>, vector<3x16xf32>
    %cst_582 = arith.constant 0.000000e+00 : f32
    %551 = vector.broadcast %cst_582 : f32 to vector<1x17x16xf32>
    %c0_583 = arith.constant 0 : index
    %c0_584 = arith.constant 0 : index
    %c0_585 = arith.constant 0 : index
    %552 = vector.load %arg12[%c0_583, %c0_584, %c0_585] : memref<1x17x16xf32, #tpu.memory_space<vmem>>, vector<1x17x16xf32>
    tpu.vector_store %arg12[%c0_583, %c0_584, %c0_585], %551 {strides = array<i32>} : memref<1x17x16xf32, #tpu.memory_space<vmem>>, vector<1x17x16xf32>,
    %c3_586 = arith.constant 3 : index
    %c0_587 = arith.constant 0 : index
    %c0_588 = arith.constant 0 : index
    %553 = vector.load %arg4[%c3_586, %c0_587, %c0_588] : memref<4x288x1xf32, #tpu.memory_space<vmem>>, vector<1x3x1xf32>
    %554 = vector.shape_cast %553 : vector<1x3x1xf32> to vector<3x1xf32>
    %555 = vector.broadcast %554 : vector<3x1xf32> to vector<3x16xf32>
    %556 = arith.mulf %550, %555 : vector<3x16xf32>
    %c0_589 = arith.constant 0 : index
    %c4_590 = arith.constant 4 : index
    %c0_591 = arith.constant 0 : index
    %557 = vector.load %arg12[%c0_589, %c4_590, %c0_591] : memref<1x17x16xf32, #tpu.memory_space<vmem>>, vector<1x3x16xf32>
    %558 = vector.shape_cast %557 : vector<1x3x16xf32> to vector<3x16xf32>
    %559 = vector.shape_cast %556 : vector<3x16xf32> to vector<1x3x16xf32>
    tpu.vector_store %arg12[%c0_589, %c4_590, %c0_591], %559 {strides = array<i32>} : memref<1x17x16xf32, #tpu.memory_space<vmem>>, vector<1x3x16xf32>,
    return
  }
  func.func @transform_0(%arg0: i32) -> (i32, i32, i32) {
    %c0_i32 = arith.constant 0 : i32
    %c0_i32_0 = arith.constant 0 : i32
    %c0_i32_1 = arith.constant 0 : i32
    return %arg0, %c0_i32, %c0_i32_0 : i32, i32, i32
  }
  func.func @transform_1(%arg0: i32) -> (i32, i32, i32) {
    %c0_i32 = arith.constant 0 : i32
    %c0_i32_0 = arith.constant 0 : i32
    %c0_i32_1 = arith.constant 0 : i32
    %c0_i32_2 = arith.constant 0 : i32
    return %c0_i32, %c0_i32_0, %c0_i32_1 : i32, i32, i32
  }
  func.func @transform_2(%arg0: i32) -> (i32, i32, i32) {
    %c0_i32 = arith.constant 0 : i32
    %c0_i32_0 = arith.constant 0 : i32
    %c0_i32_1 = arith.constant 0 : i32
    %c0_i32_2 = arith.constant 0 : i32
    return %c0_i32, %c0_i32_0, %c0_i32_1 : i32, i32, i32
  }
  func.func @transform_3(%arg0: i32) -> (i32, i32, i32) {
    %c0_i32 = arith.constant 0 : i32
    %c0_i32_0 = arith.constant 0 : i32
    %c0_i32_1 = arith.constant 0 : i32
    %c0_i32_2 = arith.constant 0 : i32
    return %c0_i32, %c0_i32_0, %c0_i32_1 : i32, i32, i32
  }
  func.func @transform_4(%arg0: i32) -> (i32, i32) {
    %c0_i32 = arith.constant 0 : i32
    %c0_i32_0 = arith.constant 0 : i32
    %c0_i32_1 = arith.constant 0 : i32
    return %c0_i32, %c0_i32_0 : i32, i32
  }
  func.func @transform_5(%arg0: i32) -> (i32, i32) {
    %c0_i32 = arith.constant 0 : i32
    %c0_i32_0 = arith.constant 0 : i32
    %c0_i32_1 = arith.constant 0 : i32
    return %c0_i32, %c0_i32_0 : i32, i32
  }
  func.func @transform_6(%arg0: i32) -> (i32, i32) {
    %c0_i32 = arith.constant 0 : i32
    %c0_i32_0 = arith.constant 0 : i32
    %c0_i32_1 = arith.constant 0 : i32
    return %c0_i32, %c0_i32_0 : i32, i32
  }
  func.func @transform_7(%arg0: i32) -> (i32, i32) {
    %c0_i32 = arith.constant 0 : i32
    %c0_i32_0 = arith.constant 0 : i32
    %c0_i32_1 = arith.constant 0 : i32
    return %c0_i32, %c0_i32_0 : i32, i32
  }
  func.func @transform_8(%arg0: i32) -> (i32, i32, i32) {
    %c0_i32 = arith.constant 0 : i32
    %c0_i32_0 = arith.constant 0 : i32
    %c0_i32_1 = arith.constant 0 : i32
    return %arg0, %c0_i32, %c0_i32_0 : i32, i32, i32
  }
  func.func @transform_9(%arg0: i32) -> (i32, i32, i32) {
    %c0_i32 = arith.constant 0 : i32
    %c0_i32_0 = arith.constant 0 : i32
    %c0_i32_1 = arith.constant 0 : i32
    return %arg0, %c0_i32, %c0_i32_0 : i32, i32, i32
  }
  func.func @transform_10(%arg0: i32) -> (i32, i32, i32) {
    %c0_i32 = arith.constant 0 : i32
    %c0_i32_0 = arith.constant 0 : i32
    %c0_i32_1 = arith.constant 0 : i32
    return %arg0, %c0_i32, %c0_i32_0 : i32, i32, i32
  }
  func.func @transform_11(%arg0: i32) -> (i32, i32, i32) {
    %c0_i32 = arith.constant 0 : i32
    %c0_i32_0 = arith.constant 0 : i32
    %c0_i32_1 = arith.constant 0 : i32
    return %arg0, %c0_i32, %c0_i32_0 : i32, i32, i32
  }
}

</mosaic_0001>

<llo_original>
// kernel: res_encoder_forward.1
$region0: #{res_encoder_forward.1}
  #allocation0 [shape = 'u32[]', space=smem, size = 0x4, offset = 0x4, fixed_abs, tag = 'smem constant byte address 0x4 - core index']
  #allocation1 [shape = 'u32[72,128]{1,0:T(1,128)}', space=vmem, size = 0x9000, scoped, tag = 'internal scratch']
  #allocation2 [shape = 'f32[1,332,16]{2,1,0:T(8,128)}', space=vmem, size = 0x2a000, scoped, tag = 'scratch operand']
  #allocation3 [shape = 'f32[1,288,144]{2,1,0:T(8,128)}', space=vmem, size = 0x48000, scoped, tag = 'scratch operand']
  %s0 = inlined_call_operand.vmem [shape: f32[2,332,16], index: 0, kind: input, shape index: {}]
  %s1 = inlined_call_operand.vmem [shape: bf16[8,144,16], index: 1, kind: input, shape index: {}]
  %s2 = inlined_call_operand.vmem [shape: f32[8,2,16], index: 2, kind: input, shape index: {}]
  %s3 = inlined_call_operand.vmem [shape: f32[4,288,1], index: 3, kind: input, shape index: {}]
  %s4 = inlined_call_operand.vmem [shape: f32[100,288], index: 4, kind: input, shape index: {}]
  %s5 = inlined_call_operand.vmem [shape: f32[36,80], index: 5, kind: input, shape index: {}]
  %s6 = inlined_call_operand.vmem [shape: f32[16,24], index: 6, kind: input, shape index: {}]
  %s7 = inlined_call_operand.vmem [shape: f32[9,8], index: 7, kind: input, shape index: {}]
  %s8 = inlined_call_operand.vmem [shape: f32[2,108,16], index: 8, kind: output, shape index: {0}]
  %s9 = inlined_call_operand.vmem [shape: f32[2,44,16], index: 9, kind: output, shape index: {1}]
  %s10 = inlined_call_operand.vmem [shape: f32[2,24,16], index: 10, kind: output, shape index: {2}]
  %s11 = inlined_call_operand.vmem [shape: f32[2,17,16], index: 11, kind: output, shape index: {3}]
  %12 = xla_tuple %s8, %s9, %s10, %s11
  %s13 = sld [smem:[#allocation0]]
  $region89: #{res_encoder_forward.1} parent=0
    _
  %s15 = ssub.s32 1, %s13
  %s16 = scalar_select 0, %s15, %s13
  loop: start=0, step=1, limit=4
  $region2: #{res_encoder_forward.1} parent=0 // loop_pre_header
    _
  $region3: #{res_encoder_forward.1} parent=0 // loop_header
    %s18 = sphi 0, %s22
    %p19 = scmp.ge.s32.totalorder %s18, 4
    %s28 = sphi 0, %s30
    %s31 = sphi 0, %s28
    %s32 = sphi 0, %s31
    %s48 = sphi 0, %s32
    %s52 = sphi 0, %s52
    %s54 = sphi 0, %s52
    %s55 = sphi 0, %s54
    %s69 = sphi 0, %s55
    %s73 = sphi 0, %s73
    %s75 = sphi 0, %s73
    %s76 = sphi 0, %s75
    %s90 = sphi 0, %s76
    %s94 = sphi 0, %s94
    %s96 = sphi 0, %s94
    %s97 = sphi 0, %s96
    %s111 = sphi 0, %s97
    %s115 = sphi 0, %s115
    %s117 = sphi 0, %s115
    %s118 = sphi 0, %s117
    %s132 = sphi 0, %s118
    %s136 = sphi 0, %s136
    %s138 = sphi 0, %s136
    %s139 = sphi 0, %s138
    %s153 = sphi 0, %s139
    %s157 = sphi 0, %s157
    %s159 = sphi 0, %s157
    %s160 = sphi 0, %s159
    %s174 = sphi 0, %s160
    %s178 = sphi 0, %s178
    %s180 = sphi 0, %s178
    %s181 = sphi 0, %s180
    %s195 = sphi 0, %s181
    %s201 = sphi 0, %s203
    %s204 = sphi 0, %s201
    %s205 = sphi 0, %s204
    %s221 = sphi 0, %s205
    %s227 = sphi 0, %s229
    %s230 = sphi 0, %s227
    %s231 = sphi 0, %s230
    %s247 = sphi 0, %s231
    %s253 = sphi 0, %s255
    %s256 = sphi 0, %s253
    %s257 = sphi 0, %s256
    %s273 = sphi 0, %s257
    %s279 = sphi 0, %s281
    %s282 = sphi 0, %s279
    %s283 = sphi 0, %s282
    %s299 = sphi 0, %s283
  $region4: #{res_encoder_forward.1} parent=0 // loop_header_branch
    %21 = sbr.rel (%p19) target = $region8
  $region5: #{res_encoder_forward.1} parent=0 // loop_body
    %s23 = ssub.s32 %s18, 1
    %s24 = ssub.s32 %s18, 2
    %s25 = sadd.s32 %s18, 1
    %s26 = ssub.s32 %s18, %s25
    %p27 = scmp.eq.s32.totalorder %s26, 0
    %s29 = sadd.s32 %s28, 1
    %s30 = scalar_select %p27, %s28, %s29
    %p33 = pneg %p27
    %p34 = scmp.eq.s32.totalorder %s18, 1
    %p35 = por %p33, %p34
    %p36 = scmp.ne.s32.totalorder %s28, %s31
    %p37 = scmp.eq.s32.totalorder %s18, 0
    %p38 = por %p36, %p37
    %p39 = scmp.ne.s32.totalorder %s28, %s31
    %p40 = scmp.eq.s32.totalorder %s23, 1
    %p41 = por %p39, %p40
    %p42 = scmp.ne.s32.totalorder %s31, %s32
    %p43 = scmp.eq.s32.totalorder %s23, 0
    %p44 = por %p42, %p43
    %p45 = scmp.ne.s32.totalorder %s31, %s32
    %p46 = scmp.eq.s32.totalorder %s24, 1
    %p47 = por %p45, %p46
    %p49 = scmp.ne.s32.totalorder %s32, %s48
    %p50 = scmp.eq.s32.totalorder %s24, 0
    %p51 = por %p49, %p50
    %s53 = sadd.s32 %s52, 1
    %p56 = scmp.eq.s32.totalorder %s18, 1
    %p57 = scmp.ne.s32.totalorder %s52, %s54
    %p58 = scmp.eq.s32.totalorder %s18, 0
    %p59 = por %p57, %p58
    %p60 = scmp.ne.s32.totalorder %s52, %s54
    %p61 = scmp.eq.s32.totalorder %s23, 1
    %p62 = por %p60, %p61
    %p63 = scmp.ne.s32.totalorder %s54, %s55
    %p64 = scmp.eq.s32.totalorder %s23, 0
    %p65 = por %p63, %p64
    %p66 = scmp.ne.s32.totalorder %s54, %s55
    %p67 = scmp.eq.s32.totalorder %s24, 1
    %p68 = por %p66, %p67
    %p70 = scmp.ne.s32.totalorder %s55, %s69
    %p71 = scmp.eq.s32.totalorder %s24, 0
    %p72 = por %p70, %p71
    %s74 = sadd.s32 %s73, 1
    %p77 = scmp.eq.s32.totalorder %s18, 1
    %p78 = scmp.ne.s32.totalorder %s73, %s75
    %p79 = scmp.eq.s32.totalorder %s18, 0
    %p80 = por %p78, %p79
    %p81 = scmp.ne.s32.totalorder %s73, %s75
    %p82 = scmp.eq.s32.totalorder %s23, 1
    %p83 = por %p81, %p82
    %p84 = scmp.ne.s32.totalorder %s75, %s76
    %p85 = scmp.eq.s32.totalorder %s23, 0
    %p86 = por %p84, %p85
    %p87 = scmp.ne.s32.totalorder %s75, %s76
    %p88 = scmp.eq.s32.totalorder %s24, 1
    %p89 = por %p87, %p88
    %p91 = scmp.ne.s32.totalorder %s76, %s90
    %p92 = scmp.eq.s32.totalorder %s24, 0
    %p93 = por %p91, %p92
    %s95 = sadd.s32 %s94, 1
    %p98 = scmp.eq.s32.totalorder %s18, 1
    %p99 = scmp.ne.s32.totalorder %s94, %s96
    %p100 = scmp.eq.s32.totalorder %s18, 0
    %p101 = por %p99, %p100
    %p102 = scmp.ne.s32.totalorder %s94, %s96
    %p103 = scmp.eq.s32.totalorder %s23, 1
    %p104 = por %p102, %p103
    %p105 = scmp.ne.s32.totalorder %s96, %s97
    %p106 = scmp.eq.s32.totalorder %s23, 0
    %p107 = por %p105, %p106
    %p108 = scmp.ne.s32.totalorder %s96, %s97
    %p109 = scmp.eq.s32.totalorder %s24, 1
    %p110 = por %p108, %p109
    %p112 = scmp.ne.s32.totalorder %s97, %s111
    %p113 = scmp.eq.s32.totalorder %s24, 0
    %p114 = por %p112, %p113
    %s116 = sadd.s32 %s115, 1
    %p119 = scmp.eq.s32.totalorder %s18, 1
    %p120 = scmp.ne.s32.totalorder %s115, %s117
    %p121 = scmp.eq.s32.totalorder %s18, 0
    %p122 = por %p120, %p121
    %p123 = scmp.ne.s32.totalorder %s115, %s117
    %p124 = scmp.eq.s32.totalorder %s23, 1
    %p125 = por %p123, %p124
    %p126 = scmp.ne.s32.totalorder %s117, %s118
    %p127 = scmp.eq.s32.totalorder %s23, 0
    %p128 = por %p126, %p127
    %p129 = scmp.ne.s32.totalorder %s117, %s118
    %p130 = scmp.eq.s32.totalorder %s24, 1
    %p131 = por %p129, %p130
    %p133 = scmp.ne.s32.totalorder %s118, %s132
    %p134 = scmp.eq.s32.totalorder %s24, 0
    %p135 = por %p133, %p134
    %s137 = sadd.s32 %s136, 1
    %p140 = scmp.eq.s32.totalorder %s18, 1
    %p141 = scmp.ne.s32.totalorder %s136, %s138
    %p142 = scmp.eq.s32.totalorder %s18, 0
    %p143 = por %p141, %p142
    %p144 = scmp.ne.s32.totalorder %s136, %s138
    %p145 = scmp.eq.s32.totalorder %s23, 1
    %p146 = por %p144, %p145
    %p147 = scmp.ne.s32.totalorder %s138, %s139
    %p148 = scmp.eq.s32.totalorder %s23, 0
    %p149 = por %p147, %p148
    %p150 = scmp.ne.s32.totalorder %s138, %s139
    %p151 = scmp.eq.s32.totalorder %s24, 1
    %p152 = por %p150, %p151
    %p154 = scmp.ne.s32.totalorder %s139, %s153
    %p155 = scmp.eq.s32.totalorder %s24, 0
    %p156 = por %p154, %p155
    %s158 = sadd.s32 %s157, 1
    %p161 = scmp.eq.s32.totalorder %s18, 1
    %p162 = scmp.ne.s32.totalorder %s157, %s159
    %p163 = scmp.eq.s32.totalorder %s18, 0
    %p164 = por %p162, %p163
    %p165 = scmp.ne.s32.totalorder %s157, %s159
    %p166 = scmp.eq.s32.totalorder %s23, 1
    %p167 = por %p165, %p166
    %p168 = scmp.ne.s32.totalorder %s159, %s160
    %p169 = scmp.eq.s32.totalorder %s23, 0
    %p170 = por %p168, %p169
    %p171 = scmp.ne.s32.totalorder %s159, %s160
    %p172 = scmp.eq.s32.totalorder %s24, 1
    %p173 = por %p171, %p172
    %p175 = scmp.ne.s32.totalorder %s160, %s174
    %p176 = scmp.eq.s32.totalorder %s24, 0
    %p177 = por %p175, %p176
    %s179 = sadd.s32 %s178, 1
    %p182 = scmp.eq.s32.totalorder %s18, 1
    %p183 = scmp.ne.s32.totalorder %s178, %s180
    %p184 = scmp.eq.s32.totalorder %s18, 0
    %p185 = por %p183, %p184
    %p186 = scmp.ne.s32.totalorder %s178, %s180
    %p187 = scmp.eq.s32.totalorder %s23, 1
    %p188 = por %p186, %p187
    %p189 = scmp.ne.s32.totalorder %s180, %s181
    %p190 = scmp.eq.s32.totalorder %s23, 0
    %p191 = por %p189, %p190
    %p192 = scmp.ne.s32.totalorder %s180, %s181
    %p193 = scmp.eq.s32.totalorder %s24, 1
    %p194 = por %p192, %p193
    %p196 = scmp.ne.s32.totalorder %s181, %s195
    %p197 = scmp.eq.s32.totalorder %s24, 0
    %p198 = por %p196, %p197
    %s199 = ssub.s32 %s18, %s25
    %p200 = scmp.eq.s32.totalorder %s199, 0
    %s202 = sadd.s32 %s201, 1
    %s203 = scalar_select %p200, %s201, %s202
    %p206 = pneg %p200
    %p207 = scmp.eq.s32.totalorder %s18, 1
    %p208 = por %p206, %p207
    %p209 = scmp.ne.s32.totalorder %s201, %s204
    %p210 = scmp.eq.s32.totalorder %s18, 0
    %p211 = por %p209, %p210
    %p212 = scmp.ne.s32.totalorder %s201, %s204
    %p213 = scmp.eq.s32.totalorder %s23, 1
    %p214 = por %p212, %p213
    %p215 = scmp.ne.s32.totalorder %s204, %s205
    %p216 = scmp.eq.s32.totalorder %s23, 0
    %p217 = por %p215, %p216
    %p218 = scmp.ne.s32.totalorder %s204, %s205
    %p219 = scmp.eq.s32.totalorder %s24, 1
    %p220 = por %p218, %p219
    %p222 = scmp.ne.s32.totalorder %s205, %s221
    %p223 = scmp.eq.s32.totalorder %s24, 0
    %p224 = por %p222, %p223
    %s225 = ssub.s32 %s18, %s25
    %p226 = scmp.eq.s32.totalorder %s225, 0
    %s228 = sadd.s32 %s227, 1
    %s229 = scalar_select %p226, %s227, %s228
    %p232 = pneg %p226
    %p233 = scmp.eq.s32.totalorder %s18, 1
    %p234 = por %p232, %p233
    %p235 = scmp.ne.s32.totalorder %s227, %s230
    %p236 = scmp.eq.s32.totalorder %s18, 0
    %p237 = por %p235, %p236
    %p238 = scmp.ne.s32.totalorder %s227, %s230
    %p239 = scmp.eq.s32.totalorder %s23, 1
    %p240 = por %p238, %p239
    %p241 = scmp.ne.s32.totalorder %s230, %s231
    %p242 = scmp.eq.s32.totalorder %s23, 0
    %p243 = por %p241, %p242
    %p244 = scmp.ne.s32.totalorder %s230, %s231
    %p245 = scmp.eq.s32.totalorder %s24, 1
    %p246 = por %p244, %p245
    %p248 = scmp.ne.s32.totalorder %s231, %s247
    %p249 = scmp.eq.s32.totalorder %s24, 0
    %p250 = por %p248, %p249
    %s251 = ssub.s32 %s18, %s25
    %p252 = scmp.eq.s32.totalorder %s251, 0
    %s254 = sadd.s32 %s253, 1
    %s255 = scalar_select %p252, %s253, %s254
    %p258 = pneg %p252
    %p259 = scmp.eq.s32.totalorder %s18, 1
    %p260 = por %p258, %p259
    %p261 = scmp.ne.s32.totalorder %s253, %s256
    %p262 = scmp.eq.s32.totalorder %s18, 0
    %p263 = por %p261, %p262
    %p264 = scmp.ne.s32.totalorder %s253, %s256
    %p265 = scmp.eq.s32.totalorder %s23, 1
    %p266 = por %p264, %p265
    %p267 = scmp.ne.s32.totalorder %s256, %s257
    %p268 = scmp.eq.s32.totalorder %s23, 0
    %p269 = por %p267, %p268
    %p270 = scmp.ne.s32.totalorder %s256, %s257
    %p271 = scmp.eq.s32.totalorder %s24, 1
    %p272 = por %p270, %p271
    %p274 = scmp.ne.s32.totalorder %s257, %s273
    %p275 = scmp.eq.s32.totalorder %s24, 0
    %p276 = por %p274, %p275
    %s277 = ssub.s32 %s18, %s25
    %p278 = scmp.eq.s32.totalorder %s277, 0
    %s280 = sadd.s32 %s279, 1
    %s281 = scalar_select %p278, %s279, %s280
    %p284 = pneg %p278
    %p285 = scmp.eq.s32.totalorder %s18, 1
    %p286 = por %p284, %p285
    %p287 = scmp.ne.s32.totalorder %s279, %s282
    %p288 = scmp.eq.s32.totalorder %s18, 0
    %p289 = por %p287, %p288
    %p290 = scmp.ne.s32.totalorder %s279, %s282
    %p291 = scmp.eq.s32.totalorder %s23, 1
    %p292 = por %p290, %p291
    %p293 = scmp.ne.s32.totalorder %s282, %s283
    %p294 = scmp.eq.s32.totalorder %s23, 0
    %p295 = por %p293, %p294
    %p296 = scmp.ne.s32.totalorder %s282, %s283
    %p297 = scmp.eq.s32.totalorder %s24, 1
    %p298 = por %p296, %p297
    %p300 = scmp.ne.s32.totalorder %s283, %s299
    %p301 = scmp.eq.s32.totalorder %s24, 0
    %p302 = por %p300, %p301
    %p303 = scmp.le.s32.totalorder 1, %s18
    %p304 = scmp.lt.s32.totalorder %s18, 3
    %p305 = pnand %p303, %p304
    %p306 = pneg %p305
    // Predicated region
    $region9: #{res_encoder_forward.1} parent=5 // pred_check
      _
    $region10: #{res_encoder_forward.1} parent=5 // pred_check_branch
      %308 = sbr.rel (%p305) target = $region12
    $region11: #{res_encoder_forward.1} parent=5 // pred_region
      %s309 = ssub.s32 %s18, 1
      // Predicated region
      $region13: #{res_encoder_forward.1} parent=11 // pred_check
        %p310 = pneg %p65
      $region14: #{res_encoder_forward.1} parent=11 // pred_check_branch
        %312 = sbr.rel (%p310) target = $region16
      $region15: #{res_encoder_forward.1} parent=11 // pred_region
        _
      $region16: #{res_encoder_forward.1} parent=11 // pred_fallthru
        _
      // Predicated region
      $region17: #{res_encoder_forward.1} parent=11 // pred_check
        %p313 = pneg %p86
      $region18: #{res_encoder_forward.1} parent=11 // pred_check_branch
        %315 = sbr.rel (%p313) target = $region20
      $region19: #{res_encoder_forward.1} parent=11 // pred_region
        _
      $region20: #{res_encoder_forward.1} parent=11 // pred_fallthru
        _
      // Predicated region
      $region21: #{res_encoder_forward.1} parent=11 // pred_check
        %p316 = pneg %p107
      $region22: #{res_encoder_forward.1} parent=11 // pred_check_branch
        %318 = sbr.rel (%p316) target = $region24
      $region23: #{res_encoder_forward.1} parent=11 // pred_region
        _
      $region24: #{res_encoder_forward.1} parent=11 // pred_fallthru
        _
      // Predicated region
      $region25: #{res_encoder_forward.1} parent=11 // pred_check
        %p319 = pneg %p128
      $region26: #{res_encoder_forward.1} parent=11 // pred_check_branch
        %321 = sbr.rel (%p319) target = $region28
      $region27: #{res_encoder_forward.1} parent=11 // pred_region
        _
      $region28: #{res_encoder_forward.1} parent=11 // pred_fallthru
        _
      // Predicated region
      $region29: #{res_encoder_forward.1} parent=11 // pred_check
        %p322 = pneg %p149
      $region30: #{res_encoder_forward.1} parent=11 // pred_check_branch
        %324 = sbr.rel (%p322) target = $region32
      $region31: #{res_encoder_forward.1} parent=11 // pred_region
        _
      $region32: #{res_encoder_forward.1} parent=11 // pred_fallthru
        _
      // Predicated region
      $region33: #{res_encoder_forward.1} parent=11 // pred_check
        %p325 = pneg %p170
      $region34: #{res_encoder_forward.1} parent=11 // pred_check_branch
        %327 = sbr.rel (%p325) target = $region36
      $region35: #{res_encoder_forward.1} parent=11 // pred_region
        _
      $region36: #{res_encoder_forward.1} parent=11 // pred_fallthru
        _
      // Predicated region
      $region37: #{res_encoder_forward.1} parent=11 // pred_check
        %p328 = pneg %p191
      $region38: #{res_encoder_forward.1} parent=11 // pred_check_branch
        %330 = sbr.rel (%p328) target = $region40
      $region39: #{res_encoder_forward.1} parent=11 // pred_region
        _
      $region40: #{res_encoder_forward.1} parent=11 // pred_fallthru
        _
    $region12: #{res_encoder_forward.1} parent=5 // pred_fallthru
      _
    %p331 = scmp.lt.s32.totalorder %s18, 2
    // Predicated region
    $region41: #{res_encoder_forward.1} parent=5 // pred_check
      %p332 = pneg %p331
    $region42: #{res_encoder_forward.1} parent=5 // pred_check_branch
      %334 = sbr.rel (%p332) target = $region44
    $region43: #{res_encoder_forward.1} parent=5 // pred_region
      // Predicated region
      $region45: #{res_encoder_forward.1} parent=43 // pred_check
        %p335 = pneg %p38
      $region46: #{res_encoder_forward.1} parent=43 // pred_check_branch
        %337 = sbr.rel (%p335) target = $region48
      $region47: #{res_encoder_forward.1} parent=43 // pred_region
        %p338 = scmp.lt.s32.totalorder %s18, 1
        %s339 = scalar_select %p338, %s18, 1
        %s340 = smul.addr %s339, 42
        %s341 = smul.addr %s340, 8
        %s342 = scalar_lea.vmem %s0, %s341
      $region48: #{res_encoder_forward.1} parent=43 // pred_fallthru
        _
    $region44: #{res_encoder_forward.1} parent=5 // pred_fallthru
      _
    %p343 = scmp.le.s32.totalorder 1, %s18
    %p344 = scmp.lt.s32.totalorder %s18, 3
    %p345 = pnand %p343, %p344
    %p346 = pneg %p345
    // Predicated region
    $region49: #{res_encoder_forward.1} parent=5 // pred_check
      _
    $region50: #{res_encoder_forward.1} parent=5 // pred_check_branch
      %348 = sbr.rel (%p345) target = $region52
    $region51: #{res_encoder_forward.1} parent=5 // pred_region
      %s349 = ssub.s32 %s18, 1
      %p350 = scmp.lt.s32.totalorder %s23, 1
      %s351 = scalar_select %p350, %s23, 1
      %s352 = smul.addr %s351, 42
      %s353 = smul.addr %s352, 8
      %s354 = scalar_lea.vmem %s0, %s353
      %p355 = pneg %p44
      %p356 = pneg %p41
      %p357 = pneg %p65
      %p358 = pneg %p62
      %p359 = pneg %p86
      %p360 = pneg %p83
      %p361 = pneg %p107
      %p362 = pneg %p104
      %p363 = pneg %p128
      %p364 = pneg %p125
      %p365 = pneg %p149
      %p366 = pneg %p146
      %p367 = pneg %p170
      %p368 = pneg %p167
      %p369 = pneg %p191
      %p370 = pneg %p188
      %p371 = pneg %p217
      %p372 = pneg %p214
      %p373 = scmp.lt.s32.totalorder %s23, 1
      %s374 = scalar_select %p373, %s23, 1
      %s375 = smul.addr %s374, 14
      %s376 = smul.addr %s375, 8
      %s377 = scalar_lea.vmem %s8, %s376
      %p378 = pneg %p243
      %p379 = pneg %p240
      %p380 = scmp.lt.s32.totalorder %s23, 1
      %s381 = scalar_select %p380, %s23, 1
      %s382 = smul.addr %s381, 6
      %s383 = smul.addr %s382, 8
      %s384 = scalar_lea.vmem %s9, %s383
      %p385 = pneg %p269
      %p386 = pneg %p266
      %p387 = scmp.lt.s32.totalorder %s23, 1
      %s388 = scalar_select %p387, %s23, 1
      %s389 = smul.addr %s388, 3
      %s390 = smul.addr %s389, 8
      %s391 = scalar_lea.vmem %s10, %s390
      %p392 = pneg %p295
      %p393 = pneg %p292
      %p394 = scmp.lt.s32.totalorder %s23, 1
      %s395 = scalar_select %p394, %s23, 1
      %s396 = smul.addr %s395, 3
      %s397 = smul.addr %s396, 8
      %s398 = scalar_lea.vmem %s11, %s397
      %p399 = scmp.lt.s32.totalorder %s23, 1
      %s400 = scalar_select %p399, %s23, 1
      %s401 = smul.addr %s400, 42
      %s402 = smul.addr %s401, 8
      %s403 = scalar_lea.vmem %s0, %s402
      %p404 = scmp.lt.s32.totalorder %s23, 1
      %s405 = scalar_select %p404, %s23, 1
      %s406 = smul.addr %s405, 14
      %s407 = smul.addr %s406, 8
      %s408 = scalar_lea.vmem %s8, %s407
      %p409 = scmp.lt.s32.totalorder %s23, 1
      %s410 = scalar_select %p409, %s23, 1
      %s411 = smul.addr %s410, 6
      %s412 = smul.addr %s411, 8
      %s413 = scalar_lea.vmem %s9, %s412
      %p414 = scmp.lt.s32.totalorder %s23, 1
      %s415 = scalar_select %p414, %s23, 1
      %s416 = smul.addr %s415, 3
      %s417 = smul.addr %s416, 8
      %s418 = scalar_lea.vmem %s10, %s417
      %p419 = scmp.lt.s32.totalorder %s23, 1
      %s420 = scalar_select %p419, %s23, 1
      %s421 = smul.addr %s420, 3
      %s422 = smul.addr %s421, 8
      %s423 = scalar_lea.vmem %s11, %s422
      %v425 = vld [vmem:[%s403] sm:$0xff]
      %v426 = vld [vmem:[%s403 + $0x8] sm:$0xff]
      %v427 = vld [vmem:[%s403 + $0x10] sm:$0xff]
      %v428 = vld [vmem:[%s403 + $0x18] sm:$0xff]
      %v429 = vld [vmem:[%s403 + $0x20] sm:$0xff]
      %v430 = vld [vmem:[%s403 + $0x28] sm:$0xff]
      %v431 = vld [vmem:[%s403 + $0x30] sm:$0xff]
      %v432 = vld [vmem:[%s403 + $0x38] sm:$0xff]
      %v433 = vld [vmem:[%s403 + $0x40] sm:$0xff]
      %v434 = vld [vmem:[%s403 + $0x48] sm:$0xff]
      %v435 = vld [vmem:[%s403 + $0x50] sm:$0xff]
      %v436 = vld [vmem:[%s403 + $0x58] sm:$0xff]
      %v437 = vld [vmem:[%s403 + $0x60] sm:$0xff]
      %v438 = vld [vmem:[%s403 + $0x68] sm:$0xff]
      %v439 = vld [vmem:[%s403 + $0x70] sm:$0xff]
      %v440 = vld [vmem:[%s403 + $0x78] sm:$0xff]
      %v441 = vld [vmem:[%s403 + $0x80] sm:$0xff]
      %v442 = vld [vmem:[%s403 + $0x88] sm:$0xff]
      %v443 = vld [vmem:[%s403 + $0x90] sm:$0xff]
      %v444 = vld [vmem:[%s403 + $0x98] sm:$0xff]
      %v445 = vld [vmem:[%s403 + $0xa0] sm:$0xff]
      %v446 = vld [vmem:[%s403 + $0xa8] sm:$0xff]
      %v447 = vld [vmem:[%s403 + $0xb0] sm:$0xff]
      %v448 = vld [vmem:[%s403 + $0xb8] sm:$0xff]
      %v449 = vld [vmem:[%s403 + $0xc0] sm:$0xff]
      %v450 = vld [vmem:[%s403 + $0xc8] sm:$0xff]
      %v451 = vld [vmem:[%s403 + $0xd0] sm:$0xff]
      %v452 = vld [vmem:[%s403 + $0xd8] sm:$0xff]
      %v453 = vld [vmem:[%s403 + $0xe0] sm:$0xff]
      %v454 = vld [vmem:[%s403 + $0xe8] sm:$0xff]
      %v455 = vld [vmem:[%s403 + $0xf0] sm:$0xff]
      %v456 = vld [vmem:[%s403 + $0xf8] sm:$0xff]
      %v457 = vld [vmem:[%s403 + $0x100] sm:$0xff]
      %v458 = vld [vmem:[%s403 + $0x108] sm:$0xff]
      %v459 = vld [vmem:[%s403 + $0x110] sm:$0xff]
      %v460 = vld [vmem:[%s403 + $0x118] sm:$0xff]
      %vm461 = vcmask 130048
      %462 = vst.msk [vmem:[#allocation3] sm:$0xff] %vm461, %v425
      %463 = vst.msk [vmem:[#allocation3 + $0x10] sm:$0xff] %vm461, %v426
      %464 = vst.msk [vmem:[#allocation3 + $0x20] sm:$0xff] %vm461, %v427
      %465 = vst.msk [vmem:[#allocation3 + $0x30] sm:$0xff] %vm461, %v428
      %466 = vst.msk [vmem:[#allocation3 + $0x40] sm:$0xff] %vm461, %v429
      %467 = vst.msk [vmem:[#allocation3 + $0x50] sm:$0xff] %vm461, %v430
      %468 = vst.msk [vmem:[#allocation3 + $0x60] sm:$0xff] %vm461, %v431
      %469 = vst.msk [vmem:[#allocation3 + $0x70] sm:$0xff] %vm461, %v432
      %470 = vst.msk [vmem:[#allocation3 + $0x80] sm:$0xff] %vm461, %v433
      %471 = vst.msk [vmem:[#allocation3 + $0x90] sm:$0xff] %vm461, %v434
      %472 = vst.msk [vmem:[#allocation3 + $0xa0] sm:$0xff] %vm461, %v435
      %473 = vst.msk [vmem:[#allocation3 + $0xb0] sm:$0xff] %vm461, %v436
      %474 = vst.msk [vmem:[#allocation3 + $0xc0] sm:$0xff] %vm461, %v437
      %475 = vst.msk [vmem:[#allocation3 + $0xd0] sm:$0xff] %vm461, %v438
      %476 = vst.msk [vmem:[#allocation3 + $0xe0] sm:$0xff] %vm461, %v439
      %477 = vst.msk [vmem:[#allocation3 + $0xf0] sm:$0xff] %vm461, %v440
      %478 = vst.msk [vmem:[#allocation3 + $0x100] sm:$0xff] %vm461, %v441
      %479 = vst.msk [vmem:[#allocation3 + $0x110] sm:$0xff] %vm461, %v442
      %480 = vst.msk [vmem:[#allocation3 + $0x120] sm:$0xff] %vm461, %v443
      %481 = vst.msk [vmem:[#allocation3 + $0x130] sm:$0xff] %vm461, %v444
      %482 = vst.msk [vmem:[#allocation3 + $0x140] sm:$0xff] %vm461, %v445
      %483 = vst.msk [vmem:[#allocation3 + $0x150] sm:$0xff] %vm461, %v446
      %484 = vst.msk [vmem:[#allocation3 + $0x160] sm:$0xff] %vm461, %v447
      %485 = vst.msk [vmem:[#allocation3 + $0x170] sm:$0xff] %vm461, %v448
      %486 = vst.msk [vmem:[#allocation3 + $0x180] sm:$0xff] %vm461, %v449
      %487 = vst.msk [vmem:[#allocation3 + $0x190] sm:$0xff] %vm461, %v450
      %488 = vst.msk [vmem:[#allocation3 + $0x1a0] sm:$0xff] %vm461, %v451
      %489 = vst.msk [vmem:[#allocation3 + $0x1b0] sm:$0xff] %vm461, %v452
      %490 = vst.msk [vmem:[#allocation3 + $0x1c0] sm:$0xff] %vm461, %v453
      %491 = vst.msk [vmem:[#allocation3 + $0x1d0] sm:$0xff] %vm461, %v454
      %492 = vst.msk [vmem:[#allocation3 + $0x1e0] sm:$0xff] %vm461, %v455
      %493 = vst.msk [vmem:[#allocation3 + $0x1f0] sm:$0xff] %vm461, %v456
      %494 = vst.msk [vmem:[#allocation3 + $0x200] sm:$0xff] %vm461, %v457
      %495 = vst.msk [vmem:[#allocation3 + $0x210] sm:$0xff] %vm461, %v458
      %496 = vst.msk [vmem:[#allocation3 + $0x220] sm:$0xff] %vm461, %v459
      %497 = vst.msk [vmem:[#allocation3 + $0x230] sm:$0xff] %vm461, %v460
      %v498 = vld [vmem:[%s403 + $0x1] sm:$0xff]
      %v499 = vld [vmem:[%s403 + $0x9] sm:$0xff]
      %v500 = vld [vmem:[%s403 + $0x11] sm:$0xff]
      %v501 = vld [vmem:[%s403 + $0x19] sm:$0xff]
      %v502 = vld [vmem:[%s403 + $0x21] sm:$0xff]
      %v503 = vld [vmem:[%s403 + $0x29] sm:$0xff]
      %v504 = vld [vmem:[%s403 + $0x31] sm:$0xff]
      %v505 = vld [vmem:[%s403 + $0x39] sm:$0xff]
      %v506 = vld [vmem:[%s403 + $0x41] sm:$0xff]
      %v507 = vld [vmem:[%s403 + $0x49] sm:$0xff]
      %v508 = vld [vmem:[%s403 + $0x51] sm:$0xff]
      %v509 = vld [vmem:[%s403 + $0x59] sm:$0xff]
      %v510 = vld [vmem:[%s403 + $0x61] sm:$0xff]
      %v511 = vld [vmem:[%s403 + $0x69] sm:$0xff]
      %v512 = vld [vmem:[%s403 + $0x71] sm:$0xff]
      %v513 = vld [vmem:[%s403 + $0x79] sm:$0xff]
      %v514 = vld [vmem:[%s403 + $0x81] sm:$0xff]
      %v515 = vld [vmem:[%s403 + $0x89] sm:$0xff]
      %v516 = vld [vmem:[%s403 + $0x91] sm:$0xff]
      %v517 = vld [vmem:[%s403 + $0x99] sm:$0xff]
      %v518 = vld [vmem:[%s403 + $0xa1] sm:$0xff]
      %v519 = vld [vmem:[%s403 + $0xa9] sm:$0xff]
      %v520 = vld [vmem:[%s403 + $0xb1] sm:$0xff]
      %v521 = vld [vmem:[%s403 + $0xb9] sm:$0xff]
      %v522 = vld [vmem:[%s403 + $0xc1] sm:$0xff]
      %v523 = vld [vmem:[%s403 + $0xc9] sm:$0xff]
      %v524 = vld [vmem:[%s403 + $0xd1] sm:$0xff]
      %v525 = vld [vmem:[%s403 + $0xd9] sm:$0xff]
      %v526 = vld [vmem:[%s403 + $0xe1] sm:$0xff]
      %v527 = vld [vmem:[%s403 + $0xe9] sm:$0xff]
      %v528 = vld [vmem:[%s403 + $0xf1] sm:$0xff]
      %v529 = vld [vmem:[%s403 + $0xf9] sm:$0xff]
      %v530 = vld [vmem:[%s403 + $0x101] sm:$0xff]
      %v531 = vld [vmem:[%s403 + $0x109] sm:$0xff]
      %v532 = vld [vmem:[%s403 + $0x111] sm:$0xff]
      %v533 = vld [vmem:[%s403 + $0x119] sm:$0xff]
      %570 = vrot.lane.b32.xlu0 %v498, 16
      %v571 = vpop.permute.xlu0 %570
      %572 = vrot.lane.b32.xlu0 %v499, 16
      %v573 = vpop.permute.xlu0 %572
      %574 = vrot.lane.b32.xlu0 %v500, 16
      %v575 = vpop.permute.xlu0 %574
      %576 = vrot.lane.b32.xlu0 %v501, 16
      %v577 = vpop.permute.xlu0 %576
      %578 = vrot.lane.b32.xlu0 %v502, 16
      %v579 = vpop.permute.xlu0 %578
      %580 = vrot.lane.b32.xlu0 %v503, 16
      %v581 = vpop.permute.xlu0 %580
      %582 = vrot.lane.b32.xlu0 %v504, 16
      %v583 = vpop.permute.xlu0 %582
      %584 = vrot.lane.b32.xlu0 %v505, 16
      %v585 = vpop.permute.xlu0 %584
      %586 = vrot.lane.b32.xlu0 %v506, 16
      %v587 = vpop.permute.xlu0 %586
      %588 = vrot.lane.b32.xlu0 %v507, 16
      %v589 = vpop.permute.xlu0 %588
      %590 = vrot.lane.b32.xlu0 %v508, 16
      %v591 = vpop.permute.xlu0 %590
      %592 = vrot.lane.b32.xlu0 %v509, 16
      %v593 = vpop.permute.xlu0 %592
      %594 = vrot.lane.b32.xlu0 %v510, 16
      %v595 = vpop.permute.xlu0 %594
      %596 = vrot.lane.b32.xlu0 %v511, 16
      %v597 = vpop.permute.xlu0 %596
      %598 = vrot.lane.b32.xlu0 %v512, 16
      %v599 = vpop.permute.xlu0 %598
      %600 = vrot.lane.b32.xlu0 %v513, 16
      %v601 = vpop.permute.xlu0 %600
      %602 = vrot.lane.b32.xlu0 %v514, 16
      %v603 = vpop.permute.xlu0 %602
      %604 = vrot.lane.b32.xlu0 %v515, 16
      %v605 = vpop.permute.xlu0 %604
      %606 = vrot.lane.b32.xlu0 %v516, 16
      %v607 = vpop.permute.xlu0 %606
      %608 = vrot.lane.b32.xlu0 %v517, 16
      %v609 = vpop.permute.xlu0 %608
      %610 = vrot.lane.b32.xlu0 %v518, 16
      %v611 = vpop.permute.xlu0 %610
      %612 = vrot.lane.b32.xlu0 %v519, 16
      %v613 = vpop.permute.xlu0 %612
      %614 = vrot.lane.b32.xlu0 %v520, 16
      %v615 = vpop.permute.xlu0 %614
      %616 = vrot.lane.b32.xlu0 %v521, 16
      %v617 = vpop.permute.xlu0 %616
      %618 = vrot.lane.b32.xlu0 %v522, 16
      %v619 = vpop.permute.xlu0 %618
      %620 = vrot.lane.b32.xlu0 %v523, 16
      %v621 = vpop.permute.xlu0 %620
      %622 = vrot.lane.b32.xlu0 %v524, 16
      %v623 = vpop.permute.xlu0 %622
      %624 = vrot.lane.b32.xlu0 %v525, 16
      %v625 = vpop.permute.xlu0 %624
      %626 = vrot.lane.b32.xlu0 %v526, 16
      %v627 = vpop.permute.xlu0 %626
      %628 = vrot.lane.b32.xlu0 %v527, 16
      %v629 = vpop.permute.xlu0 %628
      %630 = vrot.lane.b32.xlu0 %v528, 16
      %v631 = vpop.permute.xlu0 %630
      %632 = vrot.lane.b32.xlu0 %v529, 16
      %v633 = vpop.permute.xlu0 %632
      %634 = vrot.lane.b32.xlu0 %v530, 16
      %v635 = vpop.permute.xlu0 %634
      %636 = vrot.lane.b32.xlu0 %v531, 16
      %v637 = vpop.permute.xlu0 %636
      %638 = vrot.lane.b32.xlu0 %v532, 16
      %v639 = vpop.permute.xlu0 %638
      %640 = vrot.lane.b32.xlu0 %v533, 16
      %v641 = vpop.permute.xlu0 %640
      %vm678 = vcmask 261248
      %679 = vst.msk [vmem:[#allocation3] sm:$0xff] %vm678, %v571
      %680 = vst.msk [vmem:[#allocation3 + $0x10] sm:$0xff] %vm678, %v573
      %681 = vst.msk [vmem:[#allocation3 + $0x20] sm:$0xff] %vm678, %v575
      %682 = vst.msk [vmem:[#allocation3 + $0x30] sm:$0xff] %vm678, %v577
      %683 = vst.msk [vmem:[#allocation3 + $0x40] sm:$0xff] %vm678, %v579
      %684 = vst.msk [vmem:[#allocation3 + $0x50] sm:$0xff] %vm678, %v581
      %685 = vst.msk [vmem:[#allocation3 + $0x60] sm:$0xff] %vm678, %v583
      %686 = vst.msk [vmem:[#allocation3 + $0x70] sm:$0xff] %vm678, %v585
      %687 = vst.msk [vmem:[#allocation3 + $0x80] sm:$0xff] %vm678, %v587
      %688 = vst.msk [vmem:[#allocation3 + $0x90] sm:$0xff] %vm678, %v589
      %689 = vst.msk [vmem:[#allocation3 + $0xa0] sm:$0xff] %vm678, %v591
      %690 = vst.msk [vmem:[#allocation3 + $0xb0] sm:$0xff] %vm678, %v593
      %691 = vst.msk [vmem:[#allocation3 + $0xc0] sm:$0xff] %vm678, %v595
      %692 = vst.msk [vmem:[#allocation3 + $0xd0] sm:$0xff] %vm678, %v597
      %693 = vst.msk [vmem:[#allocation3 + $0xe0] sm:$0xff] %vm678, %v599
      %694 = vst.msk [vmem:[#allocation3 + $0xf0] sm:$0xff] %vm678, %v601
      %695 = vst.msk [vmem:[#allocation3 + $0x100] sm:$0xff] %vm678, %v603
      %696 = vst.msk [vmem:[#allocation3 + $0x110] sm:$0xff] %vm678, %v605
      %697 = vst.msk [vmem:[#allocation3 + $0x120] sm:$0xff] %vm678, %v607
      %698 = vst.msk [vmem:[#allocation3 + $0x130] sm:$0xff] %vm678, %v609
      %699 = vst.msk [vmem:[#allocation3 + $0x140] sm:$0xff] %vm678, %v611
      %700 = vst.msk [vmem:[#allocation3 + $0x150] sm:$0xff] %vm678, %v613
      %701 = vst.msk [vmem:[#allocation3 + $0x160] sm:$0xff] %vm678, %v615
      %702 = vst.msk [vmem:[#allocation3 + $0x170] sm:$0xff] %vm678, %v617
      %703 = vst.msk [vmem:[#allocation3 + $0x180] sm:$0xff] %vm678, %v619
      %704 = vst.msk [vmem:[#allocation3 + $0x190] sm:$0xff] %vm678, %v621
      %705 = vst.msk [vmem:[#allocation3 + $0x1a0] sm:$0xff] %vm678, %v623
      %706 = vst.msk [vmem:[#allocation3 + $0x1b0] sm:$0xff] %vm678, %v625
      %707 = vst.msk [vmem:[#allocation3 + $0x1c0] sm:$0xff] %vm678, %v627
      %708 = vst.msk [vmem:[#allocation3 + $0x1d0] sm:$0xff] %vm678, %v629
      %709 = vst.msk [vmem:[#allocation3 + $0x1e0] sm:$0xff] %vm678, %v631
      %710 = vst.msk [vmem:[#allocation3 + $0x1f0] sm:$0xff] %vm678, %v633
      %711 = vst.msk [vmem:[#allocation3 + $0x200] sm:$0xff] %vm678, %v635
      %712 = vst.msk [vmem:[#allocation3 + $0x210] sm:$0xff] %vm678, %v637
      %713 = vst.msk [vmem:[#allocation3 + $0x220] sm:$0xff] %vm678, %v639
      %714 = vst.msk [vmem:[#allocation3 + $0x230] sm:$0xff] %vm678, %v641
      %v715 = vld [vmem:[%s403 + $0x2] sm:$0xff]
      %v716 = vld [vmem:[%s403 + $0xa] sm:$0xff]
      %v717 = vld [vmem:[%s403 + $0x12] sm:$0xff]
      %v718 = vld [vmem:[%s403 + $0x1a] sm:$0xff]
      %v719 = vld [vmem:[%s403 + $0x22] sm:$0xff]
      %v720 = vld [vmem:[%s403 + $0x2a] sm:$0xff]
      %v721 = vld [vmem:[%s403 + $0x32] sm:$0xff]
      %v722 = vld [vmem:[%s403 + $0x3a] sm:$0xff]
      %v723 = vld [vmem:[%s403 + $0x42] sm:$0xff]
      %v724 = vld [vmem:[%s403 + $0x4a] sm:$0xff]
      %v725 = vld [vmem:[%s403 + $0x52] sm:$0xff]
      %v726 = vld [vmem:[%s403 + $0x5a] sm:$0xff]
      %v727 = vld [vmem:[%s403 + $0x62] sm:$0xff]
      %v728 = vld [vmem:[%s403 + $0x6a] sm:$0xff]
      %v729 = vld [vmem:[%s403 + $0x72] sm:$0xff]
      %v730 = vld [vmem:[%s403 + $0x7a] sm:$0xff]
      %v731 = vld [vmem:[%s403 + $0x82] sm:$0xff]
      %v732 = vld [vmem:[%s403 + $0x8a] sm:$0xff]
      %v733 = vld [vmem:[%s403 + $0x92] sm:$0xff]
      %v734 = vld [vmem:[%s403 + $0x9a] sm:$0xff]
      %v735 = vld [vmem:[%s403 + $0xa2] sm:$0xff]
      %v736 = vld [vmem:[%s403 + $0xaa] sm:$0xff]
      %v737 = vld [vmem:[%s403 + $0xb2] sm:$0xff]
      %v738 = vld [vmem:[%s403 + $0xba] sm:$0xff]
      %v739 = vld [vmem:[%s403 + $0xc2] sm:$0xff]
      %v740 = vld [vmem:[%s403 + $0xca] sm:$0xff]
      %v741 = vld [vmem:[%s403 + $0xd2] sm:$0xff]
      %v742 = vld [vmem:[%s403 + $0xda] sm:$0xff]
      %v743 = vld [vmem:[%s403 + $0xe2] sm:$0xff]
      %v744 = vld [vmem:[%s403 + $0xea] sm:$0xff]
      %v745 = vld [vmem:[%s403 + $0xf2] sm:$0xff]
      %v746 = vld [vmem:[%s403 + $0xfa] sm:$0xff]
      %v747 = vld [vmem:[%s403 + $0x102] sm:$0xff]
      %v748 = vld [vmem:[%s403 + $0x10a] sm:$0xff]
      %v749 = vld [vmem:[%s403 + $0x112] sm:$0xff]
      %v750 = vld [vmem:[%s403 + $0x11a] sm:$0xff]
      %787 = vrot.lane.b32.xlu0 %v715, 32
      %v788 = vpop.permute.xlu0 %787
      %789 = vrot.lane.b32.xlu0 %v716, 32
      %v790 = vpop.permute.xlu0 %789
      %791 = vrot.lane.b32.xlu0 %v717, 32
      %v792 = vpop.permute.xlu0 %791
      %793 = vrot.lane.b32.xlu0 %v718, 32
      %v794 = vpop.permute.xlu0 %793
      %795 = vrot.lane.b32.xlu0 %v719, 32
      %v796 = vpop.permute.xlu0 %795
      %797 = vrot.lane.b32.xlu0 %v720, 32
      %v798 = vpop.permute.xlu0 %797
      %799 = vrot.lane.b32.xlu0 %v721, 32
      %v800 = vpop.permute.xlu0 %799
      %801 = vrot.lane.b32.xlu0 %v722, 32
      %v802 = vpop.permute.xlu0 %801
      %803 = vrot.lane.b32.xlu0 %v723, 32
      %v804 = vpop.permute.xlu0 %803
      %805 = vrot.lane.b32.xlu0 %v724, 32
      %v806 = vpop.permute.xlu0 %805
      %807 = vrot.lane.b32.xlu0 %v725, 32
      %v808 = vpop.permute.xlu0 %807
      %809 = vrot.lane.b32.xlu0 %v726, 32
      %v810 = vpop.permute.xlu0 %809
      %811 = vrot.lane.b32.xlu0 %v727, 32
      %v812 = vpop.permute.xlu0 %811
      %813 = vrot.lane.b32.xlu0 %v728, 32
      %v814 = vpop.permute.xlu0 %813
      %815 = vrot.lane.b32.xlu0 %v729, 32
      %v816 = vpop.permute.xlu0 %815
      %817 = vrot.lane.b32.xlu0 %v730, 32
      %v818 = vpop.permute.xlu0 %817
      %819 = vrot.lane.b32.xlu0 %v731, 32
      %v820 = vpop.permute.xlu0 %819
      %821 = vrot.lane.b32.xlu0 %v732, 32
      %v822 = vpop.permute.xlu0 %821
      %823 = vrot.lane.b32.xlu0 %v733, 32
      %v824 = vpop.permute.xlu0 %823
      %825 = vrot.lane.b32.xlu0 %v734, 32
      %v826 = vpop.permute.xlu0 %825
      %827 = vrot.lane.b32.xlu0 %v735, 32
      %v828 = vpop.permute.xlu0 %827
      %829 = vrot.lane.b32.xlu0 %v736, 32
      %v830 = vpop.permute.xlu0 %829
      %831 = vrot.lane.b32.xlu0 %v737, 32
      %v832 = vpop.permute.xlu0 %831
      %833 = vrot.lane.b32.xlu0 %v738, 32
      %v834 = vpop.permute.xlu0 %833
      %835 = vrot.lane.b32.xlu0 %v739, 32
      %v836 = vpop.permute.xlu0 %835
      %837 = vrot.lane.b32.xlu0 %v740, 32
      %v838 = vpop.permute.xlu0 %837
      %839 = vrot.lane.b32.xlu0 %v741, 32
      %v840 = vpop.permute.xlu0 %839
      %841 = vrot.lane.b32.xlu0 %v742, 32
      %v842 = vpop.permute.xlu0 %841
      %843 = vrot.lane.b32.xlu0 %v743, 32
      %v844 = vpop.permute.xlu0 %843
      %845 = vrot.lane.b32.xlu0 %v744, 32
      %v846 = vpop.permute.xlu0 %845
      %847 = vrot.lane.b32.xlu0 %v745, 32
      %v848 = vpop.permute.xlu0 %847
      %849 = vrot.lane.b32.xlu0 %v746, 32
      %v850 = vpop.permute.xlu0 %849
      %851 = vrot.lane.b32.xlu0 %v747, 32
      %v852 = vpop.permute.xlu0 %851
      %853 = vrot.lane.b32.xlu0 %v748, 32
      %v854 = vpop.permute.xlu0 %853
      %855 = vrot.lane.b32.xlu0 %v749, 32
      %v856 = vpop.permute.xlu0 %855
      %857 = vrot.lane.b32.xlu0 %v750, 32
      %v858 = vpop.permute.xlu0 %857
      %vm895 = vcmask 392448
      %896 = vst.msk [vmem:[#allocation3] sm:$0xff] %vm895, %v788
      %897 = vst.msk [vmem:[#allocation3 + $0x10] sm:$0xff] %vm895, %v790
      %898 = vst.msk [vmem:[#allocation3 + $0x20] sm:$0xff] %vm895, %v792
      %899 = vst.msk [vmem:[#allocation3 + $0x30] sm:$0xff] %vm895, %v794
      %900 = vst.msk [vmem:[#allocation3 + $0x40] sm:$0xff] %vm895, %v796
      %901 = vst.msk [vmem:[#allocation3 + $0x50] sm:$0xff] %vm895, %v798
      %902 = vst.msk [vmem:[#allocation3 + $0x60] sm:$0xff] %vm895, %v800
      %903 = vst.msk [vmem:[#allocation3 + $0x70] sm:$0xff] %vm895, %v802
      %904 = vst.msk [vmem:[#allocation3 + $0x80] sm:$0xff] %vm895, %v804
      %905 = vst.msk [vmem:[#allocation3 + $0x90] sm:$0xff] %vm895, %v806
      %906 = vst.msk [vmem:[#allocation3 + $0xa0] sm:$0xff] %vm895, %v808
      %907 = vst.msk [vmem:[#allocation3 + $0xb0] sm:$0xff] %vm895, %v810
      %908 = vst.msk [vmem:[#allocation3 + $0xc0] sm:$0xff] %vm895, %v812
      %909 = vst.msk [vmem:[#allocation3 + $0xd0] sm:$0xff] %vm895, %v814
      %910 = vst.msk [vmem:[#allocation3 + $0xe0] sm:$0xff] %vm895, %v816
      %911 = vst.msk [vmem:[#allocation3 + $0xf0] sm:$0xff] %vm895, %v818
      %912 = vst.msk [vmem:[#allocation3 + $0x100] sm:$0xff] %vm895, %v820
      %913 = vst.msk [vmem:[#allocation3 + $0x110] sm:$0xff] %vm895, %v822
      %914 = vst.msk [vmem:[#allocation3 + $0x120] sm:$0xff] %vm895, %v824
      %915 = vst.msk [vmem:[#allocation3 + $0x130] sm:$0xff] %vm895, %v826
      %916 = vst.msk [vmem:[#allocation3 + $0x140] sm:$0xff] %vm895, %v828
      %917 = vst.msk [vmem:[#allocation3 + $0x150] sm:$0xff] %vm895, %v830
      %918 = vst.msk [vmem:[#allocation3 + $0x160] sm:$0xff] %vm895, %v832
      %919 = vst.msk [vmem:[#allocation3 + $0x170] sm:$0xff] %vm895, %v834
      %920 = vst.msk [vmem:[#allocation3 + $0x180] sm:$0xff] %vm895, %v836
      %921 = vst.msk [vmem:[#allocation3 + $0x190] sm:$0xff] %vm895, %v838
      %922 = vst.msk [vmem:[#allocation3 + $0x1a0] sm:$0xff] %vm895, %v840
      %923 = vst.msk [vmem:[#allocation3 + $0x1b0] sm:$0xff] %vm895, %v842
      %924 = vst.msk [vmem:[#allocation3 + $0x1c0] sm:$0xff] %vm895, %v844
      %925 = vst.msk [vmem:[#allocation3 + $0x1d0] sm:$0xff] %vm895, %v846
      %926 = vst.msk [vmem:[#allocation3 + $0x1e0] sm:$0xff] %vm895, %v848
      %927 = vst.msk [vmem:[#allocation3 + $0x1f0] sm:$0xff] %vm895, %v850
      %928 = vst.msk [vmem:[#allocation3 + $0x200] sm:$0xff] %vm895, %v852
      %929 = vst.msk [vmem:[#allocation3 + $0x210] sm:$0xff] %vm895, %v854
      %930 = vst.msk [vmem:[#allocation3 + $0x220] sm:$0xff] %vm895, %v856
      %931 = vst.msk [vmem:[#allocation3 + $0x230] sm:$0xff] %vm895, %v858
      %v932 = vld [vmem:[%s403 + $0x12] sm:$0xff]
      %v933 = vld [vmem:[%s403 + $0x1a] sm:$0xff]
      %v934 = vld [vmem:[%s403 + $0x22] sm:$0xff]
      %v935 = vld [vmem:[%s403 + $0x2a] sm:$0xff]
      %v936 = vld [vmem:[%s403 + $0x32] sm:$0xff]
      %v937 = vld [vmem:[%s403 + $0x3a] sm:$0xff]
      %v938 = vld [vmem:[%s403 + $0x42] sm:$0xff]
      %v939 = vld [vmem:[%s403 + $0x4a] sm:$0xff]
      %v940 = vld [vmem:[%s403 + $0x52] sm:$0xff]
      %v941 = vld [vmem:[%s403 + $0x5a] sm:$0xff]
      %v942 = vld [vmem:[%s403 + $0x62] sm:$0xff]
      %v943 = vld [vmem:[%s403 + $0x6a] sm:$0xff]
      %v944 = vld [vmem:[%s403 + $0x72] sm:$0xff]
      %v945 = vld [vmem:[%s403 + $0x7a] sm:$0xff]
      %v946 = vld [vmem:[%s403 + $0x82] sm:$0xff]
      %v947 = vld [vmem:[%s403 + $0x8a] sm:$0xff]
      %v948 = vld [vmem:[%s403 + $0x92] sm:$0xff]
      %v949 = vld [vmem:[%s403 + $0x9a] sm:$0xff]
      %v950 = vld [vmem:[%s403 + $0xa2] sm:$0xff]
      %v951 = vld [vmem:[%s403 + $0xaa] sm:$0xff]
      %v952 = vld [vmem:[%s403 + $0xb2] sm:$0xff]
      %v953 = vld [vmem:[%s403 + $0xba] sm:$0xff]
      %v954 = vld [vmem:[%s403 + $0xc2] sm:$0xff]
      %v955 = vld [vmem:[%s403 + $0xca] sm:$0xff]
      %v956 = vld [vmem:[%s403 + $0xd2] sm:$0xff]
      %v957 = vld [vmem:[%s403 + $0xda] sm:$0xff]
      %v958 = vld [vmem:[%s403 + $0xe2] sm:$0xff]
      %v959 = vld [vmem:[%s403 + $0xea] sm:$0xff]
      %v960 = vld [vmem:[%s403 + $0xf2] sm:$0xff]
      %v961 = vld [vmem:[%s403 + $0xfa] sm:$0xff]
      %v962 = vld [vmem:[%s403 + $0x102] sm:$0xff]
      %v963 = vld [vmem:[%s403 + $0x10a] sm:$0xff]
      %v964 = vld [vmem:[%s403 + $0x112] sm:$0xff]
      %v965 = vld [vmem:[%s403 + $0x11a] sm:$0xff]
      %v966 = vld [vmem:[%s403 + $0x122] sm:$0xff]
      %v967 = vld [vmem:[%s403 + $0x12a] sm:$0xff]
      %1004 = vrot.lane.b32.xlu0 %v932, 48
      %v1005 = vpop.permute.xlu0 %1004
      %1006 = vrot.lane.b32.xlu0 %v933, 48
      %v1007 = vpop.permute.xlu0 %1006
      %1008 = vrot.lane.b32.xlu0 %v934, 48
      %v1009 = vpop.permute.xlu0 %1008
      %1010 = vrot.lane.b32.xlu0 %v935, 48
      %v1011 = vpop.permute.xlu0 %1010
      %1012 = vrot.lane.b32.xlu0 %v936, 48
      %v1013 = vpop.permute.xlu0 %1012
      %1014 = vrot.lane.b32.xlu0 %v937, 48
      %v1015 = vpop.permute.xlu0 %1014
      %1016 = vrot.lane.b32.xlu0 %v938, 48
      %v1017 = vpop.permute.xlu0 %1016
      %1018 = vrot.lane.b32.xlu0 %v939, 48
      %v1019 = vpop.permute.xlu0 %1018
      %1020 = vrot.lane.b32.xlu0 %v940, 48
      %v1021 = vpop.permute.xlu0 %1020
      %1022 = vrot.lane.b32.xlu0 %v941, 48
      %v1023 = vpop.permute.xlu0 %1022
      %1024 = vrot.lane.b32.xlu0 %v942, 48
      %v1025 = vpop.permute.xlu0 %1024
      %1026 = vrot.lane.b32.xlu0 %v943, 48
      %v1027 = vpop.permute.xlu0 %1026
      %1028 = vrot.lane.b32.xlu0 %v944, 48
      %v1029 = vpop.permute.xlu0 %1028
      %1030 = vrot.lane.b32.xlu0 %v945, 48
      %v1031 = vpop.permute.xlu0 %1030
      %1032 = vrot.lane.b32.xlu0 %v946, 48
      %v1033 = vpop.permute.xlu0 %1032
      %1034 = vrot.lane.b32.xlu0 %v947, 48
      %v1035 = vpop.permute.xlu0 %1034
      %1036 = vrot.lane.b32.xlu0 %v948, 48
      %v1037 = vpop.permute.xlu0 %1036
      %1038 = vrot.lane.b32.xlu0 %v949, 48
      %v1039 = vpop.permute.xlu0 %1038
      %1040 = vrot.lane.b32.xlu0 %v950, 48
      %v1041 = vpop.permute.xlu0 %1040
      %1042 = vrot.lane.b32.xlu0 %v951, 48
      %v1043 = vpop.permute.xlu0 %1042
      %1044 = vrot.lane.b32.xlu0 %v952, 48
      %v1045 = vpop.permute.xlu0 %1044
      %1046 = vrot.lane.b32.xlu0 %v953, 48
      %v1047 = vpop.permute.xlu0 %1046
      %1048 = vrot.lane.b32.xlu0 %v954, 48
      %v1049 = vpop.permute.xlu0 %1048
      %1050 = vrot.lane.b32.xlu0 %v955, 48
      %v1051 = vpop.permute.xlu0 %1050
      %1052 = vrot.lane.b32.xlu0 %v956, 48
      %v1053 = vpop.permute.xlu0 %1052
      %1054 = vrot.lane.b32.xlu0 %v957, 48
      %v1055 = vpop.permute.xlu0 %1054
      %1056 = vrot.lane.b32.xlu0 %v958, 48
      %v1057 = vpop.permute.xlu0 %1056
      %1058 = vrot.lane.b32.xlu0 %v959, 48
      %v1059 = vpop.permute.xlu0 %1058
      %1060 = vrot.lane.b32.xlu0 %v960, 48
      %v1061 = vpop.permute.xlu0 %1060
      %1062 = vrot.lane.b32.xlu0 %v961, 48
      %v1063 = vpop.permute.xlu0 %1062
      %1064 = vrot.lane.b32.xlu0 %v962, 48
      %v1065 = vpop.permute.xlu0 %1064
      %1066 = vrot.lane.b32.xlu0 %v963, 48
      %v1067 = vpop.permute.xlu0 %1066
      %1068 = vrot.lane.b32.xlu0 %v964, 48
      %v1069 = vpop.permute.xlu0 %1068
      %1070 = vrot.lane.b32.xlu0 %v965, 48
      %v1071 = vpop.permute.xlu0 %1070
      %1072 = vrot.lane.b32.xlu0 %v966, 48
      %v1073 = vpop.permute.xlu0 %1072
      %1074 = vrot.lane.b32.xlu0 %v967, 48
      %v1075 = vpop.permute.xlu0 %1074
      %vm1112 = vcmask 523648
      %1113 = vst.msk [vmem:[#allocation3] sm:$0xff] %vm1112, %v1005
      %1114 = vst.msk [vmem:[#allocation3 + $0x10] sm:$0xff] %vm1112, %v1007
      %1115 = vst.msk [vmem:[#allocation3 + $0x20] sm:$0xff] %vm1112, %v1009
      %1116 = vst.msk [vmem:[#allocation3 + $0x30] sm:$0xff] %vm1112, %v1011
      %1117 = vst.msk [vmem:[#allocation3 + $0x40] sm:$0xff] %vm1112, %v1013
      %1118 = vst.msk [vmem:[#allocation3 + $0x50] sm:$0xff] %vm1112, %v1015
      %1119 = vst.msk [vmem:[#allocation3 + $0x60] sm:$0xff] %vm1112, %v1017
      %1120 = vst.msk [vmem:[#allocation3 + $0x70] sm:$0xff] %vm1112, %v1019
      %1121 = vst.msk [vmem:[#allocation3 + $0x80] sm:$0xff] %vm1112, %v1021
      %1122 = vst.msk [vmem:[#allocation3 + $0x90] sm:$0xff] %vm1112, %v1023
      %1123 = vst.msk [vmem:[#allocation3 + $0xa0] sm:$0xff] %vm1112, %v1025
      %1124 = vst.msk [vmem:[#allocation3 + $0xb0] sm:$0xff] %vm1112, %v1027
      %1125 = vst.msk [vmem:[#allocation3 + $0xc0] sm:$0xff] %vm1112, %v1029
      %1126 = vst.msk [vmem:[#allocation3 + $0xd0] sm:$0xff] %vm1112, %v1031
      %1127 = vst.msk [vmem:[#allocation3 + $0xe0] sm:$0xff] %vm1112, %v1033
      %1128 = vst.msk [vmem:[#allocation3 + $0xf0] sm:$0xff] %vm1112, %v1035
      %1129 = vst.msk [vmem:[#allocation3 + $0x100] sm:$0xff] %vm1112, %v1037
      %1130 = vst.msk [vmem:[#allocation3 + $0x110] sm:$0xff] %vm1112, %v1039
      %1131 = vst.msk [vmem:[#allocation3 + $0x120] sm:$0xff] %vm1112, %v1041
      %1132 = vst.msk [vmem:[#allocation3 + $0x130] sm:$0xff] %vm1112, %v1043
      %1133 = vst.msk [vmem:[#allocation3 + $0x140] sm:$0xff] %vm1112, %v1045
      %1134 = vst.msk [vmem:[#allocation3 + $0x150] sm:$0xff] %vm1112, %v1047
      %1135 = vst.msk [vmem:[#allocation3 + $0x160] sm:$0xff] %vm1112, %v1049
      %1136 = vst.msk [vmem:[#allocation3 + $0x170] sm:$0xff] %vm1112, %v1051
      %1137 = vst.msk [vmem:[#allocation3 + $0x180] sm:$0xff] %vm1112, %v1053
      %1138 = vst.msk [vmem:[#allocation3 + $0x190] sm:$0xff] %vm1112, %v1055
      %1139 = vst.msk [vmem:[#allocation3 + $0x1a0] sm:$0xff] %vm1112, %v1057
      %1140 = vst.msk [vmem:[#allocation3 + $0x1b0] sm:$0xff] %vm1112, %v1059
      %1141 = vst.msk [vmem:[#allocation3 + $0x1c0] sm:$0xff] %vm1112, %v1061
      %1142 = vst.msk [vmem:[#allocation3 + $0x1d0] sm:$0xff] %vm1112, %v1063
      %1143 = vst.msk [vmem:[#allocation3 + $0x1e0] sm:$0xff] %vm1112, %v1065
      %1144 = vst.msk [vmem:[#allocation3 + $0x1f0] sm:$0xff] %vm1112, %v1067
      %1145 = vst.msk [vmem:[#allocation3 + $0x200] sm:$0xff] %vm1112, %v1069
      %1146 = vst.msk [vmem:[#allocation3 + $0x210] sm:$0xff] %vm1112, %v1071
      %1147 = vst.msk [vmem:[#allocation3 + $0x220] sm:$0xff] %vm1112, %v1073
      %1148 = vst.msk [vmem:[#allocation3 + $0x230] sm:$0xff] %vm1112, %v1075
      %v1149 = vld [vmem:[%s403 + $0x13] sm:$0xff]
      %v1150 = vld [vmem:[%s403 + $0x1b] sm:$0xff]
      %v1151 = vld [vmem:[%s403 + $0x23] sm:$0xff]
      %v1152 = vld [vmem:[%s403 + $0x2b] sm:$0xff]
      %v1153 = vld [vmem:[%s403 + $0x33] sm:$0xff]
      %v1154 = vld [vmem:[%s403 + $0x3b] sm:$0xff]
      %v1155 = vld [vmem:[%s403 + $0x43] sm:$0xff]
      %v1156 = vld [vmem:[%s403 + $0x4b] sm:$0xff]
      %v1157 = vld [vmem:[%s403 + $0x53] sm:$0xff]
      %v1158 = vld [vmem:[%s403 + $0x5b] sm:$0xff]
      %v1159 = vld [vmem:[%s403 + $0x63] sm:$0xff]
      %v1160 = vld [vmem:[%s403 + $0x6b] sm:$0xff]
      %v1161 = vld [vmem:[%s403 + $0x73] sm:$0xff]
      %v1162 = vld [vmem:[%s403 + $0x7b] sm:$0xff]
      %v1163 = vld [vmem:[%s403 + $0x83] sm:$0xff]
      %v1164 = vld [vmem:[%s403 + $0x8b] sm:$0xff]
      %v1165 = vld [vmem:[%s403 + $0x93] sm:$0xff]
      %v1166 = vld [vmem:[%s403 + $0x9b] sm:$0xff]
      %v1167 = vld [vmem:[%s403 + $0xa3] sm:$0xff]
      %v1168 = vld [vmem:[%s403 + $0xab] sm:$0xff]
      %v1169 = vld [vmem:[%s403 + $0xb3] sm:$0xff]
      %v1170 = vld [vmem:[%s403 + $0xbb] sm:$0xff]
      %v1171 = vld [vmem:[%s403 + $0xc3] sm:$0xff]
      %v1172 = vld [vmem:[%s403 + $0xcb] sm:$0xff]
      %v1173 = vld [vmem:[%s403 + $0xd3] sm:$0xff]
      %v1174 = vld [vmem:[%s403 + $0xdb] sm:$0xff]
      %v1175 = vld [vmem:[%s403 + $0xe3] sm:$0xff]
      %v1176 = vld [vmem:[%s403 + $0xeb] sm:$0xff]
      %v1177 = vld [vmem:[%s403 + $0xf3] sm:$0xff]
      %v1178 = vld [vmem:[%s403 + $0xfb] sm:$0xff]
      %v1179 = vld [vmem:[%s403 + $0x103] sm:$0xff]
      %v1180 = vld [vmem:[%s403 + $0x10b] sm:$0xff]
      %v1181 = vld [vmem:[%s403 + $0x113] sm:$0xff]
      %v1182 = vld [vmem:[%s403 + $0x11b] sm:$0xff]
      %v1183 = vld [vmem:[%s403 + $0x123] sm:$0xff]
      %v1184 = vld [vmem:[%s403 + $0x12b] sm:$0xff]
      %1221 = vrot.lane.b32.xlu0 %v1149, 64
      %v1222 = vpop.permute.xlu0 %1221
      %1223 = vrot.lane.b32.xlu0 %v1150, 64
      %v1224 = vpop.permute.xlu0 %1223
      %1225 = vrot.lane.b32.xlu0 %v1151, 64
      %v1226 = vpop.permute.xlu0 %1225
      %1227 = vrot.lane.b32.xlu0 %v1152, 64
      %v1228 = vpop.permute.xlu0 %1227
      %1229 = vrot.lane.b32.xlu0 %v1153, 64
      %v1230 = vpop.permute.xlu0 %1229
      %1231 = vrot.lane.b32.xlu0 %v1154, 64
      %v1232 = vpop.permute.xlu0 %1231
      %1233 = vrot.lane.b32.xlu0 %v1155, 64
      %v1234 = vpop.permute.xlu0 %1233
      %1235 = vrot.lane.b32.xlu0 %v1156, 64
      %v1236 = vpop.permute.xlu0 %1235
      %1237 = vrot.lane.b32.xlu0 %v1157, 64
      %v1238 = vpop.permute.xlu0 %1237
      %1239 = vrot.lane.b32.xlu0 %v1158, 64
      %v1240 = vpop.permute.xlu0 %1239
      %1241 = vrot.lane.b32.xlu0 %v1159, 64
      %v1242 = vpop.permute.xlu0 %1241
      %1243 = vrot.lane.b32.xlu0 %v1160, 64
      %v1244 = vpop.permute.xlu0 %1243
      %1245 = vrot.lane.b32.xlu0 %v1161, 64
      %v1246 = vpop.permute.xlu0 %1245
      %1247 = vrot.lane.b32.xlu0 %v1162, 64
      %v1248 = vpop.permute.xlu0 %1247
      %1249 = vrot.lane.b32.xlu0 %v1163, 64
      %v1250 = vpop.permute.xlu0 %1249
      %1251 = vrot.lane.b32.xlu0 %v1164, 64
      %v1252 = vpop.permute.xlu0 %1251
      %1253 = vrot.lane.b32.xlu0 %v1165, 64
      %v1254 = vpop.permute.xlu0 %1253
      %1255 = vrot.lane.b32.xlu0 %v1166, 64
      %v1256 = vpop.permute.xlu0 %1255
      %1257 = vrot.lane.b32.xlu0 %v1167, 64
      %v1258 = vpop.permute.xlu0 %1257
      %1259 = vrot.lane.b32.xlu0 %v1168, 64
      %v1260 = vpop.permute.xlu0 %1259
      %1261 = vrot.lane.b32.xlu0 %v1169, 64
      %v1262 = vpop.permute.xlu0 %1261
      %1263 = vrot.lane.b32.xlu0 %v1170, 64
      %v1264 = vpop.permute.xlu0 %1263
      %1265 = vrot.lane.b32.xlu0 %v1171, 64
      %v1266 = vpop.permute.xlu0 %1265
      %1267 = vrot.lane.b32.xlu0 %v1172, 64
      %v1268 = vpop.permute.xlu0 %1267
      %1269 = vrot.lane.b32.xlu0 %v1173, 64
      %v1270 = vpop.permute.xlu0 %1269
      %1271 = vrot.lane.b32.xlu0 %v1174, 64
      %v1272 = vpop.permute.xlu0 %1271
      %1273 = vrot.lane.b32.xlu0 %v1175, 64
      %v1274 = vpop.permute.xlu0 %1273
      %1275 = vrot.lane.b32.xlu0 %v1176, 64
      %v1276 = vpop.permute.xlu0 %1275
      %1277 = vrot.lane.b32.xlu0 %v1177, 64
      %v1278 = vpop.permute.xlu0 %1277
      %1279 = vrot.lane.b32.xlu0 %v1178, 64
      %v1280 = vpop.permute.xlu0 %1279
      %1281 = vrot.lane.b32.xlu0 %v1179, 64
      %v1282 = vpop.permute.xlu0 %1281
      %1283 = vrot.lane.b32.xlu0 %v1180, 64
      %v1284 = vpop.permute.xlu0 %1283
      %1285 = vrot.lane.b32.xlu0 %v1181, 64
      %v1286 = vpop.permute.xlu0 %1285
      %1287 = vrot.lane.b32.xlu0 %v1182, 64
      %v1288 = vpop.permute.xlu0 %1287
      %1289 = vrot.lane.b32.xlu0 %v1183, 64
      %v1290 = vpop.permute.xlu0 %1289
      %1291 = vrot.lane.b32.xlu0 %v1184, 64
      %v1292 = vpop.permute.xlu0 %1291
      %vm1329 = vcmask 654848
      %1330 = vst.msk [vmem:[#allocation3] sm:$0xff] %vm1329, %v1222
      %1331 = vst.msk [vmem:[#allocation3 + $0x10] sm:$0xff] %vm1329, %v1224
      %1332 = vst.msk [vmem:[#allocation3 + $0x20] sm:$0xff] %vm1329, %v1226
      %1333 = vst.msk [vmem:[#allocation3 + $0x30] sm:$0xff] %vm1329, %v1228
      %1334 = vst.msk [vmem:[#allocation3 + $0x40] sm:$0xff] %vm1329, %v1230
      %1335 = vst.msk [vmem:[#allocation3 + $0x50] sm:$0xff] %vm1329, %v1232
      %1336 = vst.msk [vmem:[#allocation3 + $0x60] sm:$0xff] %vm1329, %v1234
      %1337 = vst.msk [vmem:[#allocation3 + $0x70] sm:$0xff] %vm1329, %v1236
      %1338 = vst.msk [vmem:[#allocation3 + $0x80] sm:$0xff] %vm1329, %v1238
      %1339 = vst.msk [vmem:[#allocation3 + $0x90] sm:$0xff] %vm1329, %v1240
      %1340 = vst.msk [vmem:[#allocation3 + $0xa0] sm:$0xff] %vm1329, %v1242
      %1341 = vst.msk [vmem:[#allocation3 + $0xb0] sm:$0xff] %vm1329, %v1244
      %1342 = vst.msk [vmem:[#allocation3 + $0xc0] sm:$0xff] %vm1329, %v1246
      %1343 = vst.msk [vmem:[#allocation3 + $0xd0] sm:$0xff] %vm1329, %v1248
      %1344 = vst.msk [vmem:[#allocation3 + $0xe0] sm:$0xff] %vm1329, %v1250
      %1345 = vst.msk [vmem:[#allocation3 + $0xf0] sm:$0xff] %vm1329, %v1252
      %1346 = vst.msk [vmem:[#allocation3 + $0x100] sm:$0xff] %vm1329, %v1254
      %1347 = vst.msk [vmem:[#allocation3 + $0x110] sm:$0xff] %vm1329, %v1256
      %1348 = vst.msk [vmem:[#allocation3 + $0x120] sm:$0xff] %vm1329, %v1258
      %1349 = vst.msk [vmem:[#allocation3 + $0x130] sm:$0xff] %vm1329, %v1260
      %1350 = vst.msk [vmem:[#allocation3 + $0x140] sm:$0xff] %vm1329, %v1262
      %1351 = vst.msk [vmem:[#allocation3 + $0x150] sm:$0xff] %vm1329, %v1264
      %1352 = vst.msk [vmem:[#allocation3 + $0x160] sm:$0xff] %vm1329, %v1266
      %1353 = vst.msk [vmem:[#allocation3 + $0x170] sm:$0xff] %vm1329, %v1268
      %1354 = vst.msk [vmem:[#allocation3 + $0x180] sm:$0xff] %vm1329, %v1270
      %1355 = vst.msk [vmem:[#allocation3 + $0x190] sm:$0xff] %vm1329, %v1272
      %1356 = vst.msk [vmem:[#allocation3 + $0x1a0] sm:$0xff] %vm1329, %v1274
      %1357 = vst.msk [vmem:[#allocation3 + $0x1b0] sm:$0xff] %vm1329, %v1276
      %1358 = vst.msk [vmem:[#allocation3 + $0x1c0] sm:$0xff] %vm1329, %v1278
      %1359 = vst.msk [vmem:[#allocation3 + $0x1d0] sm:$0xff] %vm1329, %v1280
      %1360 = vst.msk [vmem:[#allocation3 + $0x1e0] sm:$0xff] %vm1329, %v1282
      %1361 = vst.msk [vmem:[#allocation3 + $0x1f0] sm:$0xff] %vm1329, %v1284
      %1362 = vst.msk [vmem:[#allocation3 + $0x200] sm:$0xff] %vm1329, %v1286
      %1363 = vst.msk [vmem:[#allocation3 + $0x210] sm:$0xff] %vm1329, %v1288
      %1364 = vst.msk [vmem:[#allocation3 + $0x220] sm:$0xff] %vm1329, %v1290
      %1365 = vst.msk [vmem:[#allocation3 + $0x230] sm:$0xff] %vm1329, %v1292
      %v1366 = vld [vmem:[%s403 + $0x14] sm:$0xff]
      %v1367 = vld [vmem:[%s403 + $0x1c] sm:$0xff]
      %v1368 = vld [vmem:[%s403 + $0x24] sm:$0xff]
      %v1369 = vld [vmem:[%s403 + $0x2c] sm:$0xff]
      %v1370 = vld [vmem:[%s403 + $0x34] sm:$0xff]
      %v1371 = vld [vmem:[%s403 + $0x3c] sm:$0xff]
      %v1372 = vld [vmem:[%s403 + $0x44] sm:$0xff]
      %v1373 = vld [vmem:[%s403 + $0x4c] sm:$0xff]
      %v1374 = vld [vmem:[%s403 + $0x54] sm:$0xff]
      %v1375 = vld [vmem:[%s403 + $0x5c] sm:$0xff]
      %v1376 = vld [vmem:[%s403 + $0x64] sm:$0xff]
      %v1377 = vld [vmem:[%s403 + $0x6c] sm:$0xff]
      %v1378 = vld [vmem:[%s403 + $0x74] sm:$0xff]
      %v1379 = vld [vmem:[%s403 + $0x7c] sm:$0xff]
      %v1380 = vld [vmem:[%s403 + $0x84] sm:$0xff]
      %v1381 = vld [vmem:[%s403 + $0x8c] sm:$0xff]
      %v1382 = vld [vmem:[%s403 + $0x94] sm:$0xff]
      %v1383 = vld [vmem:[%s403 + $0x9c] sm:$0xff]
      %v1384 = vld [vmem:[%s403 + $0xa4] sm:$0xff]
      %v1385 = vld [vmem:[%s403 + $0xac] sm:$0xff]
      %v1386 = vld [vmem:[%s403 + $0xb4] sm:$0xff]
      %v1387 = vld [vmem:[%s403 + $0xbc] sm:$0xff]
      %v1388 = vld [vmem:[%s403 + $0xc4] sm:$0xff]
      %v1389 = vld [vmem:[%s403 + $0xcc] sm:$0xff]
      %v1390 = vld [vmem:[%s403 + $0xd4] sm:$0xff]
      %v1391 = vld [vmem:[%s403 + $0xdc] sm:$0xff]
      %v1392 = vld [vmem:[%s403 + $0xe4] sm:$0xff]
      %v1393 = vld [vmem:[%s403 + $0xec] sm:$0xff]
      %v1394 = vld [vmem:[%s403 + $0xf4] sm:$0xff]
      %v1395 = vld [vmem:[%s403 + $0xfc] sm:$0xff]
      %v1396 = vld [vmem:[%s403 + $0x104] sm:$0xff]
      %v1397 = vld [vmem:[%s403 + $0x10c] sm:$0xff]
      %v1398 = vld [vmem:[%s403 + $0x114] sm:$0xff]
      %v1399 = vld [vmem:[%s403 + $0x11c] sm:$0xff]
      %v1400 = vld [vmem:[%s403 + $0x124] sm:$0xff]
      %v1401 = vld [vmem:[%s403 + $0x12c] sm:$0xff]
      %1438 = vrot.lane.b32.xlu0 %v1366, 80
      %v1439 = vpop.permute.xlu0 %1438
      %1440 = vrot.lane.b32.xlu0 %v1367, 80
      %v1441 = vpop.permute.xlu0 %1440
      %1442 = vrot.lane.b32.xlu0 %v1368, 80
      %v1443 = vpop.permute.xlu0 %1442
      %1444 = vrot.lane.b32.xlu0 %v1369, 80
      %v1445 = vpop.permute.xlu0 %1444
      %1446 = vrot.lane.b32.xlu0 %v1370, 80
      %v1447 = vpop.permute.xlu0 %1446
      %1448 = vrot.lane.b32.xlu0 %v1371, 80
      %v1449 = vpop.permute.xlu0 %1448
      %1450 = vrot.lane.b32.xlu0 %v1372, 80
      %v1451 = vpop.permute.xlu0 %1450
      %1452 = vrot.lane.b32.xlu0 %v1373, 80
      %v1453 = vpop.permute.xlu0 %1452
      %1454 = vrot.lane.b32.xlu0 %v1374, 80
      %v1455 = vpop.permute.xlu0 %1454
      %1456 = vrot.lane.b32.xlu0 %v1375, 80
      %v1457 = vpop.permute.xlu0 %1456
      %1458 = vrot.lane.b32.xlu0 %v1376, 80
      %v1459 = vpop.permute.xlu0 %1458
      %1460 = vrot.lane.b32.xlu0 %v1377, 80
      %v1461 = vpop.permute.xlu0 %1460
      %1462 = vrot.lane.b32.xlu0 %v1378, 80
      %v1463 = vpop.permute.xlu0 %1462
      %1464 = vrot.lane.b32.xlu0 %v1379, 80
      %v1465 = vpop.permute.xlu0 %1464
      %1466 = vrot.lane.b32.xlu0 %v1380, 80
      %v1467 = vpop.permute.xlu0 %1466
      %1468 = vrot.lane.b32.xlu0 %v1381, 80
      %v1469 = vpop.permute.xlu0 %1468
      %1470 = vrot.lane.b32.xlu0 %v1382, 80
      %v1471 = vpop.permute.xlu0 %1470
      %1472 = vrot.lane.b32.xlu0 %v1383, 80
      %v1473 = vpop.permute.xlu0 %1472
      %1474 = vrot.lane.b32.xlu0 %v1384, 80
      %v1475 = vpop.permute.xlu0 %1474
      %1476 = vrot.lane.b32.xlu0 %v1385, 80
      %v1477 = vpop.permute.xlu0 %1476
      %1478 = vrot.lane.b32.xlu0 %v1386, 80
      %v1479 = vpop.permute.xlu0 %1478
      %1480 = vrot.lane.b32.xlu0 %v1387, 80
      %v1481 = vpop.permute.xlu0 %1480
      %1482 = vrot.lane.b32.xlu0 %v1388, 80
      %v1483 = vpop.permute.xlu0 %1482
      %1484 = vrot.lane.b32.xlu0 %v1389, 80
      %v1485 = vpop.permute.xlu0 %1484
      %1486 = vrot.lane.b32.xlu0 %v1390, 80
      %v1487 = vpop.permute.xlu0 %1486
      %1488 = vrot.lane.b32.xlu0 %v1391, 80
      %v1489 = vpop.permute.xlu0 %1488
      %1490 = vrot.lane.b32.xlu0 %v1392, 80
      %v1491 = vpop.permute.xlu0 %1490
      %1492 = vrot.lane.b32.xlu0 %v1393, 80
      %v1493 = vpop.permute.xlu0 %1492
      %1494 = vrot.lane.b32.xlu0 %v1394, 80
      %v1495 = vpop.permute.xlu0 %1494
      %1496 = vrot.lane.b32.xlu0 %v1395, 80
      %v1497 = vpop.permute.xlu0 %1496
      %1498 = vrot.lane.b32.xlu0 %v1396, 80
      %v1499 = vpop.permute.xlu0 %1498
      %1500 = vrot.lane.b32.xlu0 %v1397, 80
      %v1501 = vpop.permute.xlu0 %1500
      %1502 = vrot.lane.b32.xlu0 %v1398, 80
      %v1503 = vpop.permute.xlu0 %1502
      %1504 = vrot.lane.b32.xlu0 %v1399, 80
      %v1505 = vpop.permute.xlu0 %1504
      %1506 = vrot.lane.b32.xlu0 %v1400, 80
      %v1507 = vpop.permute.xlu0 %1506
      %1508 = vrot.lane.b32.xlu0 %v1401, 80
      %v1509 = vpop.permute.xlu0 %1508
      %vm1546 = vcmask 786048
      %1547 = vst.msk [vmem:[#allocation3] sm:$0xff] %vm1546, %v1439
      %1548 = vst.msk [vmem:[#allocation3 + $0x10] sm:$0xff] %vm1546, %v1441
      %1549 = vst.msk [vmem:[#allocation3 + $0x20] sm:$0xff] %vm1546, %v1443
      %1550 = vst.msk [vmem:[#allocation3 + $0x30] sm:$0xff] %vm1546, %v1445
      %1551 = vst.msk [vmem:[#allocation3 + $0x40] sm:$0xff] %vm1546, %v1447
      %1552 = vst.msk [vmem:[#allocation3 + $0x50] sm:$0xff] %vm1546, %v1449
      %1553 = vst.msk [vmem:[#allocation3 + $0x60] sm:$0xff] %vm1546, %v1451
      %1554 = vst.msk [vmem:[#allocation3 + $0x70] sm:$0xff] %vm1546, %v1453
      %1555 = vst.msk [vmem:[#allocation3 + $0x80] sm:$0xff] %vm1546, %v1455
      %1556 = vst.msk [vmem:[#allocation3 + $0x90] sm:$0xff] %vm1546, %v1457
      %1557 = vst.msk [vmem:[#allocation3 + $0xa0] sm:$0xff] %vm1546, %v1459
      %1558 = vst.msk [vmem:[#allocation3 + $0xb0] sm:$0xff] %vm1546, %v1461
      %1559 = vst.msk [vmem:[#allocation3 + $0xc0] sm:$0xff] %vm1546, %v1463
      %1560 = vst.msk [vmem:[#allocation3 + $0xd0] sm:$0xff] %vm1546, %v1465
      %1561 = vst.msk [vmem:[#allocation3 + $0xe0] sm:$0xff] %vm1546, %v1467
      %1562 = vst.msk [vmem:[#allocation3 + $0xf0] sm:$0xff] %vm1546, %v1469
      %1563 = vst.msk [vmem:[#allocation3 + $0x100] sm:$0xff] %vm1546, %v1471
      %1564 = vst.msk [vmem:[#allocation3 + $0x110] sm:$0xff] %vm1546, %v1473
      %1565 = vst.msk [vmem:[#allocation3 + $0x120] sm:$0xff] %vm1546, %v1475
      %1566 = vst.msk [vmem:[#allocation3 + $0x130] sm:$0xff] %vm1546, %v1477
      %1567 = vst.msk [vmem:[#allocation3 + $0x140] sm:$0xff] %vm1546, %v1479
      %1568 = vst.msk [vmem:[#allocation3 + $0x150] sm:$0xff] %vm1546, %v1481
      %1569 = vst.msk [vmem:[#allocation3 + $0x160] sm:$0xff] %vm1546, %v1483
      %1570 = vst.msk [vmem:[#allocation3 + $0x170] sm:$0xff] %vm1546, %v1485
      %1571 = vst.msk [vmem:[#allocation3 + $0x180] sm:$0xff] %vm1546, %v1487
      %1572 = vst.msk [vmem:[#allocation3 + $0x190] sm:$0xff] %vm1546, %v1489
      %1573 = vst.msk [vmem:[#allocation3 + $0x1a0] sm:$0xff] %vm1546, %v1491
      %1574 = vst.msk [vmem:[#allocation3 + $0x1b0] sm:$0xff] %vm1546, %v1493
      %1575 = vst.msk [vmem:[#allocation3 + $0x1c0] sm:$0xff] %vm1546, %v1495
      %1576 = vst.msk [vmem:[#allocation3 + $0x1d0] sm:$0xff] %vm1546, %v1497
      %1577 = vst.msk [vmem:[#allocation3 + $0x1e0] sm:$0xff] %vm1546, %v1499
      %1578 = vst.msk [vmem:[#allocation3 + $0x1f0] sm:$0xff] %vm1546, %v1501
      %1579 = vst.msk [vmem:[#allocation3 + $0x200] sm:$0xff] %vm1546, %v1503
      %1580 = vst.msk [vmem:[#allocation3 + $0x210] sm:$0xff] %vm1546, %v1505
      %1581 = vst.msk [vmem:[#allocation3 + $0x220] sm:$0xff] %vm1546, %v1507
      %1582 = vst.msk [vmem:[#allocation3 + $0x230] sm:$0xff] %vm1546, %v1509
      %v1583 = vld [vmem:[%s403 + $0x24] sm:$0xff]
      %v1584 = vld [vmem:[%s403 + $0x2c] sm:$0xff]
      %v1585 = vld [vmem:[%s403 + $0x34] sm:$0xff]
      %v1586 = vld [vmem:[%s403 + $0x3c] sm:$0xff]
      %v1587 = vld [vmem:[%s403 + $0x44] sm:$0xff]
      %v1588 = vld [vmem:[%s403 + $0x4c] sm:$0xff]
      %v1589 = vld [vmem:[%s403 + $0x54] sm:$0xff]
      %v1590 = vld [vmem:[%s403 + $0x5c] sm:$0xff]
      %v1591 = vld [vmem:[%s403 + $0x64] sm:$0xff]
      %v1592 = vld [vmem:[%s403 + $0x6c] sm:$0xff]
      %v1593 = vld [vmem:[%s403 + $0x74] sm:$0xff]
      %v1594 = vld [vmem:[%s403 + $0x7c] sm:$0xff]
      %v1595 = vld [vmem:[%s403 + $0x84] sm:$0xff]
      %v1596 = vld [vmem:[%s403 + $0x8c] sm:$0xff]
      %v1597 = vld [vmem:[%s403 + $0x94] sm:$0xff]
      %v1598 = vld [vmem:[%s403 + $0x9c] sm:$0xff]
      %v1599 = vld [vmem:[%s403 + $0xa4] sm:$0xff]
      %v1600 = vld [vmem:[%s403 + $0xac] sm:$0xff]
      %v1601 = vld [vmem:[%s403 + $0xb4] sm:$0xff]
      %v1602 = vld [vmem:[%s403 + $0xbc] sm:$0xff]
      %v1603 = vld [vmem:[%s403 + $0xc4] sm:$0xff]
      %v1604 = vld [vmem:[%s403 + $0xcc] sm:$0xff]
      %v1605 = vld [vmem:[%s403 + $0xd4] sm:$0xff]
      %v1606 = vld [vmem:[%s403 + $0xdc] sm:$0xff]
      %v1607 = vld [vmem:[%s403 + $0xe4] sm:$0xff]
      %v1608 = vld [vmem:[%s403 + $0xec] sm:$0xff]
      %v1609 = vld [vmem:[%s403 + $0xf4] sm:$0xff]
      %v1610 = vld [vmem:[%s403 + $0xfc] sm:$0xff]
      %v1611 = vld [vmem:[%s403 + $0x104] sm:$0xff]
      %v1612 = vld [vmem:[%s403 + $0x10c] sm:$0xff]
      %v1613 = vld [vmem:[%s403 + $0x114] sm:$0xff]
      %v1614 = vld [vmem:[%s403 + $0x11c] sm:$0xff]
      %v1615 = vld [vmem:[%s403 + $0x124] sm:$0xff]
      %v1616 = vld [vmem:[%s403 + $0x12c] sm:$0xff]
      %v1617 = vld [vmem:[%s403 + $0x134] sm:$0xff]
      %v1618 = vld [vmem:[%s403 + $0x13c] sm:$0xff]
      %1655 = vrot.lane.b32.xlu0 %v1583, 96
      %v1656 = vpop.permute.xlu0 %1655
      %1657 = vrot.lane.b32.xlu0 %v1584, 96
      %v1658 = vpop.permute.xlu0 %1657
      %1659 = vrot.lane.b32.xlu0 %v1585, 96
      %v1660 = vpop.permute.xlu0 %1659
      %1661 = vrot.lane.b32.xlu0 %v1586, 96
      %v1662 = vpop.permute.xlu0 %1661
      %1663 = vrot.lane.b32.xlu0 %v1587, 96
      %v1664 = vpop.permute.xlu0 %1663
      %1665 = vrot.lane.b32.xlu0 %v1588, 96
      %v1666 = vpop.permute.xlu0 %1665
      %1667 = vrot.lane.b32.xlu0 %v1589, 96
      %v1668 = vpop.permute.xlu0 %1667
      %1669 = vrot.lane.b32.xlu0 %v1590, 96
      %v1670 = vpop.permute.xlu0 %1669
      %1671 = vrot.lane.b32.xlu0 %v1591, 96
      %v1672 = vpop.permute.xlu0 %1671
      %1673 = vrot.lane.b32.xlu0 %v1592, 96
      %v1674 = vpop.permute.xlu0 %1673
      %1675 = vrot.lane.b32.xlu0 %v1593, 96
      %v1676 = vpop.permute.xlu0 %1675
      %1677 = vrot.lane.b32.xlu0 %v1594, 96
      %v1678 = vpop.permute.xlu0 %1677
      %1679 = vrot.lane.b32.xlu0 %v1595, 96
      %v1680 = vpop.permute.xlu0 %1679
      %1681 = vrot.lane.b32.xlu0 %v1596, 96
      %v1682 = vpop.permute.xlu0 %1681
      %1683 = vrot.lane.b32.xlu0 %v1597, 96
      %v1684 = vpop.permute.xlu0 %1683
      %1685 = vrot.lane.b32.xlu0 %v1598, 96
      %v1686 = vpop.permute.xlu0 %1685
      %1687 = vrot.lane.b32.xlu0 %v1599, 96
      %v1688 = vpop.permute.xlu0 %1687
      %1689 = vrot.lane.b32.xlu0 %v1600, 96
      %v1690 = vpop.permute.xlu0 %1689
      %1691 = vrot.lane.b32.xlu0 %v1601, 96
      %v1692 = vpop.permute.xlu0 %1691
      %1693 = vrot.lane.b32.xlu0 %v1602, 96
      %v1694 = vpop.permute.xlu0 %1693
      %1695 = vrot.lane.b32.xlu0 %v1603, 96
      %v1696 = vpop.permute.xlu0 %1695
      %1697 = vrot.lane.b32.xlu0 %v1604, 96
      %v1698 = vpop.permute.xlu0 %1697
      %1699 = vrot.lane.b32.xlu0 %v1605, 96
      %v1700 = vpop.permute.xlu0 %1699
      %1701 = vrot.lane.b32.xlu0 %v1606, 96
      %v1702 = vpop.permute.xlu0 %1701
      %1703 = vrot.lane.b32.xlu0 %v1607, 96
      %v1704 = vpop.permute.xlu0 %1703
      %1705 = vrot.lane.b32.xlu0 %v1608, 96
      %v1706 = vpop.permute.xlu0 %1705
      %1707 = vrot.lane.b32.xlu0 %v1609, 96
      %v1708 = vpop.permute.xlu0 %1707
      %1709 = vrot.lane.b32.xlu0 %v1610, 96
      %v1710 = vpop.permute.xlu0 %1709
      %1711 = vrot.lane.b32.xlu0 %v1611, 96
      %v1712 = vpop.permute.xlu0 %1711
      %1713 = vrot.lane.b32.xlu0 %v1612, 96
      %v1714 = vpop.permute.xlu0 %1713
      %1715 = vrot.lane.b32.xlu0 %v1613, 96
      %v1716 = vpop.permute.xlu0 %1715
      %1717 = vrot.lane.b32.xlu0 %v1614, 96
      %v1718 = vpop.permute.xlu0 %1717
      %1719 = vrot.lane.b32.xlu0 %v1615, 96
      %v1720 = vpop.permute.xlu0 %1719
      %1721 = vrot.lane.b32.xlu0 %v1616, 96
      %v1722 = vpop.permute.xlu0 %1721
      %1723 = vrot.lane.b32.xlu0 %v1617, 96
      %v1724 = vpop.permute.xlu0 %1723
      %1725 = vrot.lane.b32.xlu0 %v1618, 96
      %v1726 = vpop.permute.xlu0 %1725
      %vm1763 = vcmask 917248
      %1764 = vst.msk [vmem:[#allocation3] sm:$0xff] %vm1763, %v1656
      %1765 = vst.msk [vmem:[#allocation3 + $0x10] sm:$0xff] %vm1763, %v1658
      %1766 = vst.msk [vmem:[#allocation3 + $0x20] sm:$0xff] %vm1763, %v1660
      %1767 = vst.msk [vmem:[#allocation3 + $0x30] sm:$0xff] %vm1763, %v1662
      %1768 = vst.msk [vmem:[#allocation3 + $0x40] sm:$0xff] %vm1763, %v1664
      %1769 = vst.msk [vmem:[#allocation3 + $0x50] sm:$0xff] %vm1763, %v1666
      %1770 = vst.msk [vmem:[#allocation3 + $0x60] sm:$0xff] %vm1763, %v1668
      %1771 = vst.msk [vmem:[#allocation3 + $0x70] sm:$0xff] %vm1763, %v1670
      %1772 = vst.msk [vmem:[#allocation3 + $0x80] sm:$0xff] %vm1763, %v1672
      %1773 = vst.msk [vmem:[#allocation3 + $0x90] sm:$0xff] %vm1763, %v1674
      %1774 = vst.msk [vmem:[#allocation3 + $0xa0] sm:$0xff] %vm1763, %v1676
      %1775 = vst.msk [vmem:[#allocation3 + $0xb0] sm:$0xff] %vm1763, %v1678
      %1776 = vst.msk [vmem:[#allocation3 + $0xc0] sm:$0xff] %vm1763, %v1680
      %1777 = vst.msk [vmem:[#allocation3 + $0xd0] sm:$0xff] %vm1763, %v1682
      %1778 = vst.msk [vmem:[#allocation3 + $0xe0] sm:$0xff] %vm1763, %v1684
      %1779 = vst.msk [vmem:[#allocation3 + $0xf0] sm:$0xff] %vm1763, %v1686
      %1780 = vst.msk [vmem:[#allocation3 + $0x100] sm:$0xff] %vm1763, %v1688
      %1781 = vst.msk [vmem:[#allocation3 + $0x110] sm:$0xff] %vm1763, %v1690
      %1782 = vst.msk [vmem:[#allocation3 + $0x120] sm:$0xff] %vm1763, %v1692
      %1783 = vst.msk [vmem:[#allocation3 + $0x130] sm:$0xff] %vm1763, %v1694
      %1784 = vst.msk [vmem:[#allocation3 + $0x140] sm:$0xff] %vm1763, %v1696
      %1785 = vst.msk [vmem:[#allocation3 + $0x150] sm:$0xff] %vm1763, %v1698
      %1786 = vst.msk [vmem:[#allocation3 + $0x160] sm:$0xff] %vm1763, %v1700
      %1787 = vst.msk [vmem:[#allocation3 + $0x170] sm:$0xff] %vm1763, %v1702
      %1788 = vst.msk [vmem:[#allocation3 + $0x180] sm:$0xff] %vm1763, %v1704
      %1789 = vst.msk [vmem:[#allocation3 + $0x190] sm:$0xff] %vm1763, %v1706
      %1790 = vst.msk [vmem:[#allocation3 + $0x1a0] sm:$0xff] %vm1763, %v1708
      %1791 = vst.msk [vmem:[#allocation3 + $0x1b0] sm:$0xff] %vm1763, %v1710
      %1792 = vst.msk [vmem:[#allocation3 + $0x1c0] sm:$0xff] %vm1763, %v1712
      %1793 = vst.msk [vmem:[#allocation3 + $0x1d0] sm:$0xff] %vm1763, %v1714
      %1794 = vst.msk [vmem:[#allocation3 + $0x1e0] sm:$0xff] %vm1763, %v1716
      %1795 = vst.msk [vmem:[#allocation3 + $0x1f0] sm:$0xff] %vm1763, %v1718
      %1796 = vst.msk [vmem:[#allocation3 + $0x200] sm:$0xff] %vm1763, %v1720
      %1797 = vst.msk [vmem:[#allocation3 + $0x210] sm:$0xff] %vm1763, %v1722
      %1798 = vst.msk [vmem:[#allocation3 + $0x220] sm:$0xff] %vm1763, %v1724
      %1799 = vst.msk [vmem:[#allocation3 + $0x230] sm:$0xff] %vm1763, %v1726
      %v1800 = vld [vmem:[%s403 + $0x25] sm:$0xff]
      %v1801 = vld [vmem:[%s403 + $0x2d] sm:$0xff]
      %v1802 = vld [vmem:[%s403 + $0x35] sm:$0xff]
      %v1803 = vld [vmem:[%s403 + $0x3d] sm:$0xff]
      %v1804 = vld [vmem:[%s403 + $0x45] sm:$0xff]
      %v1805 = vld [vmem:[%s403 + $0x4d] sm:$0xff]
      %v1806 = vld [vmem:[%s403 + $0x55] sm:$0xff]
      %v1807 = vld [vmem:[%s403 + $0x5d] sm:$0xff]
      %v1808 = vld [vmem:[%s403 + $0x65] sm:$0xff]
      %v1809 = vld [vmem:[%s403 + $0x6d] sm:$0xff]
      %v1810 = vld [vmem:[%s403 + $0x75] sm:$0xff]
      %v1811 = vld [vmem:[%s403 + $0x7d] sm:$0xff]
      %v1812 = vld [vmem:[%s403 + $0x85] sm:$0xff]
      %v1813 = vld [vmem:[%s403 + $0x8d] sm:$0xff]
      %v1814 = vld [vmem:[%s403 + $0x95] sm:$0xff]
      %v1815 = vld [vmem:[%s403 + $0x9d] sm:$0xff]
      %v1816 = vld [vmem:[%s403 + $0xa5] sm:$0xff]
      %v1817 = vld [vmem:[%s403 + $0xad] sm:$0xff]
      %v1818 = vld [vmem:[%s403 + $0xb5] sm:$0xff]
      %v1819 = vld [vmem:[%s403 + $0xbd] sm:$0xff]
      %v1820 = vld [vmem:[%s403 + $0xc5] sm:$0xff]
      %v1821 = vld [vmem:[%s403 + $0xcd] sm:$0xff]
      %v1822 = vld [vmem:[%s403 + $0xd5] sm:$0xff]
      %v1823 = vld [vmem:[%s403 + $0xdd] sm:$0xff]
      %v1824 = vld [vmem:[%s403 + $0xe5] sm:$0xff]
      %v1825 = vld [vmem:[%s403 + $0xed] sm:$0xff]
      %v1826 = vld [vmem:[%s403 + $0xf5] sm:$0xff]
      %v1827 = vld [vmem:[%s403 + $0xfd] sm:$0xff]
      %v1828 = vld [vmem:[%s403 + $0x105] sm:$0xff]
      %v1829 = vld [vmem:[%s403 + $0x10d] sm:$0xff]
      %v1830 = vld [vmem:[%s403 + $0x115] sm:$0xff]
      %v1831 = vld [vmem:[%s403 + $0x11d] sm:$0xff]
      %v1832 = vld [vmem:[%s403 + $0x125] sm:$0xff]
      %v1833 = vld [vmem:[%s403 + $0x12d] sm:$0xff]
      %v1834 = vld [vmem:[%s403 + $0x135] sm:$0xff]
      %v1835 = vld [vmem:[%s403 + $0x13d] sm:$0xff]
      %1872 = vrot.lane.b32.xlu0 %v1800, 112
      %v1873 = vpop.permute.xlu0 %1872
      %1874 = vrot.lane.b32.xlu0 %v1801, 112
      %v1875 = vpop.permute.xlu0 %1874
      %1876 = vrot.lane.b32.xlu0 %v1802, 112
      %v1877 = vpop.permute.xlu0 %1876
      %1878 = vrot.lane.b32.xlu0 %v1803, 112
      %v1879 = vpop.permute.xlu0 %1878
      %1880 = vrot.lane.b32.xlu0 %v1804, 112
      %v1881 = vpop.permute.xlu0 %1880
      %1882 = vrot.lane.b32.xlu0 %v1805, 112
      %v1883 = vpop.permute.xlu0 %1882
      %1884 = vrot.lane.b32.xlu0 %v1806, 112
      %v1885 = vpop.permute.xlu0 %1884
      %1886 = vrot.lane.b32.xlu0 %v1807, 112
      %v1887 = vpop.permute.xlu0 %1886
      %1888 = vrot.lane.b32.xlu0 %v1808, 112
      %v1889 = vpop.permute.xlu0 %1888
      %1890 = vrot.lane.b32.xlu0 %v1809, 112
      %v1891 = vpop.permute.xlu0 %1890
      %1892 = vrot.lane.b32.xlu0 %v1810, 112
      %v1893 = vpop.permute.xlu0 %1892
      %1894 = vrot.lane.b32.xlu0 %v1811, 112
      %v1895 = vpop.permute.xlu0 %1894
      %1896 = vrot.lane.b32.xlu0 %v1812, 112
      %v1897 = vpop.permute.xlu0 %1896
      %1898 = vrot.lane.b32.xlu0 %v1813, 112
      %v1899 = vpop.permute.xlu0 %1898
      %1900 = vrot.lane.b32.xlu0 %v1814, 112
      %v1901 = vpop.permute.xlu0 %1900
      %1902 = vrot.lane.b32.xlu0 %v1815, 112
      %v1903 = vpop.permute.xlu0 %1902
      %1904 = vrot.lane.b32.xlu0 %v1816, 112
      %v1905 = vpop.permute.xlu0 %1904
      %1906 = vrot.lane.b32.xlu0 %v1817, 112
      %v1907 = vpop.permute.xlu0 %1906
      %1908 = vrot.lane.b32.xlu0 %v1818, 112
      %v1909 = vpop.permute.xlu0 %1908
      %1910 = vrot.lane.b32.xlu0 %v1819, 112
      %v1911 = vpop.permute.xlu0 %1910
      %1912 = vrot.lane.b32.xlu0 %v1820, 112
      %v1913 = vpop.permute.xlu0 %1912
      %1914 = vrot.lane.b32.xlu0 %v1821, 112
      %v1915 = vpop.permute.xlu0 %1914
      %1916 = vrot.lane.b32.xlu0 %v1822, 112
      %v1917 = vpop.permute.xlu0 %1916
      %1918 = vrot.lane.b32.xlu0 %v1823, 112
      %v1919 = vpop.permute.xlu0 %1918
      %1920 = vrot.lane.b32.xlu0 %v1824, 112
      %v1921 = vpop.permute.xlu0 %1920
      %1922 = vrot.lane.b32.xlu0 %v1825, 112
      %v1923 = vpop.permute.xlu0 %1922
      %1924 = vrot.lane.b32.xlu0 %v1826, 112
      %v1925 = vpop.permute.xlu0 %1924
      %1926 = vrot.lane.b32.xlu0 %v1827, 112
      %v1927 = vpop.permute.xlu0 %1926
      %1928 = vrot.lane.b32.xlu0 %v1828, 112
      %v1929 = vpop.permute.xlu0 %1928
      %1930 = vrot.lane.b32.xlu0 %v1829, 112
      %v1931 = vpop.permute.xlu0 %1930
      %1932 = vrot.lane.b32.xlu0 %v1830, 112
      %v1933 = vpop.permute.xlu0 %1932
      %1934 = vrot.lane.b32.xlu0 %v1831, 112
      %v1935 = vpop.permute.xlu0 %1934
      %1936 = vrot.lane.b32.xlu0 %v1832, 112
      %v1937 = vpop.permute.xlu0 %1936
      %1938 = vrot.lane.b32.xlu0 %v1833, 112
      %v1939 = vpop.permute.xlu0 %1938
      %1940 = vrot.lane.b32.xlu0 %v1834, 112
      %v1941 = vpop.permute.xlu0 %1940
      %1942 = vrot.lane.b32.xlu0 %v1835, 112
      %v1943 = vpop.permute.xlu0 %1942
      %vm1980 = vcmask 1048448
      %1981 = vst.msk [vmem:[#allocation3] sm:$0xff] %vm1980, %v1873
      %1982 = vst.msk [vmem:[#allocation3 + $0x10] sm:$0xff] %vm1980, %v1875
      %1983 = vst.msk [vmem:[#allocation3 + $0x20] sm:$0xff] %vm1980, %v1877
      %1984 = vst.msk [vmem:[#allocation3 + $0x30] sm:$0xff] %vm1980, %v1879
      %1985 = vst.msk [vmem:[#allocation3 + $0x40] sm:$0xff] %vm1980, %v1881
      %1986 = vst.msk [vmem:[#allocation3 + $0x50] sm:$0xff] %vm1980, %v1883
      %1987 = vst.msk [vmem:[#allocation3 + $0x60] sm:$0xff] %vm1980, %v1885
      %1988 = vst.msk [vmem:[#allocation3 + $0x70] sm:$0xff] %vm1980, %v1887
      %1989 = vst.msk [vmem:[#allocation3 + $0x80] sm:$0xff] %vm1980, %v1889
      %1990 = vst.msk [vmem:[#allocation3 + $0x90] sm:$0xff] %vm1980, %v1891
      %1991 = vst.msk [vmem:[#allocation3 + $0xa0] sm:$0xff] %vm1980, %v1893
      %1992 = vst.msk [vmem:[#allocation3 + $0xb0] sm:$0xff] %vm1980, %v1895
      %1993 = vst.msk [vmem:[#allocation3 + $0xc0] sm:$0xff] %vm1980, %v1897
      %1994 = vst.msk [vmem:[#allocation3 + $0xd0] sm:$0xff] %vm1980, %v1899
      %1995 = vst.msk [vmem:[#allocation3 + $0xe0] sm:$0xff] %vm1980, %v1901
      %1996 = vst.msk [vmem:[#allocation3 + $0xf0] sm:$0xff] %vm1980, %v1903
      %1997 = vst.msk [vmem:[#allocation3 + $0x100] sm:$0xff] %vm1980, %v1905
      %1998 = vst.msk [vmem:[#allocation3 + $0x110] sm:$0xff] %vm1980, %v1907
      %1999 = vst.msk [vmem:[#allocation3 + $0x120] sm:$0xff] %vm1980, %v1909
      %2000 = vst.msk [vmem:[#allocation3 + $0x130] sm:$0xff] %vm1980, %v1911
      %2001 = vst.msk [vmem:[#allocation3 + $0x140] sm:$0xff] %vm1980, %v1913
      %2002 = vst.msk [vmem:[#allocation3 + $0x150] sm:$0xff] %vm1980, %v1915
      %2003 = vst.msk [vmem:[#allocation3 + $0x160] sm:$0xff] %vm1980, %v1917
      %2004 = vst.msk [vmem:[#allocation3 + $0x170] sm:$0xff] %vm1980, %v1919
      %2005 = vst.msk [vmem:[#allocation3 + $0x180] sm:$0xff] %vm1980, %v1921
      %2006 = vst.msk [vmem:[#allocation3 + $0x190] sm:$0xff] %vm1980, %v1923
      %2007 = vst.msk [vmem:[#allocation3 + $0x1a0] sm:$0xff] %vm1980, %v1925
      %2008 = vst.msk [vmem:[#allocation3 + $0x1b0] sm:$0xff] %vm1980, %v1927
      %2009 = vst.msk [vmem:[#allocation3 + $0x1c0] sm:$0xff] %vm1980, %v1929
      %2010 = vst.msk [vmem:[#allocation3 + $0x1d0] sm:$0xff] %vm1980, %v1931
      %2011 = vst.msk [vmem:[#allocation3 + $0x1e0] sm:$0xff] %vm1980, %v1933
      %2012 = vst.msk [vmem:[#allocation3 + $0x1f0] sm:$0xff] %vm1980, %v1935
      %2013 = vst.msk [vmem:[#allocation3 + $0x200] sm:$0xff] %vm1980, %v1937
      %2014 = vst.msk [vmem:[#allocation3 + $0x210] sm:$0xff] %vm1980, %v1939
      %2015 = vst.msk [vmem:[#allocation3 + $0x220] sm:$0xff] %vm1980, %v1941
      %2016 = vst.msk [vmem:[#allocation3 + $0x230] sm:$0xff] %vm1980, %v1943
      %v2017 = vld [vmem:[%s403 + $0x26] sm:$0xff]
      %v2018 = vld [vmem:[%s403 + $0x2e] sm:$0xff]
      %v2019 = vld [vmem:[%s403 + $0x36] sm:$0xff]
      %v2020 = vld [vmem:[%s403 + $0x3e] sm:$0xff]
      %v2021 = vld [vmem:[%s403 + $0x46] sm:$0xff]
      %v2022 = vld [vmem:[%s403 + $0x4e] sm:$0xff]
      %v2023 = vld [vmem:[%s403 + $0x56] sm:$0xff]
      %v2024 = vld [vmem:[%s403 + $0x5e] sm:$0xff]
      %v2025 = vld [vmem:[%s403 + $0x66] sm:$0xff]
      %v2026 = vld [vmem:[%s403 + $0x6e] sm:$0xff]
      %v2027 = vld [vmem:[%s403 + $0x76] sm:$0xff]
      %v2028 = vld [vmem:[%s403 + $0x7e] sm:$0xff]
      %v2029 = vld [vmem:[%s403 + $0x86] sm:$0xff]
      %v2030 = vld [vmem:[%s403 + $0x8e] sm:$0xff]
      %v2031 = vld [vmem:[%s403 + $0x96] sm:$0xff]
      %v2032 = vld [vmem:[%s403 + $0x9e] sm:$0xff]
      %v2033 = vld [vmem:[%s403 + $0xa6] sm:$0xff]
      %v2034 = vld [vmem:[%s403 + $0xae] sm:$0xff]
      %v2035 = vld [vmem:[%s403 + $0xb6] sm:$0xff]
      %v2036 = vld [vmem:[%s403 + $0xbe] sm:$0xff]
      %v2037 = vld [vmem:[%s403 + $0xc6] sm:$0xff]
      %v2038 = vld [vmem:[%s403 + $0xce] sm:$0xff]
      %v2039 = vld [vmem:[%s403 + $0xd6] sm:$0xff]
      %v2040 = vld [vmem:[%s403 + $0xde] sm:$0xff]
      %v2041 = vld [vmem:[%s403 + $0xe6] sm:$0xff]
      %v2042 = vld [vmem:[%s403 + $0xee] sm:$0xff]
      %v2043 = vld [vmem:[%s403 + $0xf6] sm:$0xff]
      %v2044 = vld [vmem:[%s403 + $0xfe] sm:$0xff]
      %v2045 = vld [vmem:[%s403 + $0x106] sm:$0xff]
      %v2046 = vld [vmem:[%s403 + $0x10e] sm:$0xff]
      %v2047 = vld [vmem:[%s403 + $0x116] sm:$0xff]
      %v2048 = vld [vmem:[%s403 + $0x11e] sm:$0xff]
      %v2049 = vld [vmem:[%s403 + $0x126] sm:$0xff]
      %v2050 = vld [vmem:[%s403 + $0x12e] sm:$0xff]
      %v2051 = vld [vmem:[%s403 + $0x136] sm:$0xff]
      %v2052 = vld [vmem:[%s403 + $0x13e] sm:$0xff]
      %2053 = vst.msk [vmem:[#allocation3 + $0x8] sm:$0xff] %vm461, %v2017
      %2054 = vst.msk [vmem:[#allocation3 + $0x18] sm:$0xff] %vm461, %v2018
      %2055 = vst.msk [vmem:[#allocation3 + $0x28] sm:$0xff] %vm461, %v2019
      %2056 = vst.msk [vmem:[#allocation3 + $0x38] sm:$0xff] %vm461, %v2020
      %2057 = vst.msk [vmem:[#allocation3 + $0x48] sm:$0xff] %vm461, %v2021
      %2058 = vst.msk [vmem:[#allocation3 + $0x58] sm:$0xff] %vm461, %v2022
      %2059 = vst.msk [vmem:[#allocation3 + $0x68] sm:$0xff] %vm461, %v2023
      %2060 = vst.msk [vmem:[#allocation3 + $0x78] sm:$0xff] %vm461, %v2024
      %2061 = vst.msk [vmem:[#allocation3 + $0x88] sm:$0xff] %vm461, %v2025
      %2062 = vst.msk [vmem:[#allocation3 + $0x98] sm:$0xff] %vm461, %v2026
      %2063 = vst.msk [vmem:[#allocation3 + $0xa8] sm:$0xff] %vm461, %v2027
      %2064 = vst.msk [vmem:[#allocation3 + $0xb8] sm:$0xff] %vm461, %v2028
      %2065 = vst.msk [vmem:[#allocation3 + $0xc8] sm:$0xff] %vm461, %v2029
      %2066 = vst.msk [vmem:[#allocation3 + $0xd8] sm:$0xff] %vm461, %v2030
      %2067 = vst.msk [vmem:[#allocation3 + $0xe8] sm:$0xff] %vm461, %v2031
      %2068 = vst.msk [vmem:[#allocation3 + $0xf8] sm:$0xff] %vm461, %v2032
      %2069 = vst.msk [vmem:[#allocation3 + $0x108] sm:$0xff] %vm461, %v2033
      %2070 = vst.msk [vmem:[#allocation3 + $0x118] sm:$0xff] %vm461, %v2034
      %2071 = vst.msk [vmem:[#allocation3 + $0x128] sm:$0xff] %vm461, %v2035
      %2072 = vst.msk [vmem:[#allocation3 + $0x138] sm:$0xff] %vm461, %v2036
      %2073 = vst.msk [vmem:[#allocation3 + $0x148] sm:$0xff] %vm461, %v2037
      %2074 = vst.msk [vmem:[#allocation3 + $0x158] sm:$0xff] %vm461, %v2038
      %2075 = vst.msk [vmem:[#allocation3 + $0x168] sm:$0xff] %vm461, %v2039
      %2076 = vst.msk [vmem:[#allocation3 + $0x178] sm:$0xff] %vm461, %v2040
      %2077 = vst.msk [vmem:[#allocation3 + $0x188] sm:$0xff] %vm461, %v2041
      %2078 = vst.msk [vmem:[#allocation3 + $0x198] sm:$0xff] %vm461, %v2042
      %2079 = vst.msk [vmem:[#allocation3 + $0x1a8] sm:$0xff] %vm461, %v2043
      %2080 = vst.msk [vmem:[#allocation3 + $0x1b8] sm:$0xff] %vm461, %v2044
      %2081 = vst.msk [vmem:[#allocation3 + $0x1c8] sm:$0xff] %vm461, %v2045
      %2082 = vst.msk [vmem:[#allocation3 + $0x1d8] sm:$0xff] %vm461, %v2046
      %2083 = vst.msk [vmem:[#allocation3 + $0x1e8] sm:$0xff] %vm461, %v2047
      %2084 = vst.msk [vmem:[#allocation3 + $0x1f8] sm:$0xff] %vm461, %v2048
      %2085 = vst.msk [vmem:[#allocation3 + $0x208] sm:$0xff] %vm461, %v2049
      %2086 = vst.msk [vmem:[#allocation3 + $0x218] sm:$0xff] %vm461, %v2050
      %2087 = vst.msk [vmem:[#allocation3 + $0x228] sm:$0xff] %vm461, %v2051
      %2088 = vst.msk [vmem:[#allocation3 + $0x238] sm:$0xff] %vm461, %v2052
      %v2089 = vld [vmem:[#allocation3] sm:$0xff]
      %v2090 = vld [vmem:[#allocation3 + $0x8] sm:$0xff]
      %v2091 = vld [vmem:[#allocation3 + $0x10] sm:$0xff]
      %v2092 = vld [vmem:[#allocation3 + $0x18] sm:$0xff]
      %v2093 = vld [vmem:[#allocation3 + $0x20] sm:$0xff]
      %v2094 = vld [vmem:[#allocation3 + $0x28] sm:$0xff]
      %v2095 = vld [vmem:[#allocation3 + $0x30] sm:$0xff]
      %v2096 = vld [vmem:[#allocation3 + $0x38] sm:$0xff]
      %v2097 = vld [vmem:[#allocation3 + $0x40] sm:$0xff]
      %v2098 = vld [vmem:[#allocation3 + $0x48] sm:$0xff]
      %v2099 = vld [vmem:[#allocation3 + $0x50] sm:$0xff]
      %v2100 = vld [vmem:[#allocation3 + $0x58] sm:$0xff]
      %v2101 = vld [vmem:[#allocation3 + $0x60] sm:$0xff]
      %v2102 = vld [vmem:[#allocation3 + $0x68] sm:$0xff]
      %v2103 = vld [vmem:[#allocation3 + $0x70] sm:$0xff]
      %v2104 = vld [vmem:[#allocation3 + $0x78] sm:$0xff]
      %v2105 = vld [vmem:[#allocation3 + $0x80] sm:$0xff]
      %v2106 = vld [vmem:[#allocation3 + $0x88] sm:$0xff]
      %v2107 = vld [vmem:[#allocation3 + $0x90] sm:$0xff]
      %v2108 = vld [vmem:[#allocation3 + $0x98] sm:$0xff]
      %v2109 = vld [vmem:[#allocation3 + $0xa0] sm:$0xff]
      %v2110 = vld [vmem:[#allocation3 + $0xa8] sm:$0xff]
      %v2111 = vld [vmem:[#allocation3 + $0xb0] sm:$0xff]
      %v2112 = vld [vmem:[#allocation3 + $0xb8] sm:$0xff]
      %v2113 = vld [vmem:[#allocation3 + $0xc0] sm:$0xff]
      %v2114 = vld [vmem:[#allocation3 + $0xc8] sm:$0xff]
      %v2115 = vld [vmem:[#allocation3 + $0xd0] sm:$0xff]
      %v2116 = vld [vmem:[#allocation3 + $0xd8] sm:$0xff]
      %v2117 = vld [vmem:[#allocation3 + $0xe0] sm:$0xff]
      %v2118 = vld [vmem:[#allocation3 + $0xe8] sm:$0xff]
      %v2119 = vld [vmem:[#allocation3 + $0xf0] sm:$0xff]
      %v2120 = vld [vmem:[#allocation3 + $0xf8] sm:$0xff]
      %v2121 = vld [vmem:[#allocation3 + $0x100] sm:$0xff]
      %v2122 = vld [vmem:[#allocation3 + $0x108] sm:$0xff]
      %v2123 = vld [vmem:[#allocation3 + $0x110] sm:$0xff]
      %v2124 = vld [vmem:[#allocation3 + $0x118] sm:$0xff]
      %v2125 = vld [vmem:[#allocation3 + $0x120] sm:$0xff]
      %v2126 = vld [vmem:[#allocation3 + $0x128] sm:$0xff]
      %v2127 = vld [vmem:[#allocation3 + $0x130] sm:$0xff]
      %v2128 = vld [vmem:[#allocation3 + $0x138] sm:$0xff]
      %v2129 = vld [vmem:[#allocation3 + $0x140] sm:$0xff]
      %v2130 = vld [vmem:[#allocation3 + $0x148] sm:$0xff]
      %v2131 = vld [vmem:[#allocation3 + $0x150] sm:$0xff]
      %v2132 = vld [vmem:[#allocation3 + $0x158] sm:$0xff]
      %v2133 = vld [vmem:[#allocation3 + $0x160] sm:$0xff]
      %v2134 = vld [vmem:[#allocation3 + $0x168] sm:$0xff]
      %v2135 = vld [vmem:[#allocation3 + $0x170] sm:$0xff]
      %v2136 = vld [vmem:[#allocation3 + $0x178] sm:$0xff]
      %v2137 = vld [vmem:[#allocation3 + $0x180] sm:$0xff]
      %v2138 = vld [vmem:[#allocation3 + $0x188] sm:$0xff]
      %v2139 = vld [vmem:[#allocation3 + $0x190] sm:$0xff]
      %v2140 = vld [vmem:[#allocation3 + $0x198] sm:$0xff]
      %v2141 = vld [vmem:[#allocation3 + $0x1a0] sm:$0xff]
      %v2142 = vld [vmem:[#allocation3 + $0x1a8] sm:$0xff]
      %v2143 = vld [vmem:[#allocation3 + $0x1b0] sm:$0xff]
      %v2144 = vld [vmem:[#allocation3 + $0x1b8] sm:$0xff]
      %v2145 = vld [vmem:[#allocation3 + $0x1c0] sm:$0xff]
      %v2146 = vld [vmem:[#allocation3 + $0x1c8] sm:$0xff]
      %v2147 = vld [vmem:[#allocation3 + $0x1d0] sm:$0xff]
      %v2148 = vld [vmem:[#allocation3 + $0x1d8] sm:$0xff]
      %v2149 = vld [vmem:[#allocation3 + $0x1e0] sm:$0xff]
      %v2150 = vld [vmem:[#allocation3 + $0x1e8] sm:$0xff]
      %v2151 = vld [vmem:[#allocation3 + $0x1f0] sm:$0xff]
      %v2152 = vld [vmem:[#allocation3 + $0x1f8] sm:$0xff]
      %v2153 = vld [vmem:[#allocation3 + $0x200] sm:$0xff]
      %v2154 = vld [vmem:[#allocation3 + $0x208] sm:$0xff]
      %v2155 = vld [vmem:[#allocation3 + $0x210] sm:$0xff]
      %v2156 = vld [vmem:[#allocation3 + $0x218] sm:$0xff]
      %v2157 = vld [vmem:[#allocation3 + $0x220] sm:$0xff]
      %v2158 = vld [vmem:[#allocation3 + $0x228] sm:$0xff]
      %v2159 = vld [vmem:[#allocation3 + $0x230] sm:$0xff]
      %v2160 = vld [vmem:[#allocation3 + $0x238] sm:$0xff]
      %v2161 = vpack.c.bf16 %v2091, %v2089
      %v2162 = vpack.c.bf16 %v2092, %v2090
      %v2163 = vpack.c.bf16 %v2095, %v2093
      %v2164 = vpack.c.bf16 %v2096, %v2094
      %v2165 = vpack.c.bf16 %v2099, %v2097
      %v2166 = vpack.c.bf16 %v2100, %v2098
      %v2167 = vpack.c.bf16 %v2103, %v2101
      %v2168 = vpack.c.bf16 %v2104, %v2102
      %v2169 = vpack.c.bf16 %v2107, %v2105
      %v2170 = vpack.c.bf16 %v2108, %v2106
      %v2171 = vpack.c.bf16 %v2111, %v2109
      %v2172 = vpack.c.bf16 %v2112, %v2110
      %v2173 = vpack.c.bf16 %v2115, %v2113
      %v2174 = vpack.c.bf16 %v2116, %v2114
      %v2175 = vpack.c.bf16 %v2119, %v2117
      %v2176 = vpack.c.bf16 %v2120, %v2118
      %v2177 = vpack.c.bf16 %v2123, %v2121
      %v2178 = vpack.c.bf16 %v2124, %v2122
      %v2179 = vpack.c.bf16 %v2127, %v2125
      %v2180 = vpack.c.bf16 %v2128, %v2126
      %v2181 = vpack.c.bf16 %v2131, %v2129
      %v2182 = vpack.c.bf16 %v2132, %v2130
      %v2183 = vpack.c.bf16 %v2135, %v2133
      %v2184 = vpack.c.bf16 %v2136, %v2134
      %v2185 = vpack.c.bf16 %v2139, %v2137
      %v2186 = vpack.c.bf16 %v2140, %v2138
      %v2187 = vpack.c.bf16 %v2143, %v2141
      %v2188 = vpack.c.bf16 %v2144, %v2142
      %v2189 = vpack.c.bf16 %v2147, %v2145
      %v2190 = vpack.c.bf16 %v2148, %v2146
      %v2191 = vpack.c.bf16 %v2151, %v2149
      %v2192 = vpack.c.bf16 %v2152, %v2150
      %v2193 = vpack.c.bf16 %v2155, %v2153
      %v2194 = vpack.c.bf16 %v2156, %v2154
      %v2195 = vpack.c.bf16 %v2159, %v2157
      %v2196 = vpack.c.bf16 %v2160, %v2158
      %v2197 = vld [vmem:[%s1] sm:$0xf]
      %v2198 = vld [vmem:[%s1 + $0x4] sm:$0xf]
      %v2199 = vld [vmem:[%s1 + $0x8] sm:$0xf]
      %v2200 = vld [vmem:[%s1 + $0xc] sm:$0xf]
      %v2201 = vld [vmem:[%s1 + $0x10] sm:$0xf]
      %v2202 = vld [vmem:[%s1 + $0x14] sm:$0xf]
      %v2203 = vld [vmem:[%s1 + $0x18] sm:$0xf]
      %v2204 = vld [vmem:[%s1 + $0x1c] sm:$0xf]
      %v2205 = vld [vmem:[%s1 + $0x20] sm:$0xf]
      %v2206 = vld [vmem:[%s1 + $0x24] sm:$0xf]
      %v2207 = vld [vmem:[%s1 + $0x28] sm:$0xf]
      %v2208 = vld [vmem:[%s1 + $0x2c] sm:$0xf]
      %v2209 = vld [vmem:[%s1 + $0x30] sm:$0xf]
      %v2210 = vld [vmem:[%s1 + $0x34] sm:$0xf]
      %v2211 = vld [vmem:[%s1 + $0x38] sm:$0xf]
      %v2212 = vld [vmem:[%s1 + $0x3c] sm:$0xf]
      %v2213 = vld [vmem:[%s1 + $0x40] sm:$0xf]
      %v2214 = vld [vmem:[%s1 + $0x44] sm:$0xf]
      %v2215 = vld [vmem:[%s2] sm:$0x1]
      %v2216 = vperm.slane %v2215, 0
      %v2235 = vunpack.c.l.b16 %v2197
      %v2236 = vunpack.c.l.b16 %v2198
      %v2237 = vunpack.c.l.b16 %v2199
      %v2238 = vunpack.c.l.b16 %v2200
      %v2239 = vunpack.c.l.b16 %v2201
      %v2240 = vunpack.c.l.b16 %v2202
      %v2241 = vunpack.c.l.b16 %v2203
      %v2242 = vunpack.c.l.b16 %v2204
      %v2243 = vunpack.c.l.b16 %v2205
      %v2244 = vunpack.c.l.b16 %v2206
      %v2245 = vunpack.c.l.b16 %v2207
      %v2246 = vunpack.c.l.b16 %v2208
      %v2247 = vunpack.c.l.b16 %v2209
      %v2248 = vunpack.c.l.b16 %v2210
      %v2249 = vunpack.c.l.b16 %v2211
      %v2250 = vunpack.c.l.b16 %v2212
      %v2251 = vunpack.c.l.b16 %v2213
      %v2252 = vunpack.c.l.b16 %v2214
      %v2253 = vpack.c.b16 %v2236, %v2235
      %v2254 = vpack.c.b16 %v2238, %v2237
      %v2255 = vpack.c.b16 %v2240, %v2239
      %v2256 = vpack.c.b16 %v2242, %v2241
      %v2257 = vpack.c.b16 %v2244, %v2243
      %v2258 = vpack.c.b16 %v2246, %v2245
      %v2259 = vpack.c.b16 %v2248, %v2247
      %v2260 = vpack.c.b16 %v2250, %v2249
      %v2261 = vpack.c.b16 %v2252, %v2251
      %v2272 = vsel %vm461, %v2162, 0
      %v2275 = vsel %vm461, %v2164, 0
      %v2278 = vsel %vm461, %v2166, 0
      %v2281 = vsel %vm461, %v2168, 0
      %v2284 = vsel %vm461, %v2170, 0
      %v2287 = vsel %vm461, %v2172, 0
      %v2290 = vsel %vm461, %v2174, 0
      %v2293 = vsel %vm461, %v2176, 0
      %v2296 = vsel %vm461, %v2178, 0
      %v2299 = vsel %vm461, %v2180, 0
      %v2302 = vsel %vm461, %v2182, 0
      %v2305 = vsel %vm461, %v2184, 0
      %v2308 = vsel %vm461, %v2186, 0
      %v2311 = vsel %vm461, %v2188, 0
      %v2314 = vsel %vm461, %v2190, 0
      %v2317 = vsel %vm461, %v2192, 0
      %v2320 = vsel %vm461, %v2194, 0
      %v2323 = vsel %vm461, %v2196, 0
      %2325 = vmatpush.bf16.msra.mxu0 %v2260
      %2326 = vmatpush.bf16.msra.mxu0 %v2259
      %2327 = vmatpush.bf16.msra.mxu0 %v2258
      %2328 = vmatpush.bf16.msra.mxu0 %v2257
      %2329 = vmatpush.bf16.msra.mxu0 %v2256
      %2330 = vmatpush.bf16.msra.mxu0 %v2255
      %2331 = vmatpush.bf16.msra.mxu0 %v2254
      %2332 = vmatpush.bf16.msra.mxu0 %v2253
      %2333 = vmatmul.bf16.gmra.mxu0 %v2161
      %v2334 = vpop.f32.mrf.mxu0
      %v2335 = vadd.f32 %v2216, %v2334
      %v2336 = vpop.f32.mrf.mxu0
      %v2337 = vadd.f32 %v2216, %v2336
      %2338 = vmatmul.bf16.gmra.mxu0 %v2163
      %v2339 = vpop.f32.mrf.mxu0
      %v2340 = vadd.f32 %v2216, %v2339
      %v2341 = vpop.f32.mrf.mxu0
      %v2342 = vadd.f32 %v2216, %v2341
      %2343 = vmatmul.bf16.gmra.mxu0 %v2165
      %v2344 = vpop.f32.mrf.mxu0
      %v2345 = vadd.f32 %v2216, %v2344
      %v2346 = vpop.f32.mrf.mxu0
      %v2347 = vadd.f32 %v2216, %v2346
      %2348 = vmatmul.bf16.gmra.mxu0 %v2167
      %v2349 = vpop.f32.mrf.mxu0
      %v2350 = vadd.f32 %v2216, %v2349
      %v2351 = vpop.f32.mrf.mxu0
      %v2352 = vadd.f32 %v2216, %v2351
      %2353 = vmatmul.bf16.gmra.mxu0 %v2169
      %v2354 = vpop.f32.mrf.mxu0
      %v2355 = vadd.f32 %v2216, %v2354
      %v2356 = vpop.f32.mrf.mxu0
      %v2357 = vadd.f32 %v2216, %v2356
      %2358 = vmatmul.bf16.gmra.mxu0 %v2171
      %v2359 = vpop.f32.mrf.mxu0
      %v2360 = vadd.f32 %v2216, %v2359
      %v2361 = vpop.f32.mrf.mxu0
      %v2362 = vadd.f32 %v2216, %v2361
      %2363 = vmatmul.bf16.gmra.mxu0 %v2173
      %v2364 = vpop.f32.mrf.mxu0
      %v2365 = vadd.f32 %v2216, %v2364
      %v2366 = vpop.f32.mrf.mxu0
      %v2367 = vadd.f32 %v2216, %v2366
      %2368 = vmatmul.bf16.gmra.mxu0 %v2175
      %v2369 = vpop.f32.mrf.mxu0
      %v2370 = vadd.f32 %v2216, %v2369
      %v2371 = vpop.f32.mrf.mxu0
      %v2372 = vadd.f32 %v2216, %v2371
      %2373 = vmatmul.bf16.gmra.mxu0 %v2177
      %v2374 = vpop.f32.mrf.mxu0
      %v2375 = vadd.f32 %v2216, %v2374
      %v2376 = vpop.f32.mrf.mxu0
      %v2377 = vadd.f32 %v2216, %v2376
      %2378 = vmatmul.bf16.gmra.mxu0 %v2179
      %v2379 = vpop.f32.mrf.mxu0
      %v2380 = vadd.f32 %v2216, %v2379
      %v2381 = vpop.f32.mrf.mxu0
      %v2382 = vadd.f32 %v2216, %v2381
      %2383 = vmatmul.bf16.gmra.mxu0 %v2181
      %v2384 = vpop.f32.mrf.mxu0
      %v2385 = vadd.f32 %v2216, %v2384
      %v2386 = vpop.f32.mrf.mxu0
      %v2387 = vadd.f32 %v2216, %v2386
      %2388 = vmatmul.bf16.gmra.mxu0 %v2183
      %v2389 = vpop.f32.mrf.mxu0
      %v2390 = vadd.f32 %v2216, %v2389
      %v2391 = vpop.f32.mrf.mxu0
      %v2392 = vadd.f32 %v2216, %v2391
      %2393 = vmatmul.bf16.gmra.mxu0 %v2185
      %v2394 = vpop.f32.mrf.mxu0
      %v2395 = vadd.f32 %v2216, %v2394
      %v2396 = vpop.f32.mrf.mxu0
      %v2397 = vadd.f32 %v2216, %v2396
      %2398 = vmatmul.bf16.gmra.mxu0 %v2187
      %v2399 = vpop.f32.mrf.mxu0
      %v2400 = vadd.f32 %v2216, %v2399
      %v2401 = vpop.f32.mrf.mxu0
      %v2402 = vadd.f32 %v2216, %v2401
      %2403 = vmatmul.bf16.gmra.mxu0 %v2189
      %v2404 = vpop.f32.mrf.mxu0
      %v2405 = vadd.f32 %v2216, %v2404
      %v2406 = vpop.f32.mrf.mxu0
      %v2407 = vadd.f32 %v2216, %v2406
      %2408 = vmatmul.bf16.gmra.mxu0 %v2191
      %v2409 = vpop.f32.mrf.mxu0
      %v2410 = vadd.f32 %v2216, %v2409
      %v2411 = vpop.f32.mrf.mxu0
      %v2412 = vadd.f32 %v2216, %v2411
      %2413 = vmatmul.bf16.gmra.mxu0 %v2193
      %v2414 = vpop.f32.mrf.mxu0
      %v2415 = vadd.f32 %v2216, %v2414
      %v2416 = vpop.f32.mrf.mxu0
      %v2417 = vadd.f32 %v2216, %v2416
      %2418 = vmatmul.bf16.gmra.mxu0 %v2195
      %v2419 = vpop.f32.mrf.mxu0
      %v2420 = vadd.f32 %v2216, %v2419
      %v2421 = vpop.f32.mrf.mxu0
      %v2422 = vadd.f32 %v2216, %v2421
      %2423 = vdwg.mxu0
      %2424 = vmatpush.bf16.msra.mxu0 0
      %2425 = vmatpush.bf16.msra.mxu0 0
      %2426 = vmatpush.bf16.msra.mxu0 0
      %2427 = vmatpush.bf16.msra.mxu0 0
      %2428 = vmatpush.bf16.msra.mxu0 0
      %2429 = vmatpush.bf16.msra.mxu0 0
      %2430 = vmatpush.bf16.msra.mxu0 0
      %2431 = vmatpush.bf16.msra.mxu0 %v2261
      %2432 = vmatmul.bf16.gmra.mxu0 %v2272
      %v2433 = vpop.f32.mrf.mxu0
      %v2434 = vadd.f32 %v2335, %v2433
      %v2435 = vpop.f32.mrf.mxu0
      %v2436 = vadd.f32 %v2337, %v2435
      %2437 = vmatmul.bf16.gmra.mxu0 %v2275
      %v2438 = vpop.f32.mrf.mxu0
      %v2439 = vadd.f32 %v2340, %v2438
      %v2440 = vpop.f32.mrf.mxu0
      %v2441 = vadd.f32 %v2342, %v2440
      %2442 = vmatmul.bf16.gmra.mxu0 %v2278
      %v2443 = vpop.f32.mrf.mxu0
      %v2444 = vadd.f32 %v2345, %v2443
      %v2445 = vpop.f32.mrf.mxu0
      %v2446 = vadd.f32 %v2347, %v2445
      %2447 = vmatmul.bf16.gmra.mxu0 %v2281
      %v2448 = vpop.f32.mrf.mxu0
      %v2449 = vadd.f32 %v2350, %v2448
      %v2450 = vpop.f32.mrf.mxu0
      %v2451 = vadd.f32 %v2352, %v2450
      %2452 = vmatmul.bf16.gmra.mxu0 %v2284
      %v2453 = vpop.f32.mrf.mxu0
      %v2454 = vadd.f32 %v2355, %v2453
      %v2455 = vpop.f32.mrf.mxu0
      %v2456 = vadd.f32 %v2357, %v2455
      %2457 = vmatmul.bf16.gmra.mxu0 %v2287
      %v2458 = vpop.f32.mrf.mxu0
      %v2459 = vadd.f32 %v2360, %v2458
      %v2460 = vpop.f32.mrf.mxu0
      %v2461 = vadd.f32 %v2362, %v2460
      %2462 = vmatmul.bf16.gmra.mxu0 %v2290
      %v2463 = vpop.f32.mrf.mxu0
      %v2464 = vadd.f32 %v2365, %v2463
      %v2465 = vpop.f32.mrf.mxu0
      %v2466 = vadd.f32 %v2367, %v2465
      %2467 = vmatmul.bf16.gmra.mxu0 %v2293
      %v2468 = vpop.f32.mrf.mxu0
      %v2469 = vadd.f32 %v2370, %v2468
      %v2470 = vpop.f32.mrf.mxu0
      %v2471 = vadd.f32 %v2372, %v2470
      %2472 = vmatmul.bf16.gmra.mxu0 %v2296
      %v2473 = vpop.f32.mrf.mxu0
      %v2474 = vadd.f32 %v2375, %v2473
      %v2475 = vpop.f32.mrf.mxu0
      %v2476 = vadd.f32 %v2377, %v2475
      %2477 = vmatmul.bf16.gmra.mxu0 %v2299
      %v2478 = vpop.f32.mrf.mxu0
      %v2479 = vadd.f32 %v2380, %v2478
      %v2480 = vpop.f32.mrf.mxu0
      %v2481 = vadd.f32 %v2382, %v2480
      %2482 = vmatmul.bf16.gmra.mxu0 %v2302
      %v2483 = vpop.f32.mrf.mxu0
      %v2484 = vadd.f32 %v2385, %v2483
      %v2485 = vpop.f32.mrf.mxu0
      %v2486 = vadd.f32 %v2387, %v2485
      %2487 = vmatmul.bf16.gmra.mxu0 %v2305
      %v2488 = vpop.f32.mrf.mxu0
      %v2489 = vadd.f32 %v2390, %v2488
      %v2490 = vpop.f32.mrf.mxu0
      %v2491 = vadd.f32 %v2392, %v2490
      %2492 = vmatmul.bf16.gmra.mxu0 %v2308
      %v2493 = vpop.f32.mrf.mxu0
      %v2494 = vadd.f32 %v2395, %v2493
      %v2495 = vpop.f32.mrf.mxu0
      %v2496 = vadd.f32 %v2397, %v2495
      %2497 = vmatmul.bf16.gmra.mxu0 %v2311
      %v2498 = vpop.f32.mrf.mxu0
      %v2499 = vadd.f32 %v2400, %v2498
      %v2500 = vpop.f32.mrf.mxu0
      %v2501 = vadd.f32 %v2402, %v2500
      %2502 = vmatmul.bf16.gmra.mxu0 %v2314
      %v2503 = vpop.f32.mrf.mxu0
      %v2504 = vadd.f32 %v2405, %v2503
      %v2505 = vpop.f32.mrf.mxu0
      %v2506 = vadd.f32 %v2407, %v2505
      %2507 = vmatmul.bf16.gmra.mxu0 %v2317
      %v2508 = vpop.f32.mrf.mxu0
      %v2509 = vadd.f32 %v2410, %v2508
      %v2510 = vpop.f32.mrf.mxu0
      %v2511 = vadd.f32 %v2412, %v2510
      %2512 = vmatmul.bf16.gmra.mxu0 %v2320
      %v2513 = vpop.f32.mrf.mxu0
      %v2514 = vadd.f32 %v2415, %v2513
      %v2515 = vpop.f32.mrf.mxu0
      %v2516 = vadd.f32 %v2417, %v2515
      %2517 = vmatmul.bf16.gmra.mxu0 %v2323
      %v2518 = vpop.f32.mrf.mxu0
      %v2519 = vadd.f32 %v2420, %v2518
      %v2520 = vpop.f32.mrf.mxu0
      %v2521 = vadd.f32 %v2422, %v2520
      %2522 = vdwg.mxu0
      %vm2523 = vcmp.ge.f32.partialorder %v2434, 0.0
      %vm2524 = vcmp.ge.f32.partialorder %v2436, 0.0
      %vm2525 = vcmp.ge.f32.partialorder %v2439, 0.0
      %vm2526 = vcmp.ge.f32.partialorder %v2441, 0.0
      %vm2527 = vcmp.ge.f32.partialorder %v2444, 0.0
      %vm2528 = vcmp.ge.f32.partialorder %v2446, 0.0
      %vm2529 = vcmp.ge.f32.partialorder %v2449, 0.0
      %vm2530 = vcmp.ge.f32.partialorder %v2451, 0.0
      %vm2531 = vcmp.ge.f32.partialorder %v2454, 0.0
      %vm2532 = vcmp.ge.f32.partialorder %v2456, 0.0
      %vm2533 = vcmp.ge.f32.partialorder %v2459, 0.0
      %vm2534 = vcmp.ge.f32.partialorder %v2461, 0.0
      %vm2535 = vcmp.ge.f32.partialorder %v2464, 0.0
      %vm2536 = vcmp.ge.f32.partialorder %v2466, 0.0
      %vm2537 = vcmp.ge.f32.partialorder %v2469, 0.0
      %vm2538 = vcmp.ge.f32.partialorder %v2471, 0.0
      %vm2539 = vcmp.ge.f32.partialorder %v2474, 0.0
      %vm2540 = vcmp.ge.f32.partialorder %v2476, 0.0
      %vm2541 = vcmp.ge.f32.partialorder %v2479, 0.0
      %vm2542 = vcmp.ge.f32.partialorder %v2481, 0.0
      %vm2543 = vcmp.ge.f32.partialorder %v2484, 0.0
      %vm2544 = vcmp.ge.f32.partialorder %v2486, 0.0
      %vm2545 = vcmp.ge.f32.partialorder %v2489, 0.0
      %vm2546 = vcmp.ge.f32.partialorder %v2491, 0.0
      %vm2547 = vcmp.ge.f32.partialorder %v2494, 0.0
      %vm2548 = vcmp.ge.f32.partialorder %v2496, 0.0
      %vm2549 = vcmp.ge.f32.partialorder %v2499, 0.0
      %vm2550 = vcmp.ge.f32.partialorder %v2501, 0.0
      %vm2551 = vcmp.ge.f32.partialorder %v2504, 0.0
      %vm2552 = vcmp.ge.f32.partialorder %v2506, 0.0
      %vm2553 = vcmp.ge.f32.partialorder %v2509, 0.0
      %vm2554 = vcmp.ge.f32.partialorder %v2511, 0.0
      %vm2555 = vcmp.ge.f32.partialorder %v2514, 0.0
      %vm2556 = vcmp.ge.f32.partialorder %v2516, 0.0
      %vm2557 = vcmp.ge.f32.partialorder %v2519, 0.0
      %vm2558 = vcmp.ge.f32.partialorder %v2521, 0.0
      %v2559 = vld [vmem:[%s2 + $0x1] sm:$0x1]
      %v2560 = vperm.slane %v2559, 0
      %v2561 = vmul.f32 %v2560, %v2434
      %v2562 = vmul.f32 %v2560, %v2436
      %v2563 = vmul.f32 %v2560, %v2439
      %v2564 = vmul.f32 %v2560, %v2441
      %v2565 = vmul.f32 %v2560, %v2444
      %v2566 = vmul.f32 %v2560, %v2446
      %v2567 = vmul.f32 %v2560, %v2449
      %v2568 = vmul.f32 %v2560, %v2451
      %v2569 = vmul.f32 %v2560, %v2454
      %v2570 = vmul.f32 %v2560, %v2456
      %v2571 = vmul.f32 %v2560, %v2459
      %v2572 = vmul.f32 %v2560, %v2461
      %v2573 = vmul.f32 %v2560, %v2464
      %v2574 = vmul.f32 %v2560, %v2466
      %v2575 = vmul.f32 %v2560, %v2469
      %v2576 = vmul.f32 %v2560, %v2471
      %v2577 = vmul.f32 %v2560, %v2474
      %v2578 = vmul.f32 %v2560, %v2476
      %v2579 = vmul.f32 %v2560, %v2479
      %v2580 = vmul.f32 %v2560, %v2481
      %v2581 = vmul.f32 %v2560, %v2484
      %v2582 = vmul.f32 %v2560, %v2486
      %v2583 = vmul.f32 %v2560, %v2489
      %v2584 = vmul.f32 %v2560, %v2491
      %v2585 = vmul.f32 %v2560, %v2494
      %v2586 = vmul.f32 %v2560, %v2496
      %v2587 = vmul.f32 %v2560, %v2499
      %v2588 = vmul.f32 %v2560, %v2501
      %v2589 = vmul.f32 %v2560, %v2504
      %v2590 = vmul.f32 %v2560, %v2506
      %v2591 = vmul.f32 %v2560, %v2509
      %v2592 = vmul.f32 %v2560, %v2511
      %v2593 = vmul.f32 %v2560, %v2514
      %v2594 = vmul.f32 %v2560, %v2516
      %v2595 = vmul.f32 %v2560, %v2519
      %v2596 = vmul.f32 %v2560, %v2521
      %v2597 = vsel %vm2523, %v2434, %v2561
      %v2598 = vsel %vm2524, %v2436, %v2562
      %v2599 = vsel %vm2525, %v2439, %v2563
      %v2600 = vsel %vm2526, %v2441, %v2564
      %v2601 = vsel %vm2527, %v2444, %v2565
      %v2602 = vsel %vm2528, %v2446, %v2566
      %v2603 = vsel %vm2529, %v2449, %v2567
      %v2604 = vsel %vm2530, %v2451, %v2568
      %v2605 = vsel %vm2531, %v2454, %v2569
      %v2606 = vsel %vm2532, %v2456, %v2570
      %v2607 = vsel %vm2533, %v2459, %v2571
      %v2608 = vsel %vm2534, %v2461, %v2572
      %v2609 = vsel %vm2535, %v2464, %v2573
      %v2610 = vsel %vm2536, %v2466, %v2574
      %v2611 = vsel %vm2537, %v2469, %v2575
      %v2612 = vsel %vm2538, %v2471, %v2576
      %v2613 = vsel %vm2539, %v2474, %v2577
      %v2614 = vsel %vm2540, %v2476, %v2578
      %v2615 = vsel %vm2541, %v2479, %v2579
      %v2616 = vsel %vm2542, %v2481, %v2580
      %v2617 = vsel %vm2543, %v2484, %v2581
      %v2618 = vsel %vm2544, %v2486, %v2582
      %v2619 = vsel %vm2545, %v2489, %v2583
      %v2620 = vsel %vm2546, %v2491, %v2584
      %v2621 = vsel %vm2547, %v2494, %v2585
      %v2622 = vsel %vm2548, %v2496, %v2586
      %v2623 = vsel %vm2549, %v2499, %v2587
      %v2624 = vsel %vm2550, %v2501, %v2588
      %v2625 = vsel %vm2551, %v2504, %v2589
      %v2626 = vsel %vm2552, %v2506, %v2590
      %v2627 = vsel %vm2553, %v2509, %v2591
      %v2628 = vsel %vm2554, %v2511, %v2592
      %v2629 = vsel %vm2555, %v2514, %v2593
      %v2630 = vsel %vm2556, %v2516, %v2594
      %v2631 = vsel %vm2557, %v2519, %v2595
      %v2632 = vsel %vm2558, %v2521, %v2596
      %2633 = vst.msk [vmem:[#allocation2] sm:$0xff] %vm461, 0.0
      %2634 = vst.msk [vmem:[#allocation2 + $0x8] sm:$0xff] %vm461, 0.0
      %2635 = vst.msk [vmem:[#allocation2 + $0x10] sm:$0xff] %vm461, 0.0
      %2636 = vst.msk [vmem:[#allocation2 + $0x18] sm:$0xff] %vm461, 0.0
      %2637 = vst.msk [vmem:[#allocation2 + $0x20] sm:$0xff] %vm461, 0.0
      %2638 = vst.msk [vmem:[#allocation2 + $0x28] sm:$0xff] %vm461, 0.0
      %2639 = vst.msk [vmem:[#allocation2 + $0x30] sm:$0xff] %vm461, 0.0
      %2640 = vst.msk [vmem:[#allocation2 + $0x38] sm:$0xff] %vm461, 0.0
      %2641 = vst.msk [vmem:[#allocation2 + $0x40] sm:$0xff] %vm461, 0.0
      %2642 = vst.msk [vmem:[#allocation2 + $0x48] sm:$0xff] %vm461, 0.0
      %2643 = vst.msk [vmem:[#allocation2 + $0x50] sm:$0xff] %vm461, 0.0
      %2644 = vst.msk [vmem:[#allocation2 + $0x58] sm:$0xff] %vm461, 0.0
      %2645 = vst.msk [vmem:[#allocation2 + $0x60] sm:$0xff] %vm461, 0.0
      %2646 = vst.msk [vmem:[#allocation2 + $0x68] sm:$0xff] %vm461, 0.0
      %2647 = vst.msk [vmem:[#allocation2 + $0x70] sm:$0xff] %vm461, 0.0
      %2648 = vst.msk [vmem:[#allocation2 + $0x78] sm:$0xff] %vm461, 0.0
      %2649 = vst.msk [vmem:[#allocation2 + $0x80] sm:$0xff] %vm461, 0.0
      %2650 = vst.msk [vmem:[#allocation2 + $0x88] sm:$0xff] %vm461, 0.0
      %2651 = vst.msk [vmem:[#allocation2 + $0x90] sm:$0xff] %vm461, 0.0
      %2652 = vst.msk [vmem:[#allocation2 + $0x98] sm:$0xff] %vm461, 0.0
      %2653 = vst.msk [vmem:[#allocation2 + $0xa0] sm:$0xff] %vm461, 0.0
      %2654 = vst.msk [vmem:[#allocation2 + $0xa8] sm:$0xff] %vm461, 0.0
      %2655 = vst.msk [vmem:[#allocation2 + $0xb0] sm:$0xff] %vm461, 0.0
      %2656 = vst.msk [vmem:[#allocation2 + $0xb8] sm:$0xff] %vm461, 0.0
      %2657 = vst.msk [vmem:[#allocation2 + $0xc0] sm:$0xff] %vm461, 0.0
      %2658 = vst.msk [vmem:[#allocation2 + $0xc8] sm:$0xff] %vm461, 0.0
      %2659 = vst.msk [vmem:[#allocation2 + $0xd0] sm:$0xff] %vm461, 0.0
      %2660 = vst.msk [vmem:[#allocation2 + $0xd8] sm:$0xff] %vm461, 0.0
      %2661 = vst.msk [vmem:[#allocation2 + $0xe0] sm:$0xff] %vm461, 0.0
      %2662 = vst.msk [vmem:[#allocation2 + $0xe8] sm:$0xff] %vm461, 0.0
      %2663 = vst.msk [vmem:[#allocation2 + $0xf0] sm:$0xff] %vm461, 0.0
      %2664 = vst.msk [vmem:[#allocation2 + $0xf8] sm:$0xff] %vm461, 0.0
      %2665 = vst.msk [vmem:[#allocation2 + $0x100] sm:$0xff] %vm461, 0.0
      %2666 = vst.msk [vmem:[#allocation2 + $0x108] sm:$0xff] %vm461, 0.0
      %2667 = vst.msk [vmem:[#allocation2 + $0x110] sm:$0xff] %vm461, 0.0
      %2668 = vst.msk [vmem:[#allocation2 + $0x118] sm:$0xff] %vm461, 0.0
      %2669 = vst.msk [vmem:[#allocation2 + $0x120] sm:$0xff] %vm461, 0.0
      %2670 = vst.msk [vmem:[#allocation2 + $0x128] sm:$0xff] %vm461, 0.0
      %2671 = vst.msk [vmem:[#allocation2 + $0x130] sm:$0xff] %vm461, 0.0
      %2672 = vst.msk [vmem:[#allocation2 + $0x138] sm:$0xff] %vm461, 0.0
      %2673 = vst.msk [vmem:[#allocation2 + $0x140] sm:$0xff] %vm461, 0.0
      %vm2674 = vcmask 125952
      %2675 = vst.msk [vmem:[#allocation2 + $0x148] sm:$0xf] %vm2674, 0.0
      %v2676 = vld [vmem:[%s3] sm:$0xff]
      %v2677 = vld [vmem:[%s3 + $0x8] sm:$0xff]
      %v2678 = vld [vmem:[%s3 + $0x10] sm:$0xff]
      %v2679 = vld [vmem:[%s3 + $0x18] sm:$0xff]
      %v2680 = vld [vmem:[%s3 + $0x20] sm:$0xff]
      %v2681 = vld [vmem:[%s3 + $0x28] sm:$0xff]
      %v2682 = vld [vmem:[%s3 + $0x30] sm:$0xff]
      %v2683 = vld [vmem:[%s3 + $0x38] sm:$0xff]
      %v2684 = vld [vmem:[%s3 + $0x40] sm:$0xff]
      %v2685 = vld [vmem:[%s3 + $0x48] sm:$0xff]
      %v2686 = vld [vmem:[%s3 + $0x50] sm:$0xff]
      %v2687 = vld [vmem:[%s3 + $0x58] sm:$0xff]
      %v2688 = vld [vmem:[%s3 + $0x60] sm:$0xff]
      %v2689 = vld [vmem:[%s3 + $0x68] sm:$0xff]
      %v2690 = vld [vmem:[%s3 + $0x70] sm:$0xff]
      %v2691 = vld [vmem:[%s3 + $0x78] sm:$0xff]
      %v2692 = vld [vmem:[%s3 + $0x80] sm:$0xff]
      %v2693 = vld [vmem:[%s3 + $0x88] sm:$0xff]
      %v2694 = vld [vmem:[%s3 + $0x90] sm:$0xff]
      %v2695 = vld [vmem:[%s3 + $0x98] sm:$0xff]
      %v2696 = vld [vmem:[%s3 + $0xa0] sm:$0xff]
      %v2697 = vld [vmem:[%s3 + $0xa8] sm:$0xff]
      %v2698 = vld [vmem:[%s3 + $0xb0] sm:$0xff]
      %v2699 = vld [vmem:[%s3 + $0xb8] sm:$0xff]
      %v2700 = vld [vmem:[%s3 + $0xc0] sm:$0xff]
      %v2701 = vld [vmem:[%s3 + $0xc8] sm:$0xff]
      %v2702 = vld [vmem:[%s3 + $0xd0] sm:$0xff]
      %v2703 = vld [vmem:[%s3 + $0xd8] sm:$0xff]
      %v2704 = vld [vmem:[%s3 + $0xe0] sm:$0xff]
      %v2705 = vld [vmem:[%s3 + $0xe8] sm:$0xff]
      %v2706 = vld [vmem:[%s3 + $0xf0] sm:$0xff]
      %v2707 = vld [vmem:[%s3 + $0xf8] sm:$0xff]
      %v2708 = vld [vmem:[%s3 + $0x100] sm:$0xff]
      %v2709 = vld [vmem:[%s3 + $0x108] sm:$0xff]
      %v2710 = vld [vmem:[%s3 + $0x110] sm:$0xff]
      %v2711 = vld [vmem:[%s3 + $0x118] sm:$0xff]
      %2713 = vset.pattern.permute.xlu0 0
      %2714 = vperm.xlu0 %2713, %v2676
      %v2715 = vpop.permute.xlu0 %2714
      %2718 = vset.pattern.permute.xlu0 0
      %2719 = vperm.xlu0 %2718, %v2677
      %v2720 = vpop.permute.xlu0 %2719
      %2723 = vset.pattern.permute.xlu0 0
      %2724 = vperm.xlu0 %2723, %v2678
      %v2725 = vpop.permute.xlu0 %2724
      %2728 = vset.pattern.permute.xlu0 0
      %2729 = vperm.xlu0 %2728, %v2679
      %v2730 = vpop.permute.xlu0 %2729
      %2733 = vset.pattern.permute.xlu0 0
      %2734 = vperm.xlu0 %2733, %v2680
      %v2735 = vpop.permute.xlu0 %2734
      %2738 = vset.pattern.permute.xlu0 0
      %2739 = vperm.xlu0 %2738, %v2681
      %v2740 = vpop.permute.xlu0 %2739
      %2743 = vset.pattern.permute.xlu0 0
      %2744 = vperm.xlu0 %2743, %v2682
      %v2745 = vpop.permute.xlu0 %2744
      %2748 = vset.pattern.permute.xlu0 0
      %2749 = vperm.xlu0 %2748, %v2683
      %v2750 = vpop.permute.xlu0 %2749
      %2753 = vset.pattern.permute.xlu0 0
      %2754 = vperm.xlu0 %2753, %v2684
      %v2755 = vpop.permute.xlu0 %2754
      %2758 = vset.pattern.permute.xlu0 0
      %2759 = vperm.xlu0 %2758, %v2685
      %v2760 = vpop.permute.xlu0 %2759
      %2763 = vset.pattern.permute.xlu0 0
      %2764 = vperm.xlu0 %2763, %v2686
      %v2765 = vpop.permute.xlu0 %2764
      %2768 = vset.pattern.permute.xlu0 0
      %2769 = vperm.xlu0 %2768, %v2687
      %v2770 = vpop.permute.xlu0 %2769
      %2773 = vset.pattern.permute.xlu0 0
      %2774 = vperm.xlu0 %2773, %v2688
      %v2775 = vpop.permute.xlu0 %2774
      %2778 = vset.pattern.permute.xlu0 0
      %2779 = vperm.xlu0 %2778, %v2689
      %v2780 = vpop.permute.xlu0 %2779
      %2783 = vset.pattern.permute.xlu0 0
      %2784 = vperm.xlu0 %2783, %v2690
      %v2785 = vpop.permute.xlu0 %2784
      %2788 = vset.pattern.permute.xlu0 0
      %2789 = vperm.xlu0 %2788, %v2691
      %v2790 = vpop.permute.xlu0 %2789
      %2793 = vset.pattern.permute.xlu0 0
      %2794 = vperm.xlu0 %2793, %v2692
      %v2795 = vpop.permute.xlu0 %2794
      %2798 = vset.pattern.permute.xlu0 0
      %2799 = vperm.xlu0 %2798, %v2693
      %v2800 = vpop.permute.xlu0 %2799
      %2803 = vset.pattern.permute.xlu0 0
      %2804 = vperm.xlu0 %2803, %v2694
      %v2805 = vpop.permute.xlu0 %2804
      %2808 = vset.pattern.permute.xlu0 0
      %2809 = vperm.xlu0 %2808, %v2695
      %v2810 = vpop.permute.xlu0 %2809
      %2813 = vset.pattern.permute.xlu0 0
      %2814 = vperm.xlu0 %2813, %v2696
      %v2815 = vpop.permute.xlu0 %2814
      %2818 = vset.pattern.permute.xlu0 0
      %2819 = vperm.xlu0 %2818, %v2697
      %v2820 = vpop.permute.xlu0 %2819
      %2823 = vset.pattern.permute.xlu0 0
      %2824 = vperm.xlu0 %2823, %v2698
      %v2825 = vpop.permute.xlu0 %2824
      %2828 = vset.pattern.permute.xlu0 0
      %2829 = vperm.xlu0 %2828, %v2699
      %v2830 = vpop.permute.xlu0 %2829
      %2833 = vset.pattern.permute.xlu0 0
      %2834 = vperm.xlu0 %2833, %v2700
      %v2835 = vpop.permute.xlu0 %2834
      %2838 = vset.pattern.permute.xlu0 0
      %2839 = vperm.xlu0 %2838, %v2701
      %v2840 = vpop.permute.xlu0 %2839
      %2843 = vset.pattern.permute.xlu0 0
      %2844 = vperm.xlu0 %2843, %v2702
      %v2845 = vpop.permute.xlu0 %2844
      %2848 = vset.pattern.permute.xlu0 0
      %2849 = vperm.xlu0 %2848, %v2703
      %v2850 = vpop.permute.xlu0 %2849
      %2853 = vset.pattern.permute.xlu0 0
      %2854 = vperm.xlu0 %2853, %v2704
      %v2855 = vpop.permute.xlu0 %2854
      %2858 = vset.pattern.permute.xlu0 0
      %2859 = vperm.xlu0 %2858, %v2705
      %v2860 = vpop.permute.xlu0 %2859
      %2863 = vset.pattern.permute.xlu0 0
      %2864 = vperm.xlu0 %2863, %v2706
      %v2865 = vpop.permute.xlu0 %2864
      %2868 = vset.pattern.permute.xlu0 0
      %2869 = vperm.xlu0 %2868, %v2707
      %v2870 = vpop.permute.xlu0 %2869
      %2873 = vset.pattern.permute.xlu0 0
      %2874 = vperm.xlu0 %2873, %v2708
      %v2875 = vpop.permute.xlu0 %2874
      %2878 = vset.pattern.permute.xlu0 0
      %2879 = vperm.xlu0 %2878, %v2709
      %v2880 = vpop.permute.xlu0 %2879
      %2883 = vset.pattern.permute.xlu0 0
      %2884 = vperm.xlu0 %2883, %v2710
      %v2885 = vpop.permute.xlu0 %2884
      %2888 = vset.pattern.permute.xlu0 0
      %2889 = vperm.xlu0 %2888, %v2711
      %v2890 = vpop.permute.xlu0 %2889
      %v2892 = vmul.f32 %v2597, %v2715
      %v2893 = vmul.f32 %v2598, %v2720
      %v2894 = vmul.f32 %v2599, %v2725
      %v2895 = vmul.f32 %v2600, %v2730
      %v2896 = vmul.f32 %v2601, %v2735
      %v2897 = vmul.f32 %v2602, %v2740
      %v2898 = vmul.f32 %v2603, %v2745
      %v2899 = vmul.f32 %v2604, %v2750
      %v2900 = vmul.f32 %v2605, %v2755
      %v2901 = vmul.f32 %v2606, %v2760
      %v2902 = vmul.f32 %v2607, %v2765
      %v2903 = vmul.f32 %v2608, %v2770
      %v2904 = vmul.f32 %v2609, %v2775
      %v2905 = vmul.f32 %v2610, %v2780
      %v2906 = vmul.f32 %v2611, %v2785
      %v2907 = vmul.f32 %v2612, %v2790
      %v2908 = vmul.f32 %v2613, %v2795
      %v2909 = vmul.f32 %v2614, %v2800
      %v2910 = vmul.f32 %v2615, %v2805
      %v2911 = vmul.f32 %v2616, %v2810
      %v2912 = vmul.f32 %v2617, %v2815
      %v2913 = vmul.f32 %v2618, %v2820
      %v2914 = vmul.f32 %v2619, %v2825
      %v2915 = vmul.f32 %v2620, %v2830
      %v2916 = vmul.f32 %v2621, %v2835
      %v2917 = vmul.f32 %v2622, %v2840
      %v2918 = vmul.f32 %v2623, %v2845
      %v2919 = vmul.f32 %v2624, %v2850
      %v2920 = vmul.f32 %v2625, %v2855
      %v2921 = vmul.f32 %v2626, %v2860
      %v2922 = vmul.f32 %v2627, %v2865
      %v2923 = vmul.f32 %v2628, %v2870
      %v2924 = vmul.f32 %v2629, %v2875
      %v2925 = vmul.f32 %v2630, %v2880
      %v2926 = vmul.f32 %v2631, %v2885
      %v2927 = vmul.f32 %v2632, %v2890
      %2928 = vst.msk [vmem:[#allocation2 + $0x13] sm:$0xff] %vm461, %v2892
      %2929 = vst.msk [vmem:[#allocation2 + $0x1b] sm:$0xff] %vm461, %v2893
      %2930 = vst.msk [vmem:[#allocation2 + $0x23] sm:$0xff] %vm461, %v2894
      %2931 = vst.msk [vmem:[#allocation2 + $0x2b] sm:$0xff] %vm461, %v2895
      %2932 = vst.msk [vmem:[#allocation2 + $0x33] sm:$0xff] %vm461, %v2896
      %2933 = vst.msk [vmem:[#allocation2 + $0x3b] sm:$0xff] %vm461, %v2897
      %2934 = vst.msk [vmem:[#allocation2 + $0x43] sm:$0xff] %vm461, %v2898
      %2935 = vst.msk [vmem:[#allocation2 + $0x4b] sm:$0xff] %vm461, %v2899
      %2936 = vst.msk [vmem:[#allocation2 + $0x53] sm:$0xff] %vm461, %v2900
      %2937 = vst.msk [vmem:[#allocation2 + $0x5b] sm:$0xff] %vm461, %v2901
      %2938 = vst.msk [vmem:[#allocation2 + $0x63] sm:$0xff] %vm461, %v2902
      %2939 = vst.msk [vmem:[#allocation2 + $0x6b] sm:$0xff] %vm461, %v2903
      %2940 = vst.msk [vmem:[#allocation2 + $0x73] sm:$0xff] %vm461, %v2904
      %2941 = vst.msk [vmem:[#allocation2 + $0x7b] sm:$0xff] %vm461, %v2905
      %2942 = vst.msk [vmem:[#allocation2 + $0x83] sm:$0xff] %vm461, %v2906
      %2943 = vst.msk [vmem:[#allocation2 + $0x8b] sm:$0xff] %vm461, %v2907
      %2944 = vst.msk [vmem:[#allocation2 + $0x93] sm:$0xff] %vm461, %v2908
      %2945 = vst.msk [vmem:[#allocation2 + $0x9b] sm:$0xff] %vm461, %v2909
      %2946 = vst.msk [vmem:[#allocation2 + $0xa3] sm:$0xff] %vm461, %v2910
      %2947 = vst.msk [vmem:[#allocation2 + $0xab] sm:$0xff] %vm461, %v2911
      %2948 = vst.msk [vmem:[#allocation2 + $0xb3] sm:$0xff] %vm461, %v2912
      %2949 = vst.msk [vmem:[#allocation2 + $0xbb] sm:$0xff] %vm461, %v2913
      %2950 = vst.msk [vmem:[#allocation2 + $0xc3] sm:$0xff] %vm461, %v2914
      %2951 = vst.msk [vmem:[#allocation2 + $0xcb] sm:$0xff] %vm461, %v2915
      %2952 = vst.msk [vmem:[#allocation2 + $0xd3] sm:$0xff] %vm461, %v2916
      %2953 = vst.msk [vmem:[#allocation2 + $0xdb] sm:$0xff] %vm461, %v2917
      %2954 = vst.msk [vmem:[#allocation2 + $0xe3] sm:$0xff] %vm461, %v2918
      %2955 = vst.msk [vmem:[#allocation2 + $0xeb] sm:$0xff] %vm461, %v2919
      %2956 = vst.msk [vmem:[#allocation2 + $0xf3] sm:$0xff] %vm461, %v2920
      %2957 = vst.msk [vmem:[#allocation2 + $0xfb] sm:$0xff] %vm461, %v2921
      %2958 = vst.msk [vmem:[#allocation2 + $0x103] sm:$0xff] %vm461, %v2922
      %2959 = vst.msk [vmem:[#allocation2 + $0x10b] sm:$0xff] %vm461, %v2923
      %2960 = vst.msk [vmem:[#allocation2 + $0x113] sm:$0xff] %vm461, %v2924
      %2961 = vst.msk [vmem:[#allocation2 + $0x11b] sm:$0xff] %vm461, %v2925
      %2962 = vst.msk [vmem:[#allocation2 + $0x123] sm:$0xff] %vm461, %v2926
      %2963 = vst.msk [vmem:[#allocation2 + $0x12b] sm:$0xff] %vm461, %v2927
      %v2964 = vld [vmem:[#allocation2] sm:$0xff]
      %v2965 = vld [vmem:[#allocation2 + $0x8] sm:$0xff]
      %v2966 = vld [vmem:[#allocation2 + $0x10] sm:$0xff]
      %v2967 = vld [vmem:[#allocation2 + $0x18] sm:$0xff]
      %v2968 = vld [vmem:[#allocation2 + $0x20] sm:$0xff]
      %v2969 = vld [vmem:[#allocation2 + $0x28] sm:$0xff]
      %v2970 = vld [vmem:[#allocation2 + $0x30] sm:$0xff]
      %v2971 = vld [vmem:[#allocation2 + $0x38] sm:$0xff]
      %v2972 = vld [vmem:[#allocation2 + $0x40] sm:$0xff]
      %v2973 = vld [vmem:[#allocation2 + $0x48] sm:$0xff]
      %v2974 = vld [vmem:[#allocation2 + $0x50] sm:$0xff]
      %v2975 = vld [vmem:[#allocation2 + $0x58] sm:$0xff]
      %v2976 = vld [vmem:[#allocation2 + $0x60] sm:$0xff]
      %v2977 = vld [vmem:[#allocation2 + $0x68] sm:$0xff]
      %v2978 = vld [vmem:[#allocation2 + $0x70] sm:$0xff]
      %v2979 = vld [vmem:[#allocation2 + $0x78] sm:$0xff]
      %v2980 = vld [vmem:[#allocation2 + $0x80] sm:$0xff]
      %v2981 = vld [vmem:[#allocation2 + $0x88] sm:$0xff]
      %v2982 = vld [vmem:[#allocation2 + $0x90] sm:$0xff]
      %v2983 = vld [vmem:[#allocation2 + $0x98] sm:$0xff]
      %v2984 = vld [vmem:[#allocation2 + $0xa0] sm:$0xff]
      %v2985 = vld [vmem:[#allocation2 + $0xa8] sm:$0xff]
      %v2986 = vld [vmem:[#allocation2 + $0xb0] sm:$0xff]
      %v2987 = vld [vmem:[#allocation2 + $0xb8] sm:$0xff]
      %v2988 = vld [vmem:[#allocation2 + $0xc0] sm:$0xff]
      %v2989 = vld [vmem:[#allocation2 + $0xc8] sm:$0xff]
      %v2990 = vld [vmem:[#allocation2 + $0xd0] sm:$0xff]
      %v2991 = vld [vmem:[#allocation2 + $0xd8] sm:$0xff]
      %v2992 = vld [vmem:[#allocation2 + $0xe0] sm:$0xff]
      %v2993 = vld [vmem:[#allocation2 + $0xe8] sm:$0xff]
      %v2994 = vld [vmem:[#allocation2 + $0xf0] sm:$0xff]
      %v2995 = vld [vmem:[#allocation2 + $0xf8] sm:$0xff]
      %v2996 = vld [vmem:[#allocation2 + $0x100] sm:$0xff]
      %v2997 = vld [vmem:[#allocation2 + $0x108] sm:$0xff]
      %v2998 = vld [vmem:[#allocation2 + $0x110] sm:$0xff]
      %v2999 = vld [vmem:[#allocation2 + $0x118] sm:$0xff]
      %3000 = vst.msk [vmem:[#allocation3] sm:$0xff] %vm461, %v2964
      %3001 = vst.msk [vmem:[#allocation3 + $0x10] sm:$0xff] %vm461, %v2965
      %3002 = vst.msk [vmem:[#allocation3 + $0x20] sm:$0xff] %vm461, %v2966
      %3003 = vst.msk [vmem:[#allocation3 + $0x30] sm:$0xff] %vm461, %v2967
      %3004 = vst.msk [vmem:[#allocation3 + $0x40] sm:$0xff] %vm461, %v2968
      %3005 = vst.msk [vmem:[#allocation3 + $0x50] sm:$0xff] %vm461, %v2969
      %3006 = vst.msk [vmem:[#allocation3 + $0x60] sm:$0xff] %vm461, %v2970
      %3007 = vst.msk [vmem:[#allocation3 + $0x70] sm:$0xff] %vm461, %v2971
      %3008 = vst.msk [vmem:[#allocation3 + $0x80] sm:$0xff] %vm461, %v2972
      %3009 = vst.msk [vmem:[#allocation3 + $0x90] sm:$0xff] %vm461, %v2973
      %3010 = vst.msk [vmem:[#allocation3 + $0xa0] sm:$0xff] %vm461, %v2974
      %3011 = vst.msk [vmem:[#allocation3 + $0xb0] sm:$0xff] %vm461, %v2975
      %3012 = vst.msk [vmem:[#allocation3 + $0xc0] sm:$0xff] %vm461, %v2976
      %3013 = vst.msk [vmem:[#allocation3 + $0xd0] sm:$0xff] %vm461, %v2977
      %3014 = vst.msk [vmem:[#allocation3 + $0xe0] sm:$0xff] %vm461, %v2978
      %3015 = vst.msk [vmem:[#allocation3 + $0xf0] sm:$0xff] %vm461, %v2979
      %3016 = vst.msk [vmem:[#allocation3 + $0x100] sm:$0xff] %vm461, %v2980
      %3017 = vst.msk [vmem:[#allocation3 + $0x110] sm:$0xff] %vm461, %v2981
      %3018 = vst.msk [vmem:[#allocation3 + $0x120] sm:$0xff] %vm461, %v2982
      %3019 = vst.msk [vmem:[#allocation3 + $0x130] sm:$0xff] %vm461, %v2983
      %3020 = vst.msk [vmem:[#allocation3 + $0x140] sm:$0xff] %vm461, %v2984
      %3021 = vst.msk [vmem:[#allocation3 + $0x150] sm:$0xff] %vm461, %v2985
      %3022 = vst.msk [vmem:[#allocation3 + $0x160] sm:$0xff] %vm461, %v2986
      %3023 = vst.msk [vmem:[#allocation3 + $0x170] sm:$0xff] %vm461, %v2987
      %3024 = vst.msk [vmem:[#allocation3 + $0x180] sm:$0xff] %vm461, %v2988
      %3025 = vst.msk [vmem:[#allocation3 + $0x190] sm:$0xff] %vm461, %v2989
      %3026 = vst.msk [vmem:[#allocation3 + $0x1a0] sm:$0xff] %vm461, %v2990
      %3027 = vst.msk [vmem:[#allocation3 + $0x1b0] sm:$0xff] %vm461, %v2991
      %3028 = vst.msk [vmem:[#allocation3 + $0x1c0] sm:$0xff] %vm461, %v2992
      %3029 = vst.msk [vmem:[#allocation3 + $0x1d0] sm:$0xff] %vm461, %v2993
      %3030 = vst.msk [vmem:[#allocation3 + $0x1e0] sm:$0xff] %vm461, %v2994
      %3031 = vst.msk [vmem:[#allocation3 + $0x1f0] sm:$0xff] %vm461, %v2995
      %3032 = vst.msk [vmem:[#allocation3 + $0x200] sm:$0xff] %vm461, %v2996
      %3033 = vst.msk [vmem:[#allocation3 + $0x210] sm:$0xff] %vm461, %v2997
      %3034 = vst.msk [vmem:[#allocation3 + $0x220] sm:$0xff] %vm461, %v2998
      %3035 = vst.msk [vmem:[#allocation3 + $0x230] sm:$0xff] %vm461, %v2999
      %v3036 = vld [vmem:[#allocation2 + $0x1] sm:$0xff]
      %v3037 = vld [vmem:[#allocation2 + $0x9] sm:$0xff]
      %v3038 = vld [vmem:[#allocation2 + $0x11] sm:$0xff]
      %v3039 = vld [vmem:[#allocation2 + $0x19] sm:$0xff]
      %v3040 = vld [vmem:[#allocation2 + $0x21] sm:$0xff]
      %v3041 = vld [vmem:[#allocation2 + $0x29] sm:$0xff]
      %v3042 = vld [vmem:[#allocation2 + $0x31] sm:$0xff]
      %v3043 = vld [vmem:[#allocation2 + $0x39] sm:$0xff]
      %v3044 = vld [vmem:[#allocation2 + $0x41] sm:$0xff]
      %v3045 = vld [vmem:[#allocation2 + $0x49] sm:$0xff]
      %v3046 = vld [vmem:[#allocation2 + $0x51] sm:$0xff]
      %v3047 = vld [vmem:[#allocation2 + $0x59] sm:$0xff]
      %v3048 = vld [vmem:[#allocation2 + $0x61] sm:$0xff]
      %v3049 = vld [vmem:[#allocation2 + $0x69] sm:$0xff]
      %v3050 = vld [vmem:[#allocation2 + $0x71] sm:$0xff]
      %v3051 = vld [vmem:[#allocation2 + $0x79] sm:$0xff]
      %v3052 = vld [vmem:[#allocation2 + $0x81] sm:$0xff]
      %v3053 = vld [vmem:[#allocation2 + $0x89] sm:$0xff]
      %v3054 = vld [vmem:[#allocation2 + $0x91] sm:$0xff]
      %v3055 = vld [vmem:[#allocation2 + $0x99] sm:$0xff]
      %v3056 = vld [vmem:[#allocation2 + $0xa1] sm:$0xff]
      %v3057 = vld [vmem:[#allocation2 + $0xa9] sm:$0xff]
      %v3058 = vld [vmem:[#allocation2 + $0xb1] sm:$0xff]
      %v3059 = vld [vmem:[#allocation2 + $0xb9] sm:$0xff]
      %v3060 = vld [vmem:[#allocation2 + $0xc1] sm:$0xff]
      %v3061 = vld [vmem:[#allocation2 + $0xc9] sm:$0xff]
      %v3062 = vld [vmem:[#allocation2 + $0xd1] sm:$0xff]
      %v3063 = vld [vmem:[#allocation2 + $0xd9] sm:$0xff]
      %v3064 = vld [vmem:[#allocation2 + $0xe1] sm:$0xff]
      %v3065 = vld [vmem:[#allocation2 + $0xe9] sm:$0xff]
      %v3066 = vld [vmem:[#allocation2 + $0xf1] sm:$0xff]
      %v3067 = vld [vmem:[#allocation2 + $0xf9] sm:$0xff]
      %v3068 = vld [vmem:[#allocation2 + $0x101] sm:$0xff]
      %v3069 = vld [vmem:[#allocation2 + $0x109] sm:$0xff]
      %v3070 = vld [vmem:[#allocation2 + $0x111] sm:$0xff]
      %v3071 = vld [vmem:[#allocation2 + $0x119] sm:$0xff]
      %3108 = vrot.lane.b32.xlu0 %v3036, 16
      %v3109 = vpop.permute.xlu0 %3108
      %3110 = vrot.lane.b32.xlu0 %v3037, 16
      %v3111 = vpop.permute.xlu0 %3110
      %3112 = vrot.lane.b32.xlu0 %v3038, 16
      %v3113 = vpop.permute.xlu0 %3112
      %3114 = vrot.lane.b32.xlu0 %v3039, 16
      %v3115 = vpop.permute.xlu0 %3114
      %3116 = vrot.lane.b32.xlu0 %v3040, 16
      %v3117 = vpop.permute.xlu0 %3116
      %3118 = vrot.lane.b32.xlu0 %v3041, 16
      %v3119 = vpop.permute.xlu0 %3118
      %3120 = vrot.lane.b32.xlu0 %v3042, 16
      %v3121 = vpop.permute.xlu0 %3120
      %3122 = vrot.lane.b32.xlu0 %v3043, 16
      %v3123 = vpop.permute.xlu0 %3122
      %3124 = vrot.lane.b32.xlu0 %v3044, 16
      %v3125 = vpop.permute.xlu0 %3124
      %3126 = vrot.lane.b32.xlu0 %v3045, 16
      %v3127 = vpop.permute.xlu0 %3126
      %3128 = vrot.lane.b32.xlu0 %v3046, 16
      %v3129 = vpop.permute.xlu0 %3128
      %3130 = vrot.lane.b32.xlu0 %v3047, 16
      %v3131 = vpop.permute.xlu0 %3130
      %3132 = vrot.lane.b32.xlu0 %v3048, 16
      %v3133 = vpop.permute.xlu0 %3132
      %3134 = vrot.lane.b32.xlu0 %v3049, 16
      %v3135 = vpop.permute.xlu0 %3134
      %3136 = vrot.lane.b32.xlu0 %v3050, 16
      %v3137 = vpop.permute.xlu0 %3136
      %3138 = vrot.lane.b32.xlu0 %v3051, 16
      %v3139 = vpop.permute.xlu0 %3138
      %3140 = vrot.lane.b32.xlu0 %v3052, 16
      %v3141 = vpop.permute.xlu0 %3140
      %3142 = vrot.lane.b32.xlu0 %v3053, 16
      %v3143 = vpop.permute.xlu0 %3142
      %3144 = vrot.lane.b32.xlu0 %v3054, 16
      %v3145 = vpop.permute.xlu0 %3144
      %3146 = vrot.lane.b32.xlu0 %v3055, 16
      %v3147 = vpop.permute.xlu0 %3146
      %3148 = vrot.lane.b32.xlu0 %v3056, 16
      %v3149 = vpop.permute.xlu0 %3148
      %3150 = vrot.lane.b32.xlu0 %v3057, 16
      %v3151 = vpop.permute.xlu0 %3150
      %3152 = vrot.lane.b32.xlu0 %v3058, 16
      %v3153 = vpop.permute.xlu0 %3152
      %3154 = vrot.lane.b32.xlu0 %v3059, 16
      %v3155 = vpop.permute.xlu0 %3154
      %3156 = vrot.lane.b32.xlu0 %v3060, 16
      %v3157 = vpop.permute.xlu0 %3156
      %3158 = vrot.lane.b32.xlu0 %v3061, 16
      %v3159 = vpop.permute.xlu0 %3158
      %3160 = vrot.lane.b32.xlu0 %v3062, 16
      %v3161 = vpop.permute.xlu0 %3160
      %3162 = vrot.lane.b32.xlu0 %v3063, 16
      %v3163 = vpop.permute.xlu0 %3162
      %3164 = vrot.lane.b32.xlu0 %v3064, 16
      %v3165 = vpop.permute.xlu0 %3164
      %3166 = vrot.lane.b32.xlu0 %v3065, 16
      %v3167 = vpop.permute.xlu0 %3166
      %3168 = vrot.lane.b32.xlu0 %v3066, 16
      %v3169 = vpop.permute.xlu0 %3168
      %3170 = vrot.lane.b32.xlu0 %v3067, 16
      %v3171 = vpop.permute.xlu0 %3170
      %3172 = vrot.lane.b32.xlu0 %v3068, 16
      %v3173 = vpop.permute.xlu0 %3172
      %3174 = vrot.lane.b32.xlu0 %v3069, 16
      %v3175 = vpop.permute.xlu0 %3174
      %3176 = vrot.lane.b32.xlu0 %v3070, 16
      %v3177 = vpop.permute.xlu0 %3176
      %3178 = vrot.lane.b32.xlu0 %v3071, 16
      %v3179 = vpop.permute.xlu0 %3178
      %3216 = vst.msk [vmem:[#allocation3] sm:$0xff] %vm678, %v3109
      %3217 = vst.msk [vmem:[#allocation3 + $0x10] sm:$0xff] %vm678, %v3111
      %3218 = vst.msk [vmem:[#allocation3 + $0x20] sm:$0xff] %vm678, %v3113
      %3219 = vst.msk [vmem:[#allocation3 + $0x30] sm:$0xff] %vm678, %v3115
      %3220 = vst.msk [vmem:[#allocation3 + $0x40] sm:$0xff] %vm678, %v3117
      %3221 = vst.msk [vmem:[#allocation3 + $0x50] sm:$0xff] %vm678, %v3119
      %3222 = vst.msk [vmem:[#allocation3 + $0x60] sm:$0xff] %vm678, %v3121
      %3223 = vst.msk [vmem:[#allocation3 + $0x70] sm:$0xff] %vm678, %v3123
      %3224 = vst.msk [vmem:[#allocation3 + $0x80] sm:$0xff] %vm678, %v3125
      %3225 = vst.msk [vmem:[#allocation3 + $0x90] sm:$0xff] %vm678, %v3127
      %3226 = vst.msk [vmem:[#allocation3 + $0xa0] sm:$0xff] %vm678, %v3129
      %3227 = vst.msk [vmem:[#allocation3 + $0xb0] sm:$0xff] %vm678, %v3131
      %3228 = vst.msk [vmem:[#allocation3 + $0xc0] sm:$0xff] %vm678, %v3133
      %3229 = vst.msk [vmem:[#allocation3 + $0xd0] sm:$0xff] %vm678, %v3135
      %3230 = vst.msk [vmem:[#allocation3 + $0xe0] sm:$0xff] %vm678, %v3137
      %3231 = vst.msk [vmem:[#allocation3 + $0xf0] sm:$0xff] %vm678, %v3139
      %3232 = vst.msk [vmem:[#allocation3 + $0x100] sm:$0xff] %vm678, %v3141
      %3233 = vst.msk [vmem:[#allocation3 + $0x110] sm:$0xff] %vm678, %v3143
      %3234 = vst.msk [vmem:[#allocation3 + $0x120] sm:$0xff] %vm678, %v3145
      %3235 = vst.msk [vmem:[#allocation3 + $0x130] sm:$0xff] %vm678, %v3147
      %3236 = vst.msk [vmem:[#allocation3 + $0x140] sm:$0xff] %vm678, %v3149
      %3237 = vst.msk [vmem:[#allocation3 + $0x150] sm:$0xff] %vm678, %v3151
      %3238 = vst.msk [vmem:[#allocation3 + $0x160] sm:$0xff] %vm678, %v3153
      %3239 = vst.msk [vmem:[#allocation3 + $0x170] sm:$0xff] %vm678, %v3155
      %3240 = vst.msk [vmem:[#allocation3 + $0x180] sm:$0xff] %vm678, %v3157
      %3241 = vst.msk [vmem:[#allocation3 + $0x190] sm:$0xff] %vm678, %v3159
      %3242 = vst.msk [vmem:[#allocation3 + $0x1a0] sm:$0xff] %vm678, %v3161
      %3243 = vst.msk [vmem:[#allocation3 + $0x1b0] sm:$0xff] %vm678, %v3163
      %3244 = vst.msk [vmem:[#allocation3 + $0x1c0] sm:$0xff] %vm678, %v3165
      %3245 = vst.msk [vmem:[#allocation3 + $0x1d0] sm:$0xff] %vm678, %v3167
      %3246 = vst.msk [vmem:[#allocation3 + $0x1e0] sm:$0xff] %vm678, %v3169
      %3247 = vst.msk [vmem:[#allocation3 + $0x1f0] sm:$0xff] %vm678, %v3171
      %3248 = vst.msk [vmem:[#allocation3 + $0x200] sm:$0xff] %vm678, %v3173
      %3249 = vst.msk [vmem:[#allocation3 + $0x210] sm:$0xff] %vm678, %v3175
      %3250 = vst.msk [vmem:[#allocation3 + $0x220] sm:$0xff] %vm678, %v3177
      %3251 = vst.msk [vmem:[#allocation3 + $0x230] sm:$0xff] %vm678, %v3179
      %v3252 = vld [vmem:[#allocation2 + $0x2] sm:$0xff]
      %v3253 = vld [vmem:[#allocation2 + $0xa] sm:$0xff]
      %v3254 = vld [vmem:[#allocation2 + $0x12] sm:$0xff]
      %v3255 = vld [vmem:[#allocation2 + $0x1a] sm:$0xff]
      %v3256 = vld [vmem:[#allocation2 + $0x22] sm:$0xff]
      %v3257 = vld [vmem:[#allocation2 + $0x2a] sm:$0xff]
      %v3258 = vld [vmem:[#allocation2 + $0x32] sm:$0xff]
      %v3259 = vld [vmem:[#allocation2 + $0x3a] sm:$0xff]
      %v3260 = vld [vmem:[#allocation2 + $0x42] sm:$0xff]
      %v3261 = vld [vmem:[#allocation2 + $0x4a] sm:$0xff]
      %v3262 = vld [vmem:[#allocation2 + $0x52] sm:$0xff]
      %v3263 = vld [vmem:[#allocation2 + $0x5a] sm:$0xff]
      %v3264 = vld [vmem:[#allocation2 + $0x62] sm:$0xff]
      %v3265 = vld [vmem:[#allocation2 + $0x6a] sm:$0xff]
      %v3266 = vld [vmem:[#allocation2 + $0x72] sm:$0xff]
      %v3267 = vld [vmem:[#allocation2 + $0x7a] sm:$0xff]
      %v3268 = vld [vmem:[#allocation2 + $0x82] sm:$0xff]
      %v3269 = vld [vmem:[#allocation2 + $0x8a] sm:$0xff]
      %v3270 = vld [vmem:[#allocation2 + $0x92] sm:$0xff]
      %v3271 = vld [vmem:[#allocation2 + $0x9a] sm:$0xff]
      %v3272 = vld [vmem:[#allocation2 + $0xa2] sm:$0xff]
      %v3273 = vld [vmem:[#allocation2 + $0xaa] sm:$0xff]
      %v3274 = vld [vmem:[#allocation2 + $0xb2] sm:$0xff]
      %v3275 = vld [vmem:[#allocation2 + $0xba] sm:$0xff]
      %v3276 = vld [vmem:[#allocation2 + $0xc2] sm:$0xff]
      %v3277 = vld [vmem:[#allocation2 + $0xca] sm:$0xff]
      %v3278 = vld [vmem:[#allocation2 + $0xd2] sm:$0xff]
      %v3279 = vld [vmem:[#allocation2 + $0xda] sm:$0xff]
      %v3280 = vld [vmem:[#allocation2 + $0xe2] sm:$0xff]
      %v3281 = vld [vmem:[#allocation2 + $0xea] sm:$0xff]
      %v3282 = vld [vmem:[#allocation2 + $0xf2] sm:$0xff]
      %v3283 = vld [vmem:[#allocation2 + $0xfa] sm:$0xff]
      %v3284 = vld [vmem:[#allocation2 + $0x102] sm:$0xff]
      %v3285 = vld [vmem:[#allocation2 + $0x10a] sm:$0xff]
      %v3286 = vld [vmem:[#allocation2 + $0x112] sm:$0xff]
      %v3287 = vld [vmem:[#allocation2 + $0x11a] sm:$0xff]
      %3324 = vrot.lane.b32.xlu0 %v3252, 32
      %v3325 = vpop.permute.xlu0 %3324
      %3326 = vrot.lane.b32.xlu0 %v3253, 32
      %v3327 = vpop.permute.xlu0 %3326
      %3328 = vrot.lane.b32.xlu0 %v3254, 32
      %v3329 = vpop.permute.xlu0 %3328
      %3330 = vrot.lane.b32.xlu0 %v3255, 32
      %v3331 = vpop.permute.xlu0 %3330
      %3332 = vrot.lane.b32.xlu0 %v3256, 32
      %v3333 = vpop.permute.xlu0 %3332
      %3334 = vrot.lane.b32.xlu0 %v3257, 32
      %v3335 = vpop.permute.xlu0 %3334
      %3336 = vrot.lane.b32.xlu0 %v3258, 32
      %v3337 = vpop.permute.xlu0 %3336
      %3338 = vrot.lane.b32.xlu0 %v3259, 32
      %v3339 = vpop.permute.xlu0 %3338
      %3340 = vrot.lane.b32.xlu0 %v3260, 32
      %v3341 = vpop.permute.xlu0 %3340
      %3342 = vrot.lane.b32.xlu0 %v3261, 32
      %v3343 = vpop.permute.xlu0 %3342
      %3344 = vrot.lane.b32.xlu0 %v3262, 32
      %v3345 = vpop.permute.xlu0 %3344
      %3346 = vrot.lane.b32.xlu0 %v3263, 32
      %v3347 = vpop.permute.xlu0 %3346
      %3348 = vrot.lane.b32.xlu0 %v3264, 32
      %v3349 = vpop.permute.xlu0 %3348
      %3350 = vrot.lane.b32.xlu0 %v3265, 32
      %v3351 = vpop.permute.xlu0 %3350
      %3352 = vrot.lane.b32.xlu0 %v3266, 32
      %v3353 = vpop.permute.xlu0 %3352
      %3354 = vrot.lane.b32.xlu0 %v3267, 32
      %v3355 = vpop.permute.xlu0 %3354
      %3356 = vrot.lane.b32.xlu0 %v3268, 32
      %v3357 = vpop.permute.xlu0 %3356
      %3358 = vrot.lane.b32.xlu0 %v3269, 32
      %v3359 = vpop.permute.xlu0 %3358
      %3360 = vrot.lane.b32.xlu0 %v3270, 32
      %v3361 = vpop.permute.xlu0 %3360
      %3362 = vrot.lane.b32.xlu0 %v3271, 32
      %v3363 = vpop.permute.xlu0 %3362
      %3364 = vrot.lane.b32.xlu0 %v3272, 32
      %v3365 = vpop.permute.xlu0 %3364
      %3366 = vrot.lane.b32.xlu0 %v3273, 32
      %v3367 = vpop.permute.xlu0 %3366
      %3368 = vrot.lane.b32.xlu0 %v3274, 32
      %v3369 = vpop.permute.xlu0 %3368
      %3370 = vrot.lane.b32.xlu0 %v3275, 32
      %v3371 = vpop.permute.xlu0 %3370
      %3372 = vrot.lane.b32.xlu0 %v3276, 32
      %v3373 = vpop.permute.xlu0 %3372
      %3374 = vrot.lane.b32.xlu0 %v3277, 32
      %v3375 = vpop.permute.xlu0 %3374
      %3376 = vrot.lane.b32.xlu0 %v3278, 32
      %v3377 = vpop.permute.xlu0 %3376
      %3378 = vrot.lane.b32.xlu0 %v3279, 32
      %v3379 = vpop.permute.xlu0 %3378
      %3380 = vrot.lane.b32.xlu0 %v3280, 32
      %v3381 = vpop.permute.xlu0 %3380
      %3382 = vrot.lane.b32.xlu0 %v3281, 32
      %v3383 = vpop.permute.xlu0 %3382
      %3384 = vrot.lane.b32.xlu0 %v3282, 32
      %v3385 = vpop.permute.xlu0 %3384
      %3386 = vrot.lane.b32.xlu0 %v3283, 32
      %v3387 = vpop.permute.xlu0 %3386
      %3388 = vrot.lane.b32.xlu0 %v3284, 32
      %v3389 = vpop.permute.xlu0 %3388
      %3390 = vrot.lane.b32.xlu0 %v3285, 32
      %v3391 = vpop.permute.xlu0 %3390
      %3392 = vrot.lane.b32.xlu0 %v3286, 32
      %v3393 = vpop.permute.xlu0 %3392
      %3394 = vrot.lane.b32.xlu0 %v3287, 32
      %v3395 = vpop.permute.xlu0 %3394
      %3432 = vst.msk [vmem:[#allocation3] sm:$0xff] %vm895, %v3325
      %3433 = vst.msk [vmem:[#allocation3 + $0x10] sm:$0xff] %vm895, %v3327
      %3434 = vst.msk [vmem:[#allocation3 + $0x20] sm:$0xff] %vm895, %v3329
      %3435 = vst.msk [vmem:[#allocation3 + $0x30] sm:$0xff] %vm895, %v3331
      %3436 = vst.msk [vmem:[#allocation3 + $0x40] sm:$0xff] %vm895, %v3333
      %3437 = vst.msk [vmem:[#allocation3 + $0x50] sm:$0xff] %vm895, %v3335
      %3438 = vst.msk [vmem:[#allocation3 + $0x60] sm:$0xff] %vm895, %v3337
      %3439 = vst.msk [vmem:[#allocation3 + $0x70] sm:$0xff] %vm895, %v3339
      %3440 = vst.msk [vmem:[#allocation3 + $0x80] sm:$0xff] %vm895, %v3341
      %3441 = vst.msk [vmem:[#allocation3 + $0x90] sm:$0xff] %vm895, %v3343
      %3442 = vst.msk [vmem:[#allocation3 + $0xa0] sm:$0xff] %vm895, %v3345
      %3443 = vst.msk [vmem:[#allocation3 + $0xb0] sm:$0xff] %vm895, %v3347
      %3444 = vst.msk [vmem:[#allocation3 + $0xc0] sm:$0xff] %vm895, %v3349
      %3445 = vst.msk [vmem:[#allocation3 + $0xd0] sm:$0xff] %vm895, %v3351
      %3446 = vst.msk [vmem:[#allocation3 + $0xe0] sm:$0xff] %vm895, %v3353
      %3447 = vst.msk [vmem:[#allocation3 + $0xf0] sm:$0xff] %vm895, %v3355
      %3448 = vst.msk [vmem:[#allocation3 + $0x100] sm:$0xff] %vm895, %v3357
      %3449 = vst.msk [vmem:[#allocation3 + $0x110] sm:$0xff] %vm895, %v3359
      %3450 = vst.msk [vmem:[#allocation3 + $0x120] sm:$0xff] %vm895, %v3361
      %3451 = vst.msk [vmem:[#allocation3 + $0x130] sm:$0xff] %vm895, %v3363
      %3452 = vst.msk [vmem:[#allocation3 + $0x140] sm:$0xff] %vm895, %v3365
      %3453 = vst.msk [vmem:[#allocation3 + $0x150] sm:$0xff] %vm895, %v3367
      %3454 = vst.msk [vmem:[#allocation3 + $0x160] sm:$0xff] %vm895, %v3369
      %3455 = vst.msk [vmem:[#allocation3 + $0x170] sm:$0xff] %vm895, %v3371
      %3456 = vst.msk [vmem:[#allocation3 + $0x180] sm:$0xff] %vm895, %v3373
      %3457 = vst.msk [vmem:[#allocation3 + $0x190] sm:$0xff] %vm895, %v3375
      %3458 = vst.msk [vmem:[#allocation3 + $0x1a0] sm:$0xff] %vm895, %v3377
      %3459 = vst.msk [vmem:[#allocation3 + $0x1b0] sm:$0xff] %vm895, %v3379
      %3460 = vst.msk [vmem:[#allocation3 + $0x1c0] sm:$0xff] %vm895, %v3381
      %3461 = vst.msk [vmem:[#allocation3 + $0x1d0] sm:$0xff] %vm895, %v3383
      %3462 = vst.msk [vmem:[#allocation3 + $0x1e0] sm:$0xff] %vm895, %v3385
      %3463 = vst.msk [vmem:[#allocation3 + $0x1f0] sm:$0xff] %vm895, %v3387
      %3464 = vst.msk [vmem:[#allocation3 + $0x200] sm:$0xff] %vm895, %v3389
      %3465 = vst.msk [vmem:[#allocation3 + $0x210] sm:$0xff] %vm895, %v3391
      %3466 = vst.msk [vmem:[#allocation3 + $0x220] sm:$0xff] %vm895, %v3393
      %3467 = vst.msk [vmem:[#allocation3 + $0x230] sm:$0xff] %vm895, %v3395
      %v3468 = vld [vmem:[#allocation2 + $0x12] sm:$0xff]
      %v3469 = vld [vmem:[#allocation2 + $0x1a] sm:$0xff]
      %v3470 = vld [vmem:[#allocation2 + $0x22] sm:$0xff]
      %v3471 = vld [vmem:[#allocation2 + $0x2a] sm:$0xff]
      %v3472 = vld [vmem:[#allocation2 + $0x32] sm:$0xff]
      %v3473 = vld [vmem:[#allocation2 + $0x3a] sm:$0xff]
      %v3474 = vld [vmem:[#allocation2 + $0x42] sm:$0xff]
      %v3475 = vld [vmem:[#allocation2 + $0x4a] sm:$0xff]
      %v3476 = vld [vmem:[#allocation2 + $0x52] sm:$0xff]
      %v3477 = vld [vmem:[#allocation2 + $0x5a] sm:$0xff]
      %v3478 = vld [vmem:[#allocation2 + $0x62] sm:$0xff]
      %v3479 = vld [vmem:[#allocation2 + $0x6a] sm:$0xff]
      %v3480 = vld [vmem:[#allocation2 + $0x72] sm:$0xff]
      %v3481 = vld [vmem:[#allocation2 + $0x7a] sm:$0xff]
      %v3482 = vld [vmem:[#allocation2 + $0x82] sm:$0xff]
      %v3483 = vld [vmem:[#allocation2 + $0x8a] sm:$0xff]
      %v3484 = vld [vmem:[#allocation2 + $0x92] sm:$0xff]
      %v3485 = vld [vmem:[#allocation2 + $0x9a] sm:$0xff]
      %v3486 = vld [vmem:[#allocation2 + $0xa2] sm:$0xff]
      %v3487 = vld [vmem:[#allocation2 + $0xaa] sm:$0xff]
      %v3488 = vld [vmem:[#allocation2 + $0xb2] sm:$0xff]
      %v3489 = vld [vmem:[#allocation2 + $0xba] sm:$0xff]
      %v3490 = vld [vmem:[#allocation2 + $0xc2] sm:$0xff]
      %v3491 = vld [vmem:[#allocation2 + $0xca] sm:$0xff]
      %v3492 = vld [vmem:[#allocation2 + $0xd2] sm:$0xff]
      %v3493 = vld [vmem:[#allocation2 + $0xda] sm:$0xff]
      %v3494 = vld [vmem:[#allocation2 + $0xe2] sm:$0xff]
      %v3495 = vld [vmem:[#allocation2 + $0xea] sm:$0xff]
      %v3496 = vld [vmem:[#allocation2 + $0xf2] sm:$0xff]
      %v3497 = vld [vmem:[#allocation2 + $0xfa] sm:$0xff]
      %v3498 = vld [vmem:[#allocation2 + $0x102] sm:$0xff]
      %v3499 = vld [vmem:[#allocation2 + $0x10a] sm:$0xff]
      %v3500 = vld [vmem:[#allocation2 + $0x112] sm:$0xff]
      %v3501 = vld [vmem:[#allocation2 + $0x11a] sm:$0xff]
      %v3502 = vld [vmem:[#allocation2 + $0x122] sm:$0xff]
      %v3503 = vld [vmem:[#allocation2 + $0x12a] sm:$0xff]
      %3540 = vrot.lane.b32.xlu0 %v3468, 48
      %v3541 = vpop.permute.xlu0 %3540
      %3542 = vrot.lane.b32.xlu0 %v3469, 48
      %v3543 = vpop.permute.xlu0 %3542
      %3544 = vrot.lane.b32.xlu0 %v3470, 48
      %v3545 = vpop.permute.xlu0 %3544
      %3546 = vrot.lane.b32.xlu0 %v3471, 48
      %v3547 = vpop.permute.xlu0 %3546
      %3548 = vrot.lane.b32.xlu0 %v3472, 48
      %v3549 = vpop.permute.xlu0 %3548
      %3550 = vrot.lane.b32.xlu0 %v3473, 48
      %v3551 = vpop.permute.xlu0 %3550
      %3552 = vrot.lane.b32.xlu0 %v3474, 48
      %v3553 = vpop.permute.xlu0 %3552
      %3554 = vrot.lane.b32.xlu0 %v3475, 48
      %v3555 = vpop.permute.xlu0 %3554
      %3556 = vrot.lane.b32.xlu0 %v3476, 48
      %v3557 = vpop.permute.xlu0 %3556
      %3558 = vrot.lane.b32.xlu0 %v3477, 48
      %v3559 = vpop.permute.xlu0 %3558
      %3560 = vrot.lane.b32.xlu0 %v3478, 48
      %v3561 = vpop.permute.xlu0 %3560
      %3562 = vrot.lane.b32.xlu0 %v3479, 48
      %v3563 = vpop.permute.xlu0 %3562
      %3564 = vrot.lane.b32.xlu0 %v3480, 48
      %v3565 = vpop.permute.xlu0 %3564
      %3566 = vrot.lane.b32.xlu0 %v3481, 48
      %v3567 = vpop.permute.xlu0 %3566
      %3568 = vrot.lane.b32.xlu0 %v3482, 48
      %v3569 = vpop.permute.xlu0 %3568
      %3570 = vrot.lane.b32.xlu0 %v3483, 48
      %v3571 = vpop.permute.xlu0 %3570
      %3572 = vrot.lane.b32.xlu0 %v3484, 48
      %v3573 = vpop.permute.xlu0 %3572
      %3574 = vrot.lane.b32.xlu0 %v3485, 48
      %v3575 = vpop.permute.xlu0 %3574
      %3576 = vrot.lane.b32.xlu0 %v3486, 48
      %v3577 = vpop.permute.xlu0 %3576
      %3578 = vrot.lane.b32.xlu0 %v3487, 48
      %v3579 = vpop.permute.xlu0 %3578
      %3580 = vrot.lane.b32.xlu0 %v3488, 48
      %v3581 = vpop.permute.xlu0 %3580
      %3582 = vrot.lane.b32.xlu0 %v3489, 48
      %v3583 = vpop.permute.xlu0 %3582
      %3584 = vrot.lane.b32.xlu0 %v3490, 48
      %v3585 = vpop.permute.xlu0 %3584
      %3586 = vrot.lane.b32.xlu0 %v3491, 48
      %v3587 = vpop.permute.xlu0 %3586
      %3588 = vrot.lane.b32.xlu0 %v3492, 48
      %v3589 = vpop.permute.xlu0 %3588
      %3590 = vrot.lane.b32.xlu0 %v3493, 48
      %v3591 = vpop.permute.xlu0 %3590
      %3592 = vrot.lane.b32.xlu0 %v3494, 48
      %v3593 = vpop.permute.xlu0 %3592
      %3594 = vrot.lane.b32.xlu0 %v3495, 48
      %v3595 = vpop.permute.xlu0 %3594
      %3596 = vrot.lane.b32.xlu0 %v3496, 48
      %v3597 = vpop.permute.xlu0 %3596
      %3598 = vrot.lane.b32.xlu0 %v3497, 48
      %v3599 = vpop.permute.xlu0 %3598
      %3600 = vrot.lane.b32.xlu0 %v3498, 48
      %v3601 = vpop.permute.xlu0 %3600
      %3602 = vrot.lane.b32.xlu0 %v3499, 48
      %v3603 = vpop.permute.xlu0 %3602
      %3604 = vrot.lane.b32.xlu0 %v3500, 48
      %v3605 = vpop.permute.xlu0 %3604
      %3606 = vrot.lane.b32.xlu0 %v3501, 48
      %v3607 = vpop.permute.xlu0 %3606
      %3608 = vrot.lane.b32.xlu0 %v3502, 48
      %v3609 = vpop.permute.xlu0 %3608
      %3610 = vrot.lane.b32.xlu0 %v3503, 48
      %v3611 = vpop.permute.xlu0 %3610
      %3648 = vst.msk [vmem:[#allocation3] sm:$0xff] %vm1112, %v3541
      %3649 = vst.msk [vmem:[#allocation3 + $0x10] sm:$0xff] %vm1112, %v3543
      %3650 = vst.msk [vmem:[#allocation3 + $0x20] sm:$0xff] %vm1112, %v3545
      %3651 = vst.msk [vmem:[#allocation3 + $0x30] sm:$0xff] %vm1112, %v3547
      %3652 = vst.msk [vmem:[#allocation3 + $0x40] sm:$0xff] %vm1112, %v3549
      %3653 = vst.msk [vmem:[#allocation3 + $0x50] sm:$0xff] %vm1112, %v3551
      %3654 = vst.msk [vmem:[#allocation3 + $0x60] sm:$0xff] %vm1112, %v3553
      %3655 = vst.msk [vmem:[#allocation3 + $0x70] sm:$0xff] %vm1112, %v3555
      %3656 = vst.msk [vmem:[#allocation3 + $0x80] sm:$0xff] %vm1112, %v3557
      %3657 = vst.msk [vmem:[#allocation3 + $0x90] sm:$0xff] %vm1112, %v3559
      %3658 = vst.msk [vmem:[#allocation3 + $0xa0] sm:$0xff] %vm1112, %v3561
      %3659 = vst.msk [vmem:[#allocation3 + $0xb0] sm:$0xff] %vm1112, %v3563
      %3660 = vst.msk [vmem:[#allocation3 + $0xc0] sm:$0xff] %vm1112, %v3565
      %3661 = vst.msk [vmem:[#allocation3 + $0xd0] sm:$0xff] %vm1112, %v3567
      %3662 = vst.msk [vmem:[#allocation3 + $0xe0] sm:$0xff] %vm1112, %v3569
      %3663 = vst.msk [vmem:[#allocation3 + $0xf0] sm:$0xff] %vm1112, %v3571
      %3664 = vst.msk [vmem:[#allocation3 + $0x100] sm:$0xff] %vm1112, %v3573
      %3665 = vst.msk [vmem:[#allocation3 + $0x110] sm:$0xff] %vm1112, %v3575
      %3666 = vst.msk [vmem:[#allocation3 + $0x120] sm:$0xff] %vm1112, %v3577
      %3667 = vst.msk [vmem:[#allocation3 + $0x130] sm:$0xff] %vm1112, %v3579
      %3668 = vst.msk [vmem:[#allocation3 + $0x140] sm:$0xff] %vm1112, %v3581
      %3669 = vst.msk [vmem:[#allocation3 + $0x150] sm:$0xff] %vm1112, %v3583
      %3670 = vst.msk [vmem:[#allocation3 + $0x160] sm:$0xff] %vm1112, %v3585
      %3671 = vst.msk [vmem:[#allocation3 + $0x170] sm:$0xff] %vm1112, %v3587
      %3672 = vst.msk [vmem:[#allocation3 + $0x180] sm:$0xff] %vm1112, %v3589
      %3673 = vst.msk [vmem:[#allocation3 + $0x190] sm:$0xff] %vm1112, %v3591
      %3674 = vst.msk [vmem:[#allocation3 + $0x1a0] sm:$0xff] %vm1112, %v3593
      %3675 = vst.msk [vmem:[#allocation3 + $0x1b0] sm:$0xff] %vm1112, %v3595
      %3676 = vst.msk [vmem:[#allocation3 + $0x1c0] sm:$0xff] %vm1112, %v3597
      %3677 = vst.msk [vmem:[#allocation3 + $0x1d0] sm:$0xff] %vm1112, %v3599
      %3678 = vst.msk [vmem:[#allocation3 + $0x1e0] sm:$0xff] %vm1112, %v3601
      %3679 = vst.msk [vmem:[#allocation3 + $0x1f0] sm:$0xff] %vm1112, %v3603
      %3680 = vst.msk [vmem:[#allocation3 + $0x200] sm:$0xff] %vm1112, %v3605
      %3681 = vst.msk [vmem:[#allocation3 + $0x210] sm:$0xff] %vm1112, %v3607
      %3682 = vst.msk [vmem:[#allocation3 + $0x220] sm:$0xff] %vm1112, %v3609
      %3683 = vst.msk [vmem:[#allocation3 + $0x230] sm:$0xff] %vm1112, %v3611
      %v3684 = vld [vmem:[#allocation2 + $0x13] sm:$0xff]
      %v3685 = vld [vmem:[#allocation2 + $0x1b] sm:$0xff]
      %v3686 = vld [vmem:[#allocation2 + $0x23] sm:$0xff]
      %v3687 = vld [vmem:[#allocation2 + $0x2b] sm:$0xff]
      %v3688 = vld [vmem:[#allocation2 + $0x33] sm:$0xff]
      %v3689 = vld [vmem:[#allocation2 + $0x3b] sm:$0xff]
      %v3690 = vld [vmem:[#allocation2 + $0x43] sm:$0xff]
      %v3691 = vld [vmem:[#allocation2 + $0x4b] sm:$0xff]
      %v3692 = vld [vmem:[#allocation2 + $0x53] sm:$0xff]
      %v3693 = vld [vmem:[#allocation2 + $0x5b] sm:$0xff]
      %v3694 = vld [vmem:[#allocation2 + $0x63] sm:$0xff]
      %v3695 = vld [vmem:[#allocation2 + $0x6b] sm:$0xff]
      %v3696 = vld [vmem:[#allocation2 + $0x73] sm:$0xff]
      %v3697 = vld [vmem:[#allocation2 + $0x7b] sm:$0xff]
      %v3698 = vld [vmem:[#allocation2 + $0x83] sm:$0xff]
      %v3699 = vld [vmem:[#allocation2 + $0x8b] sm:$0xff]
      %v3700 = vld [vmem:[#allocation2 + $0x93] sm:$0xff]
      %v3701 = vld [vmem:[#allocation2 + $0x9b] sm:$0xff]
      %v3702 = vld [vmem:[#allocation2 + $0xa3] sm:$0xff]
      %v3703 = vld [vmem:[#allocation2 + $0xab] sm:$0xff]
      %v3704 = vld [vmem:[#allocation2 + $0xb3] sm:$0xff]
      %v3705 = vld [vmem:[#allocation2 + $0xbb] sm:$0xff]
      %v3706 = vld [vmem:[#allocation2 + $0xc3] sm:$0xff]
      %v3707 = vld [vmem:[#allocation2 + $0xcb] sm:$0xff]
      %v3708 = vld [vmem:[#allocation2 + $0xd3] sm:$0xff]
      %v3709 = vld [vmem:[#allocation2 + $0xdb] sm:$0xff]
      %v3710 = vld [vmem:[#allocation2 + $0xe3] sm:$0xff]
      %v3711 = vld [vmem:[#allocation2 + $0xeb] sm:$0xff]
      %v3712 = vld [vmem:[#allocation2 + $0xf3] sm:$0xff]
      %v3713 = vld [vmem:[#allocation2 + $0xfb] sm:$0xff]
      %v3714 = vld [vmem:[#allocation2 + $0x103] sm:$0xff]
      %v3715 = vld [vmem:[#allocation2 + $0x10b] sm:$0xff]
      %v3716 = vld [vmem:[#allocation2 + $0x113] sm:$0xff]
      %v3717 = vld [vmem:[#allocation2 + $0x11b] sm:$0xff]
      %v3718 = vld [vmem:[#allocation2 + $0x123] sm:$0xff]
      %v3719 = vld [vmem:[#allocation2 + $0x12b] sm:$0xff]
      %3756 = vrot.lane.b32.xlu0 %v3684, 64
      %v3757 = vpop.permute.xlu0 %3756
      %3758 = vrot.lane.b32.xlu0 %v3685, 64
      %v3759 = vpop.permute.xlu0 %3758
      %3760 = vrot.lane.b32.xlu0 %v3686, 64
      %v3761 = vpop.permute.xlu0 %3760
      %3762 = vrot.lane.b32.xlu0 %v3687, 64
      %v3763 = vpop.permute.xlu0 %3762
      %3764 = vrot.lane.b32.xlu0 %v3688, 64
      %v3765 = vpop.permute.xlu0 %3764
      %3766 = vrot.lane.b32.xlu0 %v3689, 64
      %v3767 = vpop.permute.xlu0 %3766
      %3768 = vrot.lane.b32.xlu0 %v3690, 64
      %v3769 = vpop.permute.xlu0 %3768
      %3770 = vrot.lane.b32.xlu0 %v3691, 64
      %v3771 = vpop.permute.xlu0 %3770
      %3772 = vrot.lane.b32.xlu0 %v3692, 64
      %v3773 = vpop.permute.xlu0 %3772
      %3774 = vrot.lane.b32.xlu0 %v3693, 64
      %v3775 = vpop.permute.xlu0 %3774
      %3776 = vrot.lane.b32.xlu0 %v3694, 64
      %v3777 = vpop.permute.xlu0 %3776
      %3778 = vrot.lane.b32.xlu0 %v3695, 64
      %v3779 = vpop.permute.xlu0 %3778
      %3780 = vrot.lane.b32.xlu0 %v3696, 64
      %v3781 = vpop.permute.xlu0 %3780
      %3782 = vrot.lane.b32.xlu0 %v3697, 64
      %v3783 = vpop.permute.xlu0 %3782
      %3784 = vrot.lane.b32.xlu0 %v3698, 64
      %v3785 = vpop.permute.xlu0 %3784
      %3786 = vrot.lane.b32.xlu0 %v3699, 64
      %v3787 = vpop.permute.xlu0 %3786
      %3788 = vrot.lane.b32.xlu0 %v3700, 64
      %v3789 = vpop.permute.xlu0 %3788
      %3790 = vrot.lane.b32.xlu0 %v3701, 64
      %v3791 = vpop.permute.xlu0 %3790
      %3792 = vrot.lane.b32.xlu0 %v3702, 64
      %v3793 = vpop.permute.xlu0 %3792
      %3794 = vrot.lane.b32.xlu0 %v3703, 64
      %v3795 = vpop.permute.xlu0 %3794
      %3796 = vrot.lane.b32.xlu0 %v3704, 64
      %v3797 = vpop.permute.xlu0 %3796
      %3798 = vrot.lane.b32.xlu0 %v3705, 64
      %v3799 = vpop.permute.xlu0 %3798
      %3800 = vrot.lane.b32.xlu0 %v3706, 64
      %v3801 = vpop.permute.xlu0 %3800
      %3802 = vrot.lane.b32.xlu0 %v3707, 64
      %v3803 = vpop.permute.xlu0 %3802
      %3804 = vrot.lane.b32.xlu0 %v3708, 64
      %v3805 = vpop.permute.xlu0 %3804
      %3806 = vrot.lane.b32.xlu0 %v3709, 64
      %v3807 = vpop.permute.xlu0 %3806
      %3808 = vrot.lane.b32.xlu0 %v3710, 64
      %v3809 = vpop.permute.xlu0 %3808
      %3810 = vrot.lane.b32.xlu0 %v3711, 64
      %v3811 = vpop.permute.xlu0 %3810
      %3812 = vrot.lane.b32.xlu0 %v3712, 64
      %v3813 = vpop.permute.xlu0 %3812
      %3814 = vrot.lane.b32.xlu0 %v3713, 64
      %v3815 = vpop.permute.xlu0 %3814
      %3816 = vrot.lane.b32.xlu0 %v3714, 64
      %v3817 = vpop.permute.xlu0 %3816
      %3818 = vrot.lane.b32.xlu0 %v3715, 64
      %v3819 = vpop.permute.xlu0 %3818
      %3820 = vrot.lane.b32.xlu0 %v3716, 64
      %v3821 = vpop.permute.xlu0 %3820
      %3822 = vrot.lane.b32.xlu0 %v3717, 64
      %v3823 = vpop.permute.xlu0 %3822
      %3824 = vrot.lane.b32.xlu0 %v3718, 64
      %v3825 = vpop.permute.xlu0 %3824
      %3826 = vrot.lane.b32.xlu0 %v3719, 64
      %v3827 = vpop.permute.xlu0 %3826
      %3864 = vst.msk [vmem:[#allocation3] sm:$0xff] %vm1329, %v3757
      %3865 = vst.msk [vmem:[#allocation3 + $0x10] sm:$0xff] %vm1329, %v3759
      %3866 = vst.msk [vmem:[#allocation3 + $0x20] sm:$0xff] %vm1329, %v3761
      %3867 = vst.msk [vmem:[#allocation3 + $0x30] sm:$0xff] %vm1329, %v3763
      %3868 = vst.msk [vmem:[#allocation3 + $0x40] sm:$0xff] %vm1329, %v3765
      %3869 = vst.msk [vmem:[#allocation3 + $0x50] sm:$0xff] %vm1329, %v3767
      %3870 = vst.msk [vmem:[#allocation3 + $0x60] sm:$0xff] %vm1329, %v3769
      %3871 = vst.msk [vmem:[#allocation3 + $0x70] sm:$0xff] %vm1329, %v3771
      %3872 = vst.msk [vmem:[#allocation3 + $0x80] sm:$0xff] %vm1329, %v3773
      %3873 = vst.msk [vmem:[#allocation3 + $0x90] sm:$0xff] %vm1329, %v3775
      %3874 = vst.msk [vmem:[#allocation3 + $0xa0] sm:$0xff] %vm1329, %v3777
      %3875 = vst.msk [vmem:[#allocation3 + $0xb0] sm:$0xff] %vm1329, %v3779
      %3876 = vst.msk [vmem:[#allocation3 + $0xc0] sm:$0xff] %vm1329, %v3781
      %3877 = vst.msk [vmem:[#allocation3 + $0xd0] sm:$0xff] %vm1329, %v3783
      %3878 = vst.msk [vmem:[#allocation3 + $0xe0] sm:$0xff] %vm1329, %v3785
      %3879 = vst.msk [vmem:[#allocation3 + $0xf0] sm:$0xff] %vm1329, %v3787
      %3880 = vst.msk [vmem:[#allocation3 + $0x100] sm:$0xff] %vm1329, %v3789
      %3881 = vst.msk [vmem:[#allocation3 + $0x110] sm:$0xff] %vm1329, %v3791
      %3882 = vst.msk [vmem:[#allocation3 + $0x120] sm:$0xff] %vm1329, %v3793
      %3883 = vst.msk [vmem:[#allocation3 + $0x130] sm:$0xff] %vm1329, %v3795
      %3884 = vst.msk [vmem:[#allocation3 + $0x140] sm:$0xff] %vm1329, %v3797
      %3885 = vst.msk [vmem:[#allocation3 + $0x150] sm:$0xff] %vm1329, %v3799
      %3886 = vst.msk [vmem:[#allocation3 + $0x160] sm:$0xff] %vm1329, %v3801
      %3887 = vst.msk [vmem:[#allocation3 + $0x170] sm:$0xff] %vm1329, %v3803
      %3888 = vst.msk [vmem:[#allocation3 + $0x180] sm:$0xff] %vm1329, %v3805
      %3889 = vst.msk [vmem:[#allocation3 + $0x190] sm:$0xff] %vm1329, %v3807
      %3890 = vst.msk [vmem:[#allocation3 + $0x1a0] sm:$0xff] %vm1329, %v3809
      %3891 = vst.msk [vmem:[#allocation3 + $0x1b0] sm:$0xff] %vm1329, %v3811
      %3892 = vst.msk [vmem:[#allocation3 + $0x1c0] sm:$0xff] %vm1329, %v3813
      %3893 = vst.msk [vmem:[#allocation3 + $0x1d0] sm:$0xff] %vm1329, %v3815
      %3894 = vst.msk [vmem:[#allocation3 + $0x1e0] sm:$0xff] %vm1329, %v3817
      %3895 = vst.msk [vmem:[#allocation3 + $0x1f0] sm:$0xff] %vm1329, %v3819
      %3896 = vst.msk [vmem:[#allocation3 + $0x200] sm:$0xff] %vm1329, %v3821
      %3897 = vst.msk [vmem:[#allocation3 + $0x210] sm:$0xff] %vm1329, %v3823
      %3898 = vst.msk [vmem:[#allocation3 + $0x220] sm:$0xff] %vm1329, %v3825
      %3899 = vst.msk [vmem:[#allocation3 + $0x230] sm:$0xff] %vm1329, %v3827
      %v3900 = vld [vmem:[#allocation2 + $0x14] sm:$0xff]
      %v3901 = vld [vmem:[#allocation2 + $0x1c] sm:$0xff]
      %v3902 = vld [vmem:[#allocation2 + $0x24] sm:$0xff]
      %v3903 = vld [vmem:[#allocation2 + $0x2c] sm:$0xff]
      %v3904 = vld [vmem:[#allocation2 + $0x34] sm:$0xff]
      %v3905 = vld [vmem:[#allocation2 + $0x3c] sm:$0xff]
      %v3906 = vld [vmem:[#allocation2 + $0x44] sm:$0xff]
      %v3907 = vld [vmem:[#allocation2 + $0x4c] sm:$0xff]
      %v3908 = vld [vmem:[#allocation2 + $0x54] sm:$0xff]
      %v3909 = vld [vmem:[#allocation2 + $0x5c] sm:$0xff]
      %v3910 = vld [vmem:[#allocation2 + $0x64] sm:$0xff]
      %v3911 = vld [vmem:[#allocation2 + $0x6c] sm:$0xff]
      %v3912 = vld [vmem:[#allocation2 + $0x74] sm:$0xff]
      %v3913 = vld [vmem:[#allocation2 + $0x7c] sm:$0xff]
      %v3914 = vld [vmem:[#allocation2 + $0x84] sm:$0xff]
      %v3915 = vld [vmem:[#allocation2 + $0x8c] sm:$0xff]
      %v3916 = vld [vmem:[#allocation2 + $0x94] sm:$0xff]
      %v3917 = vld [vmem:[#allocation2 + $0x9c] sm:$0xff]
      %v3918 = vld [vmem:[#allocation2 + $0xa4] sm:$0xff]
      %v3919 = vld [vmem:[#allocation2 + $0xac] sm:$0xff]
      %v3920 = vld [vmem:[#allocation2 + $0xb4] sm:$0xff]
      %v3921 = vld [vmem:[#allocation2 + $0xbc] sm:$0xff]
      %v3922 = vld [vmem:[#allocation2 + $0xc4] sm:$0xff]
      %v3923 = vld [vmem:[#allocation2 + $0xcc] sm:$0xff]
      %v3924 = vld [vmem:[#allocation2 + $0xd4] sm:$0xff]
      %v3925 = vld [vmem:[#allocation2 + $0xdc] sm:$0xff]
      %v3926 = vld [vmem:[#allocation2 + $0xe4] sm:$0xff]
      %v3927 = vld [vmem:[#allocation2 + $0xec] sm:$0xff]
      %v3928 = vld [vmem:[#allocation2 + $0xf4] sm:$0xff]
      %v3929 = vld [vmem:[#allocation2 + $0xfc] sm:$0xff]
      %v3930 = vld [vmem:[#allocation2 + $0x104] sm:$0xff]
      %v3931 = vld [vmem:[#allocation2 + $0x10c] sm:$0xff]
      %v3932 = vld [vmem:[#allocation2 + $0x114] sm:$0xff]
      %v3933 = vld [vmem:[#allocation2 + $0x11c] sm:$0xff]
      %v3934 = vld [vmem:[#allocation2 + $0x124] sm:$0xff]
      %v3935 = vld [vmem:[#allocation2 + $0x12c] sm:$0xff]
      %3972 = vrot.lane.b32.xlu0 %v3900, 80
      %v3973 = vpop.permute.xlu0 %3972
      %3974 = vrot.lane.b32.xlu0 %v3901, 80
      %v3975 = vpop.permute.xlu0 %3974
      %3976 = vrot.lane.b32.xlu0 %v3902, 80
      %v3977 = vpop.permute.xlu0 %3976
      %3978 = vrot.lane.b32.xlu0 %v3903, 80
      %v3979 = vpop.permute.xlu0 %3978
      %3980 = vrot.lane.b32.xlu0 %v3904, 80
      %v3981 = vpop.permute.xlu0 %3980
      %3982 = vrot.lane.b32.xlu0 %v3905, 80
      %v3983 = vpop.permute.xlu0 %3982
      %3984 = vrot.lane.b32.xlu0 %v3906, 80
      %v3985 = vpop.permute.xlu0 %3984
      %3986 = vrot.lane.b32.xlu0 %v3907, 80
      %v3987 = vpop.permute.xlu0 %3986
      %3988 = vrot.lane.b32.xlu0 %v3908, 80
      %v3989 = vpop.permute.xlu0 %3988
      %3990 = vrot.lane.b32.xlu0 %v3909, 80
      %v3991 = vpop.permute.xlu0 %3990
      %3992 = vrot.lane.b32.xlu0 %v3910, 80
      %v3993 = vpop.permute.xlu0 %3992
      %3994 = vrot.lane.b32.xlu0 %v3911, 80
      %v3995 = vpop.permute.xlu0 %3994
      %3996 = vrot.lane.b32.xlu0 %v3912, 80
      %v3997 = vpop.permute.xlu0 %3996
      %3998 = vrot.lane.b32.xlu0 %v3913, 80
      %v3999 = vpop.permute.xlu0 %3998
      %4000 = vrot.lane.b32.xlu0 %v3914, 80
      %v4001 = vpop.permute.xlu0 %4000
      %4002 = vrot.lane.b32.xlu0 %v3915, 80
      %v4003 = vpop.permute.xlu0 %4002
      %4004 = vrot.lane.b32.xlu0 %v3916, 80
      %v4005 = vpop.permute.xlu0 %4004
      %4006 = vrot.lane.b32.xlu0 %v3917, 80
      %v4007 = vpop.permute.xlu0 %4006
      %4008 = vrot.lane.b32.xlu0 %v3918, 80
      %v4009 = vpop.permute.xlu0 %4008
      %4010 = vrot.lane.b32.xlu0 %v3919, 80
      %v4011 = vpop.permute.xlu0 %4010
      %4012 = vrot.lane.b32.xlu0 %v3920, 80
      %v4013 = vpop.permute.xlu0 %4012
      %4014 = vrot.lane.b32.xlu0 %v3921, 80
      %v4015 = vpop.permute.xlu0 %4014
      %4016 = vrot.lane.b32.xlu0 %v3922, 80
      %v4017 = vpop.permute.xlu0 %4016
      %4018 = vrot.lane.b32.xlu0 %v3923, 80
      %v4019 = vpop.permute.xlu0 %4018
      %4020 = vrot.lane.b32.xlu0 %v3924, 80
      %v4021 = vpop.permute.xlu0 %4020
      %4022 = vrot.lane.b32.xlu0 %v3925, 80
      %v4023 = vpop.permute.xlu0 %4022
      %4024 = vrot.lane.b32.xlu0 %v3926, 80
      %v4025 = vpop.permute.xlu0 %4024
      %4026 = vrot.lane.b32.xlu0 %v3927, 80
      %v4027 = vpop.permute.xlu0 %4026
      %4028 = vrot.lane.b32.xlu0 %v3928, 80
      %v4029 = vpop.permute.xlu0 %4028
      %4030 = vrot.lane.b32.xlu0 %v3929, 80
      %v4031 = vpop.permute.xlu0 %4030
      %4032 = vrot.lane.b32.xlu0 %v3930, 80
      %v4033 = vpop.permute.xlu0 %4032
      %4034 = vrot.lane.b32.xlu0 %v3931, 80
      %v4035 = vpop.permute.xlu0 %4034
      %4036 = vrot.lane.b32.xlu0 %v3932, 80
      %v4037 = vpop.permute.xlu0 %4036
      %4038 = vrot.lane.b32.xlu0 %v3933, 80
      %v4039 = vpop.permute.xlu0 %4038
      %4040 = vrot.lane.b32.xlu0 %v3934, 80
      %v4041 = vpop.permute.xlu0 %4040
      %4042 = vrot.lane.b32.xlu0 %v3935, 80
      %v4043 = vpop.permute.xlu0 %4042
      %4080 = vst.msk [vmem:[#allocation3] sm:$0xff] %vm1546, %v3973
      %4081 = vst.msk [vmem:[#allocation3 + $0x10] sm:$0xff] %vm1546, %v3975
      %4082 = vst.msk [vmem:[#allocation3 + $0x20] sm:$0xff] %vm1546, %v3977
      %4083 = vst.msk [vmem:[#allocation3 + $0x30] sm:$0xff] %vm1546, %v3979
      %4084 = vst.msk [vmem:[#allocation3 + $0x40] sm:$0xff] %vm1546, %v3981
      %4085 = vst.msk [vmem:[#allocation3 + $0x50] sm:$0xff] %vm1546, %v3983
      %4086 = vst.msk [vmem:[#allocation3 + $0x60] sm:$0xff] %vm1546, %v3985
      %4087 = vst.msk [vmem:[#allocation3 + $0x70] sm:$0xff] %vm1546, %v3987
      %4088 = vst.msk [vmem:[#allocation3 + $0x80] sm:$0xff] %vm1546, %v3989
      %4089 = vst.msk [vmem:[#allocation3 + $0x90] sm:$0xff] %vm1546, %v3991
      %4090 = vst.msk [vmem:[#allocation3 + $0xa0] sm:$0xff] %vm1546, %v3993
      %4091 = vst.msk [vmem:[#allocation3 + $0xb0] sm:$0xff] %vm1546, %v3995
      %4092 = vst.msk [vmem:[#allocation3 + $0xc0] sm:$0xff] %vm1546, %v3997
      %4093 = vst.msk [vmem:[#allocation3 + $0xd0] sm:$0xff] %vm1546, %v3999
      %4094 = vst.msk [vmem:[#allocation3 + $0xe0] sm:$0xff] %vm1546, %v4001
      %4095 = vst.msk [vmem:[#allocation3 + $0xf0] sm:$0xff] %vm1546, %v4003
      %4096 = vst.msk [vmem:[#allocation3 + $0x100] sm:$0xff] %vm1546, %v4005
      %4097 = vst.msk [vmem:[#allocation3 + $0x110] sm:$0xff] %vm1546, %v4007
      %4098 = vst.msk [vmem:[#allocation3 + $0x120] sm:$0xff] %vm1546, %v4009
      %4099 = vst.msk [vmem:[#allocation3 + $0x130] sm:$0xff] %vm1546, %v4011
      %4100 = vst.msk [vmem:[#allocation3 + $0x140] sm:$0xff] %vm1546, %v4013
      %4101 = vst.msk [vmem:[#allocation3 + $0x150] sm:$0xff] %vm1546, %v4015
      %4102 = vst.msk [vmem:[#allocation3 + $0x160] sm:$0xff] %vm1546, %v4017
      %4103 = vst.msk [vmem:[#allocation3 + $0x170] sm:$0xff] %vm1546, %v4019
      %4104 = vst.msk [vmem:[#allocation3 + $0x180] sm:$0xff] %vm1546, %v4021
      %4105 = vst.msk [vmem:[#allocation3 + $0x190] sm:$0xff] %vm1546, %v4023
      %4106 = vst.msk [vmem:[#allocation3 + $0x1a0] sm:$0xff] %vm1546, %v4025
      %4107 = vst.msk [vmem:[#allocation3 + $0x1b0] sm:$0xff] %vm1546, %v4027
      %4108 = vst.msk [vmem:[#allocation3 + $0x1c0] sm:$0xff] %vm1546, %v4029
      %4109 = vst.msk [vmem:[#allocation3 + $0x1d0] sm:$0xff] %vm1546, %v4031
      %4110 = vst.msk [vmem:[#allocation3 + $0x1e0] sm:$0xff] %vm1546, %v4033
      %4111 = vst.msk [vmem:[#allocation3 + $0x1f0] sm:$0xff] %vm1546, %v4035
      %4112 = vst.msk [vmem:[#allocation3 + $0x200] sm:$0xff] %vm1546, %v4037
      %4113 = vst.msk [vmem:[#allocation3 + $0x210] sm:$0xff] %vm1546, %v4039
      %4114 = vst.msk [vmem:[#allocation3 + $0x220] sm:$0xff] %vm1546, %v4041
      %4115 = vst.msk [vmem:[#allocation3 + $0x230] sm:$0xff] %vm1546, %v4043
      %v4116 = vld [vmem:[#allocation2 + $0x24] sm:$0xff]
      %v4117 = vld [vmem:[#allocation2 + $0x2c] sm:$0xff]
      %v4118 = vld [vmem:[#allocation2 + $0x34] sm:$0xff]
      %v4119 = vld [vmem:[#allocation2 + $0x3c] sm:$0xff]
      %v4120 = vld [vmem:[#allocation2 + $0x44] sm:$0xff]
      %v4121 = vld [vmem:[#allocation2 + $0x4c] sm:$0xff]
      %v4122 = vld [vmem:[#allocation2 + $0x54] sm:$0xff]
      %v4123 = vld [vmem:[#allocation2 + $0x5c] sm:$0xff]
      %v4124 = vld [vmem:[#allocation2 + $0x64] sm:$0xff]
      %v4125 = vld [vmem:[#allocation2 + $0x6c] sm:$0xff]
      %v4126 = vld [vmem:[#allocation2 + $0x74] sm:$0xff]
      %v4127 = vld [vmem:[#allocation2 + $0x7c] sm:$0xff]
      %v4128 = vld [vmem:[#allocation2 + $0x84] sm:$0xff]
      %v4129 = vld [vmem:[#allocation2 + $0x8c] sm:$0xff]
      %v4130 = vld [vmem:[#allocation2 + $0x94] sm:$0xff]
      %v4131 = vld [vmem:[#allocation2 + $0x9c] sm:$0xff]
      %v4132 = vld [vmem:[#allocation2 + $0xa4] sm:$0xff]
      %v4133 = vld [vmem:[#allocation2 + $0xac] sm:$0xff]
      %v4134 = vld [vmem:[#allocation2 + $0xb4] sm:$0xff]
      %v4135 = vld [vmem:[#allocation2 + $0xbc] sm:$0xff]
      %v4136 = vld [vmem:[#allocation2 + $0xc4] sm:$0xff]
      %v4137 = vld [vmem:[#allocation2 + $0xcc] sm:$0xff]
      %v4138 = vld [vmem:[#allocation2 + $0xd4] sm:$0xff]
      %v4139 = vld [vmem:[#allocation2 + $0xdc] sm:$0xff]
      %v4140 = vld [vmem:[#allocation2 + $0xe4] sm:$0xff]
      %v4141 = vld [vmem:[#allocation2 + $0xec] sm:$0xff]
      %v4142 = vld [vmem:[#allocation2 + $0xf4] sm:$0xff]
      %v4143 = vld [vmem:[#allocation2 + $0xfc] sm:$0xff]
      %v4144 = vld [vmem:[#allocation2 + $0x104] sm:$0xff]
      %v4145 = vld [vmem:[#allocation2 + $0x10c] sm:$0xff]
      %v4146 = vld [vmem:[#allocation2 + $0x114] sm:$0xff]
      %v4147 = vld [vmem:[#allocation2 + $0x11c] sm:$0xff]
      %v4148 = vld [vmem:[#allocation2 + $0x124] sm:$0xff]
      %v4149 = vld [vmem:[#allocation2 + $0x12c] sm:$0xff]
      %v4150 = vld [vmem:[#allocation2 + $0x134] sm:$0xff]
      %v4151 = vld [vmem:[#allocation2 + $0x13c] sm:$0xff]
      %4188 = vrot.lane.b32.xlu0 %v4116, 96
      %v4189 = vpop.permute.xlu0 %4188
      %4190 = vrot.lane.b32.xlu0 %v4117, 96
      %v4191 = vpop.permute.xlu0 %4190
      %4192 = vrot.lane.b32.xlu0 %v4118, 96
      %v4193 = vpop.permute.xlu0 %4192
      %4194 = vrot.lane.b32.xlu0 %v4119, 96
      %v4195 = vpop.permute.xlu0 %4194
      %4196 = vrot.lane.b32.xlu0 %v4120, 96
      %v4197 = vpop.permute.xlu0 %4196
      %4198 = vrot.lane.b32.xlu0 %v4121, 96
      %v4199 = vpop.permute.xlu0 %4198
      %4200 = vrot.lane.b32.xlu0 %v4122, 96
      %v4201 = vpop.permute.xlu0 %4200
      %4202 = vrot.lane.b32.xlu0 %v4123, 96
      %v4203 = vpop.permute.xlu0 %4202
      %4204 = vrot.lane.b32.xlu0 %v4124, 96
      %v4205 = vpop.permute.xlu0 %4204
      %4206 = vrot.lane.b32.xlu0 %v4125, 96
      %v4207 = vpop.permute.xlu0 %4206
      %4208 = vrot.lane.b32.xlu0 %v4126, 96
      %v4209 = vpop.permute.xlu0 %4208
      %4210 = vrot.lane.b32.xlu0 %v4127, 96
      %v4211 = vpop.permute.xlu0 %4210
      %4212 = vrot.lane.b32.xlu0 %v4128, 96
      %v4213 = vpop.permute.xlu0 %4212
      %4214 = vrot.lane.b32.xlu0 %v4129, 96
      %v4215 = vpop.permute.xlu0 %4214
      %4216 = vrot.lane.b32.xlu0 %v4130, 96
      %v4217 = vpop.permute.xlu0 %4216
      %4218 = vrot.lane.b32.xlu0 %v4131, 96
      %v4219 = vpop.permute.xlu0 %4218
      %4220 = vrot.lane.b32.xlu0 %v4132, 96
      %v4221 = vpop.permute.xlu0 %4220
      %4222 = vrot.lane.b32.xlu0 %v4133, 96
      %v4223 = vpop.permute.xlu0 %4222
      %4224 = vrot.lane.b32.xlu0 %v4134, 96
      %v4225 = vpop.permute.xlu0 %4224
      %4226 = vrot.lane.b32.xlu0 %v4135, 96
      %v4227 = vpop.permute.xlu0 %4226
      %4228 = vrot.lane.b32.xlu0 %v4136, 96
      %v4229 = vpop.permute.xlu0 %4228
      %4230 = vrot.lane.b32.xlu0 %v4137, 96
      %v4231 = vpop.permute.xlu0 %4230
      %4232 = vrot.lane.b32.xlu0 %v4138, 96
      %v4233 = vpop.permute.xlu0 %4232
      %4234 = vrot.lane.b32.xlu0 %v4139, 96
      %v4235 = vpop.permute.xlu0 %4234
      %4236 = vrot.lane.b32.xlu0 %v4140, 96
      %v4237 = vpop.permute.xlu0 %4236
      %4238 = vrot.lane.b32.xlu0 %v4141, 96
      %v4239 = vpop.permute.xlu0 %4238
      %4240 = vrot.lane.b32.xlu0 %v4142, 96
      %v4241 = vpop.permute.xlu0 %4240
      %4242 = vrot.lane.b32.xlu0 %v4143, 96
      %v4243 = vpop.permute.xlu0 %4242
      %4244 = vrot.lane.b32.xlu0 %v4144, 96
      %v4245 = vpop.permute.xlu0 %4244
      %4246 = vrot.lane.b32.xlu0 %v4145, 96
      %v4247 = vpop.permute.xlu0 %4246
      %4248 = vrot.lane.b32.xlu0 %v4146, 96
      %v4249 = vpop.permute.xlu0 %4248
      %4250 = vrot.lane.b32.xlu0 %v4147, 96
      %v4251 = vpop.permute.xlu0 %4250
      %4252 = vrot.lane.b32.xlu0 %v4148, 96
      %v4253 = vpop.permute.xlu0 %4252
      %4254 = vrot.lane.b32.xlu0 %v4149, 96
      %v4255 = vpop.permute.xlu0 %4254
      %4256 = vrot.lane.b32.xlu0 %v4150, 96
      %v4257 = vpop.permute.xlu0 %4256
      %4258 = vrot.lane.b32.xlu0 %v4151, 96
      %v4259 = vpop.permute.xlu0 %4258
      %4296 = vst.msk [vmem:[#allocation3] sm:$0xff] %vm1763, %v4189
      %4297 = vst.msk [vmem:[#allocation3 + $0x10] sm:$0xff] %vm1763, %v4191
      %4298 = vst.msk [vmem:[#allocation3 + $0x20] sm:$0xff] %vm1763, %v4193
      %4299 = vst.msk [vmem:[#allocation3 + $0x30] sm:$0xff] %vm1763, %v4195
      %4300 = vst.msk [vmem:[#allocation3 + $0x40] sm:$0xff] %vm1763, %v4197
      %4301 = vst.msk [vmem:[#allocation3 + $0x50] sm:$0xff] %vm1763, %v4199
      %4302 = vst.msk [vmem:[#allocation3 + $0x60] sm:$0xff] %vm1763, %v4201
      %4303 = vst.msk [vmem:[#allocation3 + $0x70] sm:$0xff] %vm1763, %v4203
      %4304 = vst.msk [vmem:[#allocation3 + $0x80] sm:$0xff] %vm1763, %v4205
      %4305 = vst.msk [vmem:[#allocation3 + $0x90] sm:$0xff] %vm1763, %v4207
      %4306 = vst.msk [vmem:[#allocation3 + $0xa0] sm:$0xff] %vm1763, %v4209
      %4307 = vst.msk [vmem:[#allocation3 + $0xb0] sm:$0xff] %vm1763, %v4211
      %4308 = vst.msk [vmem:[#allocation3 + $0xc0] sm:$0xff] %vm1763, %v4213
      %4309 = vst.msk [vmem:[#allocation3 + $0xd0] sm:$0xff] %vm1763, %v4215
      %4310 = vst.msk [vmem:[#allocation3 + $0xe0] sm:$0xff] %vm1763, %v4217
      %4311 = vst.msk [vmem:[#allocation3 + $0xf0] sm:$0xff] %vm1763, %v4219
      %4312 = vst.msk [vmem:[#allocation3 + $0x100] sm:$0xff] %vm1763, %v4221
      %4313 = vst.msk [vmem:[#allocation3 + $0x110] sm:$0xff] %vm1763, %v4223
      %4314 = vst.msk [vmem:[#allocation3 + $0x120] sm:$0xff] %vm1763, %v4225
      %4315 = vst.msk [vmem:[#allocation3 + $0x130] sm:$0xff] %vm1763, %v4227
      %4316 = vst.msk [vmem:[#allocation3 + $0x140] sm:$0xff] %vm1763, %v4229
      %4317 = vst.msk [vmem:[#allocation3 + $0x150] sm:$0xff] %vm1763, %v4231
      %4318 = vst.msk [vmem:[#allocation3 + $0x160] sm:$0xff] %vm1763, %v4233
      %4319 = vst.msk [vmem:[#allocation3 + $0x170] sm:$0xff] %vm1763, %v4235
      %4320 = vst.msk [vmem:[#allocation3 + $0x180] sm:$0xff] %vm1763, %v4237
      %4321 = vst.msk [vmem:[#allocation3 + $0x190] sm:$0xff] %vm1763, %v4239
      %4322 = vst.msk [vmem:[#allocation3 + $0x1a0] sm:$0xff] %vm1763, %v4241
      %4323 = vst.msk [vmem:[#allocation3 + $0x1b0] sm:$0xff] %vm1763, %v4243
      %4324 = vst.msk [vmem:[#allocation3 + $0x1c0] sm:$0xff] %vm1763, %v4245
      %4325 = vst.msk [vmem:[#allocation3 + $0x1d0] sm:$0xff] %vm1763, %v4247
      %4326 = vst.msk [vmem:[#allocation3 + $0x1e0] sm:$0xff] %vm1763, %v4249
      %4327 = vst.msk [vmem:[#allocation3 + $0x1f0] sm:$0xff] %vm1763, %v4251
      %4328 = vst.msk [vmem:[#allocation3 + $0x200] sm:$0xff] %vm1763, %v4253
      %4329 = vst.msk [vmem:[#allocation3 + $0x210] sm:$0xff] %vm1763, %v4255
      %4330 = vst.msk [vmem:[#allocation3 + $0x220] sm:$0xff] %vm1763, %v4257
      %4331 = vst.msk [vmem:[#allocation3 + $0x230] sm:$0xff] %vm1763, %v4259
      %v4332 = vld [vmem:[#allocation2 + $0x25] sm:$0xff]
      %v4333 = vld [vmem:[#allocation2 + $0x2d] sm:$0xff]
      %v4334 = vld [vmem:[#allocation2 + $0x35] sm:$0xff]
      %v4335 = vld [vmem:[#allocation2 + $0x3d] sm:$0xff]
      %v4336 = vld [vmem:[#allocation2 + $0x45] sm:$0xff]
      %v4337 = vld [vmem:[#allocation2 + $0x4d] sm:$0xff]
      %v4338 = vld [vmem:[#allocation2 + $0x55] sm:$0xff]
      %v4339 = vld [vmem:[#allocation2 + $0x5d] sm:$0xff]
      %v4340 = vld [vmem:[#allocation2 + $0x65] sm:$0xff]
      %v4341 = vld [vmem:[#allocation2 + $0x6d] sm:$0xff]
      %v4342 = vld [vmem:[#allocation2 + $0x75] sm:$0xff]
      %v4343 = vld [vmem:[#allocation2 + $0x7d] sm:$0xff]
      %v4344 = vld [vmem:[#allocation2 + $0x85] sm:$0xff]
      %v4345 = vld [vmem:[#allocation2 + $0x8d] sm:$0xff]
      %v4346 = vld [vmem:[#allocation2 + $0x95] sm:$0xff]
      %v4347 = vld [vmem:[#allocation2 + $0x9d] sm:$0xff]
      %v4348 = vld [vmem:[#allocation2 + $0xa5] sm:$0xff]
      %v4349 = vld [vmem:[#allocation2 + $0xad] sm:$0xff]
      %v4350 = vld [vmem:[#allocation2 + $0xb5] sm:$0xff]
      %v4351 = vld [vmem:[#allocation2 + $0xbd] sm:$0xff]
      %v4352 = vld [vmem:[#allocation2 + $0xc5] sm:$0xff]
      %v4353 = vld [vmem:[#allocation2 + $0xcd] sm:$0xff]
      %v4354 = vld [vmem:[#allocation2 + $0xd5] sm:$0xff]
      %v4355 = vld [vmem:[#allocation2 + $0xdd] sm:$0xff]
      %v4356 = vld [vmem:[#allocation2 + $0xe5] sm:$0xff]
      %v4357 = vld [vmem:[#allocation2 + $0xed] sm:$0xff]
      %v4358 = vld [vmem:[#allocation2 + $0xf5] sm:$0xff]
      %v4359 = vld [vmem:[#allocation2 + $0xfd] sm:$0xff]
      %v4360 = vld [vmem:[#allocation2 + $0x105] sm:$0xff]
      %v4361 = vld [vmem:[#allocation2 + $0x10d] sm:$0xff]
      %v4362 = vld [vmem:[#allocation2 + $0x115] sm:$0xff]
      %v4363 = vld [vmem:[#allocation2 + $0x11d] sm:$0xff]
      %v4364 = vld [vmem:[#allocation2 + $0x125] sm:$0xff]
      %v4365 = vld [vmem:[#allocation2 + $0x12d] sm:$0xff]
      %v4366 = vld [vmem:[#allocation2 + $0x135] sm:$0xff]
      %v4367 = vld [vmem:[#allocation2 + $0x13d] sm:$0xff]
      %4404 = vrot.lane.b32.xlu0 %v4332, 112
      %v4405 = vpop.permute.xlu0 %4404
      %4406 = vrot.lane.b32.xlu0 %v4333, 112
      %v4407 = vpop.permute.xlu0 %4406
      %4408 = vrot.lane.b32.xlu0 %v4334, 112
      %v4409 = vpop.permute.xlu0 %4408
      %4410 = vrot.lane.b32.xlu0 %v4335, 112
      %v4411 = vpop.permute.xlu0 %4410
      %4412 = vrot.lane.b32.xlu0 %v4336, 112
      %v4413 = vpop.permute.xlu0 %4412
      %4414 = vrot.lane.b32.xlu0 %v4337, 112
      %v4415 = vpop.permute.xlu0 %4414
      %4416 = vrot.lane.b32.xlu0 %v4338, 112
      %v4417 = vpop.permute.xlu0 %4416
      %4418 = vrot.lane.b32.xlu0 %v4339, 112
      %v4419 = vpop.permute.xlu0 %4418
      %4420 = vrot.lane.b32.xlu0 %v4340, 112
      %v4421 = vpop.permute.xlu0 %4420
      %4422 = vrot.lane.b32.xlu0 %v4341, 112
      %v4423 = vpop.permute.xlu0 %4422
      %4424 = vrot.lane.b32.xlu0 %v4342, 112
      %v4425 = vpop.permute.xlu0 %4424
      %4426 = vrot.lane.b32.xlu0 %v4343, 112
      %v4427 = vpop.permute.xlu0 %4426
      %4428 = vrot.lane.b32.xlu0 %v4344, 112
      %v4429 = vpop.permute.xlu0 %4428
      %4430 = vrot.lane.b32.xlu0 %v4345, 112
      %v4431 = vpop.permute.xlu0 %4430
      %4432 = vrot.lane.b32.xlu0 %v4346, 112
      %v4433 = vpop.permute.xlu0 %4432
      %4434 = vrot.lane.b32.xlu0 %v4347, 112
      %v4435 = vpop.permute.xlu0 %4434
      %4436 = vrot.lane.b32.xlu0 %v4348, 112
      %v4437 = vpop.permute.xlu0 %4436
      %4438 = vrot.lane.b32.xlu0 %v4349, 112
      %v4439 = vpop.permute.xlu0 %4438
      %4440 = vrot.lane.b32.xlu0 %v4350, 112
      %v4441 = vpop.permute.xlu0 %4440
      %4442 = vrot.lane.b32.xlu0 %v4351, 112
      %v4443 = vpop.permute.xlu0 %4442
      %4444 = vrot.lane.b32.xlu0 %v4352, 112
      %v4445 = vpop.permute.xlu0 %4444
      %4446 = vrot.lane.b32.xlu0 %v4353, 112
      %v4447 = vpop.permute.xlu0 %4446
      %4448 = vrot.lane.b32.xlu0 %v4354, 112
      %v4449 = vpop.permute.xlu0 %4448
      %4450 = vrot.lane.b32.xlu0 %v4355, 112
      %v4451 = vpop.permute.xlu0 %4450
      %4452 = vrot.lane.b32.xlu0 %v4356, 112
      %v4453 = vpop.permute.xlu0 %4452
      %4454 = vrot.lane.b32.xlu0 %v4357, 112
      %v4455 = vpop.permute.xlu0 %4454
      %4456 = vrot.lane.b32.xlu0 %v4358, 112
      %v4457 = vpop.permute.xlu0 %4456
      %4458 = vrot.lane.b32.xlu0 %v4359, 112
      %v4459 = vpop.permute.xlu0 %4458
      %4460 = vrot.lane.b32.xlu0 %v4360, 112
      %v4461 = vpop.permute.xlu0 %4460
      %4462 = vrot.lane.b32.xlu0 %v4361, 112
      %v4463 = vpop.permute.xlu0 %4462
      %4464 = vrot.lane.b32.xlu0 %v4362, 112
      %v4465 = vpop.permute.xlu0 %4464
      %4466 = vrot.lane.b32.xlu0 %v4363, 112
      %v4467 = vpop.permute.xlu0 %4466
      %4468 = vrot.lane.b32.xlu0 %v4364, 112
      %v4469 = vpop.permute.xlu0 %4468
      %4470 = vrot.lane.b32.xlu0 %v4365, 112
      %v4471 = vpop.permute.xlu0 %4470
      %4472 = vrot.lane.b32.xlu0 %v4366, 112
      %v4473 = vpop.permute.xlu0 %4472
      %4474 = vrot.lane.b32.xlu0 %v4367, 112
      %v4475 = vpop.permute.xlu0 %4474
      %4512 = vst.msk [vmem:[#allocation3] sm:$0xff] %vm1980, %v4405
      %4513 = vst.msk [vmem:[#allocation3 + $0x10] sm:$0xff] %vm1980, %v4407
      %4514 = vst.msk [vmem:[#allocation3 + $0x20] sm:$0xff] %vm1980, %v4409
      %4515 = vst.msk [vmem:[#allocation3 + $0x30] sm:$0xff] %vm1980, %v4411
      %4516 = vst.msk [vmem:[#allocation3 + $0x40] sm:$0xff] %vm1980, %v4413
      %4517 = vst.msk [vmem:[#allocation3 + $0x50] sm:$0xff] %vm1980, %v4415
      %4518 = vst.msk [vmem:[#allocation3 + $0x60] sm:$0xff] %vm1980, %v4417
      %4519 = vst.msk [vmem:[#allocation3 + $0x70] sm:$0xff] %vm1980, %v4419
      %4520 = vst.msk [vmem:[#allocation3 + $0x80] sm:$0xff] %vm1980, %v4421
      %4521 = vst.msk [vmem:[#allocation3 + $0x90] sm:$0xff] %vm1980, %v4423
      %4522 = vst.msk [vmem:[#allocation3 + $0xa0] sm:$0xff] %vm1980, %v4425
      %4523 = vst.msk [vmem:[#allocation3 + $0xb0] sm:$0xff] %vm1980, %v4427
      %4524 = vst.msk [vmem:[#allocation3 + $0xc0] sm:$0xff] %vm1980, %v4429
      %4525 = vst.msk [vmem:[#allocation3 + $0xd0] sm:$0xff] %vm1980, %v4431
      %4526 = vst.msk [vmem:[#allocation3 + $0xe0] sm:$0xff] %vm1980, %v4433
      %4527 = vst.msk [vmem:[#allocation3 + $0xf0] sm:$0xff] %vm1980, %v4435
      %4528 = vst.msk [vmem:[#allocation3 + $0x100] sm:$0xff] %vm1980, %v4437
      %4529 = vst.msk [vmem:[#allocation3 + $0x110] sm:$0xff] %vm1980, %v4439
      %4530 = vst.msk [vmem:[#allocation3 + $0x120] sm:$0xff] %vm1980, %v4441
      %4531 = vst.msk [vmem:[#allocation3 + $0x130] sm:$0xff] %vm1980, %v4443
      %4532 = vst.msk [vmem:[#allocation3 + $0x140] sm:$0xff] %vm1980, %v4445
      %4533 = vst.msk [vmem:[#allocation3 + $0x150] sm:$0xff] %vm1980, %v4447
      %4534 = vst.msk [vmem:[#allocation3 + $0x160] sm:$0xff] %vm1980, %v4449
      %4535 = vst.msk [vmem:[#allocation3 + $0x170] sm:$0xff] %vm1980, %v4451
      %4536 = vst.msk [vmem:[#allocation3 + $0x180] sm:$0xff] %vm1980, %v4453
      %4537 = vst.msk [vmem:[#allocation3 + $0x190] sm:$0xff] %vm1980, %v4455
      %4538 = vst.msk [vmem:[#allocation3 + $0x1a0] sm:$0xff] %vm1980, %v4457
      %4539 = vst.msk [vmem:[#allocation3 + $0x1b0] sm:$0xff] %vm1980, %v4459
      %4540 = vst.msk [vmem:[#allocation3 + $0x1c0] sm:$0xff] %vm1980, %v4461
      %4541 = vst.msk [vmem:[#allocation3 + $0x1d0] sm:$0xff] %vm1980, %v4463
      %4542 = vst.msk [vmem:[#allocation3 + $0x1e0] sm:$0xff] %vm1980, %v4465
      %4543 = vst.msk [vmem:[#allocation3 + $0x1f0] sm:$0xff] %vm1980, %v4467
      %4544 = vst.msk [vmem:[#allocation3 + $0x200] sm:$0xff] %vm1980, %v4469
      %4545 = vst.msk [vmem:[#allocation3 + $0x210] sm:$0xff] %vm1980, %v4471
      %4546 = vst.msk [vmem:[#allocation3 + $0x220] sm:$0xff] %vm1980, %v4473
      %4547 = vst.msk [vmem:[#allocation3 + $0x230] sm:$0xff] %vm1980, %v4475
      %v4548 = vld [vmem:[#allocation2 + $0x26] sm:$0xff]
      %v4549 = vld [vmem:[#allocation2 + $0x2e] sm:$0xff]
      %v4550 = vld [vmem:[#allocation2 + $0x36] sm:$0xff]
      %v4551 = vld [vmem:[#allocation2 + $0x3e] sm:$0xff]
      %v4552 = vld [vmem:[#allocation2 + $0x46] sm:$0xff]
      %v4553 = vld [vmem:[#allocation2 + $0x4e] sm:$0xff]
      %v4554 = vld [vmem:[#allocation2 + $0x56] sm:$0xff]
      %v4555 = vld [vmem:[#allocation2 + $0x5e] sm:$0xff]
      %v4556 = vld [vmem:[#allocation2 + $0x66] sm:$0xff]
      %v4557 = vld [vmem:[#allocation2 + $0x6e] sm:$0xff]
      %v4558 = vld [vmem:[#allocation2 + $0x76] sm:$0xff]
      %v4559 = vld [vmem:[#allocation2 + $0x7e] sm:$0xff]
      %v4560 = vld [vmem:[#allocation2 + $0x86] sm:$0xff]
      %v4561 = vld [vmem:[#allocation2 + $0x8e] sm:$0xff]
      %v4562 = vld [vmem:[#allocation2 + $0x96] sm:$0xff]
      %v4563 = vld [vmem:[#allocation2 + $0x9e] sm:$0xff]
      %v4564 = vld [vmem:[#allocation2 + $0xa6] sm:$0xff]
      %v4565 = vld [vmem:[#allocation2 + $0xae] sm:$0xff]
      %v4566 = vld [vmem:[#allocation2 + $0xb6] sm:$0xff]
      %v4567 = vld [vmem:[#allocation2 + $0xbe] sm:$0xff]
      %v4568 = vld [vmem:[#allocation2 + $0xc6] sm:$0xff]
      %v4569 = vld [vmem:[#allocation2 + $0xce] sm:$0xff]
      %v4570 = vld [vmem:[#allocation2 + $0xd6] sm:$0xff]
      %v4571 = vld [vmem:[#allocation2 + $0xde] sm:$0xff]
      %v4572 = vld [vmem:[#allocation2 + $0xe6] sm:$0xff]
      %v4573 = vld [vmem:[#allocation2 + $0xee] sm:$0xff]
      %v4574 = vld [vmem:[#allocation2 + $0xf6] sm:$0xff]
      %v4575 = vld [vmem:[#allocation2 + $0xfe] sm:$0xff]
      %v4576 = vld [vmem:[#allocation2 + $0x106] sm:$0xff]
      %v4577 = vld [vmem:[#allocation2 + $0x10e] sm:$0xff]
      %v4578 = vld [vmem:[#allocation2 + $0x116] sm:$0xff]
      %v4579 = vld [vmem:[#allocation2 + $0x11e] sm:$0xff]
      %v4580 = vld [vmem:[#allocation2 + $0x126] sm:$0xff]
      %v4581 = vld [vmem:[#allocation2 + $0x12e] sm:$0xff]
      %v4582 = vld [vmem:[#allocation2 + $0x136] sm:$0xff]
      %v4583 = vld [vmem:[#allocation2 + $0x13e] sm:$0xff]
      %4584 = vst.msk [vmem:[#allocation3 + $0x8] sm:$0xff] %vm461, %v4548
      %4585 = vst.msk [vmem:[#allocation3 + $0x18] sm:$0xff] %vm461, %v4549
      %4586 = vst.msk [vmem:[#allocation3 + $0x28] sm:$0xff] %vm461, %v4550
      %4587 = vst.msk [vmem:[#allocation3 + $0x38] sm:$0xff] %vm461, %v4551
      %4588 = vst.msk [vmem:[#allocation3 + $0x48] sm:$0xff] %vm461, %v4552
      %4589 = vst.msk [vmem:[#allocation3 + $0x58] sm:$0xff] %vm461, %v4553
      %4590 = vst.msk [vmem:[#allocation3 + $0x68] sm:$0xff] %vm461, %v4554
      %4591 = vst.msk [vmem:[#allocation3 + $0x78] sm:$0xff] %vm461, %v4555
      %4592 = vst.msk [vmem:[#allocation3 + $0x88] sm:$0xff] %vm461, %v4556
      %4593 = vst.msk [vmem:[#allocation3 + $0x98] sm:$0xff] %vm461, %v4557
      %4594 = vst.msk [vmem:[#allocation3 + $0xa8] sm:$0xff] %vm461, %v4558
      %4595 = vst.msk [vmem:[#allocation3 + $0xb8] sm:$0xff] %vm461, %v4559
      %4596 = vst.msk [vmem:[#allocation3 + $0xc8] sm:$0xff] %vm461, %v4560
      %4597 = vst.msk [vmem:[#allocation3 + $0xd8] sm:$0xff] %vm461, %v4561
      %4598 = vst.msk [vmem:[#allocation3 + $0xe8] sm:$0xff] %vm461, %v4562
      %4599 = vst.msk [vmem:[#allocation3 + $0xf8] sm:$0xff] %vm461, %v4563
      %4600 = vst.msk [vmem:[#allocation3 + $0x108] sm:$0xff] %vm461, %v4564
      %4601 = vst.msk [vmem:[#allocation3 + $0x118] sm:$0xff] %vm461, %v4565
      %4602 = vst.msk [vmem:[#allocation3 + $0x128] sm:$0xff] %vm461, %v4566
      %4603 = vst.msk [vmem:[#allocation3 + $0x138] sm:$0xff] %vm461, %v4567
      %4604 = vst.msk [vmem:[#allocation3 + $0x148] sm:$0xff] %vm461, %v4568
      %4605 = vst.msk [vmem:[#allocation3 + $0x158] sm:$0xff] %vm461, %v4569
      %4606 = vst.msk [vmem:[#allocation3 + $0x168] sm:$0xff] %vm461, %v4570
      %4607 = vst.msk [vmem:[#allocation3 + $0x178] sm:$0xff] %vm461, %v4571
      %4608 = vst.msk [vmem:[#allocation3 + $0x188] sm:$0xff] %vm461, %v4572
      %4609 = vst.msk [vmem:[#allocation3 + $0x198] sm:$0xff] %vm461, %v4573
      %4610 = vst.msk [vmem:[#allocation3 + $0x1a8] sm:$0xff] %vm461, %v4574
      %4611 = vst.msk [vmem:[#allocation3 + $0x1b8] sm:$0xff] %vm461, %v4575
      %4612 = vst.msk [vmem:[#allocation3 + $0x1c8] sm:$0xff] %vm461, %v4576
      %4613 = vst.msk [vmem:[#allocation3 + $0x1d8] sm:$0xff] %vm461, %v4577
      %4614 = vst.msk [vmem:[#allocation3 + $0x1e8] sm:$0xff] %vm461, %v4578
      %4615 = vst.msk [vmem:[#allocation3 + $0x1f8] sm:$0xff] %vm461, %v4579
      %4616 = vst.msk [vmem:[#allocation3 + $0x208] sm:$0xff] %vm461, %v4580
      %4617 = vst.msk [vmem:[#allocation3 + $0x218] sm:$0xff] %vm461, %v4581
      %4618 = vst.msk [vmem:[#allocation3 + $0x228] sm:$0xff] %vm461, %v4582
      %4619 = vst.msk [vmem:[#allocation3 + $0x238] sm:$0xff] %vm461, %v4583
      %v4620 = vld [vmem:[#allocation3] sm:$0xff]
      %v4621 = vld [vmem:[#allocation3 + $0x8] sm:$0xff]
      %v4622 = vld [vmem:[#allocation3 + $0x10] sm:$0xff]
      %v4623 = vld [vmem:[#allocation3 + $0x18] sm:$0xff]
      %v4624 = vld [vmem:[#allocation3 + $0x20] sm:$0xff]
      %v4625 = vld [vmem:[#allocation3 + $0x28] sm:$0xff]
      %v4626 = vld [vmem:[#allocation3 + $0x30] sm:$0xff]
      %v4627 = vld [vmem:[#allocation3 + $0x38] sm:$0xff]
      %v4628 = vld [vmem:[#allocation3 + $0x40] sm:$0xff]
      %v4629 = vld [vmem:[#allocation3 + $0x48] sm:$0xff]
      %v4630 = vld [vmem:[#allocation3 + $0x50] sm:$0xff]
      %v4631 = vld [vmem:[#allocation3 + $0x58] sm:$0xff]
      %v4632 = vld [vmem:[#allocation3 + $0x60] sm:$0xff]
      %v4633 = vld [vmem:[#allocation3 + $0x68] sm:$0xff]
      %v4634 = vld [vmem:[#allocation3 + $0x70] sm:$0xff]
      %v4635 = vld [vmem:[#allocation3 + $0x78] sm:$0xff]
      %v4636 = vld [vmem:[#allocation3 + $0x80] sm:$0xff]
      %v4637 = vld [vmem:[#allocation3 + $0x88] sm:$0xff]
      %v4638 = vld [vmem:[#allocation3 + $0x90] sm:$0xff]
      %v4639 = vld [vmem:[#allocation3 + $0x98] sm:$0xff]
      %v4640 = vld [vmem:[#allocation3 + $0xa0] sm:$0xff]
      %v4641 = vld [vmem:[#allocation3 + $0xa8] sm:$0xff]
      %v4642 = vld [vmem:[#allocation3 + $0xb0] sm:$0xff]
      %v4643 = vld [vmem:[#allocation3 + $0xb8] sm:$0xff]
      %v4644 = vld [vmem:[#allocation3 + $0xc0] sm:$0xff]
      %v4645 = vld [vmem:[#allocation3 + $0xc8] sm:$0xff]
      %v4646 = vld [vmem:[#allocation3 + $0xd0] sm:$0xff]
      %v4647 = vld [vmem:[#allocation3 + $0xd8] sm:$0xff]
      %v4648 = vld [vmem:[#allocation3 + $0xe0] sm:$0xff]
      %v4649 = vld [vmem:[#allocation3 + $0xe8] sm:$0xff]
      %v4650 = vld [vmem:[#allocation3 + $0xf0] sm:$0xff]
      %v4651 = vld [vmem:[#allocation3 + $0xf8] sm:$0xff]
      %v4652 = vld [vmem:[#allocation3 + $0x100] sm:$0xff]
      %v4653 = vld [vmem:[#allocation3 + $0x108] sm:$0xff]
      %v4654 = vld [vmem:[#allocation3 + $0x110] sm:$0xff]
      %v4655 = vld [vmem:[#allocation3 + $0x118] sm:$0xff]
      %v4656 = vld [vmem:[#allocation3 + $0x120] sm:$0xff]
      %v4657 = vld [vmem:[#allocation3 + $0x128] sm:$0xff]
      %v4658 = vld [vmem:[#allocation3 + $0x130] sm:$0xff]
      %v4659 = vld [vmem:[#allocation3 + $0x138] sm:$0xff]
      %v4660 = vld [vmem:[#allocation3 + $0x140] sm:$0xff]
      %v4661 = vld [vmem:[#allocation3 + $0x148] sm:$0xff]
      %v4662 = vld [vmem:[#allocation3 + $0x150] sm:$0xff]
      %v4663 = vld [vmem:[#allocation3 + $0x158] sm:$0xff]
      %v4664 = vld [vmem:[#allocation3 + $0x160] sm:$0xff]
      %v4665 = vld [vmem:[#allocation3 + $0x168] sm:$0xff]
      %v4666 = vld [vmem:[#allocation3 + $0x170] sm:$0xff]
      %v4667 = vld [vmem:[#allocation3 + $0x178] sm:$0xff]
      %v4668 = vld [vmem:[#allocation3 + $0x180] sm:$0xff]
      %v4669 = vld [vmem:[#allocation3 + $0x188] sm:$0xff]
      %v4670 = vld [vmem:[#allocation3 + $0x190] sm:$0xff]
      %v4671 = vld [vmem:[#allocation3 + $0x198] sm:$0xff]
      %v4672 = vld [vmem:[#allocation3 + $0x1a0] sm:$0xff]
      %v4673 = vld [vmem:[#allocation3 + $0x1a8] sm:$0xff]
      %v4674 = vld [vmem:[#allocation3 + $0x1b0] sm:$0xff]
      %v4675 = vld [vmem:[#allocation3 + $0x1b8] sm:$0xff]
      %v4676 = vld [vmem:[#allocation3 + $0x1c0] sm:$0xff]
      %v4677 = vld [vmem:[#allocation3 + $0x1c8] sm:$0xff]
      %v4678 = vld [vmem:[#allocation3 + $0x1d0] sm:$0xff]
      %v4679 = vld [vmem:[#allocation3 + $0x1d8] sm:$0xff]
      %v4680 = vld [vmem:[#allocation3 + $0x1e0] sm:$0xff]
      %v4681 = vld [vmem:[#allocation3 + $0x1e8] sm:$0xff]
      %v4682 = vld [vmem:[#allocation3 + $0x1f0] sm:$0xff]
      %v4683 = vld [vmem:[#allocation3 + $0x1f8] sm:$0xff]
      %v4684 = vld [vmem:[#allocation3 + $0x200] sm:$0xff]
      %v4685 = vld [vmem:[#allocation3 + $0x208] sm:$0xff]
      %v4686 = vld [vmem:[#allocation3 + $0x210] sm:$0xff]
      %v4687 = vld [vmem:[#allocation3 + $0x218] sm:$0xff]
      %v4688 = vld [vmem:[#allocation3 + $0x220] sm:$0xff]
      %v4689 = vld [vmem:[#allocation3 + $0x228] sm:$0xff]
      %v4690 = vld [vmem:[#allocation3 + $0x230] sm:$0xff]
      %v4691 = vld [vmem:[#allocation3 + $0x238] sm:$0xff]
      %v4692 = vpack.c.bf16 %v4622, %v4620
      %v4693 = vpack.c.bf16 %v4623, %v4621
      %v4694 = vpack.c.bf16 %v4626, %v4624
      %v4695 = vpack.c.bf16 %v4627, %v4625
      %v4696 = vpack.c.bf16 %v4630, %v4628
      %v4697 = vpack.c.bf16 %v4631, %v4629
      %v4698 = vpack.c.bf16 %v4634, %v4632
      %v4699 = vpack.c.bf16 %v4635, %v4633
      %v4700 = vpack.c.bf16 %v4638, %v4636
      %v4701 = vpack.c.bf16 %v4639, %v4637
      %v4702 = vpack.c.bf16 %v4642, %v4640
      %v4703 = vpack.c.bf16 %v4643, %v4641
      %v4704 = vpack.c.bf16 %v4646, %v4644
      %v4705 = vpack.c.bf16 %v4647, %v4645
      %v4706 = vpack.c.bf16 %v4650, %v4648
      %v4707 = vpack.c.bf16 %v4651, %v4649
      %v4708 = vpack.c.bf16 %v4654, %v4652
      %v4709 = vpack.c.bf16 %v4655, %v4653
      %v4710 = vpack.c.bf16 %v4658, %v4656
      %v4711 = vpack.c.bf16 %v4659, %v4657
      %v4712 = vpack.c.bf16 %v4662, %v4660
      %v4713 = vpack.c.bf16 %v4663, %v4661
      %v4714 = vpack.c.bf16 %v4666, %v4664
      %v4715 = vpack.c.bf16 %v4667, %v4665
      %v4716 = vpack.c.bf16 %v4670, %v4668
      %v4717 = vpack.c.bf16 %v4671, %v4669
      %v4718 = vpack.c.bf16 %v4674, %v4672
      %v4719 = vpack.c.bf16 %v4675, %v4673
      %v4720 = vpack.c.bf16 %v4678, %v4676
      %v4721 = vpack.c.bf16 %v4679, %v4677
      %v4722 = vpack.c.bf16 %v4682, %v4680
      %v4723 = vpack.c.bf16 %v4683, %v4681
      %v4724 = vpack.c.bf16 %v4686, %v4684
      %v4725 = vpack.c.bf16 %v4687, %v4685
      %v4726 = vpack.c.bf16 %v4690, %v4688
      %v4727 = vpack.c.bf16 %v4691, %v4689
      %s4728 = scalar_lea.vmem %s1, 72
      %v4729 = vld [vmem:[%s4728] sm:$0xf]
      %v4730 = vld [vmem:[%s4728 + $0x4] sm:$0xf]
      %v4731 = vld [vmem:[%s4728 + $0x8] sm:$0xf]
      %v4732 = vld [vmem:[%s4728 + $0xc] sm:$0xf]
      %v4733 = vld [vmem:[%s4728 + $0x10] sm:$0xf]
      %v4734 = vld [vmem:[%s4728 + $0x14] sm:$0xf]
      %v4735 = vld [vmem:[%s4728 + $0x18] sm:$0xf]
      %v4736 = vld [vmem:[%s4728 + $0x1c] sm:$0xf]
      %v4737 = vld [vmem:[%s4728 + $0x20] sm:$0xf]
      %v4738 = vld [vmem:[%s4728 + $0x24] sm:$0xf]
      %v4739 = vld [vmem:[%s4728 + $0x28] sm:$0xf]
      %v4740 = vld [vmem:[%s4728 + $0x2c] sm:$0xf]
      %v4741 = vld [vmem:[%s4728 + $0x30] sm:$0xf]
      %v4742 = vld [vmem:[%s4728 + $0x34] sm:$0xf]
      %v4743 = vld [vmem:[%s4728 + $0x38] sm:$0xf]
      %v4744 = vld [vmem:[%s4728 + $0x3c] sm:$0xf]
      %v4745 = vld [vmem:[%s4728 + $0x40] sm:$0xf]
      %v4746 = vld [vmem:[%s4728 + $0x44] sm:$0xf]
      %s4747 = scalar_lea.vmem %s2, 2
      %v4748 = vld [vmem:[%s4747] sm:$0x1]
      %v4749 = vperm.slane %v4748, 0
      %v4768 = vunpack.c.l.b16 %v4729
      %v4769 = vunpack.c.l.b16 %v4730
      %v4770 = vunpack.c.l.b16 %v4731
      %v4771 = vunpack.c.l.b16 %v4732
      %v4772 = vunpack.c.l.b16 %v4733
      %v4773 = vunpack.c.l.b16 %v4734
      %v4774 = vunpack.c.l.b16 %v4735
      %v4775 = vunpack.c.l.b16 %v4736
      %v4776 = vunpack.c.l.b16 %v4737
      %v4777 = vunpack.c.l.b16 %v4738
      %v4778 = vunpack.c.l.b16 %v4739
      %v4779 = vunpack.c.l.b16 %v4740
      %v4780 = vunpack.c.l.b16 %v4741
      %v4781 = vunpack.c.l.b16 %v4742
      %v4782 = vunpack.c.l.b16 %v4743
      %v4783 = vunpack.c.l.b16 %v4744
      %v4784 = vunpack.c.l.b16 %v4745
      %v4785 = vunpack.c.l.b16 %v4746
      %v4786 = vpack.c.b16 %v4769, %v4768
      %v4787 = vpack.c.b16 %v4771, %v4770
      %v4788 = vpack.c.b16 %v4773, %v4772
      %v4789 = vpack.c.b16 %v4775, %v4774
      %v4790 = vpack.c.b16 %v4777, %v4776
      %v4791 = vpack.c.b16 %v4779, %v4778
      %v4792 = vpack.c.b16 %v4781, %v4780
      %v4793 = vpack.c.b16 %v4783, %v4782
      %v4794 = vpack.c.b16 %v4785, %v4784
      %v4805 = vsel %vm461, %v4693, 0
      %v4808 = vsel %vm461, %v4695, 0
      %v4811 = vsel %vm461, %v4697, 0
      %v4814 = vsel %vm461, %v4699, 0
      %v4817 = vsel %vm461, %v4701, 0
      %v4820 = vsel %vm461, %v4703, 0
      %v4823 = vsel %vm461, %v4705, 0
      %v4826 = vsel %vm461, %v4707, 0
      %v4829 = vsel %vm461, %v4709, 0
      %v4832 = vsel %vm461, %v4711, 0
      %v4835 = vsel %vm461, %v4713, 0
      %v4838 = vsel %vm461, %v4715, 0
      %v4841 = vsel %vm461, %v4717, 0
      %v4844 = vsel %vm461, %v4719, 0
      %v4847 = vsel %vm461, %v4721, 0
      %v4850 = vsel %vm461, %v4723, 0
      %v4853 = vsel %vm461, %v4725, 0
      %v4856 = vsel %vm461, %v4727, 0
      %4858 = vmatpush.bf16.msra.mxu0 %v4793
      %4859 = vmatpush.bf16.msra.mxu0 %v4792
      %4860 = vmatpush.bf16.msra.mxu0 %v4791
      %4861 = vmatpush.bf16.msra.mxu0 %v4790
      %4862 = vmatpush.bf16.msra.mxu0 %v4789
      %4863 = vmatpush.bf16.msra.mxu0 %v4788
      %4864 = vmatpush.bf16.msra.mxu0 %v4787
      %4865 = vmatpush.bf16.msra.mxu0 %v4786
      %4866 = vmatmul.bf16.gmra.mxu0 %v4692
      %v4867 = vpop.f32.mrf.mxu0
      %v4868 = vadd.f32 %v4749, %v4867
      %v4869 = vpop.f32.mrf.mxu0
      %v4870 = vadd.f32 %v4749, %v4869
      %4871 = vmatmul.bf16.gmra.mxu0 %v4694
      %v4872 = vpop.f32.mrf.mxu0
      %v4873 = vadd.f32 %v4749, %v4872
      %v4874 = vpop.f32.mrf.mxu0
      %v4875 = vadd.f32 %v4749, %v4874
      %4876 = vmatmul.bf16.gmra.mxu0 %v4696
      %v4877 = vpop.f32.mrf.mxu0
      %v4878 = vadd.f32 %v4749, %v4877
      %v4879 = vpop.f32.mrf.mxu0
      %v4880 = vadd.f32 %v4749, %v4879
      %4881 = vmatmul.bf16.gmra.mxu0 %v4698
      %v4882 = vpop.f32.mrf.mxu0
      %v4883 = vadd.f32 %v4749, %v4882
      %v4884 = vpop.f32.mrf.mxu0
      %v4885 = vadd.f32 %v4749, %v4884
      %4886 = vmatmul.bf16.gmra.mxu0 %v4700
      %v4887 = vpop.f32.mrf.mxu0
      %v4888 = vadd.f32 %v4749, %v4887
      %v4889 = vpop.f32.mrf.mxu0
      %v4890 = vadd.f32 %v4749, %v4889
      %4891 = vmatmul.bf16.gmra.mxu0 %v4702
      %v4892 = vpop.f32.mrf.mxu0
      %v4893 = vadd.f32 %v4749, %v4892
      %v4894 = vpop.f32.mrf.mxu0
      %v4895 = vadd.f32 %v4749, %v4894
      %4896 = vmatmul.bf16.gmra.mxu0 %v4704
      %v4897 = vpop.f32.mrf.mxu0
      %v4898 = vadd.f32 %v4749, %v4897
      %v4899 = vpop.f32.mrf.mxu0
      %v4900 = vadd.f32 %v4749, %v4899
      %4901 = vmatmul.bf16.gmra.mxu0 %v4706
      %v4902 = vpop.f32.mrf.mxu0
      %v4903 = vadd.f32 %v4749, %v4902
      %v4904 = vpop.f32.mrf.mxu0
      %v4905 = vadd.f32 %v4749, %v4904
      %4906 = vmatmul.bf16.gmra.mxu0 %v4708
      %v4907 = vpop.f32.mrf.mxu0
      %v4908 = vadd.f32 %v4749, %v4907
      %v4909 = vpop.f32.mrf.mxu0
      %v4910 = vadd.f32 %v4749, %v4909
      %4911 = vmatmul.bf16.gmra.mxu0 %v4710
      %v4912 = vpop.f32.mrf.mxu0
      %v4913 = vadd.f32 %v4749, %v4912
      %v4914 = vpop.f32.mrf.mxu0
      %v4915 = vadd.f32 %v4749, %v4914
      %4916 = vmatmul.bf16.gmra.mxu0 %v4712
      %v4917 = vpop.f32.mrf.mxu0
      %v4918 = vadd.f32 %v4749, %v4917
      %v4919 = vpop.f32.mrf.mxu0
      %v4920 = vadd.f32 %v4749, %v4919
      %4921 = vmatmul.bf16.gmra.mxu0 %v4714
      %v4922 = vpop.f32.mrf.mxu0
      %v4923 = vadd.f32 %v4749, %v4922
      %v4924 = vpop.f32.mrf.mxu0
      %v4925 = vadd.f32 %v4749, %v4924
      %4926 = vmatmul.bf16.gmra.mxu0 %v4716
      %v4927 = vpop.f32.mrf.mxu0
      %v4928 = vadd.f32 %v4749, %v4927
      %v4929 = vpop.f32.mrf.mxu0
      %v4930 = vadd.f32 %v4749, %v4929
      %4931 = vmatmul.bf16.gmra.mxu0 %v4718
      %v4932 = vpop.f32.mrf.mxu0
      %v4933 = vadd.f32 %v4749, %v4932
      %v4934 = vpop.f32.mrf.mxu0
      %v4935 = vadd.f32 %v4749, %v4934
      %4936 = vmatmul.bf16.gmra.mxu0 %v4720
      %v4937 = vpop.f32.mrf.mxu0
      %v4938 = vadd.f32 %v4749, %v4937
      %v4939 = vpop.f32.mrf.mxu0
      %v4940 = vadd.f32 %v4749, %v4939
      %4941 = vmatmul.bf16.gmra.mxu0 %v4722
      %v4942 = vpop.f32.mrf.mxu0
      %v4943 = vadd.f32 %v4749, %v4942
      %v4944 = vpop.f32.mrf.mxu0
      %v4945 = vadd.f32 %v4749, %v4944
      %4946 = vmatmul.bf16.gmra.mxu0 %v4724
      %v4947 = vpop.f32.mrf.mxu0
      %v4948 = vadd.f32 %v4749, %v4947
      %v4949 = vpop.f32.mrf.mxu0
      %v4950 = vadd.f32 %v4749, %v4949
      %4951 = vmatmul.bf16.gmra.mxu0 %v4726
      %v4952 = vpop.f32.mrf.mxu0
      %v4953 = vadd.f32 %v4749, %v4952
      %v4954 = vpop.f32.mrf.mxu0
      %v4955 = vadd.f32 %v4749, %v4954
      %4956 = vdwg.mxu0
      %4957 = vmatpush.bf16.msra.mxu0 0
      %4958 = vmatpush.bf16.msra.mxu0 0
      %4959 = vmatpush.bf16.msra.mxu0 0
      %4960 = vmatpush.bf16.msra.mxu0 0
      %4961 = vmatpush.bf16.msra.mxu0 0
      %4962 = vmatpush.bf16.msra.mxu0 0
      %4963 = vmatpush.bf16.msra.mxu0 0
      %4964 = vmatpush.bf16.msra.mxu0 %v4794
      %4965 = vmatmul.bf16.gmra.mxu0 %v4805
      %v4966 = vpop.f32.mrf.mxu0
      %v4967 = vadd.f32 %v4868, %v4966
      %v4968 = vpop.f32.mrf.mxu0
      %v4969 = vadd.f32 %v4870, %v4968
      %4970 = vmatmul.bf16.gmra.mxu0 %v4808
      %v4971 = vpop.f32.mrf.mxu0
      %v4972 = vadd.f32 %v4873, %v4971
      %v4973 = vpop.f32.mrf.mxu0
      %v4974 = vadd.f32 %v4875, %v4973
      %4975 = vmatmul.bf16.gmra.mxu0 %v4811
      %v4976 = vpop.f32.mrf.mxu0
      %v4977 = vadd.f32 %v4878, %v4976
      %v4978 = vpop.f32.mrf.mxu0
      %v4979 = vadd.f32 %v4880, %v4978
      %4980 = vmatmul.bf16.gmra.mxu0 %v4814
      %v4981 = vpop.f32.mrf.mxu0
      %v4982 = vadd.f32 %v4883, %v4981
      %v4983 = vpop.f32.mrf.mxu0
      %v4984 = vadd.f32 %v4885, %v4983
      %4985 = vmatmul.bf16.gmra.mxu0 %v4817
      %v4986 = vpop.f32.mrf.mxu0
      %v4987 = vadd.f32 %v4888, %v4986
      %v4988 = vpop.f32.mrf.mxu0
      %v4989 = vadd.f32 %v4890, %v4988
      %4990 = vmatmul.bf16.gmra.mxu0 %v4820
      %v4991 = vpop.f32.mrf.mxu0
      %v4992 = vadd.f32 %v4893, %v4991
      %v4993 = vpop.f32.mrf.mxu0
      %v4994 = vadd.f32 %v4895, %v4993
      %4995 = vmatmul.bf16.gmra.mxu0 %v4823
      %v4996 = vpop.f32.mrf.mxu0
      %v4997 = vadd.f32 %v4898, %v4996
      %v4998 = vpop.f32.mrf.mxu0
      %v4999 = vadd.f32 %v4900, %v4998
      %5000 = vmatmul.bf16.gmra.mxu0 %v4826
      %v5001 = vpop.f32.mrf.mxu0
      %v5002 = vadd.f32 %v4903, %v5001
      %v5003 = vpop.f32.mrf.mxu0
      %v5004 = vadd.f32 %v4905, %v5003
      %5005 = vmatmul.bf16.gmra.mxu0 %v4829
      %v5006 = vpop.f32.mrf.mxu0
      %v5007 = vadd.f32 %v4908, %v5006
      %v5008 = vpop.f32.mrf.mxu0
      %v5009 = vadd.f32 %v4910, %v5008
      %5010 = vmatmul.bf16.gmra.mxu0 %v4832
      %v5011 = vpop.f32.mrf.mxu0
      %v5012 = vadd.f32 %v4913, %v5011
      %v5013 = vpop.f32.mrf.mxu0
      %v5014 = vadd.f32 %v4915, %v5013
      %5015 = vmatmul.bf16.gmra.mxu0 %v4835
      %v5016 = vpop.f32.mrf.mxu0
      %v5017 = vadd.f32 %v4918, %v5016
      %v5018 = vpop.f32.mrf.mxu0
      %v5019 = vadd.f32 %v4920, %v5018
      %5020 = vmatmul.bf16.gmra.mxu0 %v4838
      %v5021 = vpop.f32.mrf.mxu0
      %v5022 = vadd.f32 %v4923, %v5021
      %v5023 = vpop.f32.mrf.mxu0
      %v5024 = vadd.f32 %v4925, %v5023
      %5025 = vmatmul.bf16.gmra.mxu0 %v4841
      %v5026 = vpop.f32.mrf.mxu0
      %v5027 = vadd.f32 %v4928, %v5026
      %v5028 = vpop.f32.mrf.mxu0
      %v5029 = vadd.f32 %v4930, %v5028
      %5030 = vmatmul.bf16.gmra.mxu0 %v4844
      %v5031 = vpop.f32.mrf.mxu0
      %v5032 = vadd.f32 %v4933, %v5031
      %v5033 = vpop.f32.mrf.mxu0
      %v5034 = vadd.f32 %v4935, %v5033
      %5035 = vmatmul.bf16.gmra.mxu0 %v4847
      %v5036 = vpop.f32.mrf.mxu0
      %v5037 = vadd.f32 %v4938, %v5036
      %v5038 = vpop.f32.mrf.mxu0
      %v5039 = vadd.f32 %v4940, %v5038
      %5040 = vmatmul.bf16.gmra.mxu0 %v4850
      %v5041 = vpop.f32.mrf.mxu0
      %v5042 = vadd.f32 %v4943, %v5041
      %v5043 = vpop.f32.mrf.mxu0
      %v5044 = vadd.f32 %v4945, %v5043
      %5045 = vmatmul.bf16.gmra.mxu0 %v4853
      %v5046 = vpop.f32.mrf.mxu0
      %v5047 = vadd.f32 %v4948, %v5046
      %v5048 = vpop.f32.mrf.mxu0
      %v5049 = vadd.f32 %v4950, %v5048
      %5050 = vmatmul.bf16.gmra.mxu0 %v4856
      %v5051 = vpop.f32.mrf.mxu0
      %v5052 = vadd.f32 %v4953, %v5051
      %v5053 = vpop.f32.mrf.mxu0
      %v5054 = vadd.f32 %v4955, %v5053
      %5055 = vdwg.mxu0
      %vm5056 = vcmp.ge.f32.partialorder %v4967, 0.0
      %vm5057 = vcmp.ge.f32.partialorder %v4969, 0.0
      %vm5058 = vcmp.ge.f32.partialorder %v4972, 0.0
      %vm5059 = vcmp.ge.f32.partialorder %v4974, 0.0
      %vm5060 = vcmp.ge.f32.partialorder %v4977, 0.0
      %vm5061 = vcmp.ge.f32.partialorder %v4979, 0.0
      %vm5062 = vcmp.ge.f32.partialorder %v4982, 0.0
      %vm5063 = vcmp.ge.f32.partialorder %v4984, 0.0
      %vm5064 = vcmp.ge.f32.partialorder %v4987, 0.0
      %vm5065 = vcmp.ge.f32.partialorder %v4989, 0.0
      %vm5066 = vcmp.ge.f32.partialorder %v4992, 0.0
      %vm5067 = vcmp.ge.f32.partialorder %v4994, 0.0
      %vm5068 = vcmp.ge.f32.partialorder %v4997, 0.0
      %vm5069 = vcmp.ge.f32.partialorder %v4999, 0.0
      %vm5070 = vcmp.ge.f32.partialorder %v5002, 0.0
      %vm5071 = vcmp.ge.f32.partialorder %v5004, 0.0
      %vm5072 = vcmp.ge.f32.partialorder %v5007, 0.0
      %vm5073 = vcmp.ge.f32.partialorder %v5009, 0.0
      %vm5074 = vcmp.ge.f32.partialorder %v5012, 0.0
      %vm5075 = vcmp.ge.f32.partialorder %v5014, 0.0
      %vm5076 = vcmp.ge.f32.partialorder %v5017, 0.0
      %vm5077 = vcmp.ge.f32.partialorder %v5019, 0.0
      %vm5078 = vcmp.ge.f32.partialorder %v5022, 0.0
      %vm5079 = vcmp.ge.f32.partialorder %v5024, 0.0
      %vm5080 = vcmp.ge.f32.partialorder %v5027, 0.0
      %vm5081 = vcmp.ge.f32.partialorder %v5029, 0.0
      %vm5082 = vcmp.ge.f32.partialorder %v5032, 0.0
      %vm5083 = vcmp.ge.f32.partialorder %v5034, 0.0
      %vm5084 = vcmp.ge.f32.partialorder %v5037, 0.0
      %vm5085 = vcmp.ge.f32.partialorder %v5039, 0.0
      %vm5086 = vcmp.ge.f32.partialorder %v5042, 0.0
      %vm5087 = vcmp.ge.f32.partialorder %v5044, 0.0
      %vm5088 = vcmp.ge.f32.partialorder %v5047, 0.0
      %vm5089 = vcmp.ge.f32.partialorder %v5049, 0.0
      %vm5090 = vcmp.ge.f32.partialorder %v5052, 0.0
      %vm5091 = vcmp.ge.f32.partialorder %v5054, 0.0
      %v5092 = vld [vmem:[%s4747 + $0x1] sm:$0x1]
      %v5093 = vperm.slane %v5092, 0
      %v5094 = vmul.f32 %v5093, %v4967
      %v5095 = vmul.f32 %v5093, %v4969
      %v5096 = vmul.f32 %v5093, %v4972
      %v5097 = vmul.f32 %v5093, %v4974
      %v5098 = vmul.f32 %v5093, %v4977
      %v5099 = vmul.f32 %v5093, %v4979
      %v5100 = vmul.f32 %v5093, %v4982
      %v5101 = vmul.f32 %v5093, %v4984
      %v5102 = vmul.f32 %v5093, %v4987
      %v5103 = vmul.f32 %v5093, %v4989
      %v5104 = vmul.f32 %v5093, %v4992
      %v5105 = vmul.f32 %v5093, %v4994
      %v5106 = vmul.f32 %v5093, %v4997
      %v5107 = vmul.f32 %v5093, %v4999
      %v5108 = vmul.f32 %v5093, %v5002
      %v5109 = vmul.f32 %v5093, %v5004
      %v5110 = vmul.f32 %v5093, %v5007
      %v5111 = vmul.f32 %v5093, %v5009
      %v5112 = vmul.f32 %v5093, %v5012
      %v5113 = vmul.f32 %v5093, %v5014
      %v5114 = vmul.f32 %v5093, %v5017
      %v5115 = vmul.f32 %v5093, %v5019
      %v5116 = vmul.f32 %v5093, %v5022
      %v5117 = vmul.f32 %v5093, %v5024
      %v5118 = vmul.f32 %v5093, %v5027
      %v5119 = vmul.f32 %v5093, %v5029
      %v5120 = vmul.f32 %v5093, %v5032
      %v5121 = vmul.f32 %v5093, %v5034
      %v5122 = vmul.f32 %v5093, %v5037
      %v5123 = vmul.f32 %v5093, %v5039
      %v5124 = vmul.f32 %v5093, %v5042
      %v5125 = vmul.f32 %v5093, %v5044
      %v5126 = vmul.f32 %v5093, %v5047
      %v5127 = vmul.f32 %v5093, %v5049
      %v5128 = vmul.f32 %v5093, %v5052
      %v5129 = vmul.f32 %v5093, %v5054
      %v5130 = vsel %vm5056, %v4967, %v5094
      %v5131 = vsel %vm5057, %v4969, %v5095
      %v5132 = vsel %vm5058, %v4972, %v5096
      %v5133 = vsel %vm5059, %v4974, %v5097
      %v5134 = vsel %vm5060, %v4977, %v5098
      %v5135 = vsel %vm5061, %v4979, %v5099
      %v5136 = vsel %vm5062, %v4982, %v5100
      %v5137 = vsel %vm5063, %v4984, %v5101
      %v5138 = vsel %vm5064, %v4987, %v5102
      %v5139 = vsel %vm5065, %v4989, %v5103
      %v5140 = vsel %vm5066, %v4992, %v5104
      %v5141 = vsel %vm5067, %v4994, %v5105
      %v5142 = vsel %vm5068, %v4997, %v5106
      %v5143 = vsel %vm5069, %v4999, %v5107
      %v5144 = vsel %vm5070, %v5002, %v5108
      %v5145 = vsel %vm5071, %v5004, %v5109
      %v5146 = vsel %vm5072, %v5007, %v5110
      %v5147 = vsel %vm5073, %v5009, %v5111
      %v5148 = vsel %vm5074, %v5012, %v5112
      %v5149 = vsel %vm5075, %v5014, %v5113
      %v5150 = vsel %vm5076, %v5017, %v5114
      %v5151 = vsel %vm5077, %v5019, %v5115
      %v5152 = vsel %vm5078, %v5022, %v5116
      %v5153 = vsel %vm5079, %v5024, %v5117
      %v5154 = vsel %vm5080, %v5027, %v5118
      %v5155 = vsel %vm5081, %v5029, %v5119
      %v5156 = vsel %vm5082, %v5032, %v5120
      %v5157 = vsel %vm5083, %v5034, %v5121
      %v5158 = vsel %vm5084, %v5037, %v5122
      %v5159 = vsel %vm5085, %v5039, %v5123
      %v5160 = vsel %vm5086, %v5042, %v5124
      %v5161 = vsel %vm5087, %v5044, %v5125
      %v5162 = vsel %vm5088, %v5047, %v5126
      %v5163 = vsel %vm5089, %v5049, %v5127
      %v5164 = vsel %vm5090, %v5052, %v5128
      %v5165 = vsel %vm5091, %v5054, %v5129
      %5166 = vst.msk [vmem:[%s408] sm:$0xff] %vm461, 0.0
      %5167 = vst.msk [vmem:[%s408 + $0x8] sm:$0xff] %vm461, 0.0
      %5168 = vst.msk [vmem:[%s408 + $0x10] sm:$0xff] %vm461, 0.0
      %5169 = vst.msk [vmem:[%s408 + $0x18] sm:$0xff] %vm461, 0.0
      %5170 = vst.msk [vmem:[%s408 + $0x20] sm:$0xff] %vm461, 0.0
      %5171 = vst.msk [vmem:[%s408 + $0x28] sm:$0xff] %vm461, 0.0
      %5172 = vst.msk [vmem:[%s408 + $0x30] sm:$0xff] %vm461, 0.0
      %5173 = vst.msk [vmem:[%s408 + $0x38] sm:$0xff] %vm461, 0.0
      %5174 = vst.msk [vmem:[%s408 + $0x40] sm:$0xff] %vm461, 0.0
      %5175 = vst.msk [vmem:[%s408 + $0x48] sm:$0xff] %vm461, 0.0
      %5176 = vst.msk [vmem:[%s408 + $0x50] sm:$0xff] %vm461, 0.0
      %5177 = vst.msk [vmem:[%s408 + $0x58] sm:$0xff] %vm461, 0.0
      %5178 = vst.msk [vmem:[%s408 + $0x60] sm:$0xff] %vm461, 0.0
      %5179 = vst.msk [vmem:[%s408 + $0x68] sm:$0xf] %vm2674, 0.0
      %v5180 = vld [vmem:[%s4] sm:$0xff]
      %v5181 = vld [vmem:[%s4 + $0x8] sm:$0xff]
      %v5182 = vld [vmem:[%s4 + $0x10] sm:$0xff]
      %v5183 = vld [vmem:[%s4 + $0x18] sm:$0xff]
      %v5184 = vld [vmem:[%s4 + $0x20] sm:$0xff]
      %v5185 = vld [vmem:[%s4 + $0x28] sm:$0xff]
      %v5186 = vld [vmem:[%s4 + $0x30] sm:$0xff]
      %v5187 = vld [vmem:[%s4 + $0x38] sm:$0xff]
      %v5188 = vld [vmem:[%s4 + $0x40] sm:$0xff]
      %v5189 = vld [vmem:[%s4 + $0x48] sm:$0xff]
      %v5190 = vld [vmem:[%s4 + $0x50] sm:$0xff]
      %v5191 = vld [vmem:[%s4 + $0x58] sm:$0xff]
      %v5192 = vld [vmem:[%s4 + $0x60] sm:$0xff]
      %v5193 = vld [vmem:[%s4 + $0x68] sm:$0xff]
      %v5194 = vld [vmem:[%s4 + $0x70] sm:$0xff]
      %v5195 = vld [vmem:[%s4 + $0x78] sm:$0xff]
      %v5196 = vld [vmem:[%s4 + $0x80] sm:$0xff]
      %v5197 = vld [vmem:[%s4 + $0x88] sm:$0xff]
      %v5198 = vld [vmem:[%s4 + $0x90] sm:$0xff]
      %v5199 = vld [vmem:[%s4 + $0x98] sm:$0xff]
      %v5200 = vld [vmem:[%s4 + $0xa0] sm:$0xff]
      %v5201 = vld [vmem:[%s4 + $0xa8] sm:$0xff]
      %v5202 = vld [vmem:[%s4 + $0xb0] sm:$0xff]
      %v5203 = vld [vmem:[%s4 + $0xb8] sm:$0xff]
      %v5204 = vld [vmem:[%s4 + $0xc0] sm:$0xff]
      %v5205 = vld [vmem:[%s4 + $0xc8] sm:$0xff]
      %v5206 = vld [vmem:[%s4 + $0xd0] sm:$0xff]
      %v5207 = vld [vmem:[%s4 + $0xd8] sm:$0xff]
      %v5208 = vld [vmem:[%s4 + $0xe0] sm:$0xff]
      %v5209 = vld [vmem:[%s4 + $0xe8] sm:$0xff]
      %v5210 = vld [vmem:[%s4 + $0xf0] sm:$0xff]
      %v5211 = vld [vmem:[%s4 + $0xf8] sm:$0xff]
      %v5212 = vld [vmem:[%s4 + $0x100] sm:$0xff]
      %v5213 = vld [vmem:[%s4 + $0x108] sm:$0xff]
      %v5214 = vld [vmem:[%s4 + $0x110] sm:$0xff]
      %v5215 = vld [vmem:[%s4 + $0x118] sm:$0xff]
      %v5216 = vld [vmem:[%s4 + $0x120] sm:$0xf]
      %v5217 = vld [vmem:[%s4 + $0x128] sm:$0xf]
      %v5218 = vld [vmem:[%s4 + $0x130] sm:$0xf]
      %vm5219 = vcmask 261120
      %v5221 = vsel %vm5219, %v5182, 0
      %v5224 = vsel %vm5219, %v5185, 0
      %v5227 = vsel %vm5219, %v5188, 0
      %v5230 = vsel %vm5219, %v5191, 0
      %v5233 = vsel %vm5219, %v5194, 0
      %v5236 = vsel %vm5219, %v5197, 0
      %v5239 = vsel %vm5219, %v5200, 0
      %v5242 = vsel %vm5219, %v5203, 0
      %v5245 = vsel %vm5219, %v5206, 0
      %v5248 = vsel %vm5219, %v5209, 0
      %v5251 = vsel %vm5219, %v5212, 0
      %v5254 = vsel %vm5219, %v5215, 0
      %v5257 = vsel %vm5219, %v5218, 0
      %5259 = vmatpush.msra.mxu0 %v5145
      %5260 = vmatpush.msra.mxu0 %v5144
      %5261 = vmatpush.msra.mxu0 %v5143
      %5262 = vmatpush.msra.mxu0 %v5142
      %5263 = vmatpush.msra.mxu0 %v5141
      %5264 = vmatpush.msra.mxu0 %v5140
      %5265 = vmatpush.msra.mxu0 %v5139
      %5266 = vmatpush.msra.mxu0 %v5138
      %5267 = vmatpush.msra.mxu0 %v5137
      %5268 = vmatpush.msra.mxu0 %v5136
      %5269 = vmatpush.msra.mxu0 %v5135
      %5270 = vmatpush.msra.mxu0 %v5134
      %5271 = vmatpush.msra.mxu0 %v5133
      %5272 = vmatpush.msra.mxu0 %v5132
      %5273 = vmatpush.msra.mxu0 %v5131
      %5274 = vmatpush.msra.mxu0 %v5130
      %5275 = vmatmul.f32.gmra.mxu0 %v5180
      %v5276 = vpop.f32.mrf.mxu0
      %v5277 = vadd.f32 0.0, %v5276
      %5278 = vmatmul.f32.gmra.mxu0 %v5183
      %v5279 = vpop.f32.mrf.mxu0
      %v5280 = vadd.f32 0.0, %v5279
      %5281 = vmatmul.f32.gmra.mxu0 %v5186
      %v5282 = vpop.f32.mrf.mxu0
      %v5283 = vadd.f32 0.0, %v5282
      %5284 = vmatmul.f32.gmra.mxu0 %v5189
      %v5285 = vpop.f32.mrf.mxu0
      %v5286 = vadd.f32 0.0, %v5285
      %5287 = vmatmul.f32.gmra.mxu0 %v5192
      %v5288 = vpop.f32.mrf.mxu0
      %v5289 = vadd.f32 0.0, %v5288
      %5290 = vmatmul.f32.gmra.mxu0 %v5195
      %v5291 = vpop.f32.mrf.mxu0
      %v5292 = vadd.f32 0.0, %v5291
      %5293 = vmatmul.f32.gmra.mxu0 %v5198
      %v5294 = vpop.f32.mrf.mxu0
      %v5295 = vadd.f32 0.0, %v5294
      %5296 = vmatmul.f32.gmra.mxu0 %v5201
      %v5297 = vpop.f32.mrf.mxu0
      %v5298 = vadd.f32 0.0, %v5297
      %5299 = vmatmul.f32.gmra.mxu0 %v5204
      %v5300 = vpop.f32.mrf.mxu0
      %v5301 = vadd.f32 0.0, %v5300
      %5302 = vmatmul.f32.gmra.mxu0 %v5207
      %v5303 = vpop.f32.mrf.mxu0
      %v5304 = vadd.f32 0.0, %v5303
      %5305 = vmatmul.f32.gmra.mxu0 %v5210
      %v5306 = vpop.f32.mrf.mxu0
      %v5307 = vadd.f32 0.0, %v5306
      %5308 = vmatmul.f32.gmra.mxu0 %v5213
      %v5309 = vpop.f32.mrf.mxu0
      %v5310 = vadd.f32 0.0, %v5309
      %5311 = vmatmul.f32.gmra.mxu0 %v5216
      %v5312 = vpop.f32.mrf.mxu0
      %v5313 = vadd.f32 0.0, %v5312
      %5314 = vdwg.mxu0
      %5315 = vmatpush.msra.mxu0 %v5161
      %5316 = vmatpush.msra.mxu0 %v5160
      %5317 = vmatpush.msra.mxu0 %v5159
      %5318 = vmatpush.msra.mxu0 %v5158
      %5319 = vmatpush.msra.mxu0 %v5157
      %5320 = vmatpush.msra.mxu0 %v5156
      %5321 = vmatpush.msra.mxu0 %v5155
      %5322 = vmatpush.msra.mxu0 %v5154
      %5323 = vmatpush.msra.mxu0 %v5153
      %5324 = vmatpush.msra.mxu0 %v5152
      %5325 = vmatpush.msra.mxu0 %v5151
      %5326 = vmatpush.msra.mxu0 %v5150
      %5327 = vmatpush.msra.mxu0 %v5149
      %5328 = vmatpush.msra.mxu0 %v5148
      %5329 = vmatpush.msra.mxu0 %v5147
      %5330 = vmatpush.msra.mxu0 %v5146
      %5331 = vmatmul.f32.gmra.mxu0 %v5181
      %v5332 = vpop.f32.mrf.mxu0
      %v5333 = vadd.f32 %v5277, %v5332
      %5334 = vmatmul.f32.gmra.mxu0 %v5184
      %v5335 = vpop.f32.mrf.mxu0
      %v5336 = vadd.f32 %v5280, %v5335
      %5337 = vmatmul.f32.gmra.mxu0 %v5187
      %v5338 = vpop.f32.mrf.mxu0
      %v5339 = vadd.f32 %v5283, %v5338
      %5340 = vmatmul.f32.gmra.mxu0 %v5190
      %v5341 = vpop.f32.mrf.mxu0
      %v5342 = vadd.f32 %v5286, %v5341
      %5343 = vmatmul.f32.gmra.mxu0 %v5193
      %v5344 = vpop.f32.mrf.mxu0
      %v5345 = vadd.f32 %v5289, %v5344
      %5346 = vmatmul.f32.gmra.mxu0 %v5196
      %v5347 = vpop.f32.mrf.mxu0
      %v5348 = vadd.f32 %v5292, %v5347
      %5349 = vmatmul.f32.gmra.mxu0 %v5199
      %v5350 = vpop.f32.mrf.mxu0
      %v5351 = vadd.f32 %v5295, %v5350
      %5352 = vmatmul.f32.gmra.mxu0 %v5202
      %v5353 = vpop.f32.mrf.mxu0
      %v5354 = vadd.f32 %v5298, %v5353
      %5355 = vmatmul.f32.gmra.mxu0 %v5205
      %v5356 = vpop.f32.mrf.mxu0
      %v5357 = vadd.f32 %v5301, %v5356
      %5358 = vmatmul.f32.gmra.mxu0 %v5208
      %v5359 = vpop.f32.mrf.mxu0
      %v5360 = vadd.f32 %v5304, %v5359
      %5361 = vmatmul.f32.gmra.mxu0 %v5211
      %v5362 = vpop.f32.mrf.mxu0
      %v5363 = vadd.f32 %v5307, %v5362
      %5364 = vmatmul.f32.gmra.mxu0 %v5214
      %v5365 = vpop.f32.mrf.mxu0
      %v5366 = vadd.f32 %v5310, %v5365
      %5367 = vmatmul.f32.gmra.mxu0 %v5217
      %v5368 = vpop.f32.mrf.mxu0
      %v5369 = vadd.f32 %v5313, %v5368
      %5370 = vdwg.mxu0
      %5371 = vmatpush.msra.mxu0 0.0
      %5372 = vmatpush.msra.mxu0 0.0
      %5373 = vmatpush.msra.mxu0 0.0
      %5374 = vmatpush.msra.mxu0 0.0
      %5375 = vmatpush.msra.mxu0 0.0
      %5376 = vmatpush.msra.mxu0 0.0
      %5377 = vmatpush.msra.mxu0 0.0
      %5378 = vmatpush.msra.mxu0 0.0
      %5379 = vmatpush.msra.mxu0 0.0
      %5380 = vmatpush.msra.mxu0 0.0
      %5381 = vmatpush.msra.mxu0 0.0
      %5382 = vmatpush.msra.mxu0 0.0
      %5383 = vmatpush.msra.mxu0 %v5165
      %5384 = vmatpush.msra.mxu0 %v5164
      %5385 = vmatpush.msra.mxu0 %v5163
      %5386 = vmatpush.msra.mxu0 %v5162
      %5387 = vmatmul.f32.gmra.mxu0 %v5221
      %v5388 = vpop.f32.mrf.mxu0
      %v5389 = vadd.f32 %v5333, %v5388
      %5390 = vmatmul.f32.gmra.mxu0 %v5224
      %v5391 = vpop.f32.mrf.mxu0
      %v5392 = vadd.f32 %v5336, %v5391
      %5393 = vmatmul.f32.gmra.mxu0 %v5227
      %v5394 = vpop.f32.mrf.mxu0
      %v5395 = vadd.f32 %v5339, %v5394
      %5396 = vmatmul.f32.gmra.mxu0 %v5230
      %v5397 = vpop.f32.mrf.mxu0
      %v5398 = vadd.f32 %v5342, %v5397
      %5399 = vmatmul.f32.gmra.mxu0 %v5233
      %v5400 = vpop.f32.mrf.mxu0
      %v5401 = vadd.f32 %v5345, %v5400
      %5402 = vmatmul.f32.gmra.mxu0 %v5236
      %v5403 = vpop.f32.mrf.mxu0
      %v5404 = vadd.f32 %v5348, %v5403
      %5405 = vmatmul.f32.gmra.mxu0 %v5239
      %v5406 = vpop.f32.mrf.mxu0
      %v5407 = vadd.f32 %v5351, %v5406
      %5408 = vmatmul.f32.gmra.mxu0 %v5242
      %v5409 = vpop.f32.mrf.mxu0
      %v5410 = vadd.f32 %v5354, %v5409
      %5411 = vmatmul.f32.gmra.mxu0 %v5245
      %v5412 = vpop.f32.mrf.mxu0
      %v5413 = vadd.f32 %v5357, %v5412
      %5414 = vmatmul.f32.gmra.mxu0 %v5248
      %v5415 = vpop.f32.mrf.mxu0
      %v5416 = vadd.f32 %v5360, %v5415
      %5417 = vmatmul.f32.gmra.mxu0 %v5251
      %v5418 = vpop.f32.mrf.mxu0
      %v5419 = vadd.f32 %v5363, %v5418
      %5420 = vmatmul.f32.gmra.mxu0 %v5254
      %v5421 = vpop.f32.mrf.mxu0
      %v5422 = vadd.f32 %v5366, %v5421
      %5423 = vmatmul.f32.gmra.mxu0 %v5257
      %v5424 = vpop.f32.mrf.mxu0
      %v5425 = vadd.f32 %v5369, %v5424
      %5426 = vdwg.mxu0
      %5427 = vst.msk [vmem:[%s408] sm:$0xff] %vm461, %v5389
      %5428 = vst.msk [vmem:[%s408 + $0x8] sm:$0xff] %vm461, %v5392
      %5429 = vst.msk [vmem:[%s408 + $0x10] sm:$0xff] %vm461, %v5395
      %5430 = vst.msk [vmem:[%s408 + $0x18] sm:$0xff] %vm461, %v5398
      %5431 = vst.msk [vmem:[%s408 + $0x20] sm:$0xff] %vm461, %v5401
      %5432 = vst.msk [vmem:[%s408 + $0x28] sm:$0xff] %vm461, %v5404
      %5433 = vst.msk [vmem:[%s408 + $0x30] sm:$0xff] %vm461, %v5407
      %5434 = vst.msk [vmem:[%s408 + $0x38] sm:$0xff] %vm461, %v5410
      %5435 = vst.msk [vmem:[%s408 + $0x40] sm:$0xff] %vm461, %v5413
      %5436 = vst.msk [vmem:[%s408 + $0x48] sm:$0xff] %vm461, %v5416
      %5437 = vst.msk [vmem:[%s408 + $0x50] sm:$0xff] %vm461, %v5419
      %5438 = vst.msk [vmem:[%s408 + $0x58] sm:$0xff] %vm461, %v5422
      %5439 = vst.msk [vmem:[%s408 + $0x60] sm:$0xf] %vm2674, %v5425
      %v5440 = vld [vmem:[%s408] sm:$0xff]
      %v5441 = vld [vmem:[%s408 + $0x8] sm:$0xff]
      %v5442 = vld [vmem:[%s408 + $0x10] sm:$0xff]
      %v5443 = vld [vmem:[%s408 + $0x18] sm:$0xff]
      %v5444 = vld [vmem:[%s408 + $0x20] sm:$0xff]
      %v5445 = vld [vmem:[%s408 + $0x28] sm:$0xff]
      %v5446 = vld [vmem:[%s408 + $0x30] sm:$0xff]
      %v5447 = vld [vmem:[%s408 + $0x38] sm:$0xff]
      %v5448 = vld [vmem:[%s408 + $0x40] sm:$0xff]
      %v5449 = vld [vmem:[%s408 + $0x48] sm:$0xff]
      %5450 = vst.msk [vmem:[#allocation3] sm:$0xff] %vm461, %v5440
      %5451 = vst.msk [vmem:[#allocation3 + $0x10] sm:$0xff] %vm461, %v5441
      %5452 = vst.msk [vmem:[#allocation3 + $0x20] sm:$0xff] %vm461, %v5442
      %5453 = vst.msk [vmem:[#allocation3 + $0x30] sm:$0xff] %vm461, %v5443
      %5454 = vst.msk [vmem:[#allocation3 + $0x40] sm:$0xff] %vm461, %v5444
      %5455 = vst.msk [vmem:[#allocation3 + $0x50] sm:$0xff] %vm461, %v5445
      %5456 = vst.msk [vmem:[#allocation3 + $0x60] sm:$0xff] %vm461, %v5446
      %5457 = vst.msk [vmem:[#allocation3 + $0x70] sm:$0xff] %vm461, %v5447
      %5458 = vst.msk [vmem:[#allocation3 + $0x80] sm:$0xff] %vm461, %v5448
      %5459 = vst.msk [vmem:[#allocation3 + $0x90] sm:$0xff] %vm461, %v5449
      %v5460 = vld [vmem:[%s408 + $0x1] sm:$0xff]
      %v5461 = vld [vmem:[%s408 + $0x9] sm:$0xff]
      %v5462 = vld [vmem:[%s408 + $0x11] sm:$0xff]
      %v5463 = vld [vmem:[%s408 + $0x19] sm:$0xff]
      %v5464 = vld [vmem:[%s408 + $0x21] sm:$0xff]
      %v5465 = vld [vmem:[%s408 + $0x29] sm:$0xff]
      %v5466 = vld [vmem:[%s408 + $0x31] sm:$0xff]
      %v5467 = vld [vmem:[%s408 + $0x39] sm:$0xff]
      %v5468 = vld [vmem:[%s408 + $0x41] sm:$0xff]
      %v5469 = vld [vmem:[%s408 + $0x49] sm:$0xff]
      %5480 = vrot.lane.b32.xlu0 %v5460, 16
      %v5481 = vpop.permute.xlu0 %5480
      %5482 = vrot.lane.b32.xlu0 %v5461, 16
      %v5483 = vpop.permute.xlu0 %5482
      %5484 = vrot.lane.b32.xlu0 %v5462, 16
      %v5485 = vpop.permute.xlu0 %5484
      %5486 = vrot.lane.b32.xlu0 %v5463, 16
      %v5487 = vpop.permute.xlu0 %5486
      %5488 = vrot.lane.b32.xlu0 %v5464, 16
      %v5489 = vpop.permute.xlu0 %5488
      %5490 = vrot.lane.b32.xlu0 %v5465, 16
      %v5491 = vpop.permute.xlu0 %5490
      %5492 = vrot.lane.b32.xlu0 %v5466, 16
      %v5493 = vpop.permute.xlu0 %5492
      %5494 = vrot.lane.b32.xlu0 %v5467, 16
      %v5495 = vpop.permute.xlu0 %5494
      %5496 = vrot.lane.b32.xlu0 %v5468, 16
      %v5497 = vpop.permute.xlu0 %5496
      %5498 = vrot.lane.b32.xlu0 %v5469, 16
      %v5499 = vpop.permute.xlu0 %5498
      %5510 = vst.msk [vmem:[#allocation3] sm:$0xff] %vm678, %v5481
      %5511 = vst.msk [vmem:[#allocation3 + $0x10] sm:$0xff] %vm678, %v5483
      %5512 = vst.msk [vmem:[#allocation3 + $0x20] sm:$0xff] %vm678, %v5485
      %5513 = vst.msk [vmem:[#allocation3 + $0x30] sm:$0xff] %vm678, %v5487
      %5514 = vst.msk [vmem:[#allocation3 + $0x40] sm:$0xff] %vm678, %v5489
      %5515 = vst.msk [vmem:[#allocation3 + $0x50] sm:$0xff] %vm678, %v5491
      %5516 = vst.msk [vmem:[#allocation3 + $0x60] sm:$0xff] %vm678, %v5493
      %5517 = vst.msk [vmem:[#allocation3 + $0x70] sm:$0xff] %vm678, %v5495
      %5518 = vst.msk [vmem:[#allocation3 + $0x80] sm:$0xff] %vm678, %v5497
      %5519 = vst.msk [vmem:[#allocation3 + $0x90] sm:$0xff] %vm678, %v5499
      %v5520 = vld [vmem:[%s408 + $0x2] sm:$0xff]
      %v5521 = vld [vmem:[%s408 + $0xa] sm:$0xff]
      %v5522 = vld [vmem:[%s408 + $0x12] sm:$0xff]
      %v5523 = vld [vmem:[%s408 + $0x1a] sm:$0xff]
      %v5524 = vld [vmem:[%s408 + $0x22] sm:$0xff]
      %v5525 = vld [vmem:[%s408 + $0x2a] sm:$0xff]
      %v5526 = vld [vmem:[%s408 + $0x32] sm:$0xff]
      %v5527 = vld [vmem:[%s408 + $0x3a] sm:$0xff]
      %v5528 = vld [vmem:[%s408 + $0x42] sm:$0xff]
      %v5529 = vld [vmem:[%s408 + $0x4a] sm:$0xff]
      %5540 = vrot.lane.b32.xlu0 %v5520, 32
      %v5541 = vpop.permute.xlu0 %5540
      %5542 = vrot.lane.b32.xlu0 %v5521, 32
      %v5543 = vpop.permute.xlu0 %5542
      %5544 = vrot.lane.b32.xlu0 %v5522, 32
      %v5545 = vpop.permute.xlu0 %5544
      %5546 = vrot.lane.b32.xlu0 %v5523, 32
      %v5547 = vpop.permute.xlu0 %5546
      %5548 = vrot.lane.b32.xlu0 %v5524, 32
      %v5549 = vpop.permute.xlu0 %5548
      %5550 = vrot.lane.b32.xlu0 %v5525, 32
      %v5551 = vpop.permute.xlu0 %5550
      %5552 = vrot.lane.b32.xlu0 %v5526, 32
      %v5553 = vpop.permute.xlu0 %5552
      %5554 = vrot.lane.b32.xlu0 %v5527, 32
      %v5555 = vpop.permute.xlu0 %5554
      %5556 = vrot.lane.b32.xlu0 %v5528, 32
      %v5557 = vpop.permute.xlu0 %5556
      %5558 = vrot.lane.b32.xlu0 %v5529, 32
      %v5559 = vpop.permute.xlu0 %5558
      %5570 = vst.msk [vmem:[#allocation3] sm:$0xff] %vm895, %v5541
      %5571 = vst.msk [vmem:[#allocation3 + $0x10] sm:$0xff] %vm895, %v5543
      %5572 = vst.msk [vmem:[#allocation3 + $0x20] sm:$0xff] %vm895, %v5545
      %5573 = vst.msk [vmem:[#allocation3 + $0x30] sm:$0xff] %vm895, %v5547
      %5574 = vst.msk [vmem:[#allocation3 + $0x40] sm:$0xff] %vm895, %v5549
      %5575 = vst.msk [vmem:[#allocation3 + $0x50] sm:$0xff] %vm895, %v5551
      %5576 = vst.msk [vmem:[#allocation3 + $0x60] sm:$0xff] %vm895, %v5553
      %5577 = vst.msk [vmem:[#allocation3 + $0x70] sm:$0xff] %vm895, %v5555
      %5578 = vst.msk [vmem:[#allocation3 + $0x80] sm:$0xff] %vm895, %v5557
      %5579 = vst.msk [vmem:[#allocation3 + $0x90] sm:$0xff] %vm895, %v5559
      %v5580 = vld [vmem:[%s408 + $0xa] sm:$0xff]
      %v5581 = vld [vmem:[%s408 + $0x12] sm:$0xff]
      %v5582 = vld [vmem:[%s408 + $0x1a] sm:$0xff]
      %v5583 = vld [vmem:[%s408 + $0x22] sm:$0xff]
      %v5584 = vld [vmem:[%s408 + $0x2a] sm:$0xff]
      %v5585 = vld [vmem:[%s408 + $0x32] sm:$0xff]
      %v5586 = vld [vmem:[%s408 + $0x3a] sm:$0xff]
      %v5587 = vld [vmem:[%s408 + $0x42] sm:$0xff]
      %v5588 = vld [vmem:[%s408 + $0x4a] sm:$0xff]
      %v5589 = vld [vmem:[%s408 + $0x52] sm:$0xff]
      %5600 = vrot.lane.b32.xlu0 %v5580, 48
      %v5601 = vpop.permute.xlu0 %5600
      %5602 = vrot.lane.b32.xlu0 %v5581, 48
      %v5603 = vpop.permute.xlu0 %5602
      %5604 = vrot.lane.b32.xlu0 %v5582, 48
      %v5605 = vpop.permute.xlu0 %5604
      %5606 = vrot.lane.b32.xlu0 %v5583, 48
      %v5607 = vpop.permute.xlu0 %5606
      %5608 = vrot.lane.b32.xlu0 %v5584, 48
      %v5609 = vpop.permute.xlu0 %5608
      %5610 = vrot.lane.b32.xlu0 %v5585, 48
      %v5611 = vpop.permute.xlu0 %5610
      %5612 = vrot.lane.b32.xlu0 %v5586, 48
      %v5613 = vpop.permute.xlu0 %5612
      %5614 = vrot.lane.b32.xlu0 %v5587, 48
      %v5615 = vpop.permute.xlu0 %5614
      %5616 = vrot.lane.b32.xlu0 %v5588, 48
      %v5617 = vpop.permute.xlu0 %5616
      %5618 = vrot.lane.b32.xlu0 %v5589, 48
      %v5619 = vpop.permute.xlu0 %5618
      %5630 = vst.msk [vmem:[#allocation3] sm:$0xff] %vm1112, %v5601
      %5631 = vst.msk [vmem:[#allocation3 + $0x10] sm:$0xff] %vm1112, %v5603
      %5632 = vst.msk [vmem:[#allocation3 + $0x20] sm:$0xff] %vm1112, %v5605
      %5633 = vst.msk [vmem:[#allocation3 + $0x30] sm:$0xff] %vm1112, %v5607
      %5634 = vst.msk [vmem:[#allocation3 + $0x40] sm:$0xff] %vm1112, %v5609
      %5635 = vst.msk [vmem:[#allocation3 + $0x50] sm:$0xff] %vm1112, %v5611
      %5636 = vst.msk [vmem:[#allocation3 + $0x60] sm:$0xff] %vm1112, %v5613
      %5637 = vst.msk [vmem:[#allocation3 + $0x70] sm:$0xff] %vm1112, %v5615
      %5638 = vst.msk [vmem:[#allocation3 + $0x80] sm:$0xff] %vm1112, %v5617
      %5639 = vst.msk [vmem:[#allocation3 + $0x90] sm:$0xff] %vm1112, %v5619
      %v5640 = vld [vmem:[%s408 + $0xb] sm:$0xff]
      %v5641 = vld [vmem:[%s408 + $0x13] sm:$0xff]
      %v5642 = vld [vmem:[%s408 + $0x1b] sm:$0xff]
      %v5643 = vld [vmem:[%s408 + $0x23] sm:$0xff]
      %v5644 = vld [vmem:[%s408 + $0x2b] sm:$0xff]
      %v5645 = vld [vmem:[%s408 + $0x33] sm:$0xff]
      %v5646 = vld [vmem:[%s408 + $0x3b] sm:$0xff]
      %v5647 = vld [vmem:[%s408 + $0x43] sm:$0xff]
      %v5648 = vld [vmem:[%s408 + $0x4b] sm:$0xff]
      %v5649 = vld [vmem:[%s408 + $0x53] sm:$0xff]
      %5660 = vrot.lane.b32.xlu0 %v5640, 64
      %v5661 = vpop.permute.xlu0 %5660
      %5662 = vrot.lane.b32.xlu0 %v5641, 64
      %v5663 = vpop.permute.xlu0 %5662
      %5664 = vrot.lane.b32.xlu0 %v5642, 64
      %v5665 = vpop.permute.xlu0 %5664
      %5666 = vrot.lane.b32.xlu0 %v5643, 64
      %v5667 = vpop.permute.xlu0 %5666
      %5668 = vrot.lane.b32.xlu0 %v5644, 64
      %v5669 = vpop.permute.xlu0 %5668
      %5670 = vrot.lane.b32.xlu0 %v5645, 64
      %v5671 = vpop.permute.xlu0 %5670
      %5672 = vrot.lane.b32.xlu0 %v5646, 64
      %v5673 = vpop.permute.xlu0 %5672
      %5674 = vrot.lane.b32.xlu0 %v5647, 64
      %v5675 = vpop.permute.xlu0 %5674
      %5676 = vrot.lane.b32.xlu0 %v5648, 64
      %v5677 = vpop.permute.xlu0 %5676
      %5678 = vrot.lane.b32.xlu0 %v5649, 64
      %v5679 = vpop.permute.xlu0 %5678
      %5690 = vst.msk [vmem:[#allocation3] sm:$0xff] %vm1329, %v5661
      %5691 = vst.msk [vmem:[#allocation3 + $0x10] sm:$0xff] %vm1329, %v5663
      %5692 = vst.msk [vmem:[#allocation3 + $0x20] sm:$0xff] %vm1329, %v5665
      %5693 = vst.msk [vmem:[#allocation3 + $0x30] sm:$0xff] %vm1329, %v5667
      %5694 = vst.msk [vmem:[#allocation3 + $0x40] sm:$0xff] %vm1329, %v5669
      %5695 = vst.msk [vmem:[#allocation3 + $0x50] sm:$0xff] %vm1329, %v5671
      %5696 = vst.msk [vmem:[#allocation3 + $0x60] sm:$0xff] %vm1329, %v5673
      %5697 = vst.msk [vmem:[#allocation3 + $0x70] sm:$0xff] %vm1329, %v5675
      %5698 = vst.msk [vmem:[#allocation3 + $0x80] sm:$0xff] %vm1329, %v5677
      %5699 = vst.msk [vmem:[#allocation3 + $0x90] sm:$0xff] %vm1329, %v5679
      %v5700 = vld [vmem:[%s408 + $0xc] sm:$0xff]
      %v5701 = vld [vmem:[%s408 + $0x14] sm:$0xff]
      %v5702 = vld [vmem:[%s408 + $0x1c] sm:$0xff]
      %v5703 = vld [vmem:[%s408 + $0x24] sm:$0xff]
      %v5704 = vld [vmem:[%s408 + $0x2c] sm:$0xff]
      %v5705 = vld [vmem:[%s408 + $0x34] sm:$0xff]
      %v5706 = vld [vmem:[%s408 + $0x3c] sm:$0xff]
      %v5707 = vld [vmem:[%s408 + $0x44] sm:$0xff]
      %v5708 = vld [vmem:[%s408 + $0x4c] sm:$0xff]
      %v5709 = vld [vmem:[%s408 + $0x54] sm:$0xff]
      %5720 = vrot.lane.b32.xlu0 %v5700, 80
      %v5721 = vpop.permute.xlu0 %5720
      %5722 = vrot.lane.b32.xlu0 %v5701, 80
      %v5723 = vpop.permute.xlu0 %5722
      %5724 = vrot.lane.b32.xlu0 %v5702, 80
      %v5725 = vpop.permute.xlu0 %5724
      %5726 = vrot.lane.b32.xlu0 %v5703, 80
      %v5727 = vpop.permute.xlu0 %5726
      %5728 = vrot.lane.b32.xlu0 %v5704, 80
      %v5729 = vpop.permute.xlu0 %5728
      %5730 = vrot.lane.b32.xlu0 %v5705, 80
      %v5731 = vpop.permute.xlu0 %5730
      %5732 = vrot.lane.b32.xlu0 %v5706, 80
      %v5733 = vpop.permute.xlu0 %5732
      %5734 = vrot.lane.b32.xlu0 %v5707, 80
      %v5735 = vpop.permute.xlu0 %5734
      %5736 = vrot.lane.b32.xlu0 %v5708, 80
      %v5737 = vpop.permute.xlu0 %5736
      %5738 = vrot.lane.b32.xlu0 %v5709, 80
      %v5739 = vpop.permute.xlu0 %5738
      %5750 = vst.msk [vmem:[#allocation3] sm:$0xff] %vm1546, %v5721
      %5751 = vst.msk [vmem:[#allocation3 + $0x10] sm:$0xff] %vm1546, %v5723
      %5752 = vst.msk [vmem:[#allocation3 + $0x20] sm:$0xff] %vm1546, %v5725
      %5753 = vst.msk [vmem:[#allocation3 + $0x30] sm:$0xff] %vm1546, %v5727
      %5754 = vst.msk [vmem:[#allocation3 + $0x40] sm:$0xff] %vm1546, %v5729
      %5755 = vst.msk [vmem:[#allocation3 + $0x50] sm:$0xff] %vm1546, %v5731
      %5756 = vst.msk [vmem:[#allocation3 + $0x60] sm:$0xff] %vm1546, %v5733
      %5757 = vst.msk [vmem:[#allocation3 + $0x70] sm:$0xff] %vm1546, %v5735
      %5758 = vst.msk [vmem:[#allocation3 + $0x80] sm:$0xff] %vm1546, %v5737
      %5759 = vst.msk [vmem:[#allocation3 + $0x90] sm:$0xff] %vm1546, %v5739
      %v5760 = vld [vmem:[%s408 + $0x14] sm:$0xff]
      %v5761 = vld [vmem:[%s408 + $0x1c] sm:$0xff]
      %v5762 = vld [vmem:[%s408 + $0x24] sm:$0xff]
      %v5763 = vld [vmem:[%s408 + $0x2c] sm:$0xff]
      %v5764 = vld [vmem:[%s408 + $0x34] sm:$0xff]
      %v5765 = vld [vmem:[%s408 + $0x3c] sm:$0xff]
      %v5766 = vld [vmem:[%s408 + $0x44] sm:$0xff]
      %v5767 = vld [vmem:[%s408 + $0x4c] sm:$0xff]
      %v5768 = vld [vmem:[%s408 + $0x54] sm:$0xff]
      %v5769 = vld [vmem:[%s408 + $0x5c] sm:$0xff]
      %5780 = vrot.lane.b32.xlu0 %v5760, 96
      %v5781 = vpop.permute.xlu0 %5780
      %5782 = vrot.lane.b32.xlu0 %v5761, 96
      %v5783 = vpop.permute.xlu0 %5782
      %5784 = vrot.lane.b32.xlu0 %v5762, 96
      %v5785 = vpop.permute.xlu0 %5784
      %5786 = vrot.lane.b32.xlu0 %v5763, 96
      %v5787 = vpop.permute.xlu0 %5786
      %5788 = vrot.lane.b32.xlu0 %v5764, 96
      %v5789 = vpop.permute.xlu0 %5788
      %5790 = vrot.lane.b32.xlu0 %v5765, 96
      %v5791 = vpop.permute.xlu0 %5790
      %5792 = vrot.lane.b32.xlu0 %v5766, 96
      %v5793 = vpop.permute.xlu0 %5792
      %5794 = vrot.lane.b32.xlu0 %v5767, 96
      %v5795 = vpop.permute.xlu0 %5794
      %5796 = vrot.lane.b32.xlu0 %v5768, 96
      %v5797 = vpop.permute.xlu0 %5796
      %5798 = vrot.lane.b32.xlu0 %v5769, 96
      %v5799 = vpop.permute.xlu0 %5798
      %5810 = vst.msk [vmem:[#allocation3] sm:$0xff] %vm1763, %v5781
      %5811 = vst.msk [vmem:[#allocation3 + $0x10] sm:$0xff] %vm1763, %v5783
      %5812 = vst.msk [vmem:[#allocation3 + $0x20] sm:$0xff] %vm1763, %v5785
      %5813 = vst.msk [vmem:[#allocation3 + $0x30] sm:$0xff] %vm1763, %v5787
      %5814 = vst.msk [vmem:[#allocation3 + $0x40] sm:$0xff] %vm1763, %v5789
      %5815 = vst.msk [vmem:[#allocation3 + $0x50] sm:$0xff] %vm1763, %v5791
      %5816 = vst.msk [vmem:[#allocation3 + $0x60] sm:$0xff] %vm1763, %v5793
      %5817 = vst.msk [vmem:[#allocation3 + $0x70] sm:$0xff] %vm1763, %v5795
      %5818 = vst.msk [vmem:[#allocation3 + $0x80] sm:$0xff] %vm1763, %v5797
      %5819 = vst.msk [vmem:[#allocation3 + $0x90] sm:$0xff] %vm1763, %v5799
      %v5820 = vld [vmem:[%s408 + $0x15] sm:$0xff]
      %v5821 = vld [vmem:[%s408 + $0x1d] sm:$0xff]
      %v5822 = vld [vmem:[%s408 + $0x25] sm:$0xff]
      %v5823 = vld [vmem:[%s408 + $0x2d] sm:$0xff]
      %v5824 = vld [vmem:[%s408 + $0x35] sm:$0xff]
      %v5825 = vld [vmem:[%s408 + $0x3d] sm:$0xff]
      %v5826 = vld [vmem:[%s408 + $0x45] sm:$0xff]
      %v5827 = vld [vmem:[%s408 + $0x4d] sm:$0xff]
      %v5828 = vld [vmem:[%s408 + $0x55] sm:$0xff]
      %v5829 = vld [vmem:[%s408 + $0x5d] sm:$0xff]
      %5840 = vrot.lane.b32.xlu0 %v5820, 112
      %v5841 = vpop.permute.xlu0 %5840
      %5842 = vrot.lane.b32.xlu0 %v5821, 112
      %v5843 = vpop.permute.xlu0 %5842
      %5844 = vrot.lane.b32.xlu0 %v5822, 112
      %v5845 = vpop.permute.xlu0 %5844
      %5846 = vrot.lane.b32.xlu0 %v5823, 112
      %v5847 = vpop.permute.xlu0 %5846
      %5848 = vrot.lane.b32.xlu0 %v5824, 112
      %v5849 = vpop.permute.xlu0 %5848
      %5850 = vrot.lane.b32.xlu0 %v5825, 112
      %v5851 = vpop.permute.xlu0 %5850
      %5852 = vrot.lane.b32.xlu0 %v5826, 112
      %v5853 = vpop.permute.xlu0 %5852
      %5854 = vrot.lane.b32.xlu0 %v5827, 112
      %v5855 = vpop.permute.xlu0 %5854
      %5856 = vrot.lane.b32.xlu0 %v5828, 112
      %v5857 = vpop.permute.xlu0 %5856
      %5858 = vrot.lane.b32.xlu0 %v5829, 112
      %v5859 = vpop.permute.xlu0 %5858
      %5870 = vst.msk [vmem:[#allocation3] sm:$0xff] %vm1980, %v5841
      %5871 = vst.msk [vmem:[#allocation3 + $0x10] sm:$0xff] %vm1980, %v5843
      %5872 = vst.msk [vmem:[#allocation3 + $0x20] sm:$0xff] %vm1980, %v5845
      %5873 = vst.msk [vmem:[#allocation3 + $0x30] sm:$0xff] %vm1980, %v5847
      %5874 = vst.msk [vmem:[#allocation3 + $0x40] sm:$0xff] %vm1980, %v5849
      %5875 = vst.msk [vmem:[#allocation3 + $0x50] sm:$0xff] %vm1980, %v5851
      %5876 = vst.msk [vmem:[#allocation3 + $0x60] sm:$0xff] %vm1980, %v5853
      %5877 = vst.msk [vmem:[#allocation3 + $0x70] sm:$0xff] %vm1980, %v5855
      %5878 = vst.msk [vmem:[#allocation3 + $0x80] sm:$0xff] %vm1980, %v5857
      %5879 = vst.msk [vmem:[#allocation3 + $0x90] sm:$0xff] %vm1980, %v5859
      %v5880 = vld [vmem:[%s408 + $0x16] sm:$0xff]
      %v5881 = vld [vmem:[%s408 + $0x1e] sm:$0xff]
      %v5882 = vld [vmem:[%s408 + $0x26] sm:$0xff]
      %v5883 = vld [vmem:[%s408 + $0x2e] sm:$0xff]
      %v5884 = vld [vmem:[%s408 + $0x36] sm:$0xff]
      %v5885 = vld [vmem:[%s408 + $0x3e] sm:$0xff]
      %v5886 = vld [vmem:[%s408 + $0x46] sm:$0xff]
      %v5887 = vld [vmem:[%s408 + $0x4e] sm:$0xff]
      %v5888 = vld [vmem:[%s408 + $0x56] sm:$0xff]
      %v5889 = vld [vmem:[%s408 + $0x5e] sm:$0xff]
      %5890 = vst.msk [vmem:[#allocation3 + $0x8] sm:$0xff] %vm461, %v5880
      %5891 = vst.msk [vmem:[#allocation3 + $0x18] sm:$0xff] %vm461, %v5881
      %5892 = vst.msk [vmem:[#allocation3 + $0x28] sm:$0xff] %vm461, %v5882
      %5893 = vst.msk [vmem:[#allocation3 + $0x38] sm:$0xff] %vm461, %v5883
      %5894 = vst.msk [vmem:[#allocation3 + $0x48] sm:$0xff] %vm461, %v5884
      %5895 = vst.msk [vmem:[#allocation3 + $0x58] sm:$0xff] %vm461, %v5885
      %5896 = vst.msk [vmem:[#allocation3 + $0x68] sm:$0xff] %vm461, %v5886
      %5897 = vst.msk [vmem:[#allocation3 + $0x78] sm:$0xff] %vm461, %v5887
      %5898 = vst.msk [vmem:[#allocation3 + $0x88] sm:$0xff] %vm461, %v5888
      %5899 = vst.msk [vmem:[#allocation3 + $0x98] sm:$0xff] %vm461, %v5889
      %v5900 = vld [vmem:[#allocation3] sm:$0xff]
      %v5901 = vld [vmem:[#allocation3 + $0x8] sm:$0xff]
      %v5902 = vld [vmem:[#allocation3 + $0x10] sm:$0xff]
      %v5903 = vld [vmem:[#allocation3 + $0x18] sm:$0xff]
      %v5904 = vld [vmem:[#allocation3 + $0x20] sm:$0xff]
      %v5905 = vld [vmem:[#allocation3 + $0x28] sm:$0xff]
      %v5906 = vld [vmem:[#allocation3 + $0x30] sm:$0xff]
      %v5907 = vld [vmem:[#allocation3 + $0x38] sm:$0xff]
      %v5908 = vld [vmem:[#allocation3 + $0x40] sm:$0xff]
      %v5909 = vld [vmem:[#allocation3 + $0x48] sm:$0xff]
      %v5910 = vld [vmem:[#allocation3 + $0x50] sm:$0xff]
      %v5911 = vld [vmem:[#allocation3 + $0x58] sm:$0xff]
      %v5912 = vld [vmem:[#allocation3 + $0x60] sm:$0xff]
      %v5913 = vld [vmem:[#allocation3 + $0x68] sm:$0xff]
      %v5914 = vld [vmem:[#allocation3 + $0x70] sm:$0xff]
      %v5915 = vld [vmem:[#allocation3 + $0x78] sm:$0xff]
      %v5916 = vld [vmem:[#allocation3 + $0x80] sm:$0xff]
      %v5917 = vld [vmem:[#allocation3 + $0x88] sm:$0xff]
      %v5918 = vld [vmem:[#allocation3 + $0x90] sm:$0xff]
      %v5919 = vld [vmem:[#allocation3 + $0x98] sm:$0xff]
      %v5920 = vpack.c.bf16 %v5902, %v5900
      %v5921 = vpack.c.bf16 %v5903, %v5901
      %v5922 = vpack.c.bf16 %v5906, %v5904
      %v5923 = vpack.c.bf16 %v5907, %v5905
      %v5924 = vpack.c.bf16 %v5910, %v5908
      %v5925 = vpack.c.bf16 %v5911, %v5909
      %v5926 = vpack.c.bf16 %v5914, %v5912
      %v5927 = vpack.c.bf16 %v5915, %v5913
      %v5928 = vpack.c.bf16 %v5918, %v5916
      %v5929 = vpack.c.bf16 %v5919, %v5917
      %s5930 = scalar_lea.vmem %s1, 144
      %v5931 = vld [vmem:[%s5930] sm:$0xf]
      %v5932 = vld [vmem:[%s5930 + $0x4] sm:$0xf]
      %v5933 = vld [vmem:[%s5930 + $0x8] sm:$0xf]
      %v5934 = vld [vmem:[%s5930 + $0xc] sm:$0xf]
      %v5935 = vld [vmem:[%s5930 + $0x10] sm:$0xf]
      %v5936 = vld [vmem:[%s5930 + $0x14] sm:$0xf]
      %v5937 = vld [vmem:[%s5930 + $0x18] sm:$0xf]
      %v5938 = vld [vmem:[%s5930 + $0x1c] sm:$0xf]
      %v5939 = vld [vmem:[%s5930 + $0x20] sm:$0xf]
      %v5940 = vld [vmem:[%s5930 + $0x24] sm:$0xf]
      %v5941 = vld [vmem:[%s5930 + $0x28] sm:$0xf]
      %v5942 = vld [vmem:[%s5930 + $0x2c] sm:$0xf]
      %v5943 = vld [vmem:[%s5930 + $0x30] sm:$0xf]
      %v5944 = vld [vmem:[%s5930 + $0x34] sm:$0xf]
      %v5945 = vld [vmem:[%s5930 + $0x38] sm:$0xf]
      %v5946 = vld [vmem:[%s5930 + $0x3c] sm:$0xf]
      %v5947 = vld [vmem:[%s5930 + $0x40] sm:$0xf]
      %v5948 = vld [vmem:[%s5930 + $0x44] sm:$0xf]
      %s5949 = scalar_lea.vmem %s2, 4
      %v5950 = vld [vmem:[%s5949] sm:$0x1]
      %v5951 = vperm.slane %v5950, 0
      %v5970 = vunpack.c.l.b16 %v5931
      %v5971 = vunpack.c.l.b16 %v5932
      %v5972 = vunpack.c.l.b16 %v5933
      %v5973 = vunpack.c.l.b16 %v5934
      %v5974 = vunpack.c.l.b16 %v5935
      %v5975 = vunpack.c.l.b16 %v5936
      %v5976 = vunpack.c.l.b16 %v5937
      %v5977 = vunpack.c.l.b16 %v5938
      %v5978 = vunpack.c.l.b16 %v5939
      %v5979 = vunpack.c.l.b16 %v5940
      %v5980 = vunpack.c.l.b16 %v5941
      %v5981 = vunpack.c.l.b16 %v5942
      %v5982 = vunpack.c.l.b16 %v5943
      %v5983 = vunpack.c.l.b16 %v5944
      %v5984 = vunpack.c.l.b16 %v5945
      %v5985 = vunpack.c.l.b16 %v5946
      %v5986 = vunpack.c.l.b16 %v5947
      %v5987 = vunpack.c.l.b16 %v5948
      %v5988 = vpack.c.b16 %v5971, %v5970
      %v5989 = vpack.c.b16 %v5973, %v5972
      %v5990 = vpack.c.b16 %v5975, %v5974
      %v5991 = vpack.c.b16 %v5977, %v5976
      %v5992 = vpack.c.b16 %v5979, %v5978
      %v5993 = vpack.c.b16 %v5981, %v5980
      %v5994 = vpack.c.b16 %v5983, %v5982
      %v5995 = vpack.c.b16 %v5985, %v5984
      %v5996 = vpack.c.b16 %v5987, %v5986
      %v6007 = vsel %vm461, %v5921, 0
      %v6010 = vsel %vm461, %v5923, 0
      %v6013 = vsel %vm461, %v5925, 0
      %v6016 = vsel %vm461, %v5927, 0
      %v6019 = vsel %vm461, %v5929, 0
      %6021 = vmatpush.bf16.msra.mxu0 %v5995
      %6022 = vmatpush.bf16.msra.mxu0 %v5994
      %6023 = vmatpush.bf16.msra.mxu0 %v5993
      %6024 = vmatpush.bf16.msra.mxu0 %v5992
      %6025 = vmatpush.bf16.msra.mxu0 %v5991
      %6026 = vmatpush.bf16.msra.mxu0 %v5990
      %6027 = vmatpush.bf16.msra.mxu0 %v5989
      %6028 = vmatpush.bf16.msra.mxu0 %v5988
      %6029 = vmatmul.bf16.gmra.mxu0 %v5920
      %v6030 = vpop.f32.mrf.mxu0
      %v6031 = vadd.f32 %v5951, %v6030
      %v6032 = vpop.f32.mrf.mxu0
      %v6033 = vadd.f32 %v5951, %v6032
      %6034 = vmatmul.bf16.gmra.mxu0 %v5922
      %v6035 = vpop.f32.mrf.mxu0
      %v6036 = vadd.f32 %v5951, %v6035
      %v6037 = vpop.f32.mrf.mxu0
      %v6038 = vadd.f32 %v5951, %v6037
      %6039 = vmatmul.bf16.gmra.mxu0 %v5924
      %v6040 = vpop.f32.mrf.mxu0
      %v6041 = vadd.f32 %v5951, %v6040
      %v6042 = vpop.f32.mrf.mxu0
      %v6043 = vadd.f32 %v5951, %v6042
      %6044 = vmatmul.bf16.gmra.mxu0 %v5926
      %v6045 = vpop.f32.mrf.mxu0
      %v6046 = vadd.f32 %v5951, %v6045
      %v6047 = vpop.f32.mrf.mxu0
      %v6048 = vadd.f32 %v5951, %v6047
      %6049 = vmatmul.bf16.gmra.mxu0 %v5928
      %v6050 = vpop.f32.mrf.mxu0
      %v6051 = vadd.f32 %v5951, %v6050
      %v6052 = vpop.f32.mrf.mxu0
      %v6053 = vadd.f32 %v5951, %v6052
      %6054 = vdwg.mxu0
      %6055 = vmatpush.bf16.msra.mxu0 0
      %6056 = vmatpush.bf16.msra.mxu0 0
      %6057 = vmatpush.bf16.msra.mxu0 0
      %6058 = vmatpush.bf16.msra.mxu0 0
      %6059 = vmatpush.bf16.msra.mxu0 0
      %6060 = vmatpush.bf16.msra.mxu0 0
      %6061 = vmatpush.bf16.msra.mxu0 0
      %6062 = vmatpush.bf16.msra.mxu0 %v5996
      %6063 = vmatmul.bf16.gmra.mxu0 %v6007
      %v6064 = vpop.f32.mrf.mxu0
      %v6065 = vadd.f32 %v6031, %v6064
      %v6066 = vpop.f32.mrf.mxu0
      %v6067 = vadd.f32 %v6033, %v6066
      %6068 = vmatmul.bf16.gmra.mxu0 %v6010
      %v6069 = vpop.f32.mrf.mxu0
      %v6070 = vadd.f32 %v6036, %v6069
      %v6071 = vpop.f32.mrf.mxu0
      %v6072 = vadd.f32 %v6038, %v6071
      %6073 = vmatmul.bf16.gmra.mxu0 %v6013
      %v6074 = vpop.f32.mrf.mxu0
      %v6075 = vadd.f32 %v6041, %v6074
      %v6076 = vpop.f32.mrf.mxu0
      %v6077 = vadd.f32 %v6043, %v6076
      %6078 = vmatmul.bf16.gmra.mxu0 %v6016
      %v6079 = vpop.f32.mrf.mxu0
      %v6080 = vadd.f32 %v6046, %v6079
      %v6081 = vpop.f32.mrf.mxu0
      %v6082 = vadd.f32 %v6048, %v6081
      %6083 = vmatmul.bf16.gmra.mxu0 %v6019
      %v6084 = vpop.f32.mrf.mxu0
      %v6085 = vadd.f32 %v6051, %v6084
      %v6086 = vpop.f32.mrf.mxu0
      %v6087 = vadd.f32 %v6053, %v6086
      %6088 = vdwg.mxu0
      %vm6089 = vcmp.ge.f32.partialorder %v6065, 0.0
      %vm6090 = vcmp.ge.f32.partialorder %v6067, 0.0
      %vm6091 = vcmp.ge.f32.partialorder %v6070, 0.0
      %vm6092 = vcmp.ge.f32.partialorder %v6072, 0.0
      %vm6093 = vcmp.ge.f32.partialorder %v6075, 0.0
      %vm6094 = vcmp.ge.f32.partialorder %v6077, 0.0
      %vm6095 = vcmp.ge.f32.partialorder %v6080, 0.0
      %vm6096 = vcmp.ge.f32.partialorder %v6082, 0.0
      %vm6097 = vcmp.ge.f32.partialorder %v6085, 0.0
      %vm6098 = vcmp.ge.f32.partialorder %v6087, 0.0
      %v6099 = vld [vmem:[%s5949 + $0x1] sm:$0x1]
      %v6100 = vperm.slane %v6099, 0
      %v6101 = vmul.f32 %v6100, %v6065
      %v6102 = vmul.f32 %v6100, %v6067
      %v6103 = vmul.f32 %v6100, %v6070
      %v6104 = vmul.f32 %v6100, %v6072
      %v6105 = vmul.f32 %v6100, %v6075
      %v6106 = vmul.f32 %v6100, %v6077
      %v6107 = vmul.f32 %v6100, %v6080
      %v6108 = vmul.f32 %v6100, %v6082
      %v6109 = vmul.f32 %v6100, %v6085
      %v6110 = vmul.f32 %v6100, %v6087
      %v6111 = vsel %vm6089, %v6065, %v6101
      %v6112 = vsel %vm6090, %v6067, %v6102
      %v6113 = vsel %vm6091, %v6070, %v6103
      %v6114 = vsel %vm6092, %v6072, %v6104
      %v6115 = vsel %vm6093, %v6075, %v6105
      %v6116 = vsel %vm6094, %v6077, %v6106
      %v6117 = vsel %vm6095, %v6080, %v6107
      %v6118 = vsel %vm6096, %v6082, %v6108
      %v6119 = vsel %vm6097, %v6085, %v6109
      %v6120 = vsel %vm6098, %v6087, %v6110
      %6121 = vst.msk [vmem:[#allocation2] sm:$0xff] %vm461, 0.0
      %6122 = vst.msk [vmem:[#allocation2 + $0x8] sm:$0xff] %vm461, 0.0
      %6123 = vst.msk [vmem:[#allocation2 + $0x10] sm:$0xff] %vm461, 0.0
      %6124 = vst.msk [vmem:[#allocation2 + $0x18] sm:$0xff] %vm461, 0.0
      %6125 = vst.msk [vmem:[#allocation2 + $0x20] sm:$0xff] %vm461, 0.0
      %6126 = vst.msk [vmem:[#allocation2 + $0x28] sm:$0xff] %vm461, 0.0
      %6127 = vst.msk [vmem:[#allocation2 + $0x30] sm:$0xff] %vm461, 0.0
      %6128 = vst.msk [vmem:[#allocation2 + $0x38] sm:$0xff] %vm461, 0.0
      %6129 = vst.msk [vmem:[#allocation2 + $0x40] sm:$0xff] %vm461, 0.0
      %6130 = vst.msk [vmem:[#allocation2 + $0x48] sm:$0xff] %vm461, 0.0
      %6131 = vst.msk [vmem:[#allocation2 + $0x50] sm:$0xff] %vm461, 0.0
      %6132 = vst.msk [vmem:[#allocation2 + $0x58] sm:$0xff] %vm461, 0.0
      %6133 = vst.msk [vmem:[#allocation2 + $0x60] sm:$0xff] %vm461, 0.0
      %6134 = vst.msk [vmem:[#allocation2 + $0x68] sm:$0xff] %vm461, 0.0
      %6135 = vst.msk [vmem:[#allocation2 + $0x70] sm:$0xff] %vm461, 0.0
      %6136 = vst.msk [vmem:[#allocation2 + $0x78] sm:$0xff] %vm461, 0.0
      %6137 = vst.msk [vmem:[#allocation2 + $0x80] sm:$0xff] %vm461, 0.0
      %6138 = vst.msk [vmem:[#allocation2 + $0x88] sm:$0xff] %vm461, 0.0
      %6139 = vst.msk [vmem:[#allocation2 + $0x90] sm:$0xff] %vm461, 0.0
      %6140 = vst.msk [vmem:[#allocation2 + $0x98] sm:$0xff] %vm461, 0.0
      %6141 = vst.msk [vmem:[#allocation2 + $0xa0] sm:$0xff] %vm461, 0.0
      %6142 = vst.msk [vmem:[#allocation2 + $0xa8] sm:$0xff] %vm461, 0.0
      %6143 = vst.msk [vmem:[#allocation2 + $0xb0] sm:$0xff] %vm461, 0.0
      %6144 = vst.msk [vmem:[#allocation2 + $0xb8] sm:$0xff] %vm461, 0.0
      %6145 = vst.msk [vmem:[#allocation2 + $0xc0] sm:$0xff] %vm461, 0.0
      %6146 = vst.msk [vmem:[#allocation2 + $0xc8] sm:$0xff] %vm461, 0.0
      %6147 = vst.msk [vmem:[#allocation2 + $0xd0] sm:$0xff] %vm461, 0.0
      %6148 = vst.msk [vmem:[#allocation2 + $0xd8] sm:$0xff] %vm461, 0.0
      %6149 = vst.msk [vmem:[#allocation2 + $0xe0] sm:$0xff] %vm461, 0.0
      %6150 = vst.msk [vmem:[#allocation2 + $0xe8] sm:$0xff] %vm461, 0.0
      %6151 = vst.msk [vmem:[#allocation2 + $0xf0] sm:$0xff] %vm461, 0.0
      %6152 = vst.msk [vmem:[#allocation2 + $0xf8] sm:$0xff] %vm461, 0.0
      %6153 = vst.msk [vmem:[#allocation2 + $0x100] sm:$0xff] %vm461, 0.0
      %6154 = vst.msk [vmem:[#allocation2 + $0x108] sm:$0xff] %vm461, 0.0
      %6155 = vst.msk [vmem:[#allocation2 + $0x110] sm:$0xff] %vm461, 0.0
      %6156 = vst.msk [vmem:[#allocation2 + $0x118] sm:$0xff] %vm461, 0.0
      %6157 = vst.msk [vmem:[#allocation2 + $0x120] sm:$0xff] %vm461, 0.0
      %6158 = vst.msk [vmem:[#allocation2 + $0x128] sm:$0xff] %vm461, 0.0
      %6159 = vst.msk [vmem:[#allocation2 + $0x130] sm:$0xff] %vm461, 0.0
      %6160 = vst.msk [vmem:[#allocation2 + $0x138] sm:$0xff] %vm461, 0.0
      %6161 = vst.msk [vmem:[#allocation2 + $0x140] sm:$0xff] %vm461, 0.0
      %6162 = vst.msk [vmem:[#allocation2 + $0x148] sm:$0xf] %vm2674, 0.0
      %v6163 = vld [vmem:[%s5] sm:$0xff]
      %v6164 = vld [vmem:[%s5 + $0x8] sm:$0xff]
      %v6165 = vld [vmem:[%s5 + $0x10] sm:$0xff]
      %v6166 = vld [vmem:[%s5 + $0x18] sm:$0xff]
      %v6167 = vld [vmem:[%s5 + $0x20] sm:$0xf]
      %vm6168 = vcmask 654336
      %v6170 = vsel %vm6168, %v6163, 0
      %v6173 = vsel %vm6168, %v6164, 0
      %v6176 = vsel %vm6168, %v6165, 0
      %v6179 = vsel %vm6168, %v6166, 0
      %v6182 = vsel %vm6168, %v6167, 0
      %6184 = vmatpush.msra.mxu0 0.0
      %6185 = vmatpush.msra.mxu0 0.0
      %6186 = vmatpush.msra.mxu0 0.0
      %6187 = vmatpush.msra.mxu0 0.0
      %6188 = vmatpush.msra.mxu0 0.0
      %6189 = vmatpush.msra.mxu0 0.0
      %6190 = vmatpush.msra.mxu0 %v6120
      %6191 = vmatpush.msra.mxu0 %v6119
      %6192 = vmatpush.msra.mxu0 %v6118
      %6193 = vmatpush.msra.mxu0 %v6117
      %6194 = vmatpush.msra.mxu0 %v6116
      %6195 = vmatpush.msra.mxu0 %v6115
      %6196 = vmatpush.msra.mxu0 %v6114
      %6197 = vmatpush.msra.mxu0 %v6113
      %6198 = vmatpush.msra.mxu0 %v6112
      %6199 = vmatpush.msra.mxu0 %v6111
      %6200 = vmatmul.f32.gmra.mxu0 %v6170
      %v6201 = vpop.f32.mrf.mxu0
      %v6202 = vadd.f32 0.0, %v6201
      %6203 = vmatmul.f32.gmra.mxu0 %v6173
      %v6204 = vpop.f32.mrf.mxu0
      %v6205 = vadd.f32 0.0, %v6204
      %6206 = vmatmul.f32.gmra.mxu0 %v6176
      %v6207 = vpop.f32.mrf.mxu0
      %v6208 = vadd.f32 0.0, %v6207
      %6209 = vmatmul.f32.gmra.mxu0 %v6179
      %v6210 = vpop.f32.mrf.mxu0
      %v6211 = vadd.f32 0.0, %v6210
      %6212 = vmatmul.f32.gmra.mxu0 %v6182
      %v6213 = vpop.f32.mrf.mxu0
      %v6214 = vadd.f32 0.0, %v6213
      %6215 = vdwg.mxu0
      %6216 = vst.msk [vmem:[#allocation2] sm:$0xff] %vm461, %v6202
      %6217 = vst.msk [vmem:[#allocation2 + $0x8] sm:$0xff] %vm461, %v6205
      %6218 = vst.msk [vmem:[#allocation2 + $0x10] sm:$0xff] %vm461, %v6208
      %6219 = vst.msk [vmem:[#allocation2 + $0x18] sm:$0xff] %vm461, %v6211
      %6220 = vst.msk [vmem:[#allocation2 + $0x20] sm:$0xf] %vm2674, %v6214
      %v6221 = vld [vmem:[#allocation2] sm:$0xff]
      %v6222 = vld [vmem:[#allocation2 + $0x8] sm:$0xff]
      %v6223 = vld [vmem:[#allocation2 + $0x10] sm:$0xff]
      %6224 = vst.msk [vmem:[#allocation3] sm:$0xff] %vm461, %v6221
      %6225 = vst.msk [vmem:[#allocation3 + $0x10] sm:$0xff] %vm461, %v6222
      %6226 = vst.msk [vmem:[#allocation3 + $0x20] sm:$0xff] %vm461, %v6223
      %v6227 = vld [vmem:[#allocation2 + $0x1] sm:$0xff]
      %v6228 = vld [vmem:[#allocation2 + $0x9] sm:$0xff]
      %v6229 = vld [vmem:[#allocation2 + $0x11] sm:$0xff]
      %6233 = vrot.lane.b32.xlu0 %v6227, 16
      %v6234 = vpop.permute.xlu0 %6233
      %6235 = vrot.lane.b32.xlu0 %v6228, 16
      %v6236 = vpop.permute.xlu0 %6235
      %6237 = vrot.lane.b32.xlu0 %v6229, 16
      %v6238 = vpop.permute.xlu0 %6237
      %6242 = vst.msk [vmem:[#allocation3] sm:$0xff] %vm678, %v6234
      %6243 = vst.msk [vmem:[#allocation3 + $0x10] sm:$0xff] %vm678, %v6236
      %6244 = vst.msk [vmem:[#allocation3 + $0x20] sm:$0xff] %vm678, %v6238
      %v6245 = vld [vmem:[#allocation2 + $0x2] sm:$0xff]
      %v6246 = vld [vmem:[#allocation2 + $0xa] sm:$0xff]
      %v6247 = vld [vmem:[#allocation2 + $0x12] sm:$0xff]
      %6251 = vrot.lane.b32.xlu0 %v6245, 32
      %v6252 = vpop.permute.xlu0 %6251
      %6253 = vrot.lane.b32.xlu0 %v6246, 32
      %v6254 = vpop.permute.xlu0 %6253
      %6255 = vrot.lane.b32.xlu0 %v6247, 32
      %v6256 = vpop.permute.xlu0 %6255
      %6260 = vst.msk [vmem:[#allocation3] sm:$0xff] %vm895, %v6252
      %6261 = vst.msk [vmem:[#allocation3 + $0x10] sm:$0xff] %vm895, %v6254
      %6262 = vst.msk [vmem:[#allocation3 + $0x20] sm:$0xff] %vm895, %v6256
      %v6263 = vld [vmem:[#allocation2 + $0x6] sm:$0xff]
      %v6264 = vld [vmem:[#allocation2 + $0xe] sm:$0xff]
      %v6265 = vld [vmem:[#allocation2 + $0x16] sm:$0xff]
      %6269 = vrot.lane.b32.xlu0 %v6263, 48
      %v6270 = vpop.permute.xlu0 %6269
      %6271 = vrot.lane.b32.xlu0 %v6264, 48
      %v6272 = vpop.permute.xlu0 %6271
      %6273 = vrot.lane.b32.xlu0 %v6265, 48
      %v6274 = vpop.permute.xlu0 %6273
      %6278 = vst.msk [vmem:[#allocation3] sm:$0xff] %vm1112, %v6270
      %6279 = vst.msk [vmem:[#allocation3 + $0x10] sm:$0xff] %vm1112, %v6272
      %6280 = vst.msk [vmem:[#allocation3 + $0x20] sm:$0xff] %vm1112, %v6274
      %v6281 = vld [vmem:[#allocation2 + $0x7] sm:$0xff]
      %v6282 = vld [vmem:[#allocation2 + $0xf] sm:$0xff]
      %v6283 = vld [vmem:[#allocation2 + $0x17] sm:$0xff]
      %6287 = vrot.lane.b32.xlu0 %v6281, 64
      %v6288 = vpop.permute.xlu0 %6287
      %6289 = vrot.lane.b32.xlu0 %v6282, 64
      %v6290 = vpop.permute.xlu0 %6289
      %6291 = vrot.lane.b32.xlu0 %v6283, 64
      %v6292 = vpop.permute.xlu0 %6291
      %6296 = vst.msk [vmem:[#allocation3] sm:$0xff] %vm1329, %v6288
      %6297 = vst.msk [vmem:[#allocation3 + $0x10] sm:$0xff] %vm1329, %v6290
      %6298 = vst.msk [vmem:[#allocation3 + $0x20] sm:$0xff] %vm1329, %v6292
      %v6299 = vld [vmem:[#allocation2 + $0x8] sm:$0xff]
      %v6300 = vld [vmem:[#allocation2 + $0x10] sm:$0xff]
      %v6301 = vld [vmem:[#allocation2 + $0x18] sm:$0xff]
      %6305 = vrot.lane.b32.xlu0 %v6299, 80
      %v6306 = vpop.permute.xlu0 %6305
      %6307 = vrot.lane.b32.xlu0 %v6300, 80
      %v6308 = vpop.permute.xlu0 %6307
      %6309 = vrot.lane.b32.xlu0 %v6301, 80
      %v6310 = vpop.permute.xlu0 %6309
      %6314 = vst.msk [vmem:[#allocation3] sm:$0xff] %vm1546, %v6306
      %6315 = vst.msk [vmem:[#allocation3 + $0x10] sm:$0xff] %vm1546, %v6308
      %6316 = vst.msk [vmem:[#allocation3 + $0x20] sm:$0xff] %vm1546, %v6310
      %v6317 = vld [vmem:[#allocation2 + $0xc] sm:$0xff]
      %v6318 = vld [vmem:[#allocation2 + $0x14] sm:$0xff]
      %v6319 = vld [vmem:[#allocation2 + $0x1c] sm:$0xff]
      %6323 = vrot.lane.b32.xlu0 %v6317, 96
      %v6324 = vpop.permute.xlu0 %6323
      %6325 = vrot.lane.b32.xlu0 %v6318, 96
      %v6326 = vpop.permute.xlu0 %6325
      %6327 = vrot.lane.b32.xlu0 %v6319, 96
      %v6328 = vpop.permute.xlu0 %6327
      %6332 = vst.msk [vmem:[#allocation3] sm:$0xff] %vm1763, %v6324
      %6333 = vst.msk [vmem:[#allocation3 + $0x10] sm:$0xff] %vm1763, %v6326
      %6334 = vst.msk [vmem:[#allocation3 + $0x20] sm:$0xff] %vm1763, %v6328
      %v6335 = vld [vmem:[#allocation2 + $0xd] sm:$0xff]
      %v6336 = vld [vmem:[#allocation2 + $0x15] sm:$0xff]
      %v6337 = vld [vmem:[#allocation2 + $0x1d] sm:$0xff]
      %6341 = vrot.lane.b32.xlu0 %v6335, 112
      %v6342 = vpop.permute.xlu0 %6341
      %6343 = vrot.lane.b32.xlu0 %v6336, 112
      %v6344 = vpop.permute.xlu0 %6343
      %6345 = vrot.lane.b32.xlu0 %v6337, 112
      %v6346 = vpop.permute.xlu0 %6345
      %6350 = vst.msk [vmem:[#allocation3] sm:$0xff] %vm1980, %v6342
      %6351 = vst.msk [vmem:[#allocation3 + $0x10] sm:$0xff] %vm1980, %v6344
      %6352 = vst.msk [vmem:[#allocation3 + $0x20] sm:$0xff] %vm1980, %v6346
      %v6353 = vld [vmem:[#allocation2 + $0xe] sm:$0xff]
      %v6354 = vld [vmem:[#allocation2 + $0x16] sm:$0xff]
      %v6355 = vld [vmem:[#allocation2 + $0x1e] sm:$0xff]
      %6356 = vst.msk [vmem:[#allocation3 + $0x8] sm:$0xff] %vm461, %v6353
      %6357 = vst.msk [vmem:[#allocation3 + $0x18] sm:$0xff] %vm461, %v6354
      %6358 = vst.msk [vmem:[#allocation3 + $0x28] sm:$0xff] %vm461, %v6355
      %v6359 = vld [vmem:[#allocation3] sm:$0xff]
      %v6360 = vld [vmem:[#allocation3 + $0x8] sm:$0xff]
      %v6361 = vld [vmem:[#allocation3 + $0x10] sm:$0xff]
      %v6362 = vld [vmem:[#allocation3 + $0x18] sm:$0xff]
      %v6363 = vld [vmem:[#allocation3 + $0x20] sm:$0xff]
      %v6364 = vld [vmem:[#allocation3 + $0x28] sm:$0xff]
      %v6365 = vpack.c.bf16 %v6361, %v6359
      %v6366 = vpack.c.bf16 %v6362, %v6360
      %v6367 = vpack.c.bf16 %v6363, %v6363
      %v6368 = vpack.c.bf16 %v6364, %v6364
      %s6369 = scalar_lea.vmem %s1, 216
      %v6370 = vld [vmem:[%s6369] sm:$0xf]
      %v6371 = vld [vmem:[%s6369 + $0x4] sm:$0xf]
      %v6372 = vld [vmem:[%s6369 + $0x8] sm:$0xf]
      %v6373 = vld [vmem:[%s6369 + $0xc] sm:$0xf]
      %v6374 = vld [vmem:[%s6369 + $0x10] sm:$0xf]
      %v6375 = vld [vmem:[%s6369 + $0x14] sm:$0xf]
      %v6376 = vld [vmem:[%s6369 + $0x18] sm:$0xf]
      %v6377 = vld [vmem:[%s6369 + $0x1c] sm:$0xf]
      %v6378 = vld [vmem:[%s6369 + $0x20] sm:$0xf]
      %v6379 = vld [vmem:[%s6369 + $0x24] sm:$0xf]
      %v6380 = vld [vmem:[%s6369 + $0x28] sm:$0xf]
      %v6381 = vld [vmem:[%s6369 + $0x2c] sm:$0xf]
      %v6382 = vld [vmem:[%s6369 + $0x30] sm:$0xf]
      %v6383 = vld [vmem:[%s6369 + $0x34] sm:$0xf]
      %v6384 = vld [vmem:[%s6369 + $0x38] sm:$0xf]
      %v6385 = vld [vmem:[%s6369 + $0x3c] sm:$0xf]
      %v6386 = vld [vmem:[%s6369 + $0x40] sm:$0xf]
      %v6387 = vld [vmem:[%s6369 + $0x44] sm:$0xf]
      %s6388 = scalar_lea.vmem %s2, 6
      %v6389 = vld [vmem:[%s6388] sm:$0x1]
      %v6390 = vperm.slane %v6389, 0
      %v6409 = vunpack.c.l.b16 %v6370
      %v6410 = vunpack.c.l.b16 %v6371
      %v6411 = vunpack.c.l.b16 %v6372
      %v6412 = vunpack.c.l.b16 %v6373
      %v6413 = vunpack.c.l.b16 %v6374
      %v6414 = vunpack.c.l.b16 %v6375
      %v6415 = vunpack.c.l.b16 %v6376
      %v6416 = vunpack.c.l.b16 %v6377
      %v6417 = vunpack.c.l.b16 %v6378
      %v6418 = vunpack.c.l.b16 %v6379
      %v6419 = vunpack.c.l.b16 %v6380
      %v6420 = vunpack.c.l.b16 %v6381
      %v6421 = vunpack.c.l.b16 %v6382
      %v6422 = vunpack.c.l.b16 %v6383
      %v6423 = vunpack.c.l.b16 %v6384
      %v6424 = vunpack.c.l.b16 %v6385
      %v6425 = vunpack.c.l.b16 %v6386
      %v6426 = vunpack.c.l.b16 %v6387
      %v6427 = vpack.c.b16 %v6410, %v6409
      %v6428 = vpack.c.b16 %v6412, %v6411
      %v6429 = vpack.c.b16 %v6414, %v6413
      %v6430 = vpack.c.b16 %v6416, %v6415
      %v6431 = vpack.c.b16 %v6418, %v6417
      %v6432 = vpack.c.b16 %v6420, %v6419
      %v6433 = vpack.c.b16 %v6422, %v6421
      %v6434 = vpack.c.b16 %v6424, %v6423
      %v6435 = vpack.c.b16 %v6426, %v6425
      %v6446 = vsel %vm461, %v6366, 0
      %v6449 = vsel %vm461, %v6368, 0
      %6451 = vmatpush.bf16.msra.mxu0 %v6434
      %6452 = vmatpush.bf16.msra.mxu0 %v6433
      %6453 = vmatpush.bf16.msra.mxu0 %v6432
      %6454 = vmatpush.bf16.msra.mxu0 %v6431
      %6455 = vmatpush.bf16.msra.mxu0 %v6430
      %6456 = vmatpush.bf16.msra.mxu0 %v6429
      %6457 = vmatpush.bf16.msra.mxu0 %v6428
      %6458 = vmatpush.bf16.msra.mxu0 %v6427
      %6459 = vmatmul.bf16.gmra.mxu0 %v6365
      %v6460 = vpop.f32.mrf.mxu0
      %v6461 = vadd.f32 %v6390, %v6460
      %v6462 = vpop.f32.mrf.mxu0
      %v6463 = vadd.f32 %v6390, %v6462
      %6464 = vmatmul.bf16.gmra.mxu0 %v6367
      %v6465 = vpop.f32.mrf.mxu0
      %v6466 = vadd.f32 %v6390, %v6465
      %v6467 = vpop.f32.mrf.mxu0
      %6468 = vdwg.mxu0
      %6469 = vmatpush.bf16.msra.mxu0 0
      %6470 = vmatpush.bf16.msra.mxu0 0
      %6471 = vmatpush.bf16.msra.mxu0 0
      %6472 = vmatpush.bf16.msra.mxu0 0
      %6473 = vmatpush.bf16.msra.mxu0 0
      %6474 = vmatpush.bf16.msra.mxu0 0
      %6475 = vmatpush.bf16.msra.mxu0 0
      %6476 = vmatpush.bf16.msra.mxu0 %v6435
      %6477 = vmatmul.bf16.gmra.mxu0 %v6446
      %v6478 = vpop.f32.mrf.mxu0
      %v6479 = vadd.f32 %v6461, %v6478
      %v6480 = vpop.f32.mrf.mxu0
      %v6481 = vadd.f32 %v6463, %v6480
      %6482 = vmatmul.bf16.gmra.mxu0 %v6449
      %v6483 = vpop.f32.mrf.mxu0
      %v6484 = vadd.f32 %v6466, %v6483
      %v6485 = vpop.f32.mrf.mxu0
      %6486 = vdwg.mxu0
      %vm6487 = vcmp.ge.f32.partialorder %v6479, 0.0
      %vm6488 = vcmp.ge.f32.partialorder %v6481, 0.0
      %vm6489 = vcmp.ge.f32.partialorder %v6484, 0.0
      %v6490 = vld [vmem:[%s6388 + $0x1] sm:$0x1]
      %v6491 = vperm.slane %v6490, 0
      %v6492 = vmul.f32 %v6491, %v6479
      %v6493 = vmul.f32 %v6491, %v6481
      %v6494 = vmul.f32 %v6491, %v6484
      %v6495 = vsel %vm6487, %v6479, %v6492
      %v6496 = vsel %vm6488, %v6481, %v6493
      %v6497 = vsel %vm6489, %v6484, %v6494
      %6498 = vst.msk [vmem:[%s413] sm:$0xff] %vm461, 0.0
      %6499 = vst.msk [vmem:[%s413 + $0x8] sm:$0xff] %vm461, 0.0
      %6500 = vst.msk [vmem:[%s413 + $0x10] sm:$0xff] %vm461, 0.0
      %6501 = vst.msk [vmem:[%s413 + $0x18] sm:$0xff] %vm461, 0.0
      %6502 = vst.msk [vmem:[%s413 + $0x20] sm:$0xff] %vm461, 0.0
      %6503 = vst.msk [vmem:[%s413 + $0x28] sm:$0xf] %vm2674, 0.0
      %s6504 = scalar_lea.vmem %s3, 288
      %v6505 = vld [vmem:[%s6504] sm:$0xff]
      %v6506 = vld [vmem:[%s6504 + $0x8] sm:$0xff]
      %v6507 = vld [vmem:[%s6504 + $0x10] sm:$0xff]
      %6509 = vset.pattern.permute.xlu0 0
      %6510 = vperm.xlu0 %6509, %v6505
      %v6511 = vpop.permute.xlu0 %6510
      %6514 = vset.pattern.permute.xlu0 0
      %6515 = vperm.xlu0 %6514, %v6506
      %v6516 = vpop.permute.xlu0 %6515
      %6519 = vset.pattern.permute.xlu0 0
      %6520 = vperm.xlu0 %6519, %v6507
      %v6521 = vpop.permute.xlu0 %6520
      %v6523 = vmul.f32 %v6495, %v6511
      %v6524 = vmul.f32 %v6496, %v6516
      %v6525 = vmul.f32 %v6497, %v6521
      %6526 = vst.msk [vmem:[%s413 + $0x7] sm:$0xff] %vm461, %v6523
      %6527 = vst.msk [vmem:[%s413 + $0xf] sm:$0xff] %vm461, %v6524
      %6528 = vst.msk [vmem:[%s413 + $0x17] sm:$0xff] %vm461, %v6525
      %v6529 = vld [vmem:[%s413] sm:$0xff]
      %v6530 = vld [vmem:[%s413 + $0x8] sm:$0xff]
      %v6531 = vld [vmem:[%s413 + $0x10] sm:$0xff]
      %6532 = vst.msk [vmem:[#allocation3] sm:$0xff] %vm461, %v6529
      %6533 = vst.msk [vmem:[#allocation3 + $0x10] sm:$0xff] %vm461, %v6530
      %6534 = vst.msk [vmem:[#allocation3 + $0x20] sm:$0xff] %vm461, %v6531
      %v6535 = vld [vmem:[%s413 + $0x1] sm:$0xff]
      %v6536 = vld [vmem:[%s413 + $0x9] sm:$0xff]
      %v6537 = vld [vmem:[%s413 + $0x11] sm:$0xff]
      %6541 = vrot.lane.b32.xlu0 %v6535, 16
      %v6542 = vpop.permute.xlu0 %6541
      %6543 = vrot.lane.b32.xlu0 %v6536, 16
      %v6544 = vpop.permute.xlu0 %6543
      %6545 = vrot.lane.b32.xlu0 %v6537, 16
      %v6546 = vpop.permute.xlu0 %6545
      %6550 = vst.msk [vmem:[#allocation3] sm:$0xff] %vm678, %v6542
      %6551 = vst.msk [vmem:[#allocation3 + $0x10] sm:$0xff] %vm678, %v6544
      %6552 = vst.msk [vmem:[#allocation3 + $0x20] sm:$0xff] %vm678, %v6546
      %v6553 = vld [vmem:[%s413 + $0x2] sm:$0xff]
      %v6554 = vld [vmem:[%s413 + $0xa] sm:$0xff]
      %v6555 = vld [vmem:[%s413 + $0x12] sm:$0xff]
      %6559 = vrot.lane.b32.xlu0 %v6553, 32
      %v6560 = vpop.permute.xlu0 %6559
      %6561 = vrot.lane.b32.xlu0 %v6554, 32
      %v6562 = vpop.permute.xlu0 %6561
      %6563 = vrot.lane.b32.xlu0 %v6555, 32
      %v6564 = vpop.permute.xlu0 %6563
      %6568 = vst.msk [vmem:[#allocation3] sm:$0xff] %vm895, %v6560
      %6569 = vst.msk [vmem:[#allocation3 + $0x10] sm:$0xff] %vm895, %v6562
      %6570 = vst.msk [vmem:[#allocation3 + $0x20] sm:$0xff] %vm895, %v6564
      %v6571 = vld [vmem:[%s413 + $0x6] sm:$0xff]
      %v6572 = vld [vmem:[%s413 + $0xe] sm:$0xff]
      %v6573 = vld [vmem:[%s413 + $0x16] sm:$0xff]
      %6577 = vrot.lane.b32.xlu0 %v6571, 48
      %v6578 = vpop.permute.xlu0 %6577
      %6579 = vrot.lane.b32.xlu0 %v6572, 48
      %v6580 = vpop.permute.xlu0 %6579
      %6581 = vrot.lane.b32.xlu0 %v6573, 48
      %v6582 = vpop.permute.xlu0 %6581
      %6586 = vst.msk [vmem:[#allocation3] sm:$0xff] %vm1112, %v6578
      %6587 = vst.msk [vmem:[#allocation3 + $0x10] sm:$0xff] %vm1112, %v6580
      %6588 = vst.msk [vmem:[#allocation3 + $0x20] sm:$0xff] %vm1112, %v6582
      %v6589 = vld [vmem:[%s413 + $0x7] sm:$0xff]
      %v6590 = vld [vmem:[%s413 + $0xf] sm:$0xff]
      %v6591 = vld [vmem:[%s413 + $0x17] sm:$0xff]
      %6595 = vrot.lane.b32.xlu0 %v6589, 64
      %v6596 = vpop.permute.xlu0 %6595
      %6597 = vrot.lane.b32.xlu0 %v6590, 64
      %v6598 = vpop.permute.xlu0 %6597
      %6599 = vrot.lane.b32.xlu0 %v6591, 64
      %v6600 = vpop.permute.xlu0 %6599
      %6604 = vst.msk [vmem:[#allocation3] sm:$0xff] %vm1329, %v6596
      %6605 = vst.msk [vmem:[#allocation3 + $0x10] sm:$0xff] %vm1329, %v6598
      %6606 = vst.msk [vmem:[#allocation3 + $0x20] sm:$0xff] %vm1329, %v6600
      %v6607 = vld [vmem:[%s413 + $0x8] sm:$0xff]
      %v6608 = vld [vmem:[%s413 + $0x10] sm:$0xff]
      %v6609 = vld [vmem:[%s413 + $0x18] sm:$0xff]
      %6613 = vrot.lane.b32.xlu0 %v6607, 80
      %v6614 = vpop.permute.xlu0 %6613
      %6615 = vrot.lane.b32.xlu0 %v6608, 80
      %v6616 = vpop.permute.xlu0 %6615
      %6617 = vrot.lane.b32.xlu0 %v6609, 80
      %v6618 = vpop.permute.xlu0 %6617
      %6622 = vst.msk [vmem:[#allocation3] sm:$0xff] %vm1546, %v6614
      %6623 = vst.msk [vmem:[#allocation3 + $0x10] sm:$0xff] %vm1546, %v6616
      %6624 = vst.msk [vmem:[#allocation3 + $0x20] sm:$0xff] %vm1546, %v6618
      %v6625 = vld [vmem:[%s413 + $0xc] sm:$0xff]
      %v6626 = vld [vmem:[%s413 + $0x14] sm:$0xff]
      %v6627 = vld [vmem:[%s413 + $0x1c] sm:$0xff]
      %6631 = vrot.lane.b32.xlu0 %v6625, 96
      %v6632 = vpop.permute.xlu0 %6631
      %6633 = vrot.lane.b32.xlu0 %v6626, 96
      %v6634 = vpop.permute.xlu0 %6633
      %6635 = vrot.lane.b32.xlu0 %v6627, 96
      %v6636 = vpop.permute.xlu0 %6635
      %6640 = vst.msk [vmem:[#allocation3] sm:$0xff] %vm1763, %v6632
      %6641 = vst.msk [vmem:[#allocation3 + $0x10] sm:$0xff] %vm1763, %v6634
      %6642 = vst.msk [vmem:[#allocation3 + $0x20] sm:$0xff] %vm1763, %v6636
      %v6643 = vld [vmem:[%s413 + $0xd] sm:$0xff]
      %v6644 = vld [vmem:[%s413 + $0x15] sm:$0xff]
      %v6645 = vld [vmem:[%s413 + $0x1d] sm:$0xff]
      %6649 = vrot.lane.b32.xlu0 %v6643, 112
      %v6650 = vpop.permute.xlu0 %6649
      %6651 = vrot.lane.b32.xlu0 %v6644, 112
      %v6652 = vpop.permute.xlu0 %6651
      %6653 = vrot.lane.b32.xlu0 %v6645, 112
      %v6654 = vpop.permute.xlu0 %6653
      %6658 = vst.msk [vmem:[#allocation3] sm:$0xff] %vm1980, %v6650
      %6659 = vst.msk [vmem:[#allocation3 + $0x10] sm:$0xff] %vm1980, %v6652
      %6660 = vst.msk [vmem:[#allocation3 + $0x20] sm:$0xff] %vm1980, %v6654
      %v6661 = vld [vmem:[%s413 + $0xe] sm:$0xff]
      %v6662 = vld [vmem:[%s413 + $0x16] sm:$0xff]
      %v6663 = vld [vmem:[%s413 + $0x1e] sm:$0xff]
      %6664 = vst.msk [vmem:[#allocation3 + $0x8] sm:$0xff] %vm461, %v6661
      %6665 = vst.msk [vmem:[#allocation3 + $0x18] sm:$0xff] %vm461, %v6662
      %6666 = vst.msk [vmem:[#allocation3 + $0x28] sm:$0xff] %vm461, %v6663
      %v6667 = vld [vmem:[#allocation3] sm:$0xff]
      %v6668 = vld [vmem:[#allocation3 + $0x8] sm:$0xff]
      %v6669 = vld [vmem:[#allocation3 + $0x10] sm:$0xff]
      %v6670 = vld [vmem:[#allocation3 + $0x18] sm:$0xff]
      %v6671 = vld [vmem:[#allocation3 + $0x20] sm:$0xff]
      %v6672 = vld [vmem:[#allocation3 + $0x28] sm:$0xff]
      %v6673 = vpack.c.bf16 %v6669, %v6667
      %v6674 = vpack.c.bf16 %v6670, %v6668
      %v6675 = vpack.c.bf16 %v6671, %v6671
      %v6676 = vpack.c.bf16 %v6672, %v6672
      %s6677 = scalar_lea.vmem %s1, 288
      %v6678 = vld [vmem:[%s6677] sm:$0xf]
      %v6679 = vld [vmem:[%s6677 + $0x4] sm:$0xf]
      %v6680 = vld [vmem:[%s6677 + $0x8] sm:$0xf]
      %v6681 = vld [vmem:[%s6677 + $0xc] sm:$0xf]
      %v6682 = vld [vmem:[%s6677 + $0x10] sm:$0xf]
      %v6683 = vld [vmem:[%s6677 + $0x14] sm:$0xf]
      %v6684 = vld [vmem:[%s6677 + $0x18] sm:$0xf]
      %v6685 = vld [vmem:[%s6677 + $0x1c] sm:$0xf]
      %v6686 = vld [vmem:[%s6677 + $0x20] sm:$0xf]
      %v6687 = vld [vmem:[%s6677 + $0x24] sm:$0xf]
      %v6688 = vld [vmem:[%s6677 + $0x28] sm:$0xf]
      %v6689 = vld [vmem:[%s6677 + $0x2c] sm:$0xf]
      %v6690 = vld [vmem:[%s6677 + $0x30] sm:$0xf]
      %v6691 = vld [vmem:[%s6677 + $0x34] sm:$0xf]
      %v6692 = vld [vmem:[%s6677 + $0x38] sm:$0xf]
      %v6693 = vld [vmem:[%s6677 + $0x3c] sm:$0xf]
      %v6694 = vld [vmem:[%s6677 + $0x40] sm:$0xf]
      %v6695 = vld [vmem:[%s6677 + $0x44] sm:$0xf]
      %s6696 = scalar_lea.vmem %s2, 8
      %v6697 = vld [vmem:[%s6696] sm:$0x1]
      %v6698 = vperm.slane %v6697, 0
      %v6717 = vunpack.c.l.b16 %v6678
      %v6718 = vunpack.c.l.b16 %v6679
      %v6719 = vunpack.c.l.b16 %v6680
      %v6720 = vunpack.c.l.b16 %v6681
      %v6721 = vunpack.c.l.b16 %v6682
      %v6722 = vunpack.c.l.b16 %v6683
      %v6723 = vunpack.c.l.b16 %v6684
      %v6724 = vunpack.c.l.b16 %v6685
      %v6725 = vunpack.c.l.b16 %v6686
      %v6726 = vunpack.c.l.b16 %v6687
      %v6727 = vunpack.c.l.b16 %v6688
      %v6728 = vunpack.c.l.b16 %v6689
      %v6729 = vunpack.c.l.b16 %v6690
      %v6730 = vunpack.c.l.b16 %v6691
      %v6731 = vunpack.c.l.b16 %v6692
      %v6732 = vunpack.c.l.b16 %v6693
      %v6733 = vunpack.c.l.b16 %v6694
      %v6734 = vunpack.c.l.b16 %v6695
      %v6735 = vpack.c.b16 %v6718, %v6717
      %v6736 = vpack.c.b16 %v6720, %v6719
      %v6737 = vpack.c.b16 %v6722, %v6721
      %v6738 = vpack.c.b16 %v6724, %v6723
      %v6739 = vpack.c.b16 %v6726, %v6725
      %v6740 = vpack.c.b16 %v6728, %v6727
      %v6741 = vpack.c.b16 %v6730, %v6729
      %v6742 = vpack.c.b16 %v6732, %v6731
      %v6743 = vpack.c.b16 %v6734, %v6733
      %v6754 = vsel %vm461, %v6674, 0
      %v6757 = vsel %vm461, %v6676, 0
      %6759 = vmatpush.bf16.msra.mxu0 %v6742
      %6760 = vmatpush.bf16.msra.mxu0 %v6741
      %6761 = vmatpush.bf16.msra.mxu0 %v6740
      %6762 = vmatpush.bf16.msra.mxu0 %v6739
      %6763 = vmatpush.bf16.msra.mxu0 %v6738
      %6764 = vmatpush.bf16.msra.mxu0 %v6737
      %6765 = vmatpush.bf16.msra.mxu0 %v6736
      %6766 = vmatpush.bf16.msra.mxu0 %v6735
      %6767 = vmatmul.bf16.gmra.mxu0 %v6673
      %v6768 = vpop.f32.mrf.mxu0
      %v6769 = vadd.f32 %v6698, %v6768
      %v6770 = vpop.f32.mrf.mxu0
      %v6771 = vadd.f32 %v6698, %v6770
      %6772 = vmatmul.bf16.gmra.mxu0 %v6675
      %v6773 = vpop.f32.mrf.mxu0
      %v6774 = vadd.f32 %v6698, %v6773
      %v6775 = vpop.f32.mrf.mxu0
      %6776 = vdwg.mxu0
      %6777 = vmatpush.bf16.msra.mxu0 0
      %6778 = vmatpush.bf16.msra.mxu0 0
      %6779 = vmatpush.bf16.msra.mxu0 0
      %6780 = vmatpush.bf16.msra.mxu0 0
      %6781 = vmatpush.bf16.msra.mxu0 0
      %6782 = vmatpush.bf16.msra.mxu0 0
      %6783 = vmatpush.bf16.msra.mxu0 0
      %6784 = vmatpush.bf16.msra.mxu0 %v6743
      %6785 = vmatmul.bf16.gmra.mxu0 %v6754
      %v6786 = vpop.f32.mrf.mxu0
      %v6787 = vadd.f32 %v6769, %v6786
      %v6788 = vpop.f32.mrf.mxu0
      %v6789 = vadd.f32 %v6771, %v6788
      %6790 = vmatmul.bf16.gmra.mxu0 %v6757
      %v6791 = vpop.f32.mrf.mxu0
      %v6792 = vadd.f32 %v6774, %v6791
      %v6793 = vpop.f32.mrf.mxu0
      %6794 = vdwg.mxu0
      %vm6795 = vcmp.ge.f32.partialorder %v6787, 0.0
      %vm6796 = vcmp.ge.f32.partialorder %v6789, 0.0
      %vm6797 = vcmp.ge.f32.partialorder %v6792, 0.0
      %v6798 = vld [vmem:[%s6696 + $0x1] sm:$0x1]
      %v6799 = vperm.slane %v6798, 0
      %v6800 = vmul.f32 %v6799, %v6787
      %v6801 = vmul.f32 %v6799, %v6789
      %v6802 = vmul.f32 %v6799, %v6792
      %v6803 = vsel %vm6795, %v6787, %v6800
      %v6804 = vsel %vm6796, %v6789, %v6801
      %v6805 = vsel %vm6797, %v6792, %v6802
      %6806 = vst.msk [vmem:[#allocation2] sm:$0xff] %vm461, 0.0
      %6807 = vst.msk [vmem:[#allocation2 + $0x8] sm:$0xff] %vm461, 0.0
      %6808 = vst.msk [vmem:[#allocation2 + $0x10] sm:$0xff] %vm461, 0.0
      %6809 = vst.msk [vmem:[#allocation2 + $0x18] sm:$0xff] %vm461, 0.0
      %6810 = vst.msk [vmem:[#allocation2 + $0x20] sm:$0xff] %vm461, 0.0
      %6811 = vst.msk [vmem:[#allocation2 + $0x28] sm:$0xff] %vm461, 0.0
      %6812 = vst.msk [vmem:[#allocation2 + $0x30] sm:$0xff] %vm461, 0.0
      %6813 = vst.msk [vmem:[#allocation2 + $0x38] sm:$0xff] %vm461, 0.0
      %6814 = vst.msk [vmem:[#allocation2 + $0x40] sm:$0xff] %vm461, 0.0
      %6815 = vst.msk [vmem:[#allocation2 + $0x48] sm:$0xff] %vm461, 0.0
      %6816 = vst.msk [vmem:[#allocation2 + $0x50] sm:$0xff] %vm461, 0.0
      %6817 = vst.msk [vmem:[#allocation2 + $0x58] sm:$0xff] %vm461, 0.0
      %6818 = vst.msk [vmem:[#allocation2 + $0x60] sm:$0xff] %vm461, 0.0
      %6819 = vst.msk [vmem:[#allocation2 + $0x68] sm:$0xff] %vm461, 0.0
      %6820 = vst.msk [vmem:[#allocation2 + $0x70] sm:$0xff] %vm461, 0.0
      %6821 = vst.msk [vmem:[#allocation2 + $0x78] sm:$0xff] %vm461, 0.0
      %6822 = vst.msk [vmem:[#allocation2 + $0x80] sm:$0xff] %vm461, 0.0
      %6823 = vst.msk [vmem:[#allocation2 + $0x88] sm:$0xff] %vm461, 0.0
      %6824 = vst.msk [vmem:[#allocation2 + $0x90] sm:$0xff] %vm461, 0.0
      %6825 = vst.msk [vmem:[#allocation2 + $0x98] sm:$0xff] %vm461, 0.0
      %6826 = vst.msk [vmem:[#allocation2 + $0xa0] sm:$0xff] %vm461, 0.0
      %6827 = vst.msk [vmem:[#allocation2 + $0xa8] sm:$0xff] %vm461, 0.0
      %6828 = vst.msk [vmem:[#allocation2 + $0xb0] sm:$0xff] %vm461, 0.0
      %6829 = vst.msk [vmem:[#allocation2 + $0xb8] sm:$0xff] %vm461, 0.0
      %6830 = vst.msk [vmem:[#allocation2 + $0xc0] sm:$0xff] %vm461, 0.0
      %6831 = vst.msk [vmem:[#allocation2 + $0xc8] sm:$0xff] %vm461, 0.0
      %6832 = vst.msk [vmem:[#allocation2 + $0xd0] sm:$0xff] %vm461, 0.0
      %6833 = vst.msk [vmem:[#allocation2 + $0xd8] sm:$0xff] %vm461, 0.0
      %6834 = vst.msk [vmem:[#allocation2 + $0xe0] sm:$0xff] %vm461, 0.0
      %6835 = vst.msk [vmem:[#allocation2 + $0xe8] sm:$0xff] %vm461, 0.0
      %6836 = vst.msk [vmem:[#allocation2 + $0xf0] sm:$0xff] %vm461, 0.0
      %6837 = vst.msk [vmem:[#allocation2 + $0xf8] sm:$0xff] %vm461, 0.0
      %6838 = vst.msk [vmem:[#allocation2 + $0x100] sm:$0xff] %vm461, 0.0
      %6839 = vst.msk [vmem:[#allocation2 + $0x108] sm:$0xff] %vm461, 0.0
      %6840 = vst.msk [vmem:[#allocation2 + $0x110] sm:$0xff] %vm461, 0.0
      %6841 = vst.msk [vmem:[#allocation2 + $0x118] sm:$0xff] %vm461, 0.0
      %6842 = vst.msk [vmem:[#allocation2 + $0x120] sm:$0xff] %vm461, 0.0
      %6843 = vst.msk [vmem:[#allocation2 + $0x128] sm:$0xff] %vm461, 0.0
      %6844 = vst.msk [vmem:[#allocation2 + $0x130] sm:$0xff] %vm461, 0.0
      %6845 = vst.msk [vmem:[#allocation2 + $0x138] sm:$0xff] %vm461, 0.0
      %6846 = vst.msk [vmem:[#allocation2 + $0x140] sm:$0xff] %vm461, 0.0
      %6847 = vst.msk [vmem:[#allocation2 + $0x148] sm:$0xf] %vm2674, 0.0
      %v6848 = vld [vmem:[%s6] sm:$0xff]
      %v6849 = vld [vmem:[%s6 + $0x8] sm:$0xff]
      %vm6850 = vcmask 195584
      %v6852 = vsel %vm6850, %v6848, 0
      %v6855 = vsel %vm6850, %v6849, 0
      %6857 = vmatpush.msra.mxu0 0.0
      %6858 = vmatpush.msra.mxu0 0.0
      %6859 = vmatpush.msra.mxu0 0.0
      %6860 = vmatpush.msra.mxu0 0.0
      %6861 = vmatpush.msra.mxu0 0.0
      %6862 = vmatpush.msra.mxu0 0.0
      %6863 = vmatpush.msra.mxu0 0.0
      %6864 = vmatpush.msra.mxu0 0.0
      %6865 = vmatpush.msra.mxu0 0.0
      %6866 = vmatpush.msra.mxu0 0.0
      %6867 = vmatpush.msra.mxu0 0.0
      %6868 = vmatpush.msra.mxu0 0.0
      %6869 = vmatpush.msra.mxu0 0.0
      %6870 = vmatpush.msra.mxu0 %v6805
      %6871 = vmatpush.msra.mxu0 %v6804
      %6872 = vmatpush.msra.mxu0 %v6803
      %6873 = vmatmul.f32.gmra.mxu0 %v6852
      %v6874 = vpop.f32.mrf.mxu0
      %v6875 = vadd.f32 0.0, %v6874
      %6876 = vmatmul.f32.gmra.mxu0 %v6855
      %v6877 = vpop.f32.mrf.mxu0
      %v6878 = vadd.f32 0.0, %v6877
      %6879 = vdwg.mxu0
      %6880 = vst.msk [vmem:[#allocation2] sm:$0xff] %vm461, %v6875
      %6881 = vst.msk [vmem:[#allocation2 + $0x8] sm:$0xff] %vm461, %v6878
      %v6882 = vld [vmem:[#allocation2] sm:$0xff]
      %6883 = vst.msk [vmem:[#allocation3] sm:$0xff] %vm461, %v6882
      %v6884 = vld [vmem:[#allocation2 + $0x1] sm:$0xff]
      %6886 = vrot.lane.b32.xlu0 %v6884, 16
      %v6887 = vpop.permute.xlu0 %6886
      %6889 = vst.msk [vmem:[#allocation3] sm:$0xff] %vm678, %v6887
      %v6890 = vld [vmem:[#allocation2 + $0x2] sm:$0xff]
      %6892 = vrot.lane.b32.xlu0 %v6890, 32
      %v6893 = vpop.permute.xlu0 %6892
      %6895 = vst.msk [vmem:[#allocation3] sm:$0xff] %vm895, %v6893
      %v6896 = vld [vmem:[#allocation2 + $0x4] sm:$0xff]
      %6898 = vrot.lane.b32.xlu0 %v6896, 48
      %v6899 = vpop.permute.xlu0 %6898
      %6901 = vst.msk [vmem:[#allocation3] sm:$0xff] %vm1112, %v6899
      %v6902 = vld [vmem:[#allocation2 + $0x5] sm:$0xff]
      %6904 = vrot.lane.b32.xlu0 %v6902, 64
      %v6905 = vpop.permute.xlu0 %6904
      %6907 = vst.msk [vmem:[#allocation3] sm:$0xff] %vm1329, %v6905
      %v6908 = vld [vmem:[#allocation2 + $0x6] sm:$0xff]
      %6910 = vrot.lane.b32.xlu0 %v6908, 80
      %v6911 = vpop.permute.xlu0 %6910
      %6913 = vst.msk [vmem:[#allocation3] sm:$0xff] %vm1546, %v6911
      %v6914 = vld [vmem:[#allocation2 + $0x8] sm:$0xff]
      %6916 = vrot.lane.b32.xlu0 %v6914, 96
      %v6917 = vpop.permute.xlu0 %6916
      %6919 = vst.msk [vmem:[#allocation3] sm:$0xff] %vm1763, %v6917
      %v6920 = vld [vmem:[#allocation2 + $0x9] sm:$0xff]
      %6922 = vrot.lane.b32.xlu0 %v6920, 112
      %v6923 = vpop.permute.xlu0 %6922
      %6925 = vst.msk [vmem:[#allocation3] sm:$0xff] %vm1980, %v6923
      %v6926 = vld [vmem:[#allocation2 + $0xa] sm:$0xff]
      %6927 = vst.msk [vmem:[#allocation3 + $0x8] sm:$0xff] %vm461, %v6926
      %v6928 = vld [vmem:[#allocation3] sm:$0xff]
      %v6929 = vld [vmem:[#allocation3 + $0x8] sm:$0xff]
      %v6930 = vpack.c.bf16 %v6928, %v6928
      %v6931 = vpack.c.bf16 %v6929, %v6929
      %s6932 = scalar_lea.vmem %s1, 360
      %v6933 = vld [vmem:[%s6932] sm:$0xf]
      %v6934 = vld [vmem:[%s6932 + $0x4] sm:$0xf]
      %v6935 = vld [vmem:[%s6932 + $0x8] sm:$0xf]
      %v6936 = vld [vmem:[%s6932 + $0xc] sm:$0xf]
      %v6937 = vld [vmem:[%s6932 + $0x10] sm:$0xf]
      %v6938 = vld [vmem:[%s6932 + $0x14] sm:$0xf]
      %v6939 = vld [vmem:[%s6932 + $0x18] sm:$0xf]
      %v6940 = vld [vmem:[%s6932 + $0x1c] sm:$0xf]
      %v6941 = vld [vmem:[%s6932 + $0x20] sm:$0xf]
      %v6942 = vld [vmem:[%s6932 + $0x24] sm:$0xf]
      %v6943 = vld [vmem:[%s6932 + $0x28] sm:$0xf]
      %v6944 = vld [vmem:[%s6932 + $0x2c] sm:$0xf]
      %v6945 = vld [vmem:[%s6932 + $0x30] sm:$0xf]
      %v6946 = vld [vmem:[%s6932 + $0x34] sm:$0xf]
      %v6947 = vld [vmem:[%s6932 + $0x38] sm:$0xf]
      %v6948 = vld [vmem:[%s6932 + $0x3c] sm:$0xf]
      %v6949 = vld [vmem:[%s6932 + $0x40] sm:$0xf]
      %v6950 = vld [vmem:[%s6932 + $0x44] sm:$0xf]
      %s6951 = scalar_lea.vmem %s2, 10
      %v6952 = vld [vmem:[%s6951] sm:$0x1]
      %v6953 = vperm.slane %v6952, 0
      %v6972 = vunpack.c.l.b16 %v6933
      %v6973 = vunpack.c.l.b16 %v6934
      %v6974 = vunpack.c.l.b16 %v6935
      %v6975 = vunpack.c.l.b16 %v6936
      %v6976 = vunpack.c.l.b16 %v6937
      %v6977 = vunpack.c.l.b16 %v6938
      %v6978 = vunpack.c.l.b16 %v6939
      %v6979 = vunpack.c.l.b16 %v6940
      %v6980 = vunpack.c.l.b16 %v6941
      %v6981 = vunpack.c.l.b16 %v6942
      %v6982 = vunpack.c.l.b16 %v6943
      %v6983 = vunpack.c.l.b16 %v6944
      %v6984 = vunpack.c.l.b16 %v6945
      %v6985 = vunpack.c.l.b16 %v6946
      %v6986 = vunpack.c.l.b16 %v6947
      %v6987 = vunpack.c.l.b16 %v6948
      %v6988 = vunpack.c.l.b16 %v6949
      %v6989 = vunpack.c.l.b16 %v6950
      %v6990 = vpack.c.b16 %v6973, %v6972
      %v6991 = vpack.c.b16 %v6975, %v6974
      %v6992 = vpack.c.b16 %v6977, %v6976
      %v6993 = vpack.c.b16 %v6979, %v6978
      %v6994 = vpack.c.b16 %v6981, %v6980
      %v6995 = vpack.c.b16 %v6983, %v6982
      %v6996 = vpack.c.b16 %v6985, %v6984
      %v6997 = vpack.c.b16 %v6987, %v6986
      %v6998 = vpack.c.b16 %v6989, %v6988
      %v7009 = vsel %vm461, %v6931, 0
      %7011 = vmatpush.bf16.msra.mxu0 %v6997
      %7012 = vmatpush.bf16.msra.mxu0 %v6996
      %7013 = vmatpush.bf16.msra.mxu0 %v6995
      %7014 = vmatpush.bf16.msra.mxu0 %v6994
      %7015 = vmatpush.bf16.msra.mxu0 %v6993
      %7016 = vmatpush.bf16.msra.mxu0 %v6992
      %7017 = vmatpush.bf16.msra.mxu0 %v6991
      %7018 = vmatpush.bf16.msra.mxu0 %v6990
      %7019 = vmatmul.bf16.gmra.mxu0 %v6930
      %v7020 = vpop.f32.mrf.mxu0
      %v7021 = vadd.f32 %v6953, %v7020
      %v7022 = vpop.f32.mrf.mxu0
      %7023 = vdwg.mxu0
      %7024 = vmatpush.bf16.msra.mxu0 0
      %7025 = vmatpush.bf16.msra.mxu0 0
      %7026 = vmatpush.bf16.msra.mxu0 0
      %7027 = vmatpush.bf16.msra.mxu0 0
      %7028 = vmatpush.bf16.msra.mxu0 0
      %7029 = vmatpush.bf16.msra.mxu0 0
      %7030 = vmatpush.bf16.msra.mxu0 0
      %7031 = vmatpush.bf16.msra.mxu0 %v6998
      %7032 = vmatmul.bf16.gmra.mxu0 %v7009
      %v7033 = vpop.f32.mrf.mxu0
      %v7034 = vadd.f32 %v7021, %v7033
      %v7035 = vpop.f32.mrf.mxu0
      %7036 = vdwg.mxu0
      %vm7037 = vcmp.ge.f32.partialorder %v7034, 0.0
      %v7038 = vld [vmem:[%s6951 + $0x1] sm:$0x1]
      %v7039 = vperm.slane %v7038, 0
      %v7040 = vmul.f32 %v7039, %v7034
      %v7041 = vsel %vm7037, %v7034, %v7040
      %7042 = vst.msk [vmem:[%s418] sm:$0xff] %vm461, 0.0
      %7043 = vst.msk [vmem:[%s418 + $0x8] sm:$0xff] %vm461, 0.0
      %7044 = vst.msk [vmem:[%s418 + $0x10] sm:$0xff] %vm461, 0.0
      %s7045 = scalar_lea.vmem %s3, 576
      %v7046 = vld [vmem:[%s7045] sm:$0xff]
      %7048 = vset.pattern.permute.xlu0 0
      %7049 = vperm.xlu0 %7048, %v7046
      %v7050 = vpop.permute.xlu0 %7049
      %v7052 = vmul.f32 %v7041, %v7050
      %7053 = vst.msk [vmem:[%s418 + $0x5] sm:$0xff] %vm461, %v7052
      %v7054 = vld [vmem:[%s418] sm:$0xff]
      %7055 = vst.msk [vmem:[#allocation3] sm:$0xff] %vm461, %v7054
      %v7056 = vld [vmem:[%s418 + $0x1] sm:$0xff]
      %7058 = vrot.lane.b32.xlu0 %v7056, 16
      %v7059 = vpop.permute.xlu0 %7058
      %7061 = vst.msk [vmem:[#allocation3] sm:$0xff] %vm678, %v7059
      %v7062 = vld [vmem:[%s418 + $0x2] sm:$0xff]
      %7064 = vrot.lane.b32.xlu0 %v7062, 32
      %v7065 = vpop.permute.xlu0 %7064
      %7067 = vst.msk [vmem:[#allocation3] sm:$0xff] %vm895, %v7065
      %v7068 = vld [vmem:[%s418 + $0x4] sm:$0xff]
      %7070 = vrot.lane.b32.xlu0 %v7068, 48
      %v7071 = vpop.permute.xlu0 %7070
      %7073 = vst.msk [vmem:[#allocation3] sm:$0xff] %vm1112, %v7071
      %v7074 = vld [vmem:[%s418 + $0x5] sm:$0xff]
      %7076 = vrot.lane.b32.xlu0 %v7074, 64
      %v7077 = vpop.permute.xlu0 %7076
      %7079 = vst.msk [vmem:[#allocation3] sm:$0xff] %vm1329, %v7077
      %v7080 = vld [vmem:[%s418 + $0x6] sm:$0xff]
      %7082 = vrot.lane.b32.xlu0 %v7080, 80
      %v7083 = vpop.permute.xlu0 %7082
      %7085 = vst.msk [vmem:[#allocation3] sm:$0xff] %vm1546, %v7083
      %v7086 = vld [vmem:[%s418 + $0x8] sm:$0xff]
      %7088 = vrot.lane.b32.xlu0 %v7086, 96
      %v7089 = vpop.permute.xlu0 %7088
      %7091 = vst.msk [vmem:[#allocation3] sm:$0xff] %vm1763, %v7089
      %v7092 = vld [vmem:[%s418 + $0x9] sm:$0xff]
      %7094 = vrot.lane.b32.xlu0 %v7092, 112
      %v7095 = vpop.permute.xlu0 %7094
      %7097 = vst.msk [vmem:[#allocation3] sm:$0xff] %vm1980, %v7095
      %v7098 = vld [vmem:[%s418 + $0xa] sm:$0xff]
      %7099 = vst.msk [vmem:[#allocation3 + $0x8] sm:$0xff] %vm461, %v7098
      %v7100 = vld [vmem:[#allocation3] sm:$0xff]
      %v7101 = vld [vmem:[#allocation3 + $0x8] sm:$0xff]
      %v7102 = vpack.c.bf16 %v7100, %v7100
      %v7103 = vpack.c.bf16 %v7101, %v7101
      %s7104 = scalar_lea.vmem %s1, 432
      %v7105 = vld [vmem:[%s7104] sm:$0xf]
      %v7106 = vld [vmem:[%s7104 + $0x4] sm:$0xf]
      %v7107 = vld [vmem:[%s7104 + $0x8] sm:$0xf]
      %v7108 = vld [vmem:[%s7104 + $0xc] sm:$0xf]
      %v7109 = vld [vmem:[%s7104 + $0x10] sm:$0xf]
      %v7110 = vld [vmem:[%s7104 + $0x14] sm:$0xf]
      %v7111 = vld [vmem:[%s7104 + $0x18] sm:$0xf]
      %v7112 = vld [vmem:[%s7104 + $0x1c] sm:$0xf]
      %v7113 = vld [vmem:[%s7104 + $0x20] sm:$0xf]
      %v7114 = vld [vmem:[%s7104 + $0x24] sm:$0xf]
      %v7115 = vld [vmem:[%s7104 + $0x28] sm:$0xf]
      %v7116 = vld [vmem:[%s7104 + $0x2c] sm:$0xf]
      %v7117 = vld [vmem:[%s7104 + $0x30] sm:$0xf]
      %v7118 = vld [vmem:[%s7104 + $0x34] sm:$0xf]
      %v7119 = vld [vmem:[%s7104 + $0x38] sm:$0xf]
      %v7120 = vld [vmem:[%s7104 + $0x3c] sm:$0xf]
      %v7121 = vld [vmem:[%s7104 + $0x40] sm:$0xf]
      %v7122 = vld [vmem:[%s7104 + $0x44] sm:$0xf]
      %s7123 = scalar_lea.vmem %s2, 12
      %v7124 = vld [vmem:[%s7123] sm:$0x1]
      %v7125 = vperm.slane %v7124, 0
      %v7144 = vunpack.c.l.b16 %v7105
      %v7145 = vunpack.c.l.b16 %v7106
      %v7146 = vunpack.c.l.b16 %v7107
      %v7147 = vunpack.c.l.b16 %v7108
      %v7148 = vunpack.c.l.b16 %v7109
      %v7149 = vunpack.c.l.b16 %v7110
      %v7150 = vunpack.c.l.b16 %v7111
      %v7151 = vunpack.c.l.b16 %v7112
      %v7152 = vunpack.c.l.b16 %v7113
      %v7153 = vunpack.c.l.b16 %v7114
      %v7154 = vunpack.c.l.b16 %v7115
      %v7155 = vunpack.c.l.b16 %v7116
      %v7156 = vunpack.c.l.b16 %v7117
      %v7157 = vunpack.c.l.b16 %v7118
      %v7158 = vunpack.c.l.b16 %v7119
      %v7159 = vunpack.c.l.b16 %v7120
      %v7160 = vunpack.c.l.b16 %v7121
      %v7161 = vunpack.c.l.b16 %v7122
      %v7162 = vpack.c.b16 %v7145, %v7144
      %v7163 = vpack.c.b16 %v7147, %v7146
      %v7164 = vpack.c.b16 %v7149, %v7148
      %v7165 = vpack.c.b16 %v7151, %v7150
      %v7166 = vpack.c.b16 %v7153, %v7152
      %v7167 = vpack.c.b16 %v7155, %v7154
      %v7168 = vpack.c.b16 %v7157, %v7156
      %v7169 = vpack.c.b16 %v7159, %v7158
      %v7170 = vpack.c.b16 %v7161, %v7160
      %v7181 = vsel %vm461, %v7103, 0
      %7183 = vmatpush.bf16.msra.mxu0 %v7169
      %7184 = vmatpush.bf16.msra.mxu0 %v7168
      %7185 = vmatpush.bf16.msra.mxu0 %v7167
      %7186 = vmatpush.bf16.msra.mxu0 %v7166
      %7187 = vmatpush.bf16.msra.mxu0 %v7165
      %7188 = vmatpush.bf16.msra.mxu0 %v7164
      %7189 = vmatpush.bf16.msra.mxu0 %v7163
      %7190 = vmatpush.bf16.msra.mxu0 %v7162
      %7191 = vmatmul.bf16.gmra.mxu0 %v7102
      %v7192 = vpop.f32.mrf.mxu0
      %v7193 = vadd.f32 %v7125, %v7192
      %v7194 = vpop.f32.mrf.mxu0
      %7195 = vdwg.mxu0
      %7196 = vmatpush.bf16.msra.mxu0 0
      %7197 = vmatpush.bf16.msra.mxu0 0
      %7198 = vmatpush.bf16.msra.mxu0 0
      %7199 = vmatpush.bf16.msra.mxu0 0
      %7200 = vmatpush.bf16.msra.mxu0 0
      %7201 = vmatpush.bf16.msra.mxu0 0
      %7202 = vmatpush.bf16.msra.mxu0 0
      %7203 = vmatpush.bf16.msra.mxu0 %v7170
      %7204 = vmatmul.bf16.gmra.mxu0 %v7181
      %v7205 = vpop.f32.mrf.mxu0
      %v7206 = vadd.f32 %v7193, %v7205
      %v7207 = vpop.f32.mrf.mxu0
      %7208 = vdwg.mxu0
      %vm7209 = vcmp.ge.f32.partialorder %v7206, 0.0
      %v7210 = vld [vmem:[%s7123 + $0x1] sm:$0x1]
      %v7211 = vperm.slane %v7210, 0
      %v7212 = vmul.f32 %v7211, %v7206
      %v7213 = vsel %vm7209, %v7206, %v7212
      %7214 = vst.msk [vmem:[#allocation2] sm:$0xff] %vm461, 0.0
      %7215 = vst.msk [vmem:[#allocation2 + $0x8] sm:$0xff] %vm461, 0.0
      %7216 = vst.msk [vmem:[#allocation2 + $0x10] sm:$0xff] %vm461, 0.0
      %7217 = vst.msk [vmem:[#allocation2 + $0x18] sm:$0xff] %vm461, 0.0
      %7218 = vst.msk [vmem:[#allocation2 + $0x20] sm:$0xff] %vm461, 0.0
      %7219 = vst.msk [vmem:[#allocation2 + $0x28] sm:$0xff] %vm461, 0.0
      %7220 = vst.msk [vmem:[#allocation2 + $0x30] sm:$0xff] %vm461, 0.0
      %7221 = vst.msk [vmem:[#allocation2 + $0x38] sm:$0xff] %vm461, 0.0
      %7222 = vst.msk [vmem:[#allocation2 + $0x40] sm:$0xff] %vm461, 0.0
      %7223 = vst.msk [vmem:[#allocation2 + $0x48] sm:$0xff] %vm461, 0.0
      %7224 = vst.msk [vmem:[#allocation2 + $0x50] sm:$0xff] %vm461, 0.0
      %7225 = vst.msk [vmem:[#allocation2 + $0x58] sm:$0xff] %vm461, 0.0
      %7226 = vst.msk [vmem:[#allocation2 + $0x60] sm:$0xff] %vm461, 0.0
      %7227 = vst.msk [vmem:[#allocation2 + $0x68] sm:$0xff] %vm461, 0.0
      %7228 = vst.msk [vmem:[#allocation2 + $0x70] sm:$0xff] %vm461, 0.0
      %7229 = vst.msk [vmem:[#allocation2 + $0x78] sm:$0xff] %vm461, 0.0
      %7230 = vst.msk [vmem:[#allocation2 + $0x80] sm:$0xff] %vm461, 0.0
      %7231 = vst.msk [vmem:[#allocation2 + $0x88] sm:$0xff] %vm461, 0.0
      %7232 = vst.msk [vmem:[#allocation2 + $0x90] sm:$0xff] %vm461, 0.0
      %7233 = vst.msk [vmem:[#allocation2 + $0x98] sm:$0xff] %vm461, 0.0
      %7234 = vst.msk [vmem:[#allocation2 + $0xa0] sm:$0xff] %vm461, 0.0
      %7235 = vst.msk [vmem:[#allocation2 + $0xa8] sm:$0xff] %vm461, 0.0
      %7236 = vst.msk [vmem:[#allocation2 + $0xb0] sm:$0xff] %vm461, 0.0
      %7237 = vst.msk [vmem:[#allocation2 + $0xb8] sm:$0xff] %vm461, 0.0
      %7238 = vst.msk [vmem:[#allocation2 + $0xc0] sm:$0xff] %vm461, 0.0
      %7239 = vst.msk [vmem:[#allocation2 + $0xc8] sm:$0xff] %vm461, 0.0
      %7240 = vst.msk [vmem:[#allocation2 + $0xd0] sm:$0xff] %vm461, 0.0
      %7241 = vst.msk [vmem:[#allocation2 + $0xd8] sm:$0xff] %vm461, 0.0
      %7242 = vst.msk [vmem:[#allocation2 + $0xe0] sm:$0xff] %vm461, 0.0
      %7243 = vst.msk [vmem:[#allocation2 + $0xe8] sm:$0xff] %vm461, 0.0
      %7244 = vst.msk [vmem:[#allocation2 + $0xf0] sm:$0xff] %vm461, 0.0
      %7245 = vst.msk [vmem:[#allocation2 + $0xf8] sm:$0xff] %vm461, 0.0
      %7246 = vst.msk [vmem:[#allocation2 + $0x100] sm:$0xff] %vm461, 0.0
      %7247 = vst.msk [vmem:[#allocation2 + $0x108] sm:$0xff] %vm461, 0.0
      %7248 = vst.msk [vmem:[#allocation2 + $0x110] sm:$0xff] %vm461, 0.0
      %7249 = vst.msk [vmem:[#allocation2 + $0x118] sm:$0xff] %vm461, 0.0
      %7250 = vst.msk [vmem:[#allocation2 + $0x120] sm:$0xff] %vm461, 0.0
      %7251 = vst.msk [vmem:[#allocation2 + $0x128] sm:$0xff] %vm461, 0.0
      %7252 = vst.msk [vmem:[#allocation2 + $0x130] sm:$0xff] %vm461, 0.0
      %7253 = vst.msk [vmem:[#allocation2 + $0x138] sm:$0xff] %vm461, 0.0
      %7254 = vst.msk [vmem:[#allocation2 + $0x140] sm:$0xff] %vm461, 0.0
      %7255 = vst.msk [vmem:[#allocation2 + $0x148] sm:$0xf] %vm2674, 0.0
      %v7256 = vld [vmem:[%s7] sm:$0xff]
      %v7257 = vld [vmem:[%s7 + $0x8] sm:$0x1]
      %vm7258 = vcmask 64512
      %v7260 = vsel %vm7258, %v7256, 0
      %v7263 = vsel %vm7258, %v7257, 0
      %7265 = vmatpush.msra.mxu0 0.0
      %7266 = vmatpush.msra.mxu0 0.0
      %7267 = vmatpush.msra.mxu0 0.0
      %7268 = vmatpush.msra.mxu0 0.0
      %7269 = vmatpush.msra.mxu0 0.0
      %7270 = vmatpush.msra.mxu0 0.0
      %7271 = vmatpush.msra.mxu0 0.0
      %7272 = vmatpush.msra.mxu0 0.0
      %7273 = vmatpush.msra.mxu0 0.0
      %7274 = vmatpush.msra.mxu0 0.0
      %7275 = vmatpush.msra.mxu0 0.0
      %7276 = vmatpush.msra.mxu0 0.0
      %7277 = vmatpush.msra.mxu0 0.0
      %7278 = vmatpush.msra.mxu0 0.0
      %7279 = vmatpush.msra.mxu0 0.0
      %7280 = vmatpush.msra.mxu0 %v7213
      %7281 = vmatmul.f32.gmra.mxu0 %v7260
      %v7282 = vpop.f32.mrf.mxu0
      %v7283 = vadd.f32 0.0, %v7282
      %7284 = vmatmul.f32.gmra.mxu0 %v7263
      %v7285 = vpop.f32.mrf.mxu0
      %v7286 = vadd.f32 0.0, %v7285
      %7287 = vdwg.mxu0
      %7288 = vst.msk [vmem:[#allocation2] sm:$0xff] %vm461, %v7283
      %vm7289 = vcmask 122880
      %7290 = vst.msk [vmem:[#allocation2 + $0x8] sm:$0x1] %vm7289, %v7286
      %v7291 = vld [vmem:[#allocation2] sm:$0x7]
      %vm7292 = vcmask 124928
      %7293 = vst.msk [vmem:[#allocation3] sm:$0x7] %vm7292, %v7291
      %v7294 = vld [vmem:[#allocation2 + $0x1] sm:$0x7]
      %7296 = vrot.lane.b32.xlu0 %v7294, 16
      %v7297 = vpop.permute.xlu0 %7296
      %vm7299 = vcmask 256128
      %7300 = vst.msk [vmem:[#allocation3] sm:$0x7] %vm7299, %v7297
      %v7301 = vld [vmem:[#allocation2 + $0x2] sm:$0x7]
      %7303 = vrot.lane.b32.xlu0 %v7301, 32
      %v7304 = vpop.permute.xlu0 %7303
      %vm7306 = vcmask 387328
      %7307 = vst.msk [vmem:[#allocation3] sm:$0x7] %vm7306, %v7304
      %v7308 = vld [vmem:[#allocation2 + $0x3] sm:$0x7]
      %7310 = vrot.lane.b32.xlu0 %v7308, 48
      %v7311 = vpop.permute.xlu0 %7310
      %vm7313 = vcmask 518528
      %7314 = vst.msk [vmem:[#allocation3] sm:$0x7] %vm7313, %v7311
      %v7315 = vld [vmem:[#allocation2 + $0x4] sm:$0x7]
      %7317 = vrot.lane.b32.xlu0 %v7315, 64
      %v7318 = vpop.permute.xlu0 %7317
      %vm7320 = vcmask 649728
      %7321 = vst.msk [vmem:[#allocation3] sm:$0x7] %vm7320, %v7318
      %v7322 = vld [vmem:[#allocation2 + $0x5] sm:$0x7]
      %7324 = vrot.lane.b32.xlu0 %v7322, 80
      %v7325 = vpop.permute.xlu0 %7324
      %vm7327 = vcmask 780928
      %7328 = vst.msk [vmem:[#allocation3] sm:$0x7] %vm7327, %v7325
      %v7329 = vld [vmem:[#allocation2 + $0x6] sm:$0x7]
      %7331 = vrot.lane.b32.xlu0 %v7329, 96
      %v7332 = vpop.permute.xlu0 %7331
      %vm7334 = vcmask 912128
      %7335 = vst.msk [vmem:[#allocation3] sm:$0x7] %vm7334, %v7332
      %v7336 = vld [vmem:[#allocation2 + $0x7] sm:$0x7]
      %7338 = vrot.lane.b32.xlu0 %v7336, 112
      %v7339 = vpop.permute.xlu0 %7338
      %vm7341 = vcmask 1043328
      %7342 = vst.msk [vmem:[#allocation3] sm:$0x7] %vm7341, %v7339
      %v7343 = vld [vmem:[#allocation2 + $0x8] sm:$0x7]
      %7344 = vst.msk [vmem:[#allocation3 + $0x8] sm:$0x7] %vm7292, %v7343
      %v7345 = vld [vmem:[#allocation3] sm:$0x7]
      %v7346 = vld [vmem:[#allocation3 + $0x8] sm:$0x7]
      %v7347 = vpack.c.bf16 %v7345, %v7345
      %v7348 = vpack.c.bf16 %v7346, %v7346
      %s7349 = scalar_lea.vmem %s1, 504
      %v7350 = vld [vmem:[%s7349] sm:$0xf]
      %v7351 = vld [vmem:[%s7349 + $0x4] sm:$0xf]
      %v7352 = vld [vmem:[%s7349 + $0x8] sm:$0xf]
      %v7353 = vld [vmem:[%s7349 + $0xc] sm:$0xf]
      %v7354 = vld [vmem:[%s7349 + $0x10] sm:$0xf]
      %v7355 = vld [vmem:[%s7349 + $0x14] sm:$0xf]
      %v7356 = vld [vmem:[%s7349 + $0x18] sm:$0xf]
      %v7357 = vld [vmem:[%s7349 + $0x1c] sm:$0xf]
      %v7358 = vld [vmem:[%s7349 + $0x20] sm:$0xf]
      %v7359 = vld [vmem:[%s7349 + $0x24] sm:$0xf]
      %v7360 = vld [vmem:[%s7349 + $0x28] sm:$0xf]
      %v7361 = vld [vmem:[%s7349 + $0x2c] sm:$0xf]
      %v7362 = vld [vmem:[%s7349 + $0x30] sm:$0xf]
      %v7363 = vld [vmem:[%s7349 + $0x34] sm:$0xf]
      %v7364 = vld [vmem:[%s7349 + $0x38] sm:$0xf]
      %v7365 = vld [vmem:[%s7349 + $0x3c] sm:$0xf]
      %v7366 = vld [vmem:[%s7349 + $0x40] sm:$0xf]
      %v7367 = vld [vmem:[%s7349 + $0x44] sm:$0xf]
      %s7368 = scalar_lea.vmem %s2, 14
      %v7369 = vld [vmem:[%s7368] sm:$0x1]
      %v7370 = vperm.slane %v7369, 0
      %v7389 = vunpack.c.l.b16 %v7350
      %v7390 = vunpack.c.l.b16 %v7351
      %v7391 = vunpack.c.l.b16 %v7352
      %v7392 = vunpack.c.l.b16 %v7353
      %v7393 = vunpack.c.l.b16 %v7354
      %v7394 = vunpack.c.l.b16 %v7355
      %v7395 = vunpack.c.l.b16 %v7356
      %v7396 = vunpack.c.l.b16 %v7357
      %v7397 = vunpack.c.l.b16 %v7358
      %v7398 = vunpack.c.l.b16 %v7359
      %v7399 = vunpack.c.l.b16 %v7360
      %v7400 = vunpack.c.l.b16 %v7361
      %v7401 = vunpack.c.l.b16 %v7362
      %v7402 = vunpack.c.l.b16 %v7363
      %v7403 = vunpack.c.l.b16 %v7364
      %v7404 = vunpack.c.l.b16 %v7365
      %v7405 = vunpack.c.l.b16 %v7366
      %v7406 = vunpack.c.l.b16 %v7367
      %v7407 = vpack.c.b16 %v7390, %v7389
      %v7408 = vpack.c.b16 %v7392, %v7391
      %v7409 = vpack.c.b16 %v7394, %v7393
      %v7410 = vpack.c.b16 %v7396, %v7395
      %v7411 = vpack.c.b16 %v7398, %v7397
      %v7412 = vpack.c.b16 %v7400, %v7399
      %v7413 = vpack.c.b16 %v7402, %v7401
      %v7414 = vpack.c.b16 %v7404, %v7403
      %v7415 = vpack.c.b16 %v7406, %v7405
      %v7426 = vsel %vm461, %v7348, 0
      %7428 = vmatpush.bf16.msra.mxu0 %v7414
      %7429 = vmatpush.bf16.msra.mxu0 %v7413
      %7430 = vmatpush.bf16.msra.mxu0 %v7412
      %7431 = vmatpush.bf16.msra.mxu0 %v7411
      %7432 = vmatpush.bf16.msra.mxu0 %v7410
      %7433 = vmatpush.bf16.msra.mxu0 %v7409
      %7434 = vmatpush.bf16.msra.mxu0 %v7408
      %7435 = vmatpush.bf16.msra.mxu0 %v7407
      %7436 = vmatmul.bf16.gmra.mxu0 %v7347
      %v7437 = vpop.f32.mrf.mxu0
      %v7438 = vadd.f32 %v7370, %v7437
      %v7439 = vpop.f32.mrf.mxu0
      %7440 = vdwg.mxu0
      %7441 = vmatpush.bf16.msra.mxu0 0
      %7442 = vmatpush.bf16.msra.mxu0 0
      %7443 = vmatpush.bf16.msra.mxu0 0
      %7444 = vmatpush.bf16.msra.mxu0 0
      %7445 = vmatpush.bf16.msra.mxu0 0
      %7446 = vmatpush.bf16.msra.mxu0 0
      %7447 = vmatpush.bf16.msra.mxu0 0
      %7448 = vmatpush.bf16.msra.mxu0 %v7415
      %7449 = vmatmul.bf16.gmra.mxu0 %v7426
      %v7450 = vpop.f32.mrf.mxu0
      %v7451 = vadd.f32 %v7438, %v7450
      %v7452 = vpop.f32.mrf.mxu0
      %7453 = vdwg.mxu0
      %vm7454 = vcmp.ge.f32.partialorder %v7451, 0.0
      %v7455 = vld [vmem:[%s7368 + $0x1] sm:$0x1]
      %v7456 = vperm.slane %v7455, 0
      %v7457 = vmul.f32 %v7456, %v7451
      %v7458 = vsel %vm7454, %v7451, %v7457
      %7459 = vst.msk [vmem:[%s423] sm:$0xff] %vm461, 0.0
      %7460 = vst.msk [vmem:[%s423 + $0x8] sm:$0xff] %vm461, 0.0
      %7461 = vst.msk [vmem:[%s423 + $0x10] sm:$0x1] %vm7289, 0.0
      %s7462 = scalar_lea.vmem %s3, 864
      %v7463 = vld [vmem:[%s7462] sm:$0x7]
      %7465 = vset.pattern.permute.xlu0 0
      %7466 = vperm.xlu0 %7465, %v7463
      %v7467 = vpop.permute.xlu0 %7466
      %v7469 = vmul.f32 %v7458, %v7467
      %7470 = vst.msk [vmem:[%s423 + $0x4] sm:$0x7] %vm7292, %v7469
      %p7471 = scmp.lt.s32.totalorder %s23, 1
      %s7472 = scalar_select %p7471, %s23, 1
      %s7473 = smul.addr %s7472, 14
      %s7474 = smul.addr %s7473, 8
      %s7475 = scalar_lea.vmem %s8, %s7474
      %p7476 = scmp.lt.s32.totalorder %s23, 1
      %s7477 = scalar_select %p7476, %s23, 1
      %s7478 = smul.addr %s7477, 6
      %s7479 = smul.addr %s7478, 8
      %s7480 = scalar_lea.vmem %s9, %s7479
      %p7481 = scmp.lt.s32.totalorder %s23, 1
      %s7482 = scalar_select %p7481, %s23, 1
      %s7483 = smul.addr %s7482, 3
      %s7484 = smul.addr %s7483, 8
      %s7485 = scalar_lea.vmem %s10, %s7484
      %p7486 = scmp.lt.s32.totalorder %s23, 1
      %s7487 = scalar_select %p7486, %s23, 1
      %s7488 = smul.addr %s7487, 3
      %s7489 = smul.addr %s7488, 8
      %s7490 = scalar_lea.vmem %s11, %s7489
      // Predicated region
      $region53: #{res_encoder_forward.1} parent=51 // pred_check
        %p7491 = pneg %p214
      $region54: #{res_encoder_forward.1} parent=51 // pred_check_branch
        %7493 = sbr.rel (%p7491) target = $region56
      $region55: #{res_encoder_forward.1} parent=51 // pred_region
        _
      $region56: #{res_encoder_forward.1} parent=51 // pred_fallthru
        _
      // Predicated region
      $region57: #{res_encoder_forward.1} parent=51 // pred_check
        %p7494 = pneg %p240
      $region58: #{res_encoder_forward.1} parent=51 // pred_check_branch
        %7496 = sbr.rel (%p7494) target = $region60
      $region59: #{res_encoder_forward.1} parent=51 // pred_region
        _
      $region60: #{res_encoder_forward.1} parent=51 // pred_fallthru
        _
      // Predicated region
      $region61: #{res_encoder_forward.1} parent=51 // pred_check
        %p7497 = pneg %p266
      $region62: #{res_encoder_forward.1} parent=51 // pred_check_branch
        %7499 = sbr.rel (%p7497) target = $region64
      $region63: #{res_encoder_forward.1} parent=51 // pred_region
        _
      $region64: #{res_encoder_forward.1} parent=51 // pred_fallthru
        _
      // Predicated region
      $region65: #{res_encoder_forward.1} parent=51 // pred_check
        %p7500 = pneg %p292
      $region66: #{res_encoder_forward.1} parent=51 // pred_check_branch
        %7502 = sbr.rel (%p7500) target = $region68
      $region67: #{res_encoder_forward.1} parent=51 // pred_region
        _
      $region68: #{res_encoder_forward.1} parent=51 // pred_fallthru
        _
    $region52: #{res_encoder_forward.1} parent=5 // pred_fallthru
      _
    %p7503 = scmp.le.s32.totalorder 2, %s18
    // Predicated region
    $region69: #{res_encoder_forward.1} parent=5 // pred_check
      %p7504 = pneg %p7503
    $region70: #{res_encoder_forward.1} parent=5 // pred_check_branch
      %7506 = sbr.rel (%p7504) target = $region72
    $region71: #{res_encoder_forward.1} parent=5 // pred_region
      %s7507 = ssub.s32 %s18, 2
      // Predicated region
      $region73: #{res_encoder_forward.1} parent=71 // pred_check
        %p7508 = pneg %p220
      $region74: #{res_encoder_forward.1} parent=71 // pred_check_branch
        %7510 = sbr.rel (%p7508) target = $region76
      $region75: #{res_encoder_forward.1} parent=71 // pred_region
        %p7511 = scmp.lt.s32.totalorder %s24, 1
        %s7512 = scalar_select %p7511, %s24, 1
        %s7513 = smul.addr %s7512, 14
        %s7514 = smul.addr %s7513, 8
        %s7515 = scalar_lea.vmem %s8, %s7514
      $region76: #{res_encoder_forward.1} parent=71 // pred_fallthru
        _
      // Predicated region
      $region77: #{res_encoder_forward.1} parent=71 // pred_check
        %p7516 = pneg %p246
      $region78: #{res_encoder_forward.1} parent=71 // pred_check_branch
        %7518 = sbr.rel (%p7516) target = $region80
      $region79: #{res_encoder_forward.1} parent=71 // pred_region
        %p7519 = scmp.lt.s32.totalorder %s24, 1
        %s7520 = scalar_select %p7519, %s24, 1
        %s7521 = smul.addr %s7520, 6
        %s7522 = smul.addr %s7521, 8
        %s7523 = scalar_lea.vmem %s9, %s7522
      $region80: #{res_encoder_forward.1} parent=71 // pred_fallthru
        _
      // Predicated region
      $region81: #{res_encoder_forward.1} parent=71 // pred_check
        %p7524 = pneg %p272
      $region82: #{res_encoder_forward.1} parent=71 // pred_check_branch
        %7526 = sbr.rel (%p7524) target = $region84
      $region83: #{res_encoder_forward.1} parent=71 // pred_region
        %p7527 = scmp.lt.s32.totalorder %s24, 1
        %s7528 = scalar_select %p7527, %s24, 1
        %s7529 = smul.addr %s7528, 3
        %s7530 = smul.addr %s7529, 8
        %s7531 = scalar_lea.vmem %s10, %s7530
      $region84: #{res_encoder_forward.1} parent=71 // pred_fallthru
        _
      // Predicated region
      $region85: #{res_encoder_forward.1} parent=71 // pred_check
        %p7532 = pneg %p298
      $region86: #{res_encoder_forward.1} parent=71 // pred_check_branch
        %7534 = sbr.rel (%p7532) target = $region88
      $region87: #{res_encoder_forward.1} parent=71 // pred_region
        %p7535 = scmp.lt.s32.totalorder %s24, 1
        %s7536 = scalar_select %p7535, %s24, 1
        %s7537 = smul.addr %s7536, 3
        %s7538 = smul.addr %s7537, 8
        %s7539 = scalar_lea.vmem %s11, %s7538
      $region88: #{res_encoder_forward.1} parent=71 // pred_fallthru
        _
    $region72: #{res_encoder_forward.1} parent=5 // pred_fallthru
      _
  $region6: #{res_encoder_forward.1} parent=0 // loop_footer
    %s22 = sadd.s32 1, %s18
  $region7: #{res_encoder_forward.1} parent=0 // loop_footer_branch
    %17 = sbr.rel target = $region3
  $region8: #{res_encoder_forward.1} parent=0 // loop_exit
    _

</llo_original>
